<compile_context>
chip_gen: v7x
topology: tpu7x:2x2x1
jax: 0.10.0
libtpu: 0.0.40
codegen_flags: <defaults>
</compile_context>

<pallas_src>
import jax
import jax.numpy as jnp
from jax import lax
from jax.experimental import pallas as pl
from jax.experimental.pallas import tpu as pltpu


def _cca_kernel(xq_ref, xcol_ref, mq_ref, qb_ref, gwv_ref, gbv_ref, o_ref):
    """One (batch image, query-row tile) step of criss-cross attention.

    xq_ref  : (1, C, TH*W)  f32   query-row tile of x (channels on sublanes, pixels on lanes)
    xcol_ref: (1, W, H, C)  bf16  column-branch view of the full image (resident per b)
    mq_ref  : (C, C)        bf16  folded query*key matrix  Wq^T Wk
    qb_ref  : (1, C)        f32   folded query bias row    bq^T Wk
    gwv_ref : (C, C)        bf16  gamma * Wv
    gbv_ref : (C, 1)        f32   gamma * bv
    o_ref   : (1, C, TH*W)  f32   output tile (lane-dense)
    """
    _, W, H, C = xcol_ref.shape
    THW = o_ref.shape[2]
    TH = THW // W
    h0 = pl.program_id(1) * TH
    bf16, f32 = jnp.bfloat16, jnp.float32

    x_q = xq_ref[0]                                  # (C, THW)  f32 (kept for residual)
    x_qT = jnp.transpose(x_q)                        # (THW, C)  f32
    x_qT_bf = x_qT.astype(bf16)
    x_row = x_qT_bf.reshape(TH, W, C)                # (TH, W, C) bf16: row-branch keys/values
    x_col = xcol_ref[0]                              # (W, H, C)  bf16: column-branch keys/values

    # Folded query projection: energy(i, j) = (x_i^T Mq + qb) . x_j
    # (bk only shifts all H+W logits of a query equally -> cancels in the joint softmax).
    qm = jnp.dot(x_qT_bf, mq_ref[...],
                 preferred_element_type=f32) + qb_ref[...]            # (THW, C) f32
    q_row = qm.astype(bf16).reshape(TH, W, C)                         # (TH, W, C)
    q_col = jnp.transpose(q_row, (1, 0, 2))                           # (W, TH, C)

    # Energies on the MXU (bf16 operands, f32 accumulation; batch dim leading).
    e_h = jnp.einsum('wtc,wpc->wtp', q_col, x_col,
                     preferred_element_type=f32)                      # (W, TH, H)
    e_w = jnp.einsum('twc,tpc->twp', q_row, x_row,
                     preferred_element_type=f32)                      # (TH, W, W)

    # Column-branch diagonal mask (p == global query row), matching PyTorch's INF term.
    tt = lax.broadcasted_iota(jnp.int32, (1, TH, H), 1)
    pp = lax.broadcasted_iota(jnp.int32, (1, TH, H), 2)
    e_h = jnp.where(pp == tt + h0, -jnp.inf, e_h)

    # Joint softmax over the concatenated (H + W) logits (f32 on the VPU/EUP).
    m_col = jnp.max(e_h, axis=-1)                                     # (W, TH)
    m_row = jnp.max(e_w, axis=-1)                                     # (TH, W)
    m_q = jnp.maximum(m_row, jnp.transpose(m_col))                    # (TH, W)
    p_h = jnp.exp(e_h - jnp.transpose(m_q)[:, :, None])               # (W, TH, H)
    p_w = jnp.exp(e_w - m_q[:, :, None])                              # (TH, W, W)
    denom = jnp.sum(p_w, axis=-1) + jnp.transpose(jnp.sum(p_h, axis=-1))
    inv = pl.reciprocal(denom, approx=True)                           # EUP slot
    att_h = (p_h * jnp.transpose(inv)[:, :, None]).astype(bf16)       # (W, TH, H)
    att_w = (p_w * inv[:, :, None]).astype(bf16)                      # (TH, W, W)

    # Aggregate the raw input; the value projection is applied afterwards
    # (exact, because the joint softmax sums to 1).
    agg_c = jnp.einsum('wtp,wpc->wtc', att_h, x_col,
                       preferred_element_type=f32)                    # (W, TH, C)
    agg_r = jnp.einsum('twp,tpc->twc', att_w, x_row,
                       preferred_element_type=f32)                    # (TH, W, C)
    agg = agg_r + jnp.transpose(agg_c, (1, 0, 2))                     # (TH, W, C) f32

    # Fused gamma-scaled value projection + bias + residual.
    agg_ct = jnp.transpose(agg.reshape(THW, C)).astype(bf16)          # (C, THW)
    out = jnp.dot(gwv_ref[...], agg_ct, preferred_element_type=f32)   # (C, THW)
    o_ref[0] = out + gbv_ref[...] + x_q


def _vmem_capacity_bytes():
    try:
        return int(pltpu.get_tpu_info().vmem_capacity_bytes)
    except Exception:
        return 64 * 1024 * 1024  # conservative (v7x) default


def _footprint_bytes(TH, H, W, C, xcol_buffers):
    """Rough per-step VMEM footprint (buffers + dominant intermediates)."""
    thw = TH * W
    return (2 * 2 * C * thw * 4                      # x query tile + out tile, double-buffered f32
            + xcol_buffers * W * H * C * 2           # resident column view, bf16
            + 2 * C * C * 2 + 2 * C * 4              # weights
            + thw * C * 8                            # qm f32 + bf16 copies
            + (W * TH * H + TH * W * W) * 8          # energies + exp
            + 2 * thw * C * 4)                       # aggregation accumulators


def _pick_row_tile(H, W, C, budget_bytes, xcol_buffers):
    """Largest TH (preferring TH <= 32) with H % TH == 0 and lane-dense TH*W % 128 == 0
    whose estimated footprint fits the budget."""
    cands = [t for t in range(1, H + 1) if H % t == 0 and (t * W) % 128 == 0]
    if not cands:
        # TODO(synk): no lane-dense row tiling exists (e.g. odd W); fall back to one
        # whole-image step per batch element instead of 4-D masked-store blocking.
        return H
    fitting = [t for t in cands if _footprint_bytes(t, H, W, C, xcol_buffers) <= budget_bytes]
    if not fitting:
        return min(cands)
    small = [t for t in fitting if t <= 32]
    return max(small) if small else min(fitting)


@jax.jit
def criss_cross_attention(x_nchw, wq, bq, wk, bk, wv, bv, gamma):
    """x_nchw: (B, C, H, W); wq/wk: (C//8, C); wv: (C, C); biases 1-D; gamma scalar."""
    del bk  # adds a per-query constant to every logit -> cancels in the joint softmax
    B, C, H, W = x_nchw.shape
    HW = H * W
    f32, bf16 = jnp.float32, jnp.bfloat16
    hp = lax.Precision.HIGHEST

    vmem_cap = _vmem_capacity_bytes()
    xcol_bytes = W * H * C * 2
    xcol_buffers = 1 if xcol_bytes > 8 * 1024 * 1024 else 2
    TH = _pick_row_tile(H, W, C, int(0.6 * vmem_cap), xcol_buffers)

    # Folded projections (computed once in XLA, outside the kernel).
    wq32, wk32, wv32 = wq.astype(f32), wk.astype(f32), wv.astype(f32)
    g = jnp.asarray(gamma, f32).reshape(())
    mq = jnp.dot(wq32.T, wk32, precision=hp).astype(bf16)             # (C, C)
    qb = jnp.dot(bq.astype(f32)[None, :], wk32, precision=hp)         # (1, C)
    gwv = (g * wv32).astype(bf16)                                     # (C, C)
    gbv = (g * bv.astype(f32))[:, None]                               # (C, 1)

    x_flat = x_nchw.reshape(B, C, HW).astype(f32)                     # NCHW-major (free reshape)
    x_col = jnp.transpose(x_nchw, (0, 3, 2, 1)).astype(bf16)          # (B, W, H, C)

    xcol_kwargs = {}
    if xcol_buffers == 1:
        # Index map is constant over the inner axis -> single-buffer the big slab on v7x-scale shapes.
        xcol_kwargs["pipeline_mode"] = pl.Buffered(1)

    vmem_limit = int(min(max(_footprint_bytes(TH, H, W, C, xcol_buffers) + 16 * 1024 * 1024,
                             32 * 1024 * 1024),
                         int(0.9 * vmem_cap)))

    out = pl.pallas_call(
        _cca_kernel,
        out_shape=jax.ShapeDtypeStruct((B, C, HW), f32),
        grid_spec=pltpu.PrefetchScalarGridSpec(
            num_scalar_prefetch=0,
            grid=(B, H // TH),
            in_specs=[
                pl.BlockSpec((1, C, TH * W), lambda b, t: (b, 0, t)),           # x query tile (f32)
                pl.BlockSpec((1, W, H, C), lambda b, t: (b, 0, 0, 0),
                             **xcol_kwargs),                                    # column view (bf16)
                pl.BlockSpec((C, C), lambda b, t: (0, 0)),                      # Mq
                pl.BlockSpec((1, C), lambda b, t: (0, 0)),                      # qb
                pl.BlockSpec((C, C), lambda b, t: (0, 0)),                      # gamma*Wv
                pl.BlockSpec((C, 1), lambda b, t: (0, 0)),                      # gamma*bv
            ],
            out_specs=pl.BlockSpec((1, C, TH * W), lambda b, t: (b, 0, t)),
        ),
        compiler_params=pltpu.CompilerParams(
            dimension_semantics=("parallel", "parallel"),
            vmem_limit_bytes=vmem_limit,
        ),
    )(x_flat, x_col, mq, qb, gwv, gbv)

    return out.reshape(B, C, H, W).astype(x_nchw.dtype)


def _reference(x_nchw, wq, bq, wk, bk, wv, bv, gamma):
    """Pure-JAX transcription of the PyTorch forward, for verification."""
    hp = lax.Precision.HIGHEST
    B, C, H, W = x_nchw.shape

    def conv1x1(x, w, b):
        return jnp.einsum('bchw,oc->bohw', x, w, precision=hp) + b[None, :, None, None]

    q = conv1x1(x_nchw, wq, bq)
    k = conv1x1(x_nchw, wk, bk)
    v = conv1x1(x_nchw, wv, bv)

    e_h = jnp.einsum('bchw,bcpw->bhwp', q, k, precision=hp)
    diag = jnp.eye(H, dtype=bool)[None, :, None, :]
    e_h = jnp.where(diag, -jnp.inf, e_h)
    e_w = jnp.einsum('bchw,bchp->bhwp', q, k, precision=hp)
    att = jax.nn.softmax(jnp.concatenate([e_h, e_w], axis=-1), axis=-1)
    att_h, att_w = att[..., :H], att[..., H:]
    out_h = jnp.einsum('bhwp,bcpw->bchw', att_h, v, precision=hp)
    out_w = jnp.einsum('bhwp,bchp->bchw', att_w, v, precision=hp)
    return gamma * (out_h + out_w) + x_nchw


if __name__ == "__main__":
    B, C, H, W = 2, 32, 16, 16           # in_dim=32 -> query/key channels = 4
    Cq = C // 8

    key = jax.random.PRNGKey(0)
    kx, kwq, kbq, kwk, kbk, kwv, kbv = jax.random.split(key, 7)

    x = jax.random.normal(kx, (B, C, H, W), jnp.float32)
    wq = 0.1 * jax.random.normal(kwq, (Cq, C), jnp.float32)
    bq = 0.1 * jax.random.normal(kbq, (Cq,), jnp.float32)
    wk = 0.1 * jax.random.normal(kwk, (Cq, C), jnp.float32)
    bk = 0.1 * jax.random.normal(kbk, (Cq,), jnp.float32)
    wv = 0.1 * jax.random.normal(kwv, (C, C), jnp.float32)
    bv = 0.1 * jax.random.normal(kbv, (C,), jnp.float32)
    # PyTorch initializes gamma to 0 (output trivially == x); use a nonzero value
    # so the attention path is exercised.
    gamma = jnp.float32(0.5)

    out = criss_cross_attention(x, wq, bq, wk, bk, wv, bv, gamma)
    out = jax.block_until_ready(out)

    ref = _reference(x, wq, bq, wk, bk, wv, bv, gamma)
    assert out.shape == (B, C, H, W)
    err = float(jnp.max(jnp.abs(out - ref)))
    # bf16 MXU operands + approximate reciprocal -> looser tolerance than the f32 version.
    assert jnp.allclose(out, ref, atol=2e-2, rtol=2e-2), err

    print("KERNEL_OK")
</pallas_src>

<mosaic_0001>
module attributes {stable_mosaic.version = 11 : i64} {
  func.func @_cca_kernel(%arg0: i32, %arg1: i32, %arg2: memref<1x32x256xf32, #tpu.memory_space<vmem>>, %arg3: memref<1x16x16x32xbf16, #tpu.memory_space<vmem>>, %arg4: memref<32x32xbf16, #tpu.memory_space<vmem>>, %arg5: memref<1x32xf32, #tpu.memory_space<vmem>>, %arg6: memref<32x32xbf16, #tpu.memory_space<vmem>>, %arg7: memref<32x1xf32, #tpu.memory_space<vmem>>, %arg8: memref<1x32x256xf32, #tpu.memory_space<vmem>>) attributes {dimension_semantics = [#tpu.dimension_semantics<parallel>, #tpu.dimension_semantics<parallel>], iteration_bounds = array<i64: 2, 1>, scalar_prefetch = 0 : i64, scratch_operands = 0 : i64, tpu.core_type = #tpu.core_type<tc>, window_params = [{transform_indices = @transform_0, window_bounds = array<i64: 1, 32, 256>}, {transform_indices = @transform_1, window_bounds = array<i64: 1, 16, 16, 32>}, {pipeline_mode = #tpu.pipeline_mode<synchronous>, transform_indices = @transform_2, window_bounds = array<i64: 32, 32>}, {pipeline_mode = #tpu.pipeline_mode<synchronous>, transform_indices = @transform_3, window_bounds = array<i64: 1, 32>}, {pipeline_mode = #tpu.pipeline_mode<synchronous>, transform_indices = @transform_4, window_bounds = array<i64: 32, 32>}, {pipeline_mode = #tpu.pipeline_mode<synchronous>, transform_indices = @transform_5, window_bounds = array<i64: 32, 1>}, {transform_indices = @transform_6, window_bounds = array<i64: 1, 32, 256>}]} {
    %c16_i32 = arith.constant 16 : i32
    %0 = arith.muli %arg1, %c16_i32 : i32
    %c0 = arith.constant 0 : index
    %c0_0 = arith.constant 0 : index
    %c0_1 = arith.constant 0 : index
    %1 = vector.load %arg2[%c0, %c0_0, %c0_1] : memref<1x32x256xf32, #tpu.memory_space<vmem>>, vector<1x32x256xf32>
    %2 = vector.shape_cast %1 : vector<1x32x256xf32> to vector<32x256xf32>
    %3 = tpu.transpose %2, [1, 0] : vector<32x256xf32> -> vector<256x32xf32>
    %4 = arith.truncf %3 : vector<256x32xf32> to vector<256x32xbf16>
    %5 = vector.shape_cast %4 : vector<256x32xbf16> to vector<16x16x32xbf16>
    %c0_2 = arith.constant 0 : index
    %c0_3 = arith.constant 0 : index
    %c0_4 = arith.constant 0 : index
    %c0_5 = arith.constant 0 : index
    %6 = vector.load %arg3[%c0_2, %c0_3, %c0_4, %c0_5] : memref<1x16x16x32xbf16, #tpu.memory_space<vmem>>, vector<1x16x16x32xbf16>
    %7 = vector.shape_cast %6 : vector<1x16x16x32xbf16> to vector<16x16x32xbf16>
    %c0_6 = arith.constant 0 : index
    %c0_7 = arith.constant 0 : index
    %8 = vector.load %arg4[%c0_6, %c0_7] : memref<32x32xbf16, #tpu.memory_space<vmem>>, vector<32x32xbf16>
    %cst = arith.constant dense<0.000000e+00> : vector<256x32xf32>
    %9 = tpu.matmul %4, %8, %cst {dimension_numbers = #tpu.dot_dimension_numbers<[1], [0], [0], [1], [0, 0, 1, 1], [], []>} : vector<256x32xbf16>, vector<32x32xbf16>, vector<256x32xf32> -> vector<256x32xf32>
    %c0_8 = arith.constant 0 : index
    %c0_9 = arith.constant 0 : index
    %10 = vector.load %arg5[%c0_8, %c0_9] : memref<1x32xf32, #tpu.memory_space<vmem>>, vector<1x32xf32>
    %11 = vector.broadcast %10 : vector<1x32xf32> to vector<256x32xf32>
    %12 = arith.addf %9, %11 : vector<256x32xf32>
    %13 = arith.truncf %12 : vector<256x32xf32> to vector<256x32xbf16>
    %14 = vector.shape_cast %13 : vector<256x32xbf16> to vector<16x16x32xbf16>
    %15 = tpu.transpose %14, [1, 0, 2] : vector<16x16x32xbf16> -> vector<16x16x32xbf16>
    "tpu.trace_start"() <{level = 10 : i32, message = "wtc,wpc->wtp"}> : () -> ()
    %cst_10 = arith.constant dense<0.000000e+00> : vector<16x16x16xf32>
    %16 = tpu.matmul %15, %7, %cst_10 {dimension_numbers = #tpu.dot_dimension_numbers<[2], [2], [1], [1], [0, 0, 0, 1, 1, 1], [0], [0]>} : vector<16x16x32xbf16>, vector<16x16x32xbf16>, vector<16x16x16xf32> -> vector<16x16x16xf32>
    "tpu.trace_stop"() : () -> ()
    "tpu.trace_start"() <{level = 10 : i32, message = "twc,tpc->twp"}> : () -> ()
    %cst_11 = arith.constant dense<0.000000e+00> : vector<16x16x16xf32>
    %17 = tpu.matmul %14, %5, %cst_11 {dimension_numbers = #tpu.dot_dimension_numbers<[2], [2], [1], [1], [0, 0, 0, 1, 1, 1], [0], [0]>} : vector<16x16x32xbf16>, vector<16x16x32xbf16>, vector<16x16x16xf32> -> vector<16x16x16xf32>
    "tpu.trace_stop"() : () -> ()
    %18 = tpu.iota {dimensions = array<i32: 1>} : vector<1x16x16xi32>
    %19 = tpu.iota {dimensions = array<i32: 2>} : vector<1x16x16xi32>
    %20 = vector.broadcast %0 : i32 to vector<1x16x16xi32>
    %21 = arith.addi %18, %20 : vector<1x16x16xi32>
    %22 = arith.cmpi eq, %19, %21 : vector<1x16x16xi32>
    %cst_12 = arith.constant 0xFF800000 : f32
    %23 = vector.shape_cast %22 : vector<1x16x16xi1> to vector<1x16x16xi1>
    %24 = vector.broadcast %23 : vector<1x16x16xi1> to vector<16x16x16xi1>
    %25 = vector.broadcast %cst_12 : f32 to vector<16x16x16xf32>
    %26 = arith.select %24, %25, %16 : vector<16x16x16xi1>, vector<16x16x16xf32>
    %cst_13 = arith.constant dense<0xFF800000> : vector<16x16xf32>
    %27 = vector.multi_reduction <maximumf>, %26, %cst_13 [2] : vector<16x16x16xf32> to vector<16x16xf32>
    %cst_14 = arith.constant dense<0xFF800000> : vector<16x16xf32>
    %28 = vector.multi_reduction <maximumf>, %17, %cst_14 [2] : vector<16x16x16xf32> to vector<16x16xf32>
    %29 = tpu.transpose %27, [1, 0] : vector<16x16xf32> -> vector<16x16xf32>
    %30 = arith.maximumf %28, %29 : vector<16x16xf32>
    %31 = tpu.transpose %30, [1, 0] : vector<16x16xf32> -> vector<16x16xf32>
    %32 = vector.shape_cast %31 : vector<16x16xf32> to vector<16x16x1xf32>
    %33 = vector.broadcast %32 : vector<16x16x1xf32> to vector<16x16x16xf32>
    %34 = arith.subf %26, %33 : vector<16x16x16xf32>
    %35 = math.exp %34 : vector<16x16x16xf32>
    %36 = vector.shape_cast %30 : vector<16x16xf32> to vector<16x16x1xf32>
    %37 = vector.broadcast %36 : vector<16x16x1xf32> to vector<16x16x16xf32>
    %38 = arith.subf %17, %37 : vector<16x16x16xf32>
    %39 = math.exp %38 : vector<16x16x16xf32>
    %cst_15 = arith.constant dense<0.000000e+00> : vector<16x16xf32>
    %40 = vector.multi_reduction <add>, %39, %cst_15 [2] : vector<16x16x16xf32> to vector<16x16xf32>
    %cst_16 = arith.constant dense<0.000000e+00> : vector<16x16xf32>
    %41 = vector.multi_reduction <add>, %35, %cst_16 [2] : vector<16x16x16xf32> to vector<16x16xf32>
    %42 = tpu.transpose %41, [1, 0] : vector<16x16xf32> -> vector<16x16xf32>
    %43 = arith.addf %40, %42 : vector<16x16xf32>
    %44 = tpu.reciprocal %43 {approx = true} : vector<16x16xf32> -> vector<16x16xf32>
    %45 = tpu.transpose %44, [1, 0] : vector<16x16xf32> -> vector<16x16xf32>
    %46 = vector.shape_cast %45 : vector<16x16xf32> to vector<16x16x1xf32>
    %47 = vector.broadcast %46 : vector<16x16x1xf32> to vector<16x16x16xf32>
    %48 = arith.mulf %35, %47 : vector<16x16x16xf32>
    %49 = arith.truncf %48 : vector<16x16x16xf32> to vector<16x16x16xbf16>
    %50 = vector.shape_cast %44 : vector<16x16xf32> to vector<16x16x1xf32>
    %51 = vector.broadcast %50 : vector<16x16x1xf32> to vector<16x16x16xf32>
    %52 = arith.mulf %39, %51 : vector<16x16x16xf32>
    %53 = arith.truncf %52 : vector<16x16x16xf32> to vector<16x16x16xbf16>
    "tpu.trace_start"() <{level = 10 : i32, message = "wtp,wpc->wtc"}> : () -> ()
    %cst_17 = arith.constant dense<0.000000e+00> : vector<16x16x32xf32>
    %54 = tpu.matmul %49, %7, %cst_17 {dimension_numbers = #tpu.dot_dimension_numbers<[2], [1], [1], [2], [0, 0, 0, 1, 1, 2], [0], [0]>} : vector<16x16x16xbf16>, vector<16x16x32xbf16>, vector<16x16x32xf32> -> vector<16x16x32xf32>
    "tpu.trace_stop"() : () -> ()
    "tpu.trace_start"() <{level = 10 : i32, message = "twp,tpc->twc"}> : () -> ()
    %cst_18 = arith.constant dense<0.000000e+00> : vector<16x16x32xf32>
    %55 = tpu.matmul %53, %5, %cst_18 {dimension_numbers = #tpu.dot_dimension_numbers<[2], [1], [1], [2], [0, 0, 0, 1, 1, 2], [0], [0]>} : vector<16x16x16xbf16>, vector<16x16x32xbf16>, vector<16x16x32xf32> -> vector<16x16x32xf32>
    "tpu.trace_stop"() : () -> ()
    %56 = tpu.transpose %54, [1, 0, 2] : vector<16x16x32xf32> -> vector<16x16x32xf32>
    %57 = arith.addf %55, %56 : vector<16x16x32xf32>
    %58 = vector.shape_cast %57 : vector<16x16x32xf32> to vector<256x32xf32>
    %59 = tpu.transpose %58, [1, 0] : vector<256x32xf32> -> vector<32x256xf32>
    %60 = arith.truncf %59 : vector<32x256xf32> to vector<32x256xbf16>
    %c0_19 = arith.constant 0 : index
    %c0_20 = arith.constant 0 : index
    %61 = vector.load %arg6[%c0_19, %c0_20] : memref<32x32xbf16, #tpu.memory_space<vmem>>, vector<32x32xbf16>
    %cst_21 = arith.constant dense<0.000000e+00> : vector<32x256xf32>
    %62 = tpu.matmul %61, %60, %cst_21 {dimension_numbers = #tpu.dot_dimension_numbers<[1], [0], [0], [1], [0, 0, 1, 1], [], []>} : vector<32x32xbf16>, vector<32x256xbf16>, vector<32x256xf32> -> vector<32x256xf32>
    %c0_22 = arith.constant 0 : index
    %c0_23 = arith.constant 0 : index
    %63 = vector.load %arg7[%c0_22, %c0_23] : memref<32x1xf32, #tpu.memory_space<vmem>>, vector<32x1xf32>
    %64 = vector.broadcast %63 : vector<32x1xf32> to vector<32x256xf32>
    %65 = arith.addf %62, %64 : vector<32x256xf32>
    %66 = arith.addf %65, %2 : vector<32x256xf32>
    %c0_24 = arith.constant 0 : index
    %c0_25 = arith.constant 0 : index
    %c0_26 = arith.constant 0 : index
    %67 = vector.load %arg8[%c0_24, %c0_25, %c0_26] : memref<1x32x256xf32, #tpu.memory_space<vmem>>, vector<1x32x256xf32>
    %68 = vector.shape_cast %67 : vector<1x32x256xf32> to vector<32x256xf32>
    %69 = vector.shape_cast %66 : vector<32x256xf32> to vector<1x32x256xf32>
    tpu.vector_store %arg8[%c0_24, %c0_25, %c0_26], %69 {strides = array<i32>} : memref<1x32x256xf32, #tpu.memory_space<vmem>>, vector<1x32x256xf32>,
    return
  }
  func.func @transform_0(%arg0: i32, %arg1: i32) -> (i32, i32, i32) {
    %c0_i32 = arith.constant 0 : i32
    %c0_i32_0 = arith.constant 0 : i32
    return %arg0, %c0_i32, %arg1 : i32, i32, i32
  }
  func.func @transform_1(%arg0: i32, %arg1: i32) -> (i32, i32, i32, i32) {
    %c0_i32 = arith.constant 0 : i32
    %c0_i32_0 = arith.constant 0 : i32
    %c0_i32_1 = arith.constant 0 : i32
    %c0_i32_2 = arith.constant 0 : i32
    return %arg0, %c0_i32, %c0_i32_0, %c0_i32_1 : i32, i32, i32, i32
  }
  func.func @transform_2(%arg0: i32, %arg1: i32) -> (i32, i32) {
    %c0_i32 = arith.constant 0 : i32
    %c0_i32_0 = arith.constant 0 : i32
    %c0_i32_1 = arith.constant 0 : i32
    return %c0_i32, %c0_i32_0 : i32, i32
  }
  func.func @transform_3(%arg0: i32, %arg1: i32) -> (i32, i32) {
    %c0_i32 = arith.constant 0 : i32
    %c0_i32_0 = arith.constant 0 : i32
    %c0_i32_1 = arith.constant 0 : i32
    return %c0_i32, %c0_i32_0 : i32, i32
  }
  func.func @transform_4(%arg0: i32, %arg1: i32) -> (i32, i32) {
    %c0_i32 = arith.constant 0 : i32
    %c0_i32_0 = arith.constant 0 : i32
    %c0_i32_1 = arith.constant 0 : i32
    return %c0_i32, %c0_i32_0 : i32, i32
  }
  func.func @transform_5(%arg0: i32, %arg1: i32) -> (i32, i32) {
    %c0_i32 = arith.constant 0 : i32
    %c0_i32_0 = arith.constant 0 : i32
    %c0_i32_1 = arith.constant 0 : i32
    return %c0_i32, %c0_i32_0 : i32, i32
  }
  func.func @transform_6(%arg0: i32, %arg1: i32) -> (i32, i32, i32) {
    %c0_i32 = arith.constant 0 : i32
    %c0_i32_0 = arith.constant 0 : i32
    return %arg0, %c0_i32, %arg1 : i32, i32, i32
  }
}

</mosaic_0001>

<llo_original>
// kernel: criss_cross_attention.1
$region0: #{criss_cross_attention.1}
  #allocation0 [shape = 'u32[]', space=smem, size = 0x4, offset = 0x4, fixed_abs, tag = 'smem constant byte address 0x4 - core index']
  #allocation1 [shape = 'u32[144,128]{1,0:T(1,128)}', space=vmem, size = 0x12000, scoped, tag = 'internal scratch']
  %s0 = inlined_call_operand.vmem [shape: f32[2,32,256], index: 0, kind: input, shape index: {}]
  %s1 = inlined_call_operand.vmem [shape: bf16[2,16,16,32], index: 1, kind: input, shape index: {}]
  %s2 = inlined_call_operand.vmem [shape: bf16[32,32], index: 2, kind: input, shape index: {}]
  %s3 = inlined_call_operand.vmem [shape: f32[1,32], index: 3, kind: input, shape index: {}]
  %s4 = inlined_call_operand.vmem [shape: bf16[32,32], index: 4, kind: input, shape index: {}]
  %s5 = inlined_call_operand.vmem [shape: f32[32,1], index: 5, kind: input, shape index: {}]
  %s6 = inlined_call_operand.vmem [shape: f32[2,32,256], index: 6, kind: output, shape index: {}]
  %s7 = sld [smem:[#allocation0]]
  $region57: #{criss_cross_attention.1} parent=0
    _
  %s9 = ssub.s32 1, %s7
  %s10 = scalar_select 0, %s9, %s7
  loop: start=0, step=1, limit=4
  $region2: #{criss_cross_attention.1} parent=0 // loop_pre_header
    _
  $region3: #{criss_cross_attention.1} parent=0 // loop_header
    %s12 = sphi 0, %s16
    %p13 = scmp.ge.s32.totalorder %s12, 4
    %s19 = sphi 0, %s31
    %s20 = sphi 0, %s27
    %s21 = sphi 0, %s19
    %s22 = sphi 0, %s20
    %s23 = sphi 0, %s21
    %s24 = sphi 0, %s22
    %s36 = sphi 0, %s38
    %s39 = sphi 0, %s36
    %s40 = sphi 0, %s39
    %s56 = sphi 0, %s40
    %s62 = sphi 0, %s64
    %s65 = sphi 0, %s62
    %s66 = sphi 0, %s65
    %s82 = sphi 0, %s66
    %s86 = sphi 0, %s86
    %s88 = sphi 0, %s86
    %s89 = sphi 0, %s88
    %s103 = sphi 0, %s89
    %s107 = sphi 0, %s107
    %s109 = sphi 0, %s107
    %s110 = sphi 0, %s109
    %s124 = sphi 0, %s110
    %s128 = sphi 0, %s128
    %s130 = sphi 0, %s128
    %s131 = sphi 0, %s130
    %s145 = sphi 0, %s131
    %s149 = sphi 0, %s149
    %s151 = sphi 0, %s149
    %s152 = sphi 0, %s151
    %s166 = sphi 0, %s152
    %s174 = sphi 0, %s176
    %s177 = sphi 0, %s174
    %s178 = sphi 0, %s177
    %s194 = sphi 0, %s178
  $region4: #{criss_cross_attention.1} parent=0 // loop_header_branch
    %15 = sbr.rel (%p13) target = $region8
  $region5: #{criss_cross_attention.1} parent=0 // loop_body
    %s17 = ssub.s32 %s12, 1
    %s18 = ssub.s32 %s12, 2
    %s25 = sadd.s32 1, %s20
    %p26 = scmp.ge.s32.totalorder %s25, 1
    %s27 = scalar_select %p26, 0, %s25
    %s28 = sadd.s32 1, %s19
    %s29 = scalar_select %p26, %s28, %s19
    %p30 = scmp.ge.s32.totalorder %s29, 2
    %s31 = scalar_select %p30, 0, %s29
    %s32 = ssub.s32 %s19, %s31
    %s33 = ssub.s32 %s20, %s27
    %s34 = sor.u32 %s32, %s33
    %p35 = scmp.eq.s32.totalorder %s34, 0
    %s37 = sadd.s32 %s36, 1
    %s38 = scalar_select %p35, %s36, %s37
    %p41 = pneg %p35
    %p42 = scmp.eq.s32.totalorder %s12, 1
    %p43 = por %p41, %p42
    %p44 = scmp.ne.s32.totalorder %s36, %s39
    %p45 = scmp.eq.s32.totalorder %s12, 0
    %p46 = por %p44, %p45
    %p47 = scmp.ne.s32.totalorder %s36, %s39
    %p48 = scmp.eq.s32.totalorder %s17, 1
    %p49 = por %p47, %p48
    %p50 = scmp.ne.s32.totalorder %s39, %s40
    %p51 = scmp.eq.s32.totalorder %s17, 0
    %p52 = por %p50, %p51
    %p53 = scmp.ne.s32.totalorder %s39, %s40
    %p54 = scmp.eq.s32.totalorder %s18, 1
    %p55 = por %p53, %p54
    %p57 = scmp.ne.s32.totalorder %s40, %s56
    %p58 = scmp.eq.s32.totalorder %s18, 0
    %p59 = por %p57, %p58
    %s60 = ssub.s32 %s19, %s31
    %p61 = scmp.eq.s32.totalorder %s60, 0
    %s63 = sadd.s32 %s62, 1
    %s64 = scalar_select %p61, %s62, %s63
    %p67 = pneg %p61
    %p68 = scmp.eq.s32.totalorder %s12, 1
    %p69 = por %p67, %p68
    %p70 = scmp.ne.s32.totalorder %s62, %s65
    %p71 = scmp.eq.s32.totalorder %s12, 0
    %p72 = por %p70, %p71
    %p73 = scmp.ne.s32.totalorder %s62, %s65
    %p74 = scmp.eq.s32.totalorder %s17, 1
    %p75 = por %p73, %p74
    %p76 = scmp.ne.s32.totalorder %s65, %s66
    %p77 = scmp.eq.s32.totalorder %s17, 0
    %p78 = por %p76, %p77
    %p79 = scmp.ne.s32.totalorder %s65, %s66
    %p80 = scmp.eq.s32.totalorder %s18, 1
    %p81 = por %p79, %p80
    %p83 = scmp.ne.s32.totalorder %s66, %s82
    %p84 = scmp.eq.s32.totalorder %s18, 0
    %p85 = por %p83, %p84
    %s87 = sadd.s32 %s86, 1
    %p90 = scmp.eq.s32.totalorder %s12, 1
    %p91 = scmp.ne.s32.totalorder %s86, %s88
    %p92 = scmp.eq.s32.totalorder %s12, 0
    %p93 = por %p91, %p92
    %p94 = scmp.ne.s32.totalorder %s86, %s88
    %p95 = scmp.eq.s32.totalorder %s17, 1
    %p96 = por %p94, %p95
    %p97 = scmp.ne.s32.totalorder %s88, %s89
    %p98 = scmp.eq.s32.totalorder %s17, 0
    %p99 = por %p97, %p98
    %p100 = scmp.ne.s32.totalorder %s88, %s89
    %p101 = scmp.eq.s32.totalorder %s18, 1
    %p102 = por %p100, %p101
    %p104 = scmp.ne.s32.totalorder %s89, %s103
    %p105 = scmp.eq.s32.totalorder %s18, 0
    %p106 = por %p104, %p105
    %s108 = sadd.s32 %s107, 1
    %p111 = scmp.eq.s32.totalorder %s12, 1
    %p112 = scmp.ne.s32.totalorder %s107, %s109
    %p113 = scmp.eq.s32.totalorder %s12, 0
    %p114 = por %p112, %p113
    %p115 = scmp.ne.s32.totalorder %s107, %s109
    %p116 = scmp.eq.s32.totalorder %s17, 1
    %p117 = por %p115, %p116
    %p118 = scmp.ne.s32.totalorder %s109, %s110
    %p119 = scmp.eq.s32.totalorder %s17, 0
    %p120 = por %p118, %p119
    %p121 = scmp.ne.s32.totalorder %s109, %s110
    %p122 = scmp.eq.s32.totalorder %s18, 1
    %p123 = por %p121, %p122
    %p125 = scmp.ne.s32.totalorder %s110, %s124
    %p126 = scmp.eq.s32.totalorder %s18, 0
    %p127 = por %p125, %p126
    %s129 = sadd.s32 %s128, 1
    %p132 = scmp.eq.s32.totalorder %s12, 1
    %p133 = scmp.ne.s32.totalorder %s128, %s130
    %p134 = scmp.eq.s32.totalorder %s12, 0
    %p135 = por %p133, %p134
    %p136 = scmp.ne.s32.totalorder %s128, %s130
    %p137 = scmp.eq.s32.totalorder %s17, 1
    %p138 = por %p136, %p137
    %p139 = scmp.ne.s32.totalorder %s130, %s131
    %p140 = scmp.eq.s32.totalorder %s17, 0
    %p141 = por %p139, %p140
    %p142 = scmp.ne.s32.totalorder %s130, %s131
    %p143 = scmp.eq.s32.totalorder %s18, 1
    %p144 = por %p142, %p143
    %p146 = scmp.ne.s32.totalorder %s131, %s145
    %p147 = scmp.eq.s32.totalorder %s18, 0
    %p148 = por %p146, %p147
    %s150 = sadd.s32 %s149, 1
    %p153 = scmp.eq.s32.totalorder %s12, 1
    %p154 = scmp.ne.s32.totalorder %s149, %s151
    %p155 = scmp.eq.s32.totalorder %s12, 0
    %p156 = por %p154, %p155
    %p157 = scmp.ne.s32.totalorder %s149, %s151
    %p158 = scmp.eq.s32.totalorder %s17, 1
    %p159 = por %p157, %p158
    %p160 = scmp.ne.s32.totalorder %s151, %s152
    %p161 = scmp.eq.s32.totalorder %s17, 0
    %p162 = por %p160, %p161
    %p163 = scmp.ne.s32.totalorder %s151, %s152
    %p164 = scmp.eq.s32.totalorder %s18, 1
    %p165 = por %p163, %p164
    %p167 = scmp.ne.s32.totalorder %s152, %s166
    %p168 = scmp.eq.s32.totalorder %s18, 0
    %p169 = por %p167, %p168
    %s170 = ssub.s32 %s19, %s31
    %s171 = ssub.s32 %s20, %s27
    %s172 = sor.u32 %s170, %s171
    %p173 = scmp.eq.s32.totalorder %s172, 0
    %s175 = sadd.s32 %s174, 1
    %s176 = scalar_select %p173, %s174, %s175
    %p179 = pneg %p173
    %p180 = scmp.eq.s32.totalorder %s12, 1
    %p181 = por %p179, %p180
    %p182 = scmp.ne.s32.totalorder %s174, %s177
    %p183 = scmp.eq.s32.totalorder %s12, 0
    %p184 = por %p182, %p183
    %p185 = scmp.ne.s32.totalorder %s174, %s177
    %p186 = scmp.eq.s32.totalorder %s17, 1
    %p187 = por %p185, %p186
    %p188 = scmp.ne.s32.totalorder %s177, %s178
    %p189 = scmp.eq.s32.totalorder %s17, 0
    %p190 = por %p188, %p189
    %p191 = scmp.ne.s32.totalorder %s177, %s178
    %p192 = scmp.eq.s32.totalorder %s18, 1
    %p193 = por %p191, %p192
    %p195 = scmp.ne.s32.totalorder %s178, %s194
    %p196 = scmp.eq.s32.totalorder %s18, 0
    %p197 = por %p195, %p196
    %p198 = scmp.le.s32.totalorder 1, %s12
    %p199 = scmp.lt.s32.totalorder %s12, 3
    %p200 = pnand %p198, %p199
    %p201 = pneg %p200
    // Predicated region
    $region9: #{criss_cross_attention.1} parent=5 // pred_check
      _
    $region10: #{criss_cross_attention.1} parent=5 // pred_check_branch
      %203 = sbr.rel (%p200) target = $region12
    $region11: #{criss_cross_attention.1} parent=5 // pred_region
      %s204 = ssub.s32 %s12, 1
      // Predicated region
      $region13: #{criss_cross_attention.1} parent=11 // pred_check
        %p205 = pneg %p99
      $region14: #{criss_cross_attention.1} parent=11 // pred_check_branch
        %207 = sbr.rel (%p205) target = $region16
      $region15: #{criss_cross_attention.1} parent=11 // pred_region
        _
      $region16: #{criss_cross_attention.1} parent=11 // pred_fallthru
        _
      // Predicated region
      $region17: #{criss_cross_attention.1} parent=11 // pred_check
        %p208 = pneg %p120
      $region18: #{criss_cross_attention.1} parent=11 // pred_check_branch
        %210 = sbr.rel (%p208) target = $region20
      $region19: #{criss_cross_attention.1} parent=11 // pred_region
        _
      $region20: #{criss_cross_attention.1} parent=11 // pred_fallthru
        _
      // Predicated region
      $region21: #{criss_cross_attention.1} parent=11 // pred_check
        %p211 = pneg %p141
      $region22: #{criss_cross_attention.1} parent=11 // pred_check_branch
        %213 = sbr.rel (%p211) target = $region24
      $region23: #{criss_cross_attention.1} parent=11 // pred_region
        _
      $region24: #{criss_cross_attention.1} parent=11 // pred_fallthru
        _
      // Predicated region
      $region25: #{criss_cross_attention.1} parent=11 // pred_check
        %p214 = pneg %p162
      $region26: #{criss_cross_attention.1} parent=11 // pred_check_branch
        %216 = sbr.rel (%p214) target = $region28
      $region27: #{criss_cross_attention.1} parent=11 // pred_region
        _
      $region28: #{criss_cross_attention.1} parent=11 // pred_fallthru
        _
    $region12: #{criss_cross_attention.1} parent=5 // pred_fallthru
      _
    %p217 = scmp.lt.s32.totalorder %s12, 2
    // Predicated region
    $region29: #{criss_cross_attention.1} parent=5 // pred_check
      %p218 = pneg %p217
    $region30: #{criss_cross_attention.1} parent=5 // pred_check_branch
      %220 = sbr.rel (%p218) target = $region32
    $region31: #{criss_cross_attention.1} parent=5 // pred_region
      // Predicated region
      $region33: #{criss_cross_attention.1} parent=31 // pred_check
        %p221 = pneg %p46
      $region34: #{criss_cross_attention.1} parent=31 // pred_check_branch
        %223 = sbr.rel (%p221) target = $region36
      $region35: #{criss_cross_attention.1} parent=31 // pred_region
        %s224 = smul.u32 2, %s20
        %p225 = scmp.lt.s32.totalorder %s19, 1
        %s226 = scalar_select %p225, %s19, 1
        %p227 = scmp.lt.s32.totalorder %s224, 1
        %s228 = scalar_select %p227, %s224, 1
        %s229 = smul.addr %s226, 8
        %s230 = sadd.s32 %s228, %s229
        %s231 = smul.addr %s230, 8
        %s232 = scalar_lea.vmem %s0, %s231
        %s233 = smul.u32 2, %s20
      $region36: #{criss_cross_attention.1} parent=31 // pred_fallthru
        _
      // Predicated region
      $region37: #{criss_cross_attention.1} parent=31 // pred_check
        %p234 = pneg %p72
      $region38: #{criss_cross_attention.1} parent=31 // pred_check_branch
        %236 = sbr.rel (%p234) target = $region40
      $region39: #{criss_cross_attention.1} parent=31 // pred_region
        %p237 = scmp.lt.s32.totalorder %s19, 1
        %s238 = scalar_select %p237, %s19, 1
        %s239 = smul.addr %s238, 32
        %s240 = smul.addr %s239, 4
        %s241 = scalar_lea.vmem %s1, %s240
      $region40: #{criss_cross_attention.1} parent=31 // pred_fallthru
        _
    $region32: #{criss_cross_attention.1} parent=5 // pred_fallthru
      _
    %p242 = scmp.le.s32.totalorder 1, %s12
    %p243 = scmp.lt.s32.totalorder %s12, 3
    %p244 = pnand %p242, %p243
    %p245 = pneg %p244
    // Predicated region
    $region41: #{criss_cross_attention.1} parent=5 // pred_check
      _
    $region42: #{criss_cross_attention.1} parent=5 // pred_check_branch
      %247 = sbr.rel (%p244) target = $region44
    $region43: #{criss_cross_attention.1} parent=5 // pred_region
      %s248 = ssub.s32 %s12, 1
      %s249 = smul.u32 2, %s22
      %p250 = scmp.lt.s32.totalorder %s21, 1
      %s251 = scalar_select %p250, %s21, 1
      %p252 = scmp.lt.s32.totalorder %s249, 1
      %s253 = scalar_select %p252, %s249, 1
      %s254 = smul.addr %s251, 8
      %s255 = sadd.s32 %s253, %s254
      %s256 = smul.addr %s255, 8
      %s257 = scalar_lea.vmem %s0, %s256
      %p258 = pneg %p52
      %p259 = pneg %p49
      %p260 = scmp.lt.s32.totalorder %s21, 1
      %s261 = scalar_select %p260, %s21, 1
      %s262 = smul.addr %s261, 32
      %s263 = smul.addr %s262, 4
      %s264 = scalar_lea.vmem %s1, %s263
      %p265 = pneg %p78
      %p266 = pneg %p75
      %p267 = pneg %p99
      %p268 = pneg %p96
      %p269 = pneg %p120
      %p270 = pneg %p117
      %p271 = pneg %p141
      %p272 = pneg %p138
      %p273 = pneg %p162
      %p274 = pneg %p159
      %p275 = pneg %p190
      %p276 = pneg %p187
      %s277 = smul.u32 2, %s22
      %p278 = scmp.lt.s32.totalorder %s21, 1
      %s279 = scalar_select %p278, %s21, 1
      %p280 = scmp.lt.s32.totalorder %s277, 1
      %s281 = scalar_select %p280, %s277, 1
      %s282 = smul.addr %s279, 8
      %s283 = sadd.s32 %s281, %s282
      %s284 = smul.addr %s283, 8
      %s285 = scalar_lea.vmem %s6, %s284
      %s286 = smul.u32 2, %s22
      %p287 = scmp.lt.s32.totalorder %s21, 1
      %s288 = scalar_select %p287, %s21, 1
      %p289 = scmp.lt.s32.totalorder %s286, 1
      %s290 = scalar_select %p289, %s286, 1
      %s291 = smul.addr %s288, 8
      %s292 = sadd.s32 %s290, %s291
      %s293 = smul.addr %s292, 8
      %s294 = scalar_lea.vmem %s0, %s293
      %s295 = smul.u32 2, %s22
      %p296 = scmp.lt.s32.totalorder %s21, 1
      %s297 = scalar_select %p296, %s21, 1
      %s298 = smul.addr %s297, 32
      %s299 = smul.addr %s298, 4
      %s300 = scalar_lea.vmem %s1, %s299
      %s301 = smul.u32 2, %s22
      %p302 = scmp.lt.s32.totalorder %s21, 1
      %s303 = scalar_select %p302, %s21, 1
      %p304 = scmp.lt.s32.totalorder %s301, 1
      %s305 = scalar_select %p304, %s301, 1
      %s306 = smul.addr %s303, 8
      %s307 = sadd.s32 %s305, %s306
      %s308 = smul.addr %s307, 8
      %s309 = scalar_lea.vmem %s6, %s308
      %s310 = smul.u32 2, %s22
      %s312 = smul.u32 %s22, 16
      %v313 = vld [vmem:[%s294] sm:$0xff]
      %v314 = vld [vmem:[%s294 + $0x8] sm:$0xff]
      %v315 = vld [vmem:[%s294 + $0x10] sm:$0xff]
      %v316 = vld [vmem:[%s294 + $0x18] sm:$0xff]
      %v317 = vld [vmem:[%s294 + $0x20] sm:$0xff]
      %v318 = vld [vmem:[%s294 + $0x28] sm:$0xff]
      %v319 = vld [vmem:[%s294 + $0x30] sm:$0xff]
      %v320 = vld [vmem:[%s294 + $0x38] sm:$0xff]
      %321 = vxpose.xlu0.b32.start [1/16] %v313, 128
      %322 = vxpose.xlu0.b32.cont [2/16] %v315, 128
      %323 = vxpose.xlu0.b32.cont [3/16] %v317, 128
      %324 = vxpose.xlu0.b32.cont [4/16] %v319, 128
      %325 = vxpose.xlu0.b32.cont [5/16] 0.0, 128
      %326 = vxpose.xlu0.b32.cont [6/16] 0.0, 128
      %327 = vxpose.xlu0.b32.cont [7/16] 0.0, 128
      %328 = vxpose.xlu0.b32.cont [8/16] 0.0, 128
      %329 = vxpose.xlu0.b32.cont [9/16] 0.0, 128
      %330 = vxpose.xlu0.b32.cont [10/16] 0.0, 128
      %331 = vxpose.xlu0.b32.cont [11/16] 0.0, 128
      %332 = vxpose.xlu0.b32.cont [12/16] 0.0, 128
      %333 = vxpose.xlu0.b32.cont [13/16] 0.0, 128
      %334 = vxpose.xlu0.b32.cont [14/16] 0.0, 128
      %335 = vxpose.xlu0.b32.cont [15/16] 0.0, 128
      %336 = vxpose.xlu0.b32.end [16/16] 0.0, 128
      %v337 = vpop.trf.xlu0
      %v338 = vpop.trf.xlu0
      %v339 = vpop.trf.xlu0
      %v340 = vpop.trf.xlu0
      %v341 = vpop.trf.xlu0
      %v342 = vpop.trf.xlu0
      %v343 = vpop.trf.xlu0
      %v344 = vpop.trf.xlu0
      %v345 = vpop.trf.xlu0
      %v346 = vpop.trf.xlu0
      %v347 = vpop.trf.xlu0
      %v348 = vpop.trf.xlu0
      %v349 = vpop.trf.xlu0
      %v350 = vpop.trf.xlu0
      %v351 = vpop.trf.xlu0
      %v352 = vpop.trf.xlu0
      %353 = vxpose.xlu0.b32.start [1/16] %v314, 128
      %354 = vxpose.xlu0.b32.cont [2/16] %v316, 128
      %355 = vxpose.xlu0.b32.cont [3/16] %v318, 128
      %356 = vxpose.xlu0.b32.cont [4/16] %v320, 128
      %357 = vxpose.xlu0.b32.cont [5/16] 0.0, 128
      %358 = vxpose.xlu0.b32.cont [6/16] 0.0, 128
      %359 = vxpose.xlu0.b32.cont [7/16] 0.0, 128
      %360 = vxpose.xlu0.b32.cont [8/16] 0.0, 128
      %361 = vxpose.xlu0.b32.cont [9/16] 0.0, 128
      %362 = vxpose.xlu0.b32.cont [10/16] 0.0, 128
      %363 = vxpose.xlu0.b32.cont [11/16] 0.0, 128
      %364 = vxpose.xlu0.b32.cont [12/16] 0.0, 128
      %365 = vxpose.xlu0.b32.cont [13/16] 0.0, 128
      %366 = vxpose.xlu0.b32.cont [14/16] 0.0, 128
      %367 = vxpose.xlu0.b32.cont [15/16] 0.0, 128
      %368 = vxpose.xlu0.b32.end [16/16] 0.0, 128
      %v369 = vpop.trf.xlu0
      %v370 = vpop.trf.xlu0
      %v371 = vpop.trf.xlu0
      %v372 = vpop.trf.xlu0
      %v373 = vpop.trf.xlu0
      %v374 = vpop.trf.xlu0
      %v375 = vpop.trf.xlu0
      %v376 = vpop.trf.xlu0
      %v377 = vpop.trf.xlu0
      %v378 = vpop.trf.xlu0
      %v379 = vpop.trf.xlu0
      %v380 = vpop.trf.xlu0
      %v381 = vpop.trf.xlu0
      %v382 = vpop.trf.xlu0
      %v383 = vpop.trf.xlu0
      %v384 = vpop.trf.xlu0
      %v385 = vpack.c.bf16 %v338, %v337
      %v386 = vpack.c.bf16 %v340, %v339
      %v387 = vpack.c.bf16 %v342, %v341
      %v388 = vpack.c.bf16 %v344, %v343
      %v389 = vpack.c.bf16 %v346, %v345
      %v390 = vpack.c.bf16 %v348, %v347
      %v391 = vpack.c.bf16 %v350, %v349
      %v392 = vpack.c.bf16 %v352, %v351
      %v393 = vpack.c.bf16 %v370, %v369
      %v394 = vpack.c.bf16 %v372, %v371
      %v395 = vpack.c.bf16 %v374, %v373
      %v396 = vpack.c.bf16 %v376, %v375
      %v397 = vpack.c.bf16 %v378, %v377
      %v398 = vpack.c.bf16 %v380, %v379
      %v399 = vpack.c.bf16 %v382, %v381
      %v400 = vpack.c.bf16 %v384, %v383
      %v401 = vld [vmem:[%s300] sm:$0xf]
      %v402 = vld [vmem:[%s300 + $0x4] sm:$0xf]
      %v403 = vld [vmem:[%s300 + $0x8] sm:$0xf]
      %v404 = vld [vmem:[%s300 + $0xc] sm:$0xf]
      %v405 = vld [vmem:[%s300 + $0x10] sm:$0xf]
      %v406 = vld [vmem:[%s300 + $0x14] sm:$0xf]
      %v407 = vld [vmem:[%s300 + $0x18] sm:$0xf]
      %v408 = vld [vmem:[%s300 + $0x1c] sm:$0xf]
      %v409 = vld [vmem:[%s300 + $0x20] sm:$0xf]
      %v410 = vld [vmem:[%s300 + $0x24] sm:$0xf]
      %v411 = vld [vmem:[%s300 + $0x28] sm:$0xf]
      %v412 = vld [vmem:[%s300 + $0x2c] sm:$0xf]
      %v413 = vld [vmem:[%s300 + $0x30] sm:$0xf]
      %v414 = vld [vmem:[%s300 + $0x34] sm:$0xf]
      %v415 = vld [vmem:[%s300 + $0x38] sm:$0xf]
      %v416 = vld [vmem:[%s300 + $0x3c] sm:$0xf]
      %v417 = vld [vmem:[%s300 + $0x40] sm:$0xf]
      %v418 = vld [vmem:[%s300 + $0x44] sm:$0xf]
      %v419 = vld [vmem:[%s300 + $0x48] sm:$0xf]
      %v420 = vld [vmem:[%s300 + $0x4c] sm:$0xf]
      %v421 = vld [vmem:[%s300 + $0x50] sm:$0xf]
      %v422 = vld [vmem:[%s300 + $0x54] sm:$0xf]
      %v423 = vld [vmem:[%s300 + $0x58] sm:$0xf]
      %v424 = vld [vmem:[%s300 + $0x5c] sm:$0xf]
      %v425 = vld [vmem:[%s300 + $0x60] sm:$0xf]
      %v426 = vld [vmem:[%s300 + $0x64] sm:$0xf]
      %v427 = vld [vmem:[%s300 + $0x68] sm:$0xf]
      %v428 = vld [vmem:[%s300 + $0x6c] sm:$0xf]
      %v429 = vld [vmem:[%s300 + $0x70] sm:$0xf]
      %v430 = vld [vmem:[%s300 + $0x74] sm:$0xf]
      %v431 = vld [vmem:[%s300 + $0x78] sm:$0xf]
      %v432 = vld [vmem:[%s300 + $0x7c] sm:$0xf]
      %v433 = vld [vmem:[%s2] sm:$0xf]
      %v434 = vld [vmem:[%s2 + $0x4] sm:$0xf]
      %v435 = vld [vmem:[%s2 + $0x8] sm:$0xf]
      %v436 = vld [vmem:[%s2 + $0xc] sm:$0xf]
      %v437 = vld [vmem:[%s3] sm:$0x1]
      %v439 = vlaneseq
      %v440 = vshrl.u32 %v439, 7
      %v441 = vsub.s32 0, %v440
      %v442 = vrot.slane %v437, %v441
      %v448 = vunpack.c.l.b16 %v433
      %v449 = vunpack.c.l.b16 %v434
      %v450 = vunpack.c.l.b16 %v435
      %v451 = vunpack.c.l.b16 %v436
      %v452 = vpack.c.b16 %v449, %v448
      %v453 = vpack.c.b16 %v451, %v450
      %vm456 = vcmask 261120
      %v458 = vsel %vm456, %v385, 0
      %v461 = vsel %vm456, %v386, 0
      %v464 = vsel %vm456, %v387, 0
      %v467 = vsel %vm456, %v388, 0
      %v470 = vsel %vm456, %v389, 0
      %v473 = vsel %vm456, %v390, 0
      %v476 = vsel %vm456, %v391, 0
      %v479 = vsel %vm456, %v392, 0
      %v482 = vsel %vm456, %v393, 0
      %v485 = vsel %vm456, %v394, 0
      %v488 = vsel %vm456, %v395, 0
      %v491 = vsel %vm456, %v396, 0
      %v494 = vsel %vm456, %v397, 0
      %v497 = vsel %vm456, %v398, 0
      %v500 = vsel %vm456, %v399, 0
      %v503 = vsel %vm456, %v400, 0
      %505 = vmatprep.subr.bf16.mxu0 0
      %506 = vmatpush1.bf16.msra.mxu0 %v452
      %507 = vmatprep.subr.bf16.mxu0 0
      %508 = vmatpush1.bf16.msra.mxu0 %v453
      %509 = vmatprep.subr.bf16.mxu0 0
      %510 = vmatpush1.bf16.msra.mxu0 0
      %511 = vmatprep.subr.bf16.mxu0 0
      %512 = vmatpush1.bf16.msra.mxu0 0
      %513 = vmatprep.subr.bf16.mxu0 0
      %514 = vmatpush1.bf16.msra.mxu0 0
      %515 = vmatprep.subr.bf16.mxu0 0
      %516 = vmatpush1.bf16.msra.mxu0 0
      %517 = vmatprep.subr.bf16.mxu0 0
      %518 = vmatpush1.bf16.msra.mxu0 0
      %519 = vmatprep.subr.bf16.mxu0 0
      %520 = vmatpush1.bf16.msra.mxu0 0
      %521 = vmatprep.subr.bf16.mxu0 0
      %522 = vmatpush1.bf16.msra.mxu0 0
      %523 = vmatprep.subr.bf16.mxu0 0
      %524 = vmatpush1.bf16.msra.mxu0 0
      %525 = vmatprep.subr.bf16.mxu0 0
      %526 = vmatpush1.bf16.msra.mxu0 0
      %527 = vmatprep.subr.bf16.mxu0 0
      %528 = vmatpush1.bf16.msra.mxu0 0
      %529 = vmatprep.subr.bf16.mxu0 0
      %530 = vmatpush1.bf16.msra.mxu0 0
      %531 = vmatprep.subr.bf16.mxu0 0
      %532 = vmatpush1.bf16.msra.mxu0 0
      %533 = vmatprep.subr.bf16.mxu0 0
      %534 = vmatpush1.bf16.msra.mxu0 0
      %535 = vmatprep.subr.bf16.mxu0 0
      %536 = vmatpush1.bf16.msra.mxu0 0
      %537 = vmatprep.mubr.bf16.mxu0 0
      %538 = vmatmul.mubr.bf16.gmra.mrb[0].mxu0 %v458
      %v539 = vpop.f32.mrb[0].mxu0
      %v540 = vadd.f32 %v442, %v539
      %v541 = vpop.f32.mrb[0].mxu0
      %v542 = vpop.f32.mrb[0].mxu0
      %v543 = vadd.f32 %v442, %v542
      %v544 = vpop.f32.mrb[0].mxu0
      %545 = vmatprep.mubr.bf16.mxu0 0
      %546 = vmatmul.mubr.bf16.gmra.mrb[0].mxu0 %v461
      %v547 = vpop.f32.mrb[0].mxu0
      %v548 = vadd.f32 %v442, %v547
      %v549 = vpop.f32.mrb[0].mxu0
      %v550 = vpop.f32.mrb[0].mxu0
      %v551 = vadd.f32 %v442, %v550
      %v552 = vpop.f32.mrb[0].mxu0
      %553 = vmatprep.mubr.bf16.mxu0 0
      %554 = vmatmul.mubr.bf16.gmra.mrb[0].mxu0 %v464
      %v555 = vpop.f32.mrb[0].mxu0
      %v556 = vadd.f32 %v442, %v555
      %v557 = vpop.f32.mrb[0].mxu0
      %v558 = vpop.f32.mrb[0].mxu0
      %v559 = vadd.f32 %v442, %v558
      %v560 = vpop.f32.mrb[0].mxu0
      %561 = vmatprep.mubr.bf16.mxu0 0
      %562 = vmatmul.mubr.bf16.gmra.mrb[0].mxu0 %v467
      %v563 = vpop.f32.mrb[0].mxu0
      %v564 = vadd.f32 %v442, %v563
      %v565 = vpop.f32.mrb[0].mxu0
      %v566 = vpop.f32.mrb[0].mxu0
      %v567 = vadd.f32 %v442, %v566
      %v568 = vpop.f32.mrb[0].mxu0
      %569 = vmatprep.mubr.bf16.mxu0 0
      %570 = vmatmul.mubr.bf16.gmra.mrb[0].mxu0 %v470
      %v571 = vpop.f32.mrb[0].mxu0
      %v572 = vadd.f32 %v442, %v571
      %v573 = vpop.f32.mrb[0].mxu0
      %v574 = vpop.f32.mrb[0].mxu0
      %v575 = vadd.f32 %v442, %v574
      %v576 = vpop.f32.mrb[0].mxu0
      %577 = vmatprep.mubr.bf16.mxu0 0
      %578 = vmatmul.mubr.bf16.gmra.mrb[0].mxu0 %v473
      %v579 = vpop.f32.mrb[0].mxu0
      %v580 = vadd.f32 %v442, %v579
      %v581 = vpop.f32.mrb[0].mxu0
      %v582 = vpop.f32.mrb[0].mxu0
      %v583 = vadd.f32 %v442, %v582
      %v584 = vpop.f32.mrb[0].mxu0
      %585 = vmatprep.mubr.bf16.mxu0 0
      %586 = vmatmul.mubr.bf16.gmra.mrb[0].mxu0 %v476
      %v587 = vpop.f32.mrb[0].mxu0
      %v588 = vadd.f32 %v442, %v587
      %v589 = vpop.f32.mrb[0].mxu0
      %v590 = vpop.f32.mrb[0].mxu0
      %v591 = vadd.f32 %v442, %v590
      %v592 = vpop.f32.mrb[0].mxu0
      %593 = vmatprep.mubr.bf16.mxu0 0
      %594 = vmatmul.mubr.bf16.gmra.mrb[0].mxu0 %v479
      %v595 = vpop.f32.mrb[0].mxu0
      %v596 = vadd.f32 %v442, %v595
      %v597 = vpop.f32.mrb[0].mxu0
      %v598 = vpop.f32.mrb[0].mxu0
      %v599 = vadd.f32 %v442, %v598
      %v600 = vpop.f32.mrb[0].mxu0
      %601 = vmatprep.mubr.bf16.mxu0 0
      %602 = vmatmul.mubr.bf16.gmra.mrb[0].mxu0 %v482
      %v603 = vpop.f32.mrb[0].mxu0
      %v604 = vadd.f32 %v442, %v603
      %v605 = vpop.f32.mrb[0].mxu0
      %v606 = vpop.f32.mrb[0].mxu0
      %v607 = vadd.f32 %v442, %v606
      %v608 = vpop.f32.mrb[0].mxu0
      %609 = vmatprep.mubr.bf16.mxu0 0
      %610 = vmatmul.mubr.bf16.gmra.mrb[0].mxu0 %v485
      %v611 = vpop.f32.mrb[0].mxu0
      %v612 = vadd.f32 %v442, %v611
      %v613 = vpop.f32.mrb[0].mxu0
      %v614 = vpop.f32.mrb[0].mxu0
      %v615 = vadd.f32 %v442, %v614
      %v616 = vpop.f32.mrb[0].mxu0
      %617 = vmatprep.mubr.bf16.mxu0 0
      %618 = vmatmul.mubr.bf16.gmra.mrb[0].mxu0 %v488
      %v619 = vpop.f32.mrb[0].mxu0
      %v620 = vadd.f32 %v442, %v619
      %v621 = vpop.f32.mrb[0].mxu0
      %v622 = vpop.f32.mrb[0].mxu0
      %v623 = vadd.f32 %v442, %v622
      %v624 = vpop.f32.mrb[0].mxu0
      %625 = vmatprep.mubr.bf16.mxu0 0
      %626 = vmatmul.mubr.bf16.gmra.mrb[0].mxu0 %v491
      %v627 = vpop.f32.mrb[0].mxu0
      %v628 = vadd.f32 %v442, %v627
      %v629 = vpop.f32.mrb[0].mxu0
      %v630 = vpop.f32.mrb[0].mxu0
      %v631 = vadd.f32 %v442, %v630
      %v632 = vpop.f32.mrb[0].mxu0
      %633 = vmatprep.mubr.bf16.mxu0 0
      %634 = vmatmul.mubr.bf16.gmra.mrb[0].mxu0 %v494
      %v635 = vpop.f32.mrb[0].mxu0
      %v636 = vadd.f32 %v442, %v635
      %v637 = vpop.f32.mrb[0].mxu0
      %v638 = vpop.f32.mrb[0].mxu0
      %v639 = vadd.f32 %v442, %v638
      %v640 = vpop.f32.mrb[0].mxu0
      %641 = vmatprep.mubr.bf16.mxu0 0
      %642 = vmatmul.mubr.bf16.gmra.mrb[0].mxu0 %v497
      %v643 = vpop.f32.mrb[0].mxu0
      %v644 = vadd.f32 %v442, %v643
      %v645 = vpop.f32.mrb[0].mxu0
      %v646 = vpop.f32.mrb[0].mxu0
      %v647 = vadd.f32 %v442, %v646
      %v648 = vpop.f32.mrb[0].mxu0
      %649 = vmatprep.mubr.bf16.mxu0 0
      %650 = vmatmul.mubr.bf16.gmra.mrb[0].mxu0 %v500
      %v651 = vpop.f32.mrb[0].mxu0
      %v652 = vadd.f32 %v442, %v651
      %v653 = vpop.f32.mrb[0].mxu0
      %v654 = vpop.f32.mrb[0].mxu0
      %v655 = vadd.f32 %v442, %v654
      %v656 = vpop.f32.mrb[0].mxu0
      %657 = vmatprep.mubr.bf16.mxu0 0
      %658 = vmatmul.mubr.bf16.gmra.mrb[0].mxu0 %v503
      %v659 = vpop.f32.mrb[0].mxu0
      %v660 = vadd.f32 %v442, %v659
      %v661 = vpop.f32.mrb[0].mxu0
      %v662 = vpop.f32.mrb[0].mxu0
      %v663 = vadd.f32 %v442, %v662
      %v664 = vpop.f32.mrb[0].mxu0
      %665 = vdwg.mxu0
      %v666 = vpack.c.bf16 %v543, %v540
      %v667 = vpack.c.bf16 %v551, %v548
      %v668 = vpack.c.bf16 %v559, %v556
      %v669 = vpack.c.bf16 %v567, %v564
      %v670 = vpack.c.bf16 %v575, %v572
      %v671 = vpack.c.bf16 %v583, %v580
      %v672 = vpack.c.bf16 %v591, %v588
      %v673 = vpack.c.bf16 %v599, %v596
      %v674 = vpack.c.bf16 %v607, %v604
      %v675 = vpack.c.bf16 %v615, %v612
      %v676 = vpack.c.bf16 %v623, %v620
      %v677 = vpack.c.bf16 %v631, %v628
      %v678 = vpack.c.bf16 %v639, %v636
      %v679 = vpack.c.bf16 %v647, %v644
      %v680 = vpack.c.bf16 %v655, %v652
      %v681 = vpack.c.bf16 %v663, %v660
      %v682 = vcombine.low %v666, %v670
      %v683 = vcombine.high %v666, %v670
      %v685 = vunpack.c.l.s4 1983009808
      %v686 = vunpack.c.0.s8 %v685
      %v687 = vlaneseq
      %v688 = vshrl.u32 %v687, 7
      %v689 = vsub.s32 %v686, %v688
      %v690 = vrot.slane %v682, %v689
      %v692 = vunpack.c.l.s4 1983009808
      %v693 = vunpack.c.0.s8 %v692
      %v694 = vlaneseq
      %v695 = vshrl.u32 %v694, 7
      %v696 = vsub.s32 %v693, %v695
      %v697 = vrot.slane %v683, %v696
      %v698 = vcombine.low %v668, %v672
      %v699 = vcombine.high %v668, %v672
      %v701 = vunpack.c.l.s4 1983009808
      %v702 = vunpack.c.0.s8 %v701
      %v703 = vlaneseq
      %v704 = vshrl.u32 %v703, 7
      %v705 = vsub.s32 %v702, %v704
      %v706 = vrot.slane %v698, %v705
      %v708 = vunpack.c.l.s4 1983009808
      %v709 = vunpack.c.0.s8 %v708
      %v710 = vlaneseq
      %v711 = vshrl.u32 %v710, 7
      %v712 = vsub.s32 %v709, %v711
      %v713 = vrot.slane %v699, %v712
      %v714 = vcombine.low %v674, %v678
      %v715 = vcombine.high %v674, %v678
      %v717 = vunpack.c.l.s4 1983009808
      %v718 = vunpack.c.0.s8 %v717
      %v719 = vlaneseq
      %v720 = vshrl.u32 %v719, 7
      %v721 = vsub.s32 %v718, %v720
      %v722 = vrot.slane %v714, %v721
      %v724 = vunpack.c.l.s4 1983009808
      %v725 = vunpack.c.0.s8 %v724
      %v726 = vlaneseq
      %v727 = vshrl.u32 %v726, 7
      %v728 = vsub.s32 %v725, %v727
      %v729 = vrot.slane %v715, %v728
      %v730 = vcombine.low %v676, %v680
      %v731 = vcombine.high %v676, %v680
      %v733 = vunpack.c.l.s4 1983009808
      %v734 = vunpack.c.0.s8 %v733
      %v735 = vlaneseq
      %v736 = vshrl.u32 %v735, 7
      %v737 = vsub.s32 %v734, %v736
      %v738 = vrot.slane %v730, %v737
      %v740 = vunpack.c.l.s4 1983009808
      %v741 = vunpack.c.0.s8 %v740
      %v742 = vlaneseq
      %v743 = vshrl.u32 %v742, 7
      %v744 = vsub.s32 %v741, %v743
      %v745 = vrot.slane %v731, %v744
      %v746 = vcombine.low %v690, %v706
      %v747 = vcombine.high %v690, %v706
      %v749 = vunpack.c.l.s4 1934713408
      %v750 = vunpack.c.0.s8 %v749
      %v751 = vlaneseq
      %v752 = vshrl.u32 %v751, 7
      %v753 = vsub.s32 %v750, %v752
      %v754 = vrot.slane %v746, %v753
      %v756 = vunpack.c.l.s4 1934713408
      %v757 = vunpack.c.0.s8 %v756
      %v758 = vlaneseq
      %v759 = vshrl.u32 %v758, 7
      %v760 = vsub.s32 %v757, %v759
      %v761 = vrot.slane %v747, %v760
      %v762 = vcombine.low %v697, %v713
      %v763 = vcombine.high %v697, %v713
      %v765 = vunpack.c.l.s4 1934713408
      %v766 = vunpack.c.0.s8 %v765
      %v767 = vlaneseq
      %v768 = vshrl.u32 %v767, 7
      %v769 = vsub.s32 %v766, %v768
      %v770 = vrot.slane %v762, %v769
      %v772 = vunpack.c.l.s4 1934713408
      %v773 = vunpack.c.0.s8 %v772
      %v774 = vlaneseq
      %v775 = vshrl.u32 %v774, 7
      %v776 = vsub.s32 %v773, %v775
      %v777 = vrot.slane %v763, %v776
      %v778 = vcombine.low %v722, %v738
      %v779 = vcombine.high %v722, %v738
      %v781 = vunpack.c.l.s4 1934713408
      %v782 = vunpack.c.0.s8 %v781
      %v783 = vlaneseq
      %v784 = vshrl.u32 %v783, 7
      %v785 = vsub.s32 %v782, %v784
      %v786 = vrot.slane %v778, %v785
      %v788 = vunpack.c.l.s4 1934713408
      %v789 = vunpack.c.0.s8 %v788
      %v790 = vlaneseq
      %v791 = vshrl.u32 %v790, 7
      %v792 = vsub.s32 %v789, %v791
      %v793 = vrot.slane %v779, %v792
      %v794 = vcombine.low %v729, %v745
      %v795 = vcombine.high %v729, %v745
      %v797 = vunpack.c.l.s4 1934713408
      %v798 = vunpack.c.0.s8 %v797
      %v799 = vlaneseq
      %v800 = vshrl.u32 %v799, 7
      %v801 = vsub.s32 %v798, %v800
      %v802 = vrot.slane %v794, %v801
      %v804 = vunpack.c.l.s4 1934713408
      %v805 = vunpack.c.0.s8 %v804
      %v806 = vlaneseq
      %v807 = vshrl.u32 %v806, 7
      %v808 = vsub.s32 %v805, %v807
      %v809 = vrot.slane %v795, %v808
      %v810 = vcombine.low %v754, %v786
      %v811 = vcombine.high %v754, %v786
      %v812 = vcombine.low %v761, %v793
      %v813 = vcombine.high %v761, %v793
      %v814 = vcombine.low %v770, %v802
      %v815 = vcombine.high %v770, %v802
      %v816 = vcombine.low %v777, %v809
      %v817 = vcombine.high %v777, %v809
      %v818 = vcombine.low %v667, %v671
      %v819 = vcombine.high %v667, %v671
      %v821 = vunpack.c.l.s4 1983009808
      %v822 = vunpack.c.0.s8 %v821
      %v823 = vlaneseq
      %v824 = vshrl.u32 %v823, 7
      %v825 = vsub.s32 %v822, %v824
      %v826 = vrot.slane %v818, %v825
      %v828 = vunpack.c.l.s4 1983009808
      %v829 = vunpack.c.0.s8 %v828
      %v830 = vlaneseq
      %v831 = vshrl.u32 %v830, 7
      %v832 = vsub.s32 %v829, %v831
      %v833 = vrot.slane %v819, %v832
      %v834 = vcombine.low %v669, %v673
      %v835 = vcombine.high %v669, %v673
      %v837 = vunpack.c.l.s4 1983009808
      %v838 = vunpack.c.0.s8 %v837
      %v839 = vlaneseq
      %v840 = vshrl.u32 %v839, 7
      %v841 = vsub.s32 %v838, %v840
      %v842 = vrot.slane %v834, %v841
      %v844 = vunpack.c.l.s4 1983009808
      %v845 = vunpack.c.0.s8 %v844
      %v846 = vlaneseq
      %v847 = vshrl.u32 %v846, 7
      %v848 = vsub.s32 %v845, %v847
      %v849 = vrot.slane %v835, %v848
      %v850 = vcombine.low %v675, %v679
      %v851 = vcombine.high %v675, %v679
      %v853 = vunpack.c.l.s4 1983009808
      %v854 = vunpack.c.0.s8 %v853
      %v855 = vlaneseq
      %v856 = vshrl.u32 %v855, 7
      %v857 = vsub.s32 %v854, %v856
      %v858 = vrot.slane %v850, %v857
      %v860 = vunpack.c.l.s4 1983009808
      %v861 = vunpack.c.0.s8 %v860
      %v862 = vlaneseq
      %v863 = vshrl.u32 %v862, 7
      %v864 = vsub.s32 %v861, %v863
      %v865 = vrot.slane %v851, %v864
      %v866 = vcombine.low %v677, %v681
      %v867 = vcombine.high %v677, %v681
      %v869 = vunpack.c.l.s4 1983009808
      %v870 = vunpack.c.0.s8 %v869
      %v871 = vlaneseq
      %v872 = vshrl.u32 %v871, 7
      %v873 = vsub.s32 %v870, %v872
      %v874 = vrot.slane %v866, %v873
      %v876 = vunpack.c.l.s4 1983009808
      %v877 = vunpack.c.0.s8 %v876
      %v878 = vlaneseq
      %v879 = vshrl.u32 %v878, 7
      %v880 = vsub.s32 %v877, %v879
      %v881 = vrot.slane %v867, %v880
      %v882 = vcombine.low %v826, %v842
      %v883 = vcombine.high %v826, %v842
      %v885 = vunpack.c.l.s4 1934713408
      %v886 = vunpack.c.0.s8 %v885
      %v887 = vlaneseq
      %v888 = vshrl.u32 %v887, 7
      %v889 = vsub.s32 %v886, %v888
      %v890 = vrot.slane %v882, %v889
      %v892 = vunpack.c.l.s4 1934713408
      %v893 = vunpack.c.0.s8 %v892
      %v894 = vlaneseq
      %v895 = vshrl.u32 %v894, 7
      %v896 = vsub.s32 %v893, %v895
      %v897 = vrot.slane %v883, %v896
      %v898 = vcombine.low %v833, %v849
      %v899 = vcombine.high %v833, %v849
      %v901 = vunpack.c.l.s4 1934713408
      %v902 = vunpack.c.0.s8 %v901
      %v903 = vlaneseq
      %v904 = vshrl.u32 %v903, 7
      %v905 = vsub.s32 %v902, %v904
      %v906 = vrot.slane %v898, %v905
      %v908 = vunpack.c.l.s4 1934713408
      %v909 = vunpack.c.0.s8 %v908
      %v910 = vlaneseq
      %v911 = vshrl.u32 %v910, 7
      %v912 = vsub.s32 %v909, %v911
      %v913 = vrot.slane %v899, %v912
      %v914 = vcombine.low %v858, %v874
      %v915 = vcombine.high %v858, %v874
      %v917 = vunpack.c.l.s4 1934713408
      %v918 = vunpack.c.0.s8 %v917
      %v919 = vlaneseq
      %v920 = vshrl.u32 %v919, 7
      %v921 = vsub.s32 %v918, %v920
      %v922 = vrot.slane %v914, %v921
      %v924 = vunpack.c.l.s4 1934713408
      %v925 = vunpack.c.0.s8 %v924
      %v926 = vlaneseq
      %v927 = vshrl.u32 %v926, 7
      %v928 = vsub.s32 %v925, %v927
      %v929 = vrot.slane %v915, %v928
      %v930 = vcombine.low %v865, %v881
      %v931 = vcombine.high %v865, %v881
      %v933 = vunpack.c.l.s4 1934713408
      %v934 = vunpack.c.0.s8 %v933
      %v935 = vlaneseq
      %v936 = vshrl.u32 %v935, 7
      %v937 = vsub.s32 %v934, %v936
      %v938 = vrot.slane %v930, %v937
      %v940 = vunpack.c.l.s4 1934713408
      %v941 = vunpack.c.0.s8 %v940
      %v942 = vlaneseq
      %v943 = vshrl.u32 %v942, 7
      %v944 = vsub.s32 %v941, %v943
      %v945 = vrot.slane %v931, %v944
      %v946 = vcombine.low %v890, %v922
      %v947 = vcombine.high %v890, %v922
      %v948 = vcombine.low %v897, %v929
      %v949 = vcombine.high %v897, %v929
      %v950 = vcombine.low %v906, %v938
      %v951 = vcombine.high %v906, %v938
      %v952 = vcombine.low %v913, %v945
      %v953 = vcombine.high %v913, %v945
      %v956 = vpack.i.b16 %v946, %v810
      %v957 = vshrl.u32 %v810, 16
      %v958 = vshrl.u32 %v946, 16
      %v959 = vpack.i.b16 %v958, %v957
      %v962 = vpack.i.b16 %v947, %v811
      %v963 = vshrl.u32 %v811, 16
      %v964 = vshrl.u32 %v947, 16
      %v965 = vpack.i.b16 %v964, %v963
      %v968 = vpack.i.b16 %v948, %v812
      %v969 = vshrl.u32 %v812, 16
      %v970 = vshrl.u32 %v948, 16
      %v971 = vpack.i.b16 %v970, %v969
      %v974 = vpack.i.b16 %v949, %v813
      %v975 = vshrl.u32 %v813, 16
      %v976 = vshrl.u32 %v949, 16
      %v977 = vpack.i.b16 %v976, %v975
      %v980 = vpack.i.b16 %v950, %v814
      %v981 = vshrl.u32 %v814, 16
      %v982 = vshrl.u32 %v950, 16
      %v983 = vpack.i.b16 %v982, %v981
      %v986 = vpack.i.b16 %v951, %v815
      %v987 = vshrl.u32 %v815, 16
      %v988 = vshrl.u32 %v951, 16
      %v989 = vpack.i.b16 %v988, %v987
      %v992 = vpack.i.b16 %v952, %v816
      %v993 = vshrl.u32 %v816, 16
      %v994 = vshrl.u32 %v952, 16
      %v995 = vpack.i.b16 %v994, %v993
      %v998 = vpack.i.b16 %v953, %v817
      %v999 = vshrl.u32 %v817, 16
      %v1000 = vshrl.u32 %v953, 16
      %v1001 = vpack.i.b16 %v1000, %v999
      %v1004 = vunpack.c.l.b16 %v401
      %v1005 = vunpack.c.l.b16 %v402
      %v1006 = vpack.c.b16 %v1005, %v1004
      %v1008 = vsel %vm456, %v956, 0
      %v1011 = vsel %vm456, %v1006, 0
      %1013 = vmatprep.subr.bf16.mxu0 0
      %1014 = vmatpush1.bf16.xpose.msra.mxu0 %v1011
      %1015 = vmatprep.subr.bf16.mxu0 0
      %1016 = vmatpush1.bf16.xpose.msra.mxu0 0
      %1017 = vmatprep.subr.bf16.mxu0 0
      %1018 = vmatpush1.bf16.xpose.msra.mxu0 0
      %1019 = vmatprep.subr.bf16.mxu0 0
      %1020 = vmatpush1.bf16.xpose.msra.mxu0 0
      %1021 = vmatprep.subr.bf16.mxu0 0
      %1022 = vmatpush1.bf16.xpose.msra.mxu0 0
      %1023 = vmatprep.subr.bf16.mxu0 0
      %1024 = vmatpush1.bf16.xpose.msra.mxu0 0
      %1025 = vmatprep.subr.bf16.mxu0 0
      %1026 = vmatpush1.bf16.xpose.msra.mxu0 0
      %1027 = vmatprep.subr.bf16.mxu0 0
      %1028 = vmatpush1.bf16.xpose.msra.mxu0 0
      %1029 = vmatprep.subr.bf16.mxu0 0
      %1030 = vmatpush1.bf16.xpose.msra.mxu0 0
      %1031 = vmatprep.subr.bf16.mxu0 0
      %1032 = vmatpush1.bf16.xpose.msra.mxu0 0
      %1033 = vmatprep.subr.bf16.mxu0 0
      %1034 = vmatpush1.bf16.xpose.msra.mxu0 0
      %1035 = vmatprep.subr.bf16.mxu0 0
      %1036 = vmatpush1.bf16.xpose.msra.mxu0 0
      %1037 = vmatprep.subr.bf16.mxu0 0
      %1038 = vmatpush1.bf16.xpose.msra.mxu0 0
      %1039 = vmatprep.subr.bf16.mxu0 0
      %1040 = vmatpush1.bf16.xpose.msra.mxu0 0
      %1041 = vmatprep.subr.bf16.mxu0 0
      %1042 = vmatpush1.bf16.xpose.msra.mxu0 0
      %1043 = vmatprep.subr.bf16.mxu0 0
      %1044 = vmatpush1.bf16.xpose.msra.mxu0 0
      %1045 = vmatprep.mubr.bf16.mxu0 0
      %1046 = vmatmul.mubr.bf16.gmra.mrb[0].mxu0 %v1008
      %v1047 = vpop.f32.mrb[0].mxu0
      %v1048 = vadd.f32 0.0, %v1047
      %v1049 = vpop.f32.mrb[0].mxu0
      %v1050 = vpop.f32.mrb[0].mxu0
      %v1051 = vadd.f32 0.0, %v1050
      %v1052 = vpop.f32.mrb[0].mxu0
      %1053 = vdwg.mxu0
      %v1056 = vunpack.c.l.b16 %v403
      %v1057 = vunpack.c.l.b16 %v404
      %v1058 = vpack.c.b16 %v1057, %v1056
      %v1060 = vsel %vm456, %v959, 0
      %v1063 = vsel %vm456, %v1058, 0
      %1065 = vmatprep.subr.bf16.mxu0 0
      %1066 = vmatpush1.bf16.xpose.msra.mxu0 %v1063
      %1067 = vmatprep.subr.bf16.mxu0 0
      %1068 = vmatpush1.bf16.xpose.msra.mxu0 0
      %1069 = vmatprep.subr.bf16.mxu0 0
      %1070 = vmatpush1.bf16.xpose.msra.mxu0 0
      %1071 = vmatprep.subr.bf16.mxu0 0
      %1072 = vmatpush1.bf16.xpose.msra.mxu0 0
      %1073 = vmatprep.subr.bf16.mxu0 0
      %1074 = vmatpush1.bf16.xpose.msra.mxu0 0
      %1075 = vmatprep.subr.bf16.mxu0 0
      %1076 = vmatpush1.bf16.xpose.msra.mxu0 0
      %1077 = vmatprep.subr.bf16.mxu0 0
      %1078 = vmatpush1.bf16.xpose.msra.mxu0 0
      %1079 = vmatprep.subr.bf16.mxu0 0
      %1080 = vmatpush1.bf16.xpose.msra.mxu0 0
      %1081 = vmatprep.subr.bf16.mxu0 0
      %1082 = vmatpush1.bf16.xpose.msra.mxu0 0
      %1083 = vmatprep.subr.bf16.mxu0 0
      %1084 = vmatpush1.bf16.xpose.msra.mxu0 0
      %1085 = vmatprep.subr.bf16.mxu0 0
      %1086 = vmatpush1.bf16.xpose.msra.mxu0 0
      %1087 = vmatprep.subr.bf16.mxu0 0
      %1088 = vmatpush1.bf16.xpose.msra.mxu0 0
      %1089 = vmatprep.subr.bf16.mxu0 0
      %1090 = vmatpush1.bf16.xpose.msra.mxu0 0
      %1091 = vmatprep.subr.bf16.mxu0 0
      %1092 = vmatpush1.bf16.xpose.msra.mxu0 0
      %1093 = vmatprep.subr.bf16.mxu0 0
      %1094 = vmatpush1.bf16.xpose.msra.mxu0 0
      %1095 = vmatprep.subr.bf16.mxu0 0
      %1096 = vmatpush1.bf16.xpose.msra.mxu0 0
      %1097 = vmatprep.mubr.bf16.mxu0 0
      %1098 = vmatmul.mubr.bf16.gmra.mrb[0].mxu0 %v1060
      %v1099 = vpop.f32.mrb[0].mxu0
      %v1100 = vadd.f32 0.0, %v1099
      %v1101 = vpop.f32.mrb[0].mxu0
      %v1102 = vpop.f32.mrb[0].mxu0
      %v1103 = vadd.f32 0.0, %v1102
      %v1104 = vpop.f32.mrb[0].mxu0
      %1105 = vdwg.mxu0
      %v1108 = vunpack.c.l.b16 %v405
      %v1109 = vunpack.c.l.b16 %v406
      %v1110 = vpack.c.b16 %v1109, %v1108
      %v1112 = vsel %vm456, %v962, 0
      %v1115 = vsel %vm456, %v1110, 0
      %1117 = vmatprep.subr.bf16.mxu0 0
      %1118 = vmatpush1.bf16.xpose.msra.mxu0 %v1115
      %1119 = vmatprep.subr.bf16.mxu0 0
      %1120 = vmatpush1.bf16.xpose.msra.mxu0 0
      %1121 = vmatprep.subr.bf16.mxu0 0
      %1122 = vmatpush1.bf16.xpose.msra.mxu0 0
      %1123 = vmatprep.subr.bf16.mxu0 0
      %1124 = vmatpush1.bf16.xpose.msra.mxu0 0
      %1125 = vmatprep.subr.bf16.mxu0 0
      %1126 = vmatpush1.bf16.xpose.msra.mxu0 0
      %1127 = vmatprep.subr.bf16.mxu0 0
      %1128 = vmatpush1.bf16.xpose.msra.mxu0 0
      %1129 = vmatprep.subr.bf16.mxu0 0
      %1130 = vmatpush1.bf16.xpose.msra.mxu0 0
      %1131 = vmatprep.subr.bf16.mxu0 0
      %1132 = vmatpush1.bf16.xpose.msra.mxu0 0
      %1133 = vmatprep.subr.bf16.mxu0 0
      %1134 = vmatpush1.bf16.xpose.msra.mxu0 0
      %1135 = vmatprep.subr.bf16.mxu0 0
      %1136 = vmatpush1.bf16.xpose.msra.mxu0 0
      %1137 = vmatprep.subr.bf16.mxu0 0
      %1138 = vmatpush1.bf16.xpose.msra.mxu0 0
      %1139 = vmatprep.subr.bf16.mxu0 0
      %1140 = vmatpush1.bf16.xpose.msra.mxu0 0
      %1141 = vmatprep.subr.bf16.mxu0 0
      %1142 = vmatpush1.bf16.xpose.msra.mxu0 0
      %1143 = vmatprep.subr.bf16.mxu0 0
      %1144 = vmatpush1.bf16.xpose.msra.mxu0 0
      %1145 = vmatprep.subr.bf16.mxu0 0
      %1146 = vmatpush1.bf16.xpose.msra.mxu0 0
      %1147 = vmatprep.subr.bf16.mxu0 0
      %1148 = vmatpush1.bf16.xpose.msra.mxu0 0
      %1149 = vmatprep.mubr.bf16.mxu0 0
      %1150 = vmatmul.mubr.bf16.gmra.mrb[0].mxu0 %v1112
      %v1151 = vpop.f32.mrb[0].mxu0
      %v1152 = vadd.f32 0.0, %v1151
      %v1153 = vpop.f32.mrb[0].mxu0
      %v1154 = vpop.f32.mrb[0].mxu0
      %v1155 = vadd.f32 0.0, %v1154
      %v1156 = vpop.f32.mrb[0].mxu0
      %1157 = vdwg.mxu0
      %v1160 = vunpack.c.l.b16 %v407
      %v1161 = vunpack.c.l.b16 %v408
      %v1162 = vpack.c.b16 %v1161, %v1160
      %v1164 = vsel %vm456, %v965, 0
      %v1167 = vsel %vm456, %v1162, 0
      %1169 = vmatprep.subr.bf16.mxu0 0
      %1170 = vmatpush1.bf16.xpose.msra.mxu0 %v1167
      %1171 = vmatprep.subr.bf16.mxu0 0
      %1172 = vmatpush1.bf16.xpose.msra.mxu0 0
      %1173 = vmatprep.subr.bf16.mxu0 0
      %1174 = vmatpush1.bf16.xpose.msra.mxu0 0
      %1175 = vmatprep.subr.bf16.mxu0 0
      %1176 = vmatpush1.bf16.xpose.msra.mxu0 0
      %1177 = vmatprep.subr.bf16.mxu0 0
      %1178 = vmatpush1.bf16.xpose.msra.mxu0 0
      %1179 = vmatprep.subr.bf16.mxu0 0
      %1180 = vmatpush1.bf16.xpose.msra.mxu0 0
      %1181 = vmatprep.subr.bf16.mxu0 0
      %1182 = vmatpush1.bf16.xpose.msra.mxu0 0
      %1183 = vmatprep.subr.bf16.mxu0 0
      %1184 = vmatpush1.bf16.xpose.msra.mxu0 0
      %1185 = vmatprep.subr.bf16.mxu0 0
      %1186 = vmatpush1.bf16.xpose.msra.mxu0 0
      %1187 = vmatprep.subr.bf16.mxu0 0
      %1188 = vmatpush1.bf16.xpose.msra.mxu0 0
      %1189 = vmatprep.subr.bf16.mxu0 0
      %1190 = vmatpush1.bf16.xpose.msra.mxu0 0
      %1191 = vmatprep.subr.bf16.mxu0 0
      %1192 = vmatpush1.bf16.xpose.msra.mxu0 0
      %1193 = vmatprep.subr.bf16.mxu0 0
      %1194 = vmatpush1.bf16.xpose.msra.mxu0 0
      %1195 = vmatprep.subr.bf16.mxu0 0
      %1196 = vmatpush1.bf16.xpose.msra.mxu0 0
      %1197 = vmatprep.subr.bf16.mxu0 0
      %1198 = vmatpush1.bf16.xpose.msra.mxu0 0
      %1199 = vmatprep.subr.bf16.mxu0 0
      %1200 = vmatpush1.bf16.xpose.msra.mxu0 0
      %1201 = vmatprep.mubr.bf16.mxu0 0
      %1202 = vmatmul.mubr.bf16.gmra.mrb[0].mxu0 %v1164
      %v1203 = vpop.f32.mrb[0].mxu0
      %v1204 = vadd.f32 0.0, %v1203
      %v1205 = vpop.f32.mrb[0].mxu0
      %v1206 = vpop.f32.mrb[0].mxu0
      %v1207 = vadd.f32 0.0, %v1206
      %v1208 = vpop.f32.mrb[0].mxu0
      %1209 = vdwg.mxu0
      %v1212 = vunpack.c.l.b16 %v409
      %v1213 = vunpack.c.l.b16 %v410
      %v1214 = vpack.c.b16 %v1213, %v1212
      %v1216 = vsel %vm456, %v968, 0
      %v1219 = vsel %vm456, %v1214, 0
      %1221 = vmatprep.subr.bf16.mxu0 0
      %1222 = vmatpush1.bf16.xpose.msra.mxu0 %v1219
      %1223 = vmatprep.subr.bf16.mxu0 0
      %1224 = vmatpush1.bf16.xpose.msra.mxu0 0
      %1225 = vmatprep.subr.bf16.mxu0 0
      %1226 = vmatpush1.bf16.xpose.msra.mxu0 0
      %1227 = vmatprep.subr.bf16.mxu0 0
      %1228 = vmatpush1.bf16.xpose.msra.mxu0 0
      %1229 = vmatprep.subr.bf16.mxu0 0
      %1230 = vmatpush1.bf16.xpose.msra.mxu0 0
      %1231 = vmatprep.subr.bf16.mxu0 0
      %1232 = vmatpush1.bf16.xpose.msra.mxu0 0
      %1233 = vmatprep.subr.bf16.mxu0 0
      %1234 = vmatpush1.bf16.xpose.msra.mxu0 0
      %1235 = vmatprep.subr.bf16.mxu0 0
      %1236 = vmatpush1.bf16.xpose.msra.mxu0 0
      %1237 = vmatprep.subr.bf16.mxu0 0
      %1238 = vmatpush1.bf16.xpose.msra.mxu0 0
      %1239 = vmatprep.subr.bf16.mxu0 0
      %1240 = vmatpush1.bf16.xpose.msra.mxu0 0
      %1241 = vmatprep.subr.bf16.mxu0 0
      %1242 = vmatpush1.bf16.xpose.msra.mxu0 0
      %1243 = vmatprep.subr.bf16.mxu0 0
      %1244 = vmatpush1.bf16.xpose.msra.mxu0 0
      %1245 = vmatprep.subr.bf16.mxu0 0
      %1246 = vmatpush1.bf16.xpose.msra.mxu0 0
      %1247 = vmatprep.subr.bf16.mxu0 0
      %1248 = vmatpush1.bf16.xpose.msra.mxu0 0
      %1249 = vmatprep.subr.bf16.mxu0 0
      %1250 = vmatpush1.bf16.xpose.msra.mxu0 0
      %1251 = vmatprep.subr.bf16.mxu0 0
      %1252 = vmatpush1.bf16.xpose.msra.mxu0 0
      %1253 = vmatprep.mubr.bf16.mxu0 0
      %1254 = vmatmul.mubr.bf16.gmra.mrb[0].mxu0 %v1216
      %v1255 = vpop.f32.mrb[0].mxu0
      %v1256 = vadd.f32 0.0, %v1255
      %v1257 = vpop.f32.mrb[0].mxu0
      %v1258 = vpop.f32.mrb[0].mxu0
      %v1259 = vadd.f32 0.0, %v1258
      %v1260 = vpop.f32.mrb[0].mxu0
      %1261 = vdwg.mxu0
      %v1264 = vunpack.c.l.b16 %v411
      %v1265 = vunpack.c.l.b16 %v412
      %v1266 = vpack.c.b16 %v1265, %v1264
      %v1268 = vsel %vm456, %v971, 0
      %v1271 = vsel %vm456, %v1266, 0
      %1273 = vmatprep.subr.bf16.mxu0 0
      %1274 = vmatpush1.bf16.xpose.msra.mxu0 %v1271
      %1275 = vmatprep.subr.bf16.mxu0 0
      %1276 = vmatpush1.bf16.xpose.msra.mxu0 0
      %1277 = vmatprep.subr.bf16.mxu0 0
      %1278 = vmatpush1.bf16.xpose.msra.mxu0 0
      %1279 = vmatprep.subr.bf16.mxu0 0
      %1280 = vmatpush1.bf16.xpose.msra.mxu0 0
      %1281 = vmatprep.subr.bf16.mxu0 0
      %1282 = vmatpush1.bf16.xpose.msra.mxu0 0
      %1283 = vmatprep.subr.bf16.mxu0 0
      %1284 = vmatpush1.bf16.xpose.msra.mxu0 0
      %1285 = vmatprep.subr.bf16.mxu0 0
      %1286 = vmatpush1.bf16.xpose.msra.mxu0 0
      %1287 = vmatprep.subr.bf16.mxu0 0
      %1288 = vmatpush1.bf16.xpose.msra.mxu0 0
      %1289 = vmatprep.subr.bf16.mxu0 0
      %1290 = vmatpush1.bf16.xpose.msra.mxu0 0
      %1291 = vmatprep.subr.bf16.mxu0 0
      %1292 = vmatpush1.bf16.xpose.msra.mxu0 0
      %1293 = vmatprep.subr.bf16.mxu0 0
      %1294 = vmatpush1.bf16.xpose.msra.mxu0 0
      %1295 = vmatprep.subr.bf16.mxu0 0
      %1296 = vmatpush1.bf16.xpose.msra.mxu0 0
      %1297 = vmatprep.subr.bf16.mxu0 0
      %1298 = vmatpush1.bf16.xpose.msra.mxu0 0
      %1299 = vmatprep.subr.bf16.mxu0 0
      %1300 = vmatpush1.bf16.xpose.msra.mxu0 0
      %1301 = vmatprep.subr.bf16.mxu0 0
      %1302 = vmatpush1.bf16.xpose.msra.mxu0 0
      %1303 = vmatprep.subr.bf16.mxu0 0
      %1304 = vmatpush1.bf16.xpose.msra.mxu0 0
      %1305 = vmatprep.mubr.bf16.mxu0 0
      %1306 = vmatmul.mubr.bf16.gmra.mrb[0].mxu0 %v1268
      %v1307 = vpop.f32.mrb[0].mxu0
      %v1308 = vadd.f32 0.0, %v1307
      %v1309 = vpop.f32.mrb[0].mxu0
      %v1310 = vpop.f32.mrb[0].mxu0
      %v1311 = vadd.f32 0.0, %v1310
      %v1312 = vpop.f32.mrb[0].mxu0
      %1313 = vdwg.mxu0
      %v1316 = vunpack.c.l.b16 %v413
      %v1317 = vunpack.c.l.b16 %v414
      %v1318 = vpack.c.b16 %v1317, %v1316
      %v1320 = vsel %vm456, %v974, 0
      %v1323 = vsel %vm456, %v1318, 0
      %1325 = vmatprep.subr.bf16.mxu0 0
      %1326 = vmatpush1.bf16.xpose.msra.mxu0 %v1323
      %1327 = vmatprep.subr.bf16.mxu0 0
      %1328 = vmatpush1.bf16.xpose.msra.mxu0 0
      %1329 = vmatprep.subr.bf16.mxu0 0
      %1330 = vmatpush1.bf16.xpose.msra.mxu0 0
      %1331 = vmatprep.subr.bf16.mxu0 0
      %1332 = vmatpush1.bf16.xpose.msra.mxu0 0
      %1333 = vmatprep.subr.bf16.mxu0 0
      %1334 = vmatpush1.bf16.xpose.msra.mxu0 0
      %1335 = vmatprep.subr.bf16.mxu0 0
      %1336 = vmatpush1.bf16.xpose.msra.mxu0 0
      %1337 = vmatprep.subr.bf16.mxu0 0
      %1338 = vmatpush1.bf16.xpose.msra.mxu0 0
      %1339 = vmatprep.subr.bf16.mxu0 0
      %1340 = vmatpush1.bf16.xpose.msra.mxu0 0
      %1341 = vmatprep.subr.bf16.mxu0 0
      %1342 = vmatpush1.bf16.xpose.msra.mxu0 0
      %1343 = vmatprep.subr.bf16.mxu0 0
      %1344 = vmatpush1.bf16.xpose.msra.mxu0 0
      %1345 = vmatprep.subr.bf16.mxu0 0
      %1346 = vmatpush1.bf16.xpose.msra.mxu0 0
      %1347 = vmatprep.subr.bf16.mxu0 0
      %1348 = vmatpush1.bf16.xpose.msra.mxu0 0
      %1349 = vmatprep.subr.bf16.mxu0 0
      %1350 = vmatpush1.bf16.xpose.msra.mxu0 0
      %1351 = vmatprep.subr.bf16.mxu0 0
      %1352 = vmatpush1.bf16.xpose.msra.mxu0 0
      %1353 = vmatprep.subr.bf16.mxu0 0
      %1354 = vmatpush1.bf16.xpose.msra.mxu0 0
      %1355 = vmatprep.subr.bf16.mxu0 0
      %1356 = vmatpush1.bf16.xpose.msra.mxu0 0
      %1357 = vmatprep.mubr.bf16.mxu0 0
      %1358 = vmatmul.mubr.bf16.gmra.mrb[0].mxu0 %v1320
      %v1359 = vpop.f32.mrb[0].mxu0
      %v1360 = vadd.f32 0.0, %v1359
      %v1361 = vpop.f32.mrb[0].mxu0
      %v1362 = vpop.f32.mrb[0].mxu0
      %v1363 = vadd.f32 0.0, %v1362
      %v1364 = vpop.f32.mrb[0].mxu0
      %1365 = vdwg.mxu0
      %v1368 = vunpack.c.l.b16 %v415
      %v1369 = vunpack.c.l.b16 %v416
      %v1370 = vpack.c.b16 %v1369, %v1368
      %v1372 = vsel %vm456, %v977, 0
      %v1375 = vsel %vm456, %v1370, 0
      %1377 = vmatprep.subr.bf16.mxu0 0
      %1378 = vmatpush1.bf16.xpose.msra.mxu0 %v1375
      %1379 = vmatprep.subr.bf16.mxu0 0
      %1380 = vmatpush1.bf16.xpose.msra.mxu0 0
      %1381 = vmatprep.subr.bf16.mxu0 0
      %1382 = vmatpush1.bf16.xpose.msra.mxu0 0
      %1383 = vmatprep.subr.bf16.mxu0 0
      %1384 = vmatpush1.bf16.xpose.msra.mxu0 0
      %1385 = vmatprep.subr.bf16.mxu0 0
      %1386 = vmatpush1.bf16.xpose.msra.mxu0 0
      %1387 = vmatprep.subr.bf16.mxu0 0
      %1388 = vmatpush1.bf16.xpose.msra.mxu0 0
      %1389 = vmatprep.subr.bf16.mxu0 0
      %1390 = vmatpush1.bf16.xpose.msra.mxu0 0
      %1391 = vmatprep.subr.bf16.mxu0 0
      %1392 = vmatpush1.bf16.xpose.msra.mxu0 0
      %1393 = vmatprep.subr.bf16.mxu0 0
      %1394 = vmatpush1.bf16.xpose.msra.mxu0 0
      %1395 = vmatprep.subr.bf16.mxu0 0
      %1396 = vmatpush1.bf16.xpose.msra.mxu0 0
      %1397 = vmatprep.subr.bf16.mxu0 0
      %1398 = vmatpush1.bf16.xpose.msra.mxu0 0
      %1399 = vmatprep.subr.bf16.mxu0 0
      %1400 = vmatpush1.bf16.xpose.msra.mxu0 0
      %1401 = vmatprep.subr.bf16.mxu0 0
      %1402 = vmatpush1.bf16.xpose.msra.mxu0 0
      %1403 = vmatprep.subr.bf16.mxu0 0
      %1404 = vmatpush1.bf16.xpose.msra.mxu0 0
      %1405 = vmatprep.subr.bf16.mxu0 0
      %1406 = vmatpush1.bf16.xpose.msra.mxu0 0
      %1407 = vmatprep.subr.bf16.mxu0 0
      %1408 = vmatpush1.bf16.xpose.msra.mxu0 0
      %1409 = vmatprep.mubr.bf16.mxu0 0
      %1410 = vmatmul.mubr.bf16.gmra.mrb[0].mxu0 %v1372
      %v1411 = vpop.f32.mrb[0].mxu0
      %v1412 = vadd.f32 0.0, %v1411
      %v1413 = vpop.f32.mrb[0].mxu0
      %v1414 = vpop.f32.mrb[0].mxu0
      %v1415 = vadd.f32 0.0, %v1414
      %v1416 = vpop.f32.mrb[0].mxu0
      %1417 = vdwg.mxu0
      %v1420 = vunpack.c.l.b16 %v417
      %v1421 = vunpack.c.l.b16 %v418
      %v1422 = vpack.c.b16 %v1421, %v1420
      %v1424 = vsel %vm456, %v980, 0
      %v1427 = vsel %vm456, %v1422, 0
      %1429 = vmatprep.subr.bf16.mxu0 0
      %1430 = vmatpush1.bf16.xpose.msra.mxu0 %v1427
      %1431 = vmatprep.subr.bf16.mxu0 0
      %1432 = vmatpush1.bf16.xpose.msra.mxu0 0
      %1433 = vmatprep.subr.bf16.mxu0 0
      %1434 = vmatpush1.bf16.xpose.msra.mxu0 0
      %1435 = vmatprep.subr.bf16.mxu0 0
      %1436 = vmatpush1.bf16.xpose.msra.mxu0 0
      %1437 = vmatprep.subr.bf16.mxu0 0
      %1438 = vmatpush1.bf16.xpose.msra.mxu0 0
      %1439 = vmatprep.subr.bf16.mxu0 0
      %1440 = vmatpush1.bf16.xpose.msra.mxu0 0
      %1441 = vmatprep.subr.bf16.mxu0 0
      %1442 = vmatpush1.bf16.xpose.msra.mxu0 0
      %1443 = vmatprep.subr.bf16.mxu0 0
      %1444 = vmatpush1.bf16.xpose.msra.mxu0 0
      %1445 = vmatprep.subr.bf16.mxu0 0
      %1446 = vmatpush1.bf16.xpose.msra.mxu0 0
      %1447 = vmatprep.subr.bf16.mxu0 0
      %1448 = vmatpush1.bf16.xpose.msra.mxu0 0
      %1449 = vmatprep.subr.bf16.mxu0 0
      %1450 = vmatpush1.bf16.xpose.msra.mxu0 0
      %1451 = vmatprep.subr.bf16.mxu0 0
      %1452 = vmatpush1.bf16.xpose.msra.mxu0 0
      %1453 = vmatprep.subr.bf16.mxu0 0
      %1454 = vmatpush1.bf16.xpose.msra.mxu0 0
      %1455 = vmatprep.subr.bf16.mxu0 0
      %1456 = vmatpush1.bf16.xpose.msra.mxu0 0
      %1457 = vmatprep.subr.bf16.mxu0 0
      %1458 = vmatpush1.bf16.xpose.msra.mxu0 0
      %1459 = vmatprep.subr.bf16.mxu0 0
      %1460 = vmatpush1.bf16.xpose.msra.mxu0 0
      %1461 = vmatprep.mubr.bf16.mxu0 0
      %1462 = vmatmul.mubr.bf16.gmra.mrb[0].mxu0 %v1424
      %v1463 = vpop.f32.mrb[0].mxu0
      %v1464 = vadd.f32 0.0, %v1463
      %v1465 = vpop.f32.mrb[0].mxu0
      %v1466 = vpop.f32.mrb[0].mxu0
      %v1467 = vadd.f32 0.0, %v1466
      %v1468 = vpop.f32.mrb[0].mxu0
      %1469 = vdwg.mxu0
      %v1472 = vunpack.c.l.b16 %v419
      %v1473 = vunpack.c.l.b16 %v420
      %v1474 = vpack.c.b16 %v1473, %v1472
      %v1476 = vsel %vm456, %v983, 0
      %v1479 = vsel %vm456, %v1474, 0
      %1481 = vmatprep.subr.bf16.mxu0 0
      %1482 = vmatpush1.bf16.xpose.msra.mxu0 %v1479
      %1483 = vmatprep.subr.bf16.mxu0 0
      %1484 = vmatpush1.bf16.xpose.msra.mxu0 0
      %1485 = vmatprep.subr.bf16.mxu0 0
      %1486 = vmatpush1.bf16.xpose.msra.mxu0 0
      %1487 = vmatprep.subr.bf16.mxu0 0
      %1488 = vmatpush1.bf16.xpose.msra.mxu0 0
      %1489 = vmatprep.subr.bf16.mxu0 0
      %1490 = vmatpush1.bf16.xpose.msra.mxu0 0
      %1491 = vmatprep.subr.bf16.mxu0 0
      %1492 = vmatpush1.bf16.xpose.msra.mxu0 0
      %1493 = vmatprep.subr.bf16.mxu0 0
      %1494 = vmatpush1.bf16.xpose.msra.mxu0 0
      %1495 = vmatprep.subr.bf16.mxu0 0
      %1496 = vmatpush1.bf16.xpose.msra.mxu0 0
      %1497 = vmatprep.subr.bf16.mxu0 0
      %1498 = vmatpush1.bf16.xpose.msra.mxu0 0
      %1499 = vmatprep.subr.bf16.mxu0 0
      %1500 = vmatpush1.bf16.xpose.msra.mxu0 0
      %1501 = vmatprep.subr.bf16.mxu0 0
      %1502 = vmatpush1.bf16.xpose.msra.mxu0 0
      %1503 = vmatprep.subr.bf16.mxu0 0
      %1504 = vmatpush1.bf16.xpose.msra.mxu0 0
      %1505 = vmatprep.subr.bf16.mxu0 0
      %1506 = vmatpush1.bf16.xpose.msra.mxu0 0
      %1507 = vmatprep.subr.bf16.mxu0 0
      %1508 = vmatpush1.bf16.xpose.msra.mxu0 0
      %1509 = vmatprep.subr.bf16.mxu0 0
      %1510 = vmatpush1.bf16.xpose.msra.mxu0 0
      %1511 = vmatprep.subr.bf16.mxu0 0
      %1512 = vmatpush1.bf16.xpose.msra.mxu0 0
      %1513 = vmatprep.mubr.bf16.mxu0 0
      %1514 = vmatmul.mubr.bf16.gmra.mrb[0].mxu0 %v1476
      %v1515 = vpop.f32.mrb[0].mxu0
      %v1516 = vadd.f32 0.0, %v1515
      %v1517 = vpop.f32.mrb[0].mxu0
      %v1518 = vpop.f32.mrb[0].mxu0
      %v1519 = vadd.f32 0.0, %v1518
      %v1520 = vpop.f32.mrb[0].mxu0
      %1521 = vdwg.mxu0
      %v1524 = vunpack.c.l.b16 %v421
      %v1525 = vunpack.c.l.b16 %v422
      %v1526 = vpack.c.b16 %v1525, %v1524
      %v1528 = vsel %vm456, %v986, 0
      %v1531 = vsel %vm456, %v1526, 0
      %1533 = vmatprep.subr.bf16.mxu0 0
      %1534 = vmatpush1.bf16.xpose.msra.mxu0 %v1531
      %1535 = vmatprep.subr.bf16.mxu0 0
      %1536 = vmatpush1.bf16.xpose.msra.mxu0 0
      %1537 = vmatprep.subr.bf16.mxu0 0
      %1538 = vmatpush1.bf16.xpose.msra.mxu0 0
      %1539 = vmatprep.subr.bf16.mxu0 0
      %1540 = vmatpush1.bf16.xpose.msra.mxu0 0
      %1541 = vmatprep.subr.bf16.mxu0 0
      %1542 = vmatpush1.bf16.xpose.msra.mxu0 0
      %1543 = vmatprep.subr.bf16.mxu0 0
      %1544 = vmatpush1.bf16.xpose.msra.mxu0 0
      %1545 = vmatprep.subr.bf16.mxu0 0
      %1546 = vmatpush1.bf16.xpose.msra.mxu0 0
      %1547 = vmatprep.subr.bf16.mxu0 0
      %1548 = vmatpush1.bf16.xpose.msra.mxu0 0
      %1549 = vmatprep.subr.bf16.mxu0 0
      %1550 = vmatpush1.bf16.xpose.msra.mxu0 0
      %1551 = vmatprep.subr.bf16.mxu0 0
      %1552 = vmatpush1.bf16.xpose.msra.mxu0 0
      %1553 = vmatprep.subr.bf16.mxu0 0
      %1554 = vmatpush1.bf16.xpose.msra.mxu0 0
      %1555 = vmatprep.subr.bf16.mxu0 0
      %1556 = vmatpush1.bf16.xpose.msra.mxu0 0
      %1557 = vmatprep.subr.bf16.mxu0 0
      %1558 = vmatpush1.bf16.xpose.msra.mxu0 0
      %1559 = vmatprep.subr.bf16.mxu0 0
      %1560 = vmatpush1.bf16.xpose.msra.mxu0 0
      %1561 = vmatprep.subr.bf16.mxu0 0
      %1562 = vmatpush1.bf16.xpose.msra.mxu0 0
      %1563 = vmatprep.subr.bf16.mxu0 0
      %1564 = vmatpush1.bf16.xpose.msra.mxu0 0
      %1565 = vmatprep.mubr.bf16.mxu0 0
      %1566 = vmatmul.mubr.bf16.gmra.mrb[0].mxu0 %v1528
      %v1567 = vpop.f32.mrb[0].mxu0
      %v1568 = vadd.f32 0.0, %v1567
      %v1569 = vpop.f32.mrb[0].mxu0
      %v1570 = vpop.f32.mrb[0].mxu0
      %v1571 = vadd.f32 0.0, %v1570
      %v1572 = vpop.f32.mrb[0].mxu0
      %1573 = vdwg.mxu0
      %v1576 = vunpack.c.l.b16 %v423
      %v1577 = vunpack.c.l.b16 %v424
      %v1578 = vpack.c.b16 %v1577, %v1576
      %v1580 = vsel %vm456, %v989, 0
      %v1583 = vsel %vm456, %v1578, 0
      %1585 = vmatprep.subr.bf16.mxu0 0
      %1586 = vmatpush1.bf16.xpose.msra.mxu0 %v1583
      %1587 = vmatprep.subr.bf16.mxu0 0
      %1588 = vmatpush1.bf16.xpose.msra.mxu0 0
      %1589 = vmatprep.subr.bf16.mxu0 0
      %1590 = vmatpush1.bf16.xpose.msra.mxu0 0
      %1591 = vmatprep.subr.bf16.mxu0 0
      %1592 = vmatpush1.bf16.xpose.msra.mxu0 0
      %1593 = vmatprep.subr.bf16.mxu0 0
      %1594 = vmatpush1.bf16.xpose.msra.mxu0 0
      %1595 = vmatprep.subr.bf16.mxu0 0
      %1596 = vmatpush1.bf16.xpose.msra.mxu0 0
      %1597 = vmatprep.subr.bf16.mxu0 0
      %1598 = vmatpush1.bf16.xpose.msra.mxu0 0
      %1599 = vmatprep.subr.bf16.mxu0 0
      %1600 = vmatpush1.bf16.xpose.msra.mxu0 0
      %1601 = vmatprep.subr.bf16.mxu0 0
      %1602 = vmatpush1.bf16.xpose.msra.mxu0 0
      %1603 = vmatprep.subr.bf16.mxu0 0
      %1604 = vmatpush1.bf16.xpose.msra.mxu0 0
      %1605 = vmatprep.subr.bf16.mxu0 0
      %1606 = vmatpush1.bf16.xpose.msra.mxu0 0
      %1607 = vmatprep.subr.bf16.mxu0 0
      %1608 = vmatpush1.bf16.xpose.msra.mxu0 0
      %1609 = vmatprep.subr.bf16.mxu0 0
      %1610 = vmatpush1.bf16.xpose.msra.mxu0 0
      %1611 = vmatprep.subr.bf16.mxu0 0
      %1612 = vmatpush1.bf16.xpose.msra.mxu0 0
      %1613 = vmatprep.subr.bf16.mxu0 0
      %1614 = vmatpush1.bf16.xpose.msra.mxu0 0
      %1615 = vmatprep.subr.bf16.mxu0 0
      %1616 = vmatpush1.bf16.xpose.msra.mxu0 0
      %1617 = vmatprep.mubr.bf16.mxu0 0
      %1618 = vmatmul.mubr.bf16.gmra.mrb[0].mxu0 %v1580
      %v1619 = vpop.f32.mrb[0].mxu0
      %v1620 = vadd.f32 0.0, %v1619
      %v1621 = vpop.f32.mrb[0].mxu0
      %v1622 = vpop.f32.mrb[0].mxu0
      %v1623 = vadd.f32 0.0, %v1622
      %v1624 = vpop.f32.mrb[0].mxu0
      %1625 = vdwg.mxu0
      %v1628 = vunpack.c.l.b16 %v425
      %v1629 = vunpack.c.l.b16 %v426
      %v1630 = vpack.c.b16 %v1629, %v1628
      %v1632 = vsel %vm456, %v992, 0
      %v1635 = vsel %vm456, %v1630, 0
      %1637 = vmatprep.subr.bf16.mxu0 0
      %1638 = vmatpush1.bf16.xpose.msra.mxu0 %v1635
      %1639 = vmatprep.subr.bf16.mxu0 0
      %1640 = vmatpush1.bf16.xpose.msra.mxu0 0
      %1641 = vmatprep.subr.bf16.mxu0 0
      %1642 = vmatpush1.bf16.xpose.msra.mxu0 0
      %1643 = vmatprep.subr.bf16.mxu0 0
      %1644 = vmatpush1.bf16.xpose.msra.mxu0 0
      %1645 = vmatprep.subr.bf16.mxu0 0
      %1646 = vmatpush1.bf16.xpose.msra.mxu0 0
      %1647 = vmatprep.subr.bf16.mxu0 0
      %1648 = vmatpush1.bf16.xpose.msra.mxu0 0
      %1649 = vmatprep.subr.bf16.mxu0 0
      %1650 = vmatpush1.bf16.xpose.msra.mxu0 0
      %1651 = vmatprep.subr.bf16.mxu0 0
      %1652 = vmatpush1.bf16.xpose.msra.mxu0 0
      %1653 = vmatprep.subr.bf16.mxu0 0
      %1654 = vmatpush1.bf16.xpose.msra.mxu0 0
      %1655 = vmatprep.subr.bf16.mxu0 0
      %1656 = vmatpush1.bf16.xpose.msra.mxu0 0
      %1657 = vmatprep.subr.bf16.mxu0 0
      %1658 = vmatpush1.bf16.xpose.msra.mxu0 0
      %1659 = vmatprep.subr.bf16.mxu0 0
      %1660 = vmatpush1.bf16.xpose.msra.mxu0 0
      %1661 = vmatprep.subr.bf16.mxu0 0
      %1662 = vmatpush1.bf16.xpose.msra.mxu0 0
      %1663 = vmatprep.subr.bf16.mxu0 0
      %1664 = vmatpush1.bf16.xpose.msra.mxu0 0
      %1665 = vmatprep.subr.bf16.mxu0 0
      %1666 = vmatpush1.bf16.xpose.msra.mxu0 0
      %1667 = vmatprep.subr.bf16.mxu0 0
      %1668 = vmatpush1.bf16.xpose.msra.mxu0 0
      %1669 = vmatprep.mubr.bf16.mxu0 0
      %1670 = vmatmul.mubr.bf16.gmra.mrb[0].mxu0 %v1632
      %v1671 = vpop.f32.mrb[0].mxu0
      %v1672 = vadd.f32 0.0, %v1671
      %v1673 = vpop.f32.mrb[0].mxu0
      %v1674 = vpop.f32.mrb[0].mxu0
      %v1675 = vadd.f32 0.0, %v1674
      %v1676 = vpop.f32.mrb[0].mxu0
      %1677 = vdwg.mxu0
      %v1680 = vunpack.c.l.b16 %v427
      %v1681 = vunpack.c.l.b16 %v428
      %v1682 = vpack.c.b16 %v1681, %v1680
      %v1684 = vsel %vm456, %v995, 0
      %v1687 = vsel %vm456, %v1682, 0
      %1689 = vmatprep.subr.bf16.mxu0 0
      %1690 = vmatpush1.bf16.xpose.msra.mxu0 %v1687
      %1691 = vmatprep.subr.bf16.mxu0 0
      %1692 = vmatpush1.bf16.xpose.msra.mxu0 0
      %1693 = vmatprep.subr.bf16.mxu0 0
      %1694 = vmatpush1.bf16.xpose.msra.mxu0 0
      %1695 = vmatprep.subr.bf16.mxu0 0
      %1696 = vmatpush1.bf16.xpose.msra.mxu0 0
      %1697 = vmatprep.subr.bf16.mxu0 0
      %1698 = vmatpush1.bf16.xpose.msra.mxu0 0
      %1699 = vmatprep.subr.bf16.mxu0 0
      %1700 = vmatpush1.bf16.xpose.msra.mxu0 0
      %1701 = vmatprep.subr.bf16.mxu0 0
      %1702 = vmatpush1.bf16.xpose.msra.mxu0 0
      %1703 = vmatprep.subr.bf16.mxu0 0
      %1704 = vmatpush1.bf16.xpose.msra.mxu0 0
      %1705 = vmatprep.subr.bf16.mxu0 0
      %1706 = vmatpush1.bf16.xpose.msra.mxu0 0
      %1707 = vmatprep.subr.bf16.mxu0 0
      %1708 = vmatpush1.bf16.xpose.msra.mxu0 0
      %1709 = vmatprep.subr.bf16.mxu0 0
      %1710 = vmatpush1.bf16.xpose.msra.mxu0 0
      %1711 = vmatprep.subr.bf16.mxu0 0
      %1712 = vmatpush1.bf16.xpose.msra.mxu0 0
      %1713 = vmatprep.subr.bf16.mxu0 0
      %1714 = vmatpush1.bf16.xpose.msra.mxu0 0
      %1715 = vmatprep.subr.bf16.mxu0 0
      %1716 = vmatpush1.bf16.xpose.msra.mxu0 0
      %1717 = vmatprep.subr.bf16.mxu0 0
      %1718 = vmatpush1.bf16.xpose.msra.mxu0 0
      %1719 = vmatprep.subr.bf16.mxu0 0
      %1720 = vmatpush1.bf16.xpose.msra.mxu0 0
      %1721 = vmatprep.mubr.bf16.mxu0 0
      %1722 = vmatmul.mubr.bf16.gmra.mrb[0].mxu0 %v1684
      %v1723 = vpop.f32.mrb[0].mxu0
      %v1724 = vadd.f32 0.0, %v1723
      %v1725 = vpop.f32.mrb[0].mxu0
      %v1726 = vpop.f32.mrb[0].mxu0
      %v1727 = vadd.f32 0.0, %v1726
      %v1728 = vpop.f32.mrb[0].mxu0
      %1729 = vdwg.mxu0
      %v1732 = vunpack.c.l.b16 %v429
      %v1733 = vunpack.c.l.b16 %v430
      %v1734 = vpack.c.b16 %v1733, %v1732
      %v1736 = vsel %vm456, %v998, 0
      %v1739 = vsel %vm456, %v1734, 0
      %1741 = vmatprep.subr.bf16.mxu0 0
      %1742 = vmatpush1.bf16.xpose.msra.mxu0 %v1739
      %1743 = vmatprep.subr.bf16.mxu0 0
      %1744 = vmatpush1.bf16.xpose.msra.mxu0 0
      %1745 = vmatprep.subr.bf16.mxu0 0
      %1746 = vmatpush1.bf16.xpose.msra.mxu0 0
      %1747 = vmatprep.subr.bf16.mxu0 0
      %1748 = vmatpush1.bf16.xpose.msra.mxu0 0
      %1749 = vmatprep.subr.bf16.mxu0 0
      %1750 = vmatpush1.bf16.xpose.msra.mxu0 0
      %1751 = vmatprep.subr.bf16.mxu0 0
      %1752 = vmatpush1.bf16.xpose.msra.mxu0 0
      %1753 = vmatprep.subr.bf16.mxu0 0
      %1754 = vmatpush1.bf16.xpose.msra.mxu0 0
      %1755 = vmatprep.subr.bf16.mxu0 0
      %1756 = vmatpush1.bf16.xpose.msra.mxu0 0
      %1757 = vmatprep.subr.bf16.mxu0 0
      %1758 = vmatpush1.bf16.xpose.msra.mxu0 0
      %1759 = vmatprep.subr.bf16.mxu0 0
      %1760 = vmatpush1.bf16.xpose.msra.mxu0 0
      %1761 = vmatprep.subr.bf16.mxu0 0
      %1762 = vmatpush1.bf16.xpose.msra.mxu0 0
      %1763 = vmatprep.subr.bf16.mxu0 0
      %1764 = vmatpush1.bf16.xpose.msra.mxu0 0
      %1765 = vmatprep.subr.bf16.mxu0 0
      %1766 = vmatpush1.bf16.xpose.msra.mxu0 0
      %1767 = vmatprep.subr.bf16.mxu0 0
      %1768 = vmatpush1.bf16.xpose.msra.mxu0 0
      %1769 = vmatprep.subr.bf16.mxu0 0
      %1770 = vmatpush1.bf16.xpose.msra.mxu0 0
      %1771 = vmatprep.subr.bf16.mxu0 0
      %1772 = vmatpush1.bf16.xpose.msra.mxu0 0
      %1773 = vmatprep.mubr.bf16.mxu0 0
      %1774 = vmatmul.mubr.bf16.gmra.mrb[0].mxu0 %v1736
      %v1775 = vpop.f32.mrb[0].mxu0
      %v1776 = vadd.f32 0.0, %v1775
      %v1777 = vpop.f32.mrb[0].mxu0
      %v1778 = vpop.f32.mrb[0].mxu0
      %v1779 = vadd.f32 0.0, %v1778
      %v1780 = vpop.f32.mrb[0].mxu0
      %1781 = vdwg.mxu0
      %v1784 = vunpack.c.l.b16 %v431
      %v1785 = vunpack.c.l.b16 %v432
      %v1786 = vpack.c.b16 %v1785, %v1784
      %v1788 = vsel %vm456, %v1001, 0
      %v1791 = vsel %vm456, %v1786, 0
      %1793 = vmatprep.subr.bf16.mxu0 0
      %1794 = vmatpush1.bf16.xpose.msra.mxu0 %v1791
      %1795 = vmatprep.subr.bf16.mxu0 0
      %1796 = vmatpush1.bf16.xpose.msra.mxu0 0
      %1797 = vmatprep.subr.bf16.mxu0 0
      %1798 = vmatpush1.bf16.xpose.msra.mxu0 0
      %1799 = vmatprep.subr.bf16.mxu0 0
      %1800 = vmatpush1.bf16.xpose.msra.mxu0 0
      %1801 = vmatprep.subr.bf16.mxu0 0
      %1802 = vmatpush1.bf16.xpose.msra.mxu0 0
      %1803 = vmatprep.subr.bf16.mxu0 0
      %1804 = vmatpush1.bf16.xpose.msra.mxu0 0
      %1805 = vmatprep.subr.bf16.mxu0 0
      %1806 = vmatpush1.bf16.xpose.msra.mxu0 0
      %1807 = vmatprep.subr.bf16.mxu0 0
      %1808 = vmatpush1.bf16.xpose.msra.mxu0 0
      %1809 = vmatprep.subr.bf16.mxu0 0
      %1810 = vmatpush1.bf16.xpose.msra.mxu0 0
      %1811 = vmatprep.subr.bf16.mxu0 0
      %1812 = vmatpush1.bf16.xpose.msra.mxu0 0
      %1813 = vmatprep.subr.bf16.mxu0 0
      %1814 = vmatpush1.bf16.xpose.msra.mxu0 0
      %1815 = vmatprep.subr.bf16.mxu0 0
      %1816 = vmatpush1.bf16.xpose.msra.mxu0 0
      %1817 = vmatprep.subr.bf16.mxu0 0
      %1818 = vmatpush1.bf16.xpose.msra.mxu0 0
      %1819 = vmatprep.subr.bf16.mxu0 0
      %1820 = vmatpush1.bf16.xpose.msra.mxu0 0
      %1821 = vmatprep.subr.bf16.mxu0 0
      %1822 = vmatpush1.bf16.xpose.msra.mxu0 0
      %1823 = vmatprep.subr.bf16.mxu0 0
      %1824 = vmatpush1.bf16.xpose.msra.mxu0 0
      %1825 = vmatprep.mubr.bf16.mxu0 0
      %1826 = vmatmul.mubr.bf16.gmra.mrb[0].mxu0 %v1788
      %v1827 = vpop.f32.mrb[0].mxu0
      %v1828 = vadd.f32 0.0, %v1827
      %v1829 = vpop.f32.mrb[0].mxu0
      %v1830 = vpop.f32.mrb[0].mxu0
      %v1831 = vadd.f32 0.0, %v1830
      %v1832 = vpop.f32.mrb[0].mxu0
      %1833 = vdwg.mxu0
      %v1835 = vsel %vm456, %v666, 0
      %1837 = vmatprep.subr.bf16.mxu0 0
      %1838 = vmatpush1.bf16.xpose.msra.mxu0 %v458
      %1839 = vmatprep.subr.bf16.mxu0 0
      %1840 = vmatpush1.bf16.xpose.msra.mxu0 0
      %1841 = vmatprep.subr.bf16.mxu0 0
      %1842 = vmatpush1.bf16.xpose.msra.mxu0 0
      %1843 = vmatprep.subr.bf16.mxu0 0
      %1844 = vmatpush1.bf16.xpose.msra.mxu0 0
      %1845 = vmatprep.subr.bf16.mxu0 0
      %1846 = vmatpush1.bf16.xpose.msra.mxu0 0
      %1847 = vmatprep.subr.bf16.mxu0 0
      %1848 = vmatpush1.bf16.xpose.msra.mxu0 0
      %1849 = vmatprep.subr.bf16.mxu0 0
      %1850 = vmatpush1.bf16.xpose.msra.mxu0 0
      %1851 = vmatprep.subr.bf16.mxu0 0
      %1852 = vmatpush1.bf16.xpose.msra.mxu0 0
      %1853 = vmatprep.subr.bf16.mxu0 0
      %1854 = vmatpush1.bf16.xpose.msra.mxu0 0
      %1855 = vmatprep.subr.bf16.mxu0 0
      %1856 = vmatpush1.bf16.xpose.msra.mxu0 0
      %1857 = vmatprep.subr.bf16.mxu0 0
      %1858 = vmatpush1.bf16.xpose.msra.mxu0 0
      %1859 = vmatprep.subr.bf16.mxu0 0
      %1860 = vmatpush1.bf16.xpose.msra.mxu0 0
      %1861 = vmatprep.subr.bf16.mxu0 0
      %1862 = vmatpush1.bf16.xpose.msra.mxu0 0
      %1863 = vmatprep.subr.bf16.mxu0 0
      %1864 = vmatpush1.bf16.xpose.msra.mxu0 0
      %1865 = vmatprep.subr.bf16.mxu0 0
      %1866 = vmatpush1.bf16.xpose.msra.mxu0 0
      %1867 = vmatprep.subr.bf16.mxu0 0
      %1868 = vmatpush1.bf16.xpose.msra.mxu0 0
      %1869 = vmatprep.mubr.bf16.mxu0 0
      %1870 = vmatmul.mubr.bf16.gmra.mrb[0].mxu0 %v1835
      %v1871 = vpop.f32.mrb[0].mxu0
      %v1872 = vadd.f32 0.0, %v1871
      %v1873 = vpop.f32.mrb[0].mxu0
      %v1874 = vpop.f32.mrb[0].mxu0
      %v1875 = vadd.f32 0.0, %v1874
      %v1876 = vpop.f32.mrb[0].mxu0
      %1877 = vdwg.mxu0
      %v1879 = vsel %vm456, %v667, 0
      %1881 = vmatprep.subr.bf16.mxu0 0
      %1882 = vmatpush1.bf16.xpose.msra.mxu0 %v461
      %1883 = vmatprep.subr.bf16.mxu0 0
      %1884 = vmatpush1.bf16.xpose.msra.mxu0 0
      %1885 = vmatprep.subr.bf16.mxu0 0
      %1886 = vmatpush1.bf16.xpose.msra.mxu0 0
      %1887 = vmatprep.subr.bf16.mxu0 0
      %1888 = vmatpush1.bf16.xpose.msra.mxu0 0
      %1889 = vmatprep.subr.bf16.mxu0 0
      %1890 = vmatpush1.bf16.xpose.msra.mxu0 0
      %1891 = vmatprep.subr.bf16.mxu0 0
      %1892 = vmatpush1.bf16.xpose.msra.mxu0 0
      %1893 = vmatprep.subr.bf16.mxu0 0
      %1894 = vmatpush1.bf16.xpose.msra.mxu0 0
      %1895 = vmatprep.subr.bf16.mxu0 0
      %1896 = vmatpush1.bf16.xpose.msra.mxu0 0
      %1897 = vmatprep.subr.bf16.mxu0 0
      %1898 = vmatpush1.bf16.xpose.msra.mxu0 0
      %1899 = vmatprep.subr.bf16.mxu0 0
      %1900 = vmatpush1.bf16.xpose.msra.mxu0 0
      %1901 = vmatprep.subr.bf16.mxu0 0
      %1902 = vmatpush1.bf16.xpose.msra.mxu0 0
      %1903 = vmatprep.subr.bf16.mxu0 0
      %1904 = vmatpush1.bf16.xpose.msra.mxu0 0
      %1905 = vmatprep.subr.bf16.mxu0 0
      %1906 = vmatpush1.bf16.xpose.msra.mxu0 0
      %1907 = vmatprep.subr.bf16.mxu0 0
      %1908 = vmatpush1.bf16.xpose.msra.mxu0 0
      %1909 = vmatprep.subr.bf16.mxu0 0
      %1910 = vmatpush1.bf16.xpose.msra.mxu0 0
      %1911 = vmatprep.subr.bf16.mxu0 0
      %1912 = vmatpush1.bf16.xpose.msra.mxu0 0
      %1913 = vmatprep.mubr.bf16.mxu0 0
      %1914 = vmatmul.mubr.bf16.gmra.mrb[0].mxu0 %v1879
      %v1915 = vpop.f32.mrb[0].mxu0
      %v1916 = vadd.f32 0.0, %v1915
      %v1917 = vpop.f32.mrb[0].mxu0
      %v1918 = vpop.f32.mrb[0].mxu0
      %v1919 = vadd.f32 0.0, %v1918
      %v1920 = vpop.f32.mrb[0].mxu0
      %1921 = vdwg.mxu0
      %v1923 = vsel %vm456, %v668, 0
      %1925 = vmatprep.subr.bf16.mxu0 0
      %1926 = vmatpush1.bf16.xpose.msra.mxu0 %v464
      %1927 = vmatprep.subr.bf16.mxu0 0
      %1928 = vmatpush1.bf16.xpose.msra.mxu0 0
      %1929 = vmatprep.subr.bf16.mxu0 0
      %1930 = vmatpush1.bf16.xpose.msra.mxu0 0
      %1931 = vmatprep.subr.bf16.mxu0 0
      %1932 = vmatpush1.bf16.xpose.msra.mxu0 0
      %1933 = vmatprep.subr.bf16.mxu0 0
      %1934 = vmatpush1.bf16.xpose.msra.mxu0 0
      %1935 = vmatprep.subr.bf16.mxu0 0
      %1936 = vmatpush1.bf16.xpose.msra.mxu0 0
      %1937 = vmatprep.subr.bf16.mxu0 0
      %1938 = vmatpush1.bf16.xpose.msra.mxu0 0
      %1939 = vmatprep.subr.bf16.mxu0 0
      %1940 = vmatpush1.bf16.xpose.msra.mxu0 0
      %1941 = vmatprep.subr.bf16.mxu0 0
      %1942 = vmatpush1.bf16.xpose.msra.mxu0 0
      %1943 = vmatprep.subr.bf16.mxu0 0
      %1944 = vmatpush1.bf16.xpose.msra.mxu0 0
      %1945 = vmatprep.subr.bf16.mxu0 0
      %1946 = vmatpush1.bf16.xpose.msra.mxu0 0
      %1947 = vmatprep.subr.bf16.mxu0 0
      %1948 = vmatpush1.bf16.xpose.msra.mxu0 0
      %1949 = vmatprep.subr.bf16.mxu0 0
      %1950 = vmatpush1.bf16.xpose.msra.mxu0 0
      %1951 = vmatprep.subr.bf16.mxu0 0
      %1952 = vmatpush1.bf16.xpose.msra.mxu0 0
      %1953 = vmatprep.subr.bf16.mxu0 0
      %1954 = vmatpush1.bf16.xpose.msra.mxu0 0
      %1955 = vmatprep.subr.bf16.mxu0 0
      %1956 = vmatpush1.bf16.xpose.msra.mxu0 0
      %1957 = vmatprep.mubr.bf16.mxu0 0
      %1958 = vmatmul.mubr.bf16.gmra.mrb[0].mxu0 %v1923
      %v1959 = vpop.f32.mrb[0].mxu0
      %v1960 = vadd.f32 0.0, %v1959
      %v1961 = vpop.f32.mrb[0].mxu0
      %v1962 = vpop.f32.mrb[0].mxu0
      %v1963 = vadd.f32 0.0, %v1962
      %v1964 = vpop.f32.mrb[0].mxu0
      %1965 = vdwg.mxu0
      %v1967 = vsel %vm456, %v669, 0
      %1969 = vmatprep.subr.bf16.mxu0 0
      %1970 = vmatpush1.bf16.xpose.msra.mxu0 %v467
      %1971 = vmatprep.subr.bf16.mxu0 0
      %1972 = vmatpush1.bf16.xpose.msra.mxu0 0
      %1973 = vmatprep.subr.bf16.mxu0 0
      %1974 = vmatpush1.bf16.xpose.msra.mxu0 0
      %1975 = vmatprep.subr.bf16.mxu0 0
      %1976 = vmatpush1.bf16.xpose.msra.mxu0 0
      %1977 = vmatprep.subr.bf16.mxu0 0
      %1978 = vmatpush1.bf16.xpose.msra.mxu0 0
      %1979 = vmatprep.subr.bf16.mxu0 0
      %1980 = vmatpush1.bf16.xpose.msra.mxu0 0
      %1981 = vmatprep.subr.bf16.mxu0 0
      %1982 = vmatpush1.bf16.xpose.msra.mxu0 0
      %1983 = vmatprep.subr.bf16.mxu0 0
      %1984 = vmatpush1.bf16.xpose.msra.mxu0 0
      %1985 = vmatprep.subr.bf16.mxu0 0
      %1986 = vmatpush1.bf16.xpose.msra.mxu0 0
      %1987 = vmatprep.subr.bf16.mxu0 0
      %1988 = vmatpush1.bf16.xpose.msra.mxu0 0
      %1989 = vmatprep.subr.bf16.mxu0 0
      %1990 = vmatpush1.bf16.xpose.msra.mxu0 0
      %1991 = vmatprep.subr.bf16.mxu0 0
      %1992 = vmatpush1.bf16.xpose.msra.mxu0 0
      %1993 = vmatprep.subr.bf16.mxu0 0
      %1994 = vmatpush1.bf16.xpose.msra.mxu0 0
      %1995 = vmatprep.subr.bf16.mxu0 0
      %1996 = vmatpush1.bf16.xpose.msra.mxu0 0
      %1997 = vmatprep.subr.bf16.mxu0 0
      %1998 = vmatpush1.bf16.xpose.msra.mxu0 0
      %1999 = vmatprep.subr.bf16.mxu0 0
      %2000 = vmatpush1.bf16.xpose.msra.mxu0 0
      %2001 = vmatprep.mubr.bf16.mxu0 0
      %2002 = vmatmul.mubr.bf16.gmra.mrb[0].mxu0 %v1967
      %v2003 = vpop.f32.mrb[0].mxu0
      %v2004 = vadd.f32 0.0, %v2003
      %v2005 = vpop.f32.mrb[0].mxu0
      %v2006 = vpop.f32.mrb[0].mxu0
      %v2007 = vadd.f32 0.0, %v2006
      %v2008 = vpop.f32.mrb[0].mxu0
      %2009 = vdwg.mxu0
      %v2011 = vsel %vm456, %v670, 0
      %2013 = vmatprep.subr.bf16.mxu0 0
      %2014 = vmatpush1.bf16.xpose.msra.mxu0 %v470
      %2015 = vmatprep.subr.bf16.mxu0 0
      %2016 = vmatpush1.bf16.xpose.msra.mxu0 0
      %2017 = vmatprep.subr.bf16.mxu0 0
      %2018 = vmatpush1.bf16.xpose.msra.mxu0 0
      %2019 = vmatprep.subr.bf16.mxu0 0
      %2020 = vmatpush1.bf16.xpose.msra.mxu0 0
      %2021 = vmatprep.subr.bf16.mxu0 0
      %2022 = vmatpush1.bf16.xpose.msra.mxu0 0
      %2023 = vmatprep.subr.bf16.mxu0 0
      %2024 = vmatpush1.bf16.xpose.msra.mxu0 0
      %2025 = vmatprep.subr.bf16.mxu0 0
      %2026 = vmatpush1.bf16.xpose.msra.mxu0 0
      %2027 = vmatprep.subr.bf16.mxu0 0
      %2028 = vmatpush1.bf16.xpose.msra.mxu0 0
      %2029 = vmatprep.subr.bf16.mxu0 0
      %2030 = vmatpush1.bf16.xpose.msra.mxu0 0
      %2031 = vmatprep.subr.bf16.mxu0 0
      %2032 = vmatpush1.bf16.xpose.msra.mxu0 0
      %2033 = vmatprep.subr.bf16.mxu0 0
      %2034 = vmatpush1.bf16.xpose.msra.mxu0 0
      %2035 = vmatprep.subr.bf16.mxu0 0
      %2036 = vmatpush1.bf16.xpose.msra.mxu0 0
      %2037 = vmatprep.subr.bf16.mxu0 0
      %2038 = vmatpush1.bf16.xpose.msra.mxu0 0
      %2039 = vmatprep.subr.bf16.mxu0 0
      %2040 = vmatpush1.bf16.xpose.msra.mxu0 0
      %2041 = vmatprep.subr.bf16.mxu0 0
      %2042 = vmatpush1.bf16.xpose.msra.mxu0 0
      %2043 = vmatprep.subr.bf16.mxu0 0
      %2044 = vmatpush1.bf16.xpose.msra.mxu0 0
      %2045 = vmatprep.mubr.bf16.mxu0 0
      %2046 = vmatmul.mubr.bf16.gmra.mrb[0].mxu0 %v2011
      %v2047 = vpop.f32.mrb[0].mxu0
      %v2048 = vadd.f32 0.0, %v2047
      %v2049 = vpop.f32.mrb[0].mxu0
      %v2050 = vpop.f32.mrb[0].mxu0
      %v2051 = vadd.f32 0.0, %v2050
      %v2052 = vpop.f32.mrb[0].mxu0
      %2053 = vdwg.mxu0
      %v2055 = vsel %vm456, %v671, 0
      %2057 = vmatprep.subr.bf16.mxu0 0
      %2058 = vmatpush1.bf16.xpose.msra.mxu0 %v473
      %2059 = vmatprep.subr.bf16.mxu0 0
      %2060 = vmatpush1.bf16.xpose.msra.mxu0 0
      %2061 = vmatprep.subr.bf16.mxu0 0
      %2062 = vmatpush1.bf16.xpose.msra.mxu0 0
      %2063 = vmatprep.subr.bf16.mxu0 0
      %2064 = vmatpush1.bf16.xpose.msra.mxu0 0
      %2065 = vmatprep.subr.bf16.mxu0 0
      %2066 = vmatpush1.bf16.xpose.msra.mxu0 0
      %2067 = vmatprep.subr.bf16.mxu0 0
      %2068 = vmatpush1.bf16.xpose.msra.mxu0 0
      %2069 = vmatprep.subr.bf16.mxu0 0
      %2070 = vmatpush1.bf16.xpose.msra.mxu0 0
      %2071 = vmatprep.subr.bf16.mxu0 0
      %2072 = vmatpush1.bf16.xpose.msra.mxu0 0
      %2073 = vmatprep.subr.bf16.mxu0 0
      %2074 = vmatpush1.bf16.xpose.msra.mxu0 0
      %2075 = vmatprep.subr.bf16.mxu0 0
      %2076 = vmatpush1.bf16.xpose.msra.mxu0 0
      %2077 = vmatprep.subr.bf16.mxu0 0
      %2078 = vmatpush1.bf16.xpose.msra.mxu0 0
      %2079 = vmatprep.subr.bf16.mxu0 0
      %2080 = vmatpush1.bf16.xpose.msra.mxu0 0
      %2081 = vmatprep.subr.bf16.mxu0 0
      %2082 = vmatpush1.bf16.xpose.msra.mxu0 0
      %2083 = vmatprep.subr.bf16.mxu0 0
      %2084 = vmatpush1.bf16.xpose.msra.mxu0 0
      %2085 = vmatprep.subr.bf16.mxu0 0
      %2086 = vmatpush1.bf16.xpose.msra.mxu0 0
      %2087 = vmatprep.subr.bf16.mxu0 0
      %2088 = vmatpush1.bf16.xpose.msra.mxu0 0
      %2089 = vmatprep.mubr.bf16.mxu0 0
      %2090 = vmatmul.mubr.bf16.gmra.mrb[0].mxu0 %v2055
      %v2091 = vpop.f32.mrb[0].mxu0
      %v2092 = vadd.f32 0.0, %v2091
      %v2093 = vpop.f32.mrb[0].mxu0
      %v2094 = vpop.f32.mrb[0].mxu0
      %v2095 = vadd.f32 0.0, %v2094
      %v2096 = vpop.f32.mrb[0].mxu0
      %2097 = vdwg.mxu0
      %v2099 = vsel %vm456, %v672, 0
      %2101 = vmatprep.subr.bf16.mxu0 0
      %2102 = vmatpush1.bf16.xpose.msra.mxu0 %v476
      %2103 = vmatprep.subr.bf16.mxu0 0
      %2104 = vmatpush1.bf16.xpose.msra.mxu0 0
      %2105 = vmatprep.subr.bf16.mxu0 0
      %2106 = vmatpush1.bf16.xpose.msra.mxu0 0
      %2107 = vmatprep.subr.bf16.mxu0 0
      %2108 = vmatpush1.bf16.xpose.msra.mxu0 0
      %2109 = vmatprep.subr.bf16.mxu0 0
      %2110 = vmatpush1.bf16.xpose.msra.mxu0 0
      %2111 = vmatprep.subr.bf16.mxu0 0
      %2112 = vmatpush1.bf16.xpose.msra.mxu0 0
      %2113 = vmatprep.subr.bf16.mxu0 0
      %2114 = vmatpush1.bf16.xpose.msra.mxu0 0
      %2115 = vmatprep.subr.bf16.mxu0 0
      %2116 = vmatpush1.bf16.xpose.msra.mxu0 0
      %2117 = vmatprep.subr.bf16.mxu0 0
      %2118 = vmatpush1.bf16.xpose.msra.mxu0 0
      %2119 = vmatprep.subr.bf16.mxu0 0
      %2120 = vmatpush1.bf16.xpose.msra.mxu0 0
      %2121 = vmatprep.subr.bf16.mxu0 0
      %2122 = vmatpush1.bf16.xpose.msra.mxu0 0
      %2123 = vmatprep.subr.bf16.mxu0 0
      %2124 = vmatpush1.bf16.xpose.msra.mxu0 0
      %2125 = vmatprep.subr.bf16.mxu0 0
      %2126 = vmatpush1.bf16.xpose.msra.mxu0 0
      %2127 = vmatprep.subr.bf16.mxu0 0
      %2128 = vmatpush1.bf16.xpose.msra.mxu0 0
      %2129 = vmatprep.subr.bf16.mxu0 0
      %2130 = vmatpush1.bf16.xpose.msra.mxu0 0
      %2131 = vmatprep.subr.bf16.mxu0 0
      %2132 = vmatpush1.bf16.xpose.msra.mxu0 0
      %2133 = vmatprep.mubr.bf16.mxu0 0
      %2134 = vmatmul.mubr.bf16.gmra.mrb[0].mxu0 %v2099
      %v2135 = vpop.f32.mrb[0].mxu0
      %v2136 = vadd.f32 0.0, %v2135
      %v2137 = vpop.f32.mrb[0].mxu0
      %v2138 = vpop.f32.mrb[0].mxu0
      %v2139 = vadd.f32 0.0, %v2138
      %v2140 = vpop.f32.mrb[0].mxu0
      %2141 = vdwg.mxu0
      %v2143 = vsel %vm456, %v673, 0
      %2145 = vmatprep.subr.bf16.mxu0 0
      %2146 = vmatpush1.bf16.xpose.msra.mxu0 %v479
      %2147 = vmatprep.subr.bf16.mxu0 0
      %2148 = vmatpush1.bf16.xpose.msra.mxu0 0
      %2149 = vmatprep.subr.bf16.mxu0 0
      %2150 = vmatpush1.bf16.xpose.msra.mxu0 0
      %2151 = vmatprep.subr.bf16.mxu0 0
      %2152 = vmatpush1.bf16.xpose.msra.mxu0 0
      %2153 = vmatprep.subr.bf16.mxu0 0
      %2154 = vmatpush1.bf16.xpose.msra.mxu0 0
      %2155 = vmatprep.subr.bf16.mxu0 0
      %2156 = vmatpush1.bf16.xpose.msra.mxu0 0
      %2157 = vmatprep.subr.bf16.mxu0 0
      %2158 = vmatpush1.bf16.xpose.msra.mxu0 0
      %2159 = vmatprep.subr.bf16.mxu0 0
      %2160 = vmatpush1.bf16.xpose.msra.mxu0 0
      %2161 = vmatprep.subr.bf16.mxu0 0
      %2162 = vmatpush1.bf16.xpose.msra.mxu0 0
      %2163 = vmatprep.subr.bf16.mxu0 0
      %2164 = vmatpush1.bf16.xpose.msra.mxu0 0
      %2165 = vmatprep.subr.bf16.mxu0 0
      %2166 = vmatpush1.bf16.xpose.msra.mxu0 0
      %2167 = vmatprep.subr.bf16.mxu0 0
      %2168 = vmatpush1.bf16.xpose.msra.mxu0 0
      %2169 = vmatprep.subr.bf16.mxu0 0
      %2170 = vmatpush1.bf16.xpose.msra.mxu0 0
      %2171 = vmatprep.subr.bf16.mxu0 0
      %2172 = vmatpush1.bf16.xpose.msra.mxu0 0
      %2173 = vmatprep.subr.bf16.mxu0 0
      %2174 = vmatpush1.bf16.xpose.msra.mxu0 0
      %2175 = vmatprep.subr.bf16.mxu0 0
      %2176 = vmatpush1.bf16.xpose.msra.mxu0 0
      %2177 = vmatprep.mubr.bf16.mxu0 0
      %2178 = vmatmul.mubr.bf16.gmra.mrb[0].mxu0 %v2143
      %v2179 = vpop.f32.mrb[0].mxu0
      %v2180 = vadd.f32 0.0, %v2179
      %v2181 = vpop.f32.mrb[0].mxu0
      %v2182 = vpop.f32.mrb[0].mxu0
      %v2183 = vadd.f32 0.0, %v2182
      %v2184 = vpop.f32.mrb[0].mxu0
      %2185 = vdwg.mxu0
      %v2187 = vsel %vm456, %v674, 0
      %2189 = vmatprep.subr.bf16.mxu0 0
      %2190 = vmatpush1.bf16.xpose.msra.mxu0 %v482
      %2191 = vmatprep.subr.bf16.mxu0 0
      %2192 = vmatpush1.bf16.xpose.msra.mxu0 0
      %2193 = vmatprep.subr.bf16.mxu0 0
      %2194 = vmatpush1.bf16.xpose.msra.mxu0 0
      %2195 = vmatprep.subr.bf16.mxu0 0
      %2196 = vmatpush1.bf16.xpose.msra.mxu0 0
      %2197 = vmatprep.subr.bf16.mxu0 0
      %2198 = vmatpush1.bf16.xpose.msra.mxu0 0
      %2199 = vmatprep.subr.bf16.mxu0 0
      %2200 = vmatpush1.bf16.xpose.msra.mxu0 0
      %2201 = vmatprep.subr.bf16.mxu0 0
      %2202 = vmatpush1.bf16.xpose.msra.mxu0 0
      %2203 = vmatprep.subr.bf16.mxu0 0
      %2204 = vmatpush1.bf16.xpose.msra.mxu0 0
      %2205 = vmatprep.subr.bf16.mxu0 0
      %2206 = vmatpush1.bf16.xpose.msra.mxu0 0
      %2207 = vmatprep.subr.bf16.mxu0 0
      %2208 = vmatpush1.bf16.xpose.msra.mxu0 0
      %2209 = vmatprep.subr.bf16.mxu0 0
      %2210 = vmatpush1.bf16.xpose.msra.mxu0 0
      %2211 = vmatprep.subr.bf16.mxu0 0
      %2212 = vmatpush1.bf16.xpose.msra.mxu0 0
      %2213 = vmatprep.subr.bf16.mxu0 0
      %2214 = vmatpush1.bf16.xpose.msra.mxu0 0
      %2215 = vmatprep.subr.bf16.mxu0 0
      %2216 = vmatpush1.bf16.xpose.msra.mxu0 0
      %2217 = vmatprep.subr.bf16.mxu0 0
      %2218 = vmatpush1.bf16.xpose.msra.mxu0 0
      %2219 = vmatprep.subr.bf16.mxu0 0
      %2220 = vmatpush1.bf16.xpose.msra.mxu0 0
      %2221 = vmatprep.mubr.bf16.mxu0 0
      %2222 = vmatmul.mubr.bf16.gmra.mrb[0].mxu0 %v2187
      %v2223 = vpop.f32.mrb[0].mxu0
      %v2224 = vadd.f32 0.0, %v2223
      %v2225 = vpop.f32.mrb[0].mxu0
      %v2226 = vpop.f32.mrb[0].mxu0
      %v2227 = vadd.f32 0.0, %v2226
      %v2228 = vpop.f32.mrb[0].mxu0
      %2229 = vdwg.mxu0
      %v2231 = vsel %vm456, %v675, 0
      %2233 = vmatprep.subr.bf16.mxu0 0
      %2234 = vmatpush1.bf16.xpose.msra.mxu0 %v485
      %2235 = vmatprep.subr.bf16.mxu0 0
      %2236 = vmatpush1.bf16.xpose.msra.mxu0 0
      %2237 = vmatprep.subr.bf16.mxu0 0
      %2238 = vmatpush1.bf16.xpose.msra.mxu0 0
      %2239 = vmatprep.subr.bf16.mxu0 0
      %2240 = vmatpush1.bf16.xpose.msra.mxu0 0
      %2241 = vmatprep.subr.bf16.mxu0 0
      %2242 = vmatpush1.bf16.xpose.msra.mxu0 0
      %2243 = vmatprep.subr.bf16.mxu0 0
      %2244 = vmatpush1.bf16.xpose.msra.mxu0 0
      %2245 = vmatprep.subr.bf16.mxu0 0
      %2246 = vmatpush1.bf16.xpose.msra.mxu0 0
      %2247 = vmatprep.subr.bf16.mxu0 0
      %2248 = vmatpush1.bf16.xpose.msra.mxu0 0
      %2249 = vmatprep.subr.bf16.mxu0 0
      %2250 = vmatpush1.bf16.xpose.msra.mxu0 0
      %2251 = vmatprep.subr.bf16.mxu0 0
      %2252 = vmatpush1.bf16.xpose.msra.mxu0 0
      %2253 = vmatprep.subr.bf16.mxu0 0
      %2254 = vmatpush1.bf16.xpose.msra.mxu0 0
      %2255 = vmatprep.subr.bf16.mxu0 0
      %2256 = vmatpush1.bf16.xpose.msra.mxu0 0
      %2257 = vmatprep.subr.bf16.mxu0 0
      %2258 = vmatpush1.bf16.xpose.msra.mxu0 0
      %2259 = vmatprep.subr.bf16.mxu0 0
      %2260 = vmatpush1.bf16.xpose.msra.mxu0 0
      %2261 = vmatprep.subr.bf16.mxu0 0
      %2262 = vmatpush1.bf16.xpose.msra.mxu0 0
      %2263 = vmatprep.subr.bf16.mxu0 0
      %2264 = vmatpush1.bf16.xpose.msra.mxu0 0
      %2265 = vmatprep.mubr.bf16.mxu0 0
      %2266 = vmatmul.mubr.bf16.gmra.mrb[0].mxu0 %v2231
      %v2267 = vpop.f32.mrb[0].mxu0
      %v2268 = vadd.f32 0.0, %v2267
      %v2269 = vpop.f32.mrb[0].mxu0
      %v2270 = vpop.f32.mrb[0].mxu0
      %v2271 = vadd.f32 0.0, %v2270
      %v2272 = vpop.f32.mrb[0].mxu0
      %2273 = vdwg.mxu0
      %v2275 = vsel %vm456, %v676, 0
      %2277 = vmatprep.subr.bf16.mxu0 0
      %2278 = vmatpush1.bf16.xpose.msra.mxu0 %v488
      %2279 = vmatprep.subr.bf16.mxu0 0
      %2280 = vmatpush1.bf16.xpose.msra.mxu0 0
      %2281 = vmatprep.subr.bf16.mxu0 0
      %2282 = vmatpush1.bf16.xpose.msra.mxu0 0
      %2283 = vmatprep.subr.bf16.mxu0 0
      %2284 = vmatpush1.bf16.xpose.msra.mxu0 0
      %2285 = vmatprep.subr.bf16.mxu0 0
      %2286 = vmatpush1.bf16.xpose.msra.mxu0 0
      %2287 = vmatprep.subr.bf16.mxu0 0
      %2288 = vmatpush1.bf16.xpose.msra.mxu0 0
      %2289 = vmatprep.subr.bf16.mxu0 0
      %2290 = vmatpush1.bf16.xpose.msra.mxu0 0
      %2291 = vmatprep.subr.bf16.mxu0 0
      %2292 = vmatpush1.bf16.xpose.msra.mxu0 0
      %2293 = vmatprep.subr.bf16.mxu0 0
      %2294 = vmatpush1.bf16.xpose.msra.mxu0 0
      %2295 = vmatprep.subr.bf16.mxu0 0
      %2296 = vmatpush1.bf16.xpose.msra.mxu0 0
      %2297 = vmatprep.subr.bf16.mxu0 0
      %2298 = vmatpush1.bf16.xpose.msra.mxu0 0
      %2299 = vmatprep.subr.bf16.mxu0 0
      %2300 = vmatpush1.bf16.xpose.msra.mxu0 0
      %2301 = vmatprep.subr.bf16.mxu0 0
      %2302 = vmatpush1.bf16.xpose.msra.mxu0 0
      %2303 = vmatprep.subr.bf16.mxu0 0
      %2304 = vmatpush1.bf16.xpose.msra.mxu0 0
      %2305 = vmatprep.subr.bf16.mxu0 0
      %2306 = vmatpush1.bf16.xpose.msra.mxu0 0
      %2307 = vmatprep.subr.bf16.mxu0 0
      %2308 = vmatpush1.bf16.xpose.msra.mxu0 0
      %2309 = vmatprep.mubr.bf16.mxu0 0
      %2310 = vmatmul.mubr.bf16.gmra.mrb[0].mxu0 %v2275
      %v2311 = vpop.f32.mrb[0].mxu0
      %v2312 = vadd.f32 0.0, %v2311
      %v2313 = vpop.f32.mrb[0].mxu0
      %v2314 = vpop.f32.mrb[0].mxu0
      %v2315 = vadd.f32 0.0, %v2314
      %v2316 = vpop.f32.mrb[0].mxu0
      %2317 = vdwg.mxu0
      %v2319 = vsel %vm456, %v677, 0
      %2321 = vmatprep.subr.bf16.mxu0 0
      %2322 = vmatpush1.bf16.xpose.msra.mxu0 %v491
      %2323 = vmatprep.subr.bf16.mxu0 0
      %2324 = vmatpush1.bf16.xpose.msra.mxu0 0
      %2325 = vmatprep.subr.bf16.mxu0 0
      %2326 = vmatpush1.bf16.xpose.msra.mxu0 0
      %2327 = vmatprep.subr.bf16.mxu0 0
      %2328 = vmatpush1.bf16.xpose.msra.mxu0 0
      %2329 = vmatprep.subr.bf16.mxu0 0
      %2330 = vmatpush1.bf16.xpose.msra.mxu0 0
      %2331 = vmatprep.subr.bf16.mxu0 0
      %2332 = vmatpush1.bf16.xpose.msra.mxu0 0
      %2333 = vmatprep.subr.bf16.mxu0 0
      %2334 = vmatpush1.bf16.xpose.msra.mxu0 0
      %2335 = vmatprep.subr.bf16.mxu0 0
      %2336 = vmatpush1.bf16.xpose.msra.mxu0 0
      %2337 = vmatprep.subr.bf16.mxu0 0
      %2338 = vmatpush1.bf16.xpose.msra.mxu0 0
      %2339 = vmatprep.subr.bf16.mxu0 0
      %2340 = vmatpush1.bf16.xpose.msra.mxu0 0
      %2341 = vmatprep.subr.bf16.mxu0 0
      %2342 = vmatpush1.bf16.xpose.msra.mxu0 0
      %2343 = vmatprep.subr.bf16.mxu0 0
      %2344 = vmatpush1.bf16.xpose.msra.mxu0 0
      %2345 = vmatprep.subr.bf16.mxu0 0
      %2346 = vmatpush1.bf16.xpose.msra.mxu0 0
      %2347 = vmatprep.subr.bf16.mxu0 0
      %2348 = vmatpush1.bf16.xpose.msra.mxu0 0
      %2349 = vmatprep.subr.bf16.mxu0 0
      %2350 = vmatpush1.bf16.xpose.msra.mxu0 0
      %2351 = vmatprep.subr.bf16.mxu0 0
      %2352 = vmatpush1.bf16.xpose.msra.mxu0 0
      %2353 = vmatprep.mubr.bf16.mxu0 0
      %2354 = vmatmul.mubr.bf16.gmra.mrb[0].mxu0 %v2319
      %v2355 = vpop.f32.mrb[0].mxu0
      %v2356 = vadd.f32 0.0, %v2355
      %v2357 = vpop.f32.mrb[0].mxu0
      %v2358 = vpop.f32.mrb[0].mxu0
      %v2359 = vadd.f32 0.0, %v2358
      %v2360 = vpop.f32.mrb[0].mxu0
      %2361 = vdwg.mxu0
      %v2363 = vsel %vm456, %v678, 0
      %2365 = vmatprep.subr.bf16.mxu0 0
      %2366 = vmatpush1.bf16.xpose.msra.mxu0 %v494
      %2367 = vmatprep.subr.bf16.mxu0 0
      %2368 = vmatpush1.bf16.xpose.msra.mxu0 0
      %2369 = vmatprep.subr.bf16.mxu0 0
      %2370 = vmatpush1.bf16.xpose.msra.mxu0 0
      %2371 = vmatprep.subr.bf16.mxu0 0
      %2372 = vmatpush1.bf16.xpose.msra.mxu0 0
      %2373 = vmatprep.subr.bf16.mxu0 0
      %2374 = vmatpush1.bf16.xpose.msra.mxu0 0
      %2375 = vmatprep.subr.bf16.mxu0 0
      %2376 = vmatpush1.bf16.xpose.msra.mxu0 0
      %2377 = vmatprep.subr.bf16.mxu0 0
      %2378 = vmatpush1.bf16.xpose.msra.mxu0 0
      %2379 = vmatprep.subr.bf16.mxu0 0
      %2380 = vmatpush1.bf16.xpose.msra.mxu0 0
      %2381 = vmatprep.subr.bf16.mxu0 0
      %2382 = vmatpush1.bf16.xpose.msra.mxu0 0
      %2383 = vmatprep.subr.bf16.mxu0 0
      %2384 = vmatpush1.bf16.xpose.msra.mxu0 0
      %2385 = vmatprep.subr.bf16.mxu0 0
      %2386 = vmatpush1.bf16.xpose.msra.mxu0 0
      %2387 = vmatprep.subr.bf16.mxu0 0
      %2388 = vmatpush1.bf16.xpose.msra.mxu0 0
      %2389 = vmatprep.subr.bf16.mxu0 0
      %2390 = vmatpush1.bf16.xpose.msra.mxu0 0
      %2391 = vmatprep.subr.bf16.mxu0 0
      %2392 = vmatpush1.bf16.xpose.msra.mxu0 0
      %2393 = vmatprep.subr.bf16.mxu0 0
      %2394 = vmatpush1.bf16.xpose.msra.mxu0 0
      %2395 = vmatprep.subr.bf16.mxu0 0
      %2396 = vmatpush1.bf16.xpose.msra.mxu0 0
      %2397 = vmatprep.mubr.bf16.mxu0 0
      %2398 = vmatmul.mubr.bf16.gmra.mrb[0].mxu0 %v2363
      %v2399 = vpop.f32.mrb[0].mxu0
      %v2400 = vadd.f32 0.0, %v2399
      %v2401 = vpop.f32.mrb[0].mxu0
      %v2402 = vpop.f32.mrb[0].mxu0
      %v2403 = vadd.f32 0.0, %v2402
      %v2404 = vpop.f32.mrb[0].mxu0
      %2405 = vdwg.mxu0
      %v2407 = vsel %vm456, %v679, 0
      %2409 = vmatprep.subr.bf16.mxu0 0
      %2410 = vmatpush1.bf16.xpose.msra.mxu0 %v497
      %2411 = vmatprep.subr.bf16.mxu0 0
      %2412 = vmatpush1.bf16.xpose.msra.mxu0 0
      %2413 = vmatprep.subr.bf16.mxu0 0
      %2414 = vmatpush1.bf16.xpose.msra.mxu0 0
      %2415 = vmatprep.subr.bf16.mxu0 0
      %2416 = vmatpush1.bf16.xpose.msra.mxu0 0
      %2417 = vmatprep.subr.bf16.mxu0 0
      %2418 = vmatpush1.bf16.xpose.msra.mxu0 0
      %2419 = vmatprep.subr.bf16.mxu0 0
      %2420 = vmatpush1.bf16.xpose.msra.mxu0 0
      %2421 = vmatprep.subr.bf16.mxu0 0
      %2422 = vmatpush1.bf16.xpose.msra.mxu0 0
      %2423 = vmatprep.subr.bf16.mxu0 0
      %2424 = vmatpush1.bf16.xpose.msra.mxu0 0
      %2425 = vmatprep.subr.bf16.mxu0 0
      %2426 = vmatpush1.bf16.xpose.msra.mxu0 0
      %2427 = vmatprep.subr.bf16.mxu0 0
      %2428 = vmatpush1.bf16.xpose.msra.mxu0 0
      %2429 = vmatprep.subr.bf16.mxu0 0
      %2430 = vmatpush1.bf16.xpose.msra.mxu0 0
      %2431 = vmatprep.subr.bf16.mxu0 0
      %2432 = vmatpush1.bf16.xpose.msra.mxu0 0
      %2433 = vmatprep.subr.bf16.mxu0 0
      %2434 = vmatpush1.bf16.xpose.msra.mxu0 0
      %2435 = vmatprep.subr.bf16.mxu0 0
      %2436 = vmatpush1.bf16.xpose.msra.mxu0 0
      %2437 = vmatprep.subr.bf16.mxu0 0
      %2438 = vmatpush1.bf16.xpose.msra.mxu0 0
      %2439 = vmatprep.subr.bf16.mxu0 0
      %2440 = vmatpush1.bf16.xpose.msra.mxu0 0
      %2441 = vmatprep.mubr.bf16.mxu0 0
      %2442 = vmatmul.mubr.bf16.gmra.mrb[0].mxu0 %v2407
      %v2443 = vpop.f32.mrb[0].mxu0
      %v2444 = vadd.f32 0.0, %v2443
      %v2445 = vpop.f32.mrb[0].mxu0
      %v2446 = vpop.f32.mrb[0].mxu0
      %v2447 = vadd.f32 0.0, %v2446
      %v2448 = vpop.f32.mrb[0].mxu0
      %2449 = vdwg.mxu0
      %v2451 = vsel %vm456, %v680, 0
      %2453 = vmatprep.subr.bf16.mxu0 0
      %2454 = vmatpush1.bf16.xpose.msra.mxu0 %v500
      %2455 = vmatprep.subr.bf16.mxu0 0
      %2456 = vmatpush1.bf16.xpose.msra.mxu0 0
      %2457 = vmatprep.subr.bf16.mxu0 0
      %2458 = vmatpush1.bf16.xpose.msra.mxu0 0
      %2459 = vmatprep.subr.bf16.mxu0 0
      %2460 = vmatpush1.bf16.xpose.msra.mxu0 0
      %2461 = vmatprep.subr.bf16.mxu0 0
      %2462 = vmatpush1.bf16.xpose.msra.mxu0 0
      %2463 = vmatprep.subr.bf16.mxu0 0
      %2464 = vmatpush1.bf16.xpose.msra.mxu0 0
      %2465 = vmatprep.subr.bf16.mxu0 0
      %2466 = vmatpush1.bf16.xpose.msra.mxu0 0
      %2467 = vmatprep.subr.bf16.mxu0 0
      %2468 = vmatpush1.bf16.xpose.msra.mxu0 0
      %2469 = vmatprep.subr.bf16.mxu0 0
      %2470 = vmatpush1.bf16.xpose.msra.mxu0 0
      %2471 = vmatprep.subr.bf16.mxu0 0
      %2472 = vmatpush1.bf16.xpose.msra.mxu0 0
      %2473 = vmatprep.subr.bf16.mxu0 0
      %2474 = vmatpush1.bf16.xpose.msra.mxu0 0
      %2475 = vmatprep.subr.bf16.mxu0 0
      %2476 = vmatpush1.bf16.xpose.msra.mxu0 0
      %2477 = vmatprep.subr.bf16.mxu0 0
      %2478 = vmatpush1.bf16.xpose.msra.mxu0 0
      %2479 = vmatprep.subr.bf16.mxu0 0
      %2480 = vmatpush1.bf16.xpose.msra.mxu0 0
      %2481 = vmatprep.subr.bf16.mxu0 0
      %2482 = vmatpush1.bf16.xpose.msra.mxu0 0
      %2483 = vmatprep.subr.bf16.mxu0 0
      %2484 = vmatpush1.bf16.xpose.msra.mxu0 0
      %2485 = vmatprep.mubr.bf16.mxu0 0
      %2486 = vmatmul.mubr.bf16.gmra.mrb[0].mxu0 %v2451
      %v2487 = vpop.f32.mrb[0].mxu0
      %v2488 = vadd.f32 0.0, %v2487
      %v2489 = vpop.f32.mrb[0].mxu0
      %v2490 = vpop.f32.mrb[0].mxu0
      %v2491 = vadd.f32 0.0, %v2490
      %v2492 = vpop.f32.mrb[0].mxu0
      %2493 = vdwg.mxu0
      %v2495 = vsel %vm456, %v681, 0
      %2497 = vmatprep.subr.bf16.mxu0 0
      %2498 = vmatpush1.bf16.xpose.msra.mxu0 %v503
      %2499 = vmatprep.subr.bf16.mxu0 0
      %2500 = vmatpush1.bf16.xpose.msra.mxu0 0
      %2501 = vmatprep.subr.bf16.mxu0 0
      %2502 = vmatpush1.bf16.xpose.msra.mxu0 0
      %2503 = vmatprep.subr.bf16.mxu0 0
      %2504 = vmatpush1.bf16.xpose.msra.mxu0 0
      %2505 = vmatprep.subr.bf16.mxu0 0
      %2506 = vmatpush1.bf16.xpose.msra.mxu0 0
      %2507 = vmatprep.subr.bf16.mxu0 0
      %2508 = vmatpush1.bf16.xpose.msra.mxu0 0
      %2509 = vmatprep.subr.bf16.mxu0 0
      %2510 = vmatpush1.bf16.xpose.msra.mxu0 0
      %2511 = vmatprep.subr.bf16.mxu0 0
      %2512 = vmatpush1.bf16.xpose.msra.mxu0 0
      %2513 = vmatprep.subr.bf16.mxu0 0
      %2514 = vmatpush1.bf16.xpose.msra.mxu0 0
      %2515 = vmatprep.subr.bf16.mxu0 0
      %2516 = vmatpush1.bf16.xpose.msra.mxu0 0
      %2517 = vmatprep.subr.bf16.mxu0 0
      %2518 = vmatpush1.bf16.xpose.msra.mxu0 0
      %2519 = vmatprep.subr.bf16.mxu0 0
      %2520 = vmatpush1.bf16.xpose.msra.mxu0 0
      %2521 = vmatprep.subr.bf16.mxu0 0
      %2522 = vmatpush1.bf16.xpose.msra.mxu0 0
      %2523 = vmatprep.subr.bf16.mxu0 0
      %2524 = vmatpush1.bf16.xpose.msra.mxu0 0
      %2525 = vmatprep.subr.bf16.mxu0 0
      %2526 = vmatpush1.bf16.xpose.msra.mxu0 0
      %2527 = vmatprep.subr.bf16.mxu0 0
      %2528 = vmatpush1.bf16.xpose.msra.mxu0 0
      %2529 = vmatprep.mubr.bf16.mxu0 0
      %2530 = vmatmul.mubr.bf16.gmra.mrb[0].mxu0 %v2495
      %v2531 = vpop.f32.mrb[0].mxu0
      %v2532 = vadd.f32 0.0, %v2531
      %v2533 = vpop.f32.mrb[0].mxu0
      %v2534 = vpop.f32.mrb[0].mxu0
      %v2535 = vadd.f32 0.0, %v2534
      %v2536 = vpop.f32.mrb[0].mxu0
      %2537 = vdwg.mxu0
      %v2538 = vlaneseq
      %v2539 = vshrl.u32 %v2538, 7
      %v2540 = vadd.s32 %v2539, 8
      %v2541 = vlaneseq
      %v2542 = vand.u32 %v2541, 127
      %v2543 = vstv %s312
      %v2544 = vadd.s32 %v2539, %v2543
      %v2545 = vadd.s32 %v2540, %v2543
      %vm2546 = vcmp.eq.s32.totalorder %v2542, %v2544
      %vm2547 = vcmp.eq.s32.totalorder %v2542, %v2545
      %v2548 = vsel %vm2546, 1, 0
      %v2549 = vsel %vm2547, 1, 0
      %vm2550 = vcmp.eq.s32.totalorder %v2548, 1
      %vm2551 = vcmp.eq.s32.totalorder %v2549, 1
      %v2552 = vsel %vm2550, -inf, %v1048
      %v2553 = vsel %vm2551, -inf, %v1051
      %v2554 = vsel %vm2550, -inf, %v1100
      %v2555 = vsel %vm2551, -inf, %v1103
      %v2556 = vsel %vm2550, -inf, %v1152
      %v2557 = vsel %vm2551, -inf, %v1155
      %v2558 = vsel %vm2550, -inf, %v1204
      %v2559 = vsel %vm2551, -inf, %v1207
      %v2560 = vsel %vm2550, -inf, %v1256
      %v2561 = vsel %vm2551, -inf, %v1259
      %v2562 = vsel %vm2550, -inf, %v1308
      %v2563 = vsel %vm2551, -inf, %v1311
      %v2564 = vsel %vm2550, -inf, %v1360
      %v2565 = vsel %vm2551, -inf, %v1363
      %v2566 = vsel %vm2550, -inf, %v1412
      %v2567 = vsel %vm2551, -inf, %v1415
      %v2568 = vsel %vm2550, -inf, %v1464
      %v2569 = vsel %vm2551, -inf, %v1467
      %v2570 = vsel %vm2550, -inf, %v1516
      %v2571 = vsel %vm2551, -inf, %v1519
      %v2572 = vsel %vm2550, -inf, %v1568
      %v2573 = vsel %vm2551, -inf, %v1571
      %v2574 = vsel %vm2550, -inf, %v1620
      %v2575 = vsel %vm2551, -inf, %v1623
      %v2576 = vsel %vm2550, -inf, %v1672
      %v2577 = vsel %vm2551, -inf, %v1675
      %v2578 = vsel %vm2550, -inf, %v1724
      %v2579 = vsel %vm2551, -inf, %v1727
      %v2580 = vsel %vm2550, -inf, %v1776
      %v2581 = vsel %vm2551, -inf, %v1779
      %v2582 = vsel %vm2550, -inf, %v1828
      %v2583 = vsel %vm2551, -inf, %v1831
      %vm2584 = vcmask 130048
      %v2585 = vsel %vm2584, %v2552, -inf
      %2586 = vmax.xlane.f32.xlu0 %v2585
      %v2587 = vpop.xlane.xlu0 %2586
      %v2588 = vsel %vm2584, %v2553, -inf
      %2589 = vmax.xlane.f32.xlu0 %v2588
      %v2590 = vpop.xlane.xlu0 %2589
      %v2591 = vsel %vm2584, %v2554, -inf
      %2592 = vmax.xlane.f32.xlu0 %v2591
      %v2593 = vpop.xlane.xlu0 %2592
      %v2594 = vsel %vm2584, %v2555, -inf
      %2595 = vmax.xlane.f32.xlu0 %v2594
      %v2596 = vpop.xlane.xlu0 %2595
      %v2597 = vsel %vm2584, %v2556, -inf
      %2598 = vmax.xlane.f32.xlu0 %v2597
      %v2599 = vpop.xlane.xlu0 %2598
      %v2600 = vsel %vm2584, %v2557, -inf
      %2601 = vmax.xlane.f32.xlu0 %v2600
      %v2602 = vpop.xlane.xlu0 %2601
      %v2603 = vsel %vm2584, %v2558, -inf
      %2604 = vmax.xlane.f32.xlu0 %v2603
      %v2605 = vpop.xlane.xlu0 %2604
      %v2606 = vsel %vm2584, %v2559, -inf
      %2607 = vmax.xlane.f32.xlu0 %v2606
      %v2608 = vpop.xlane.xlu0 %2607
      %v2609 = vsel %vm2584, %v2560, -inf
      %2610 = vmax.xlane.f32.xlu0 %v2609
      %v2611 = vpop.xlane.xlu0 %2610
      %v2612 = vsel %vm2584, %v2561, -inf
      %2613 = vmax.xlane.f32.xlu0 %v2612
      %v2614 = vpop.xlane.xlu0 %2613
      %v2615 = vsel %vm2584, %v2562, -inf
      %2616 = vmax.xlane.f32.xlu0 %v2615
      %v2617 = vpop.xlane.xlu0 %2616
      %v2618 = vsel %vm2584, %v2563, -inf
      %2619 = vmax.xlane.f32.xlu0 %v2618
      %v2620 = vpop.xlane.xlu0 %2619
      %v2621 = vsel %vm2584, %v2564, -inf
      %2622 = vmax.xlane.f32.xlu0 %v2621
      %v2623 = vpop.xlane.xlu0 %2622
      %v2624 = vsel %vm2584, %v2565, -inf
      %2625 = vmax.xlane.f32.xlu0 %v2624
      %v2626 = vpop.xlane.xlu0 %2625
      %v2627 = vsel %vm2584, %v2566, -inf
      %2628 = vmax.xlane.f32.xlu0 %v2627
      %v2629 = vpop.xlane.xlu0 %2628
      %v2630 = vsel %vm2584, %v2567, -inf
      %2631 = vmax.xlane.f32.xlu0 %v2630
      %v2632 = vpop.xlane.xlu0 %2631
      %v2633 = vsel %vm2584, %v2568, -inf
      %2634 = vmax.xlane.f32.xlu0 %v2633
      %v2635 = vpop.xlane.xlu0 %2634
      %v2636 = vsel %vm2584, %v2569, -inf
      %2637 = vmax.xlane.f32.xlu0 %v2636
      %v2638 = vpop.xlane.xlu0 %2637
      %v2639 = vsel %vm2584, %v2570, -inf
      %2640 = vmax.xlane.f32.xlu0 %v2639
      %v2641 = vpop.xlane.xlu0 %2640
      %v2642 = vsel %vm2584, %v2571, -inf
      %2643 = vmax.xlane.f32.xlu0 %v2642
      %v2644 = vpop.xlane.xlu0 %2643
      %v2645 = vsel %vm2584, %v2572, -inf
      %2646 = vmax.xlane.f32.xlu0 %v2645
      %v2647 = vpop.xlane.xlu0 %2646
      %v2648 = vsel %vm2584, %v2573, -inf
      %2649 = vmax.xlane.f32.xlu0 %v2648
      %v2650 = vpop.xlane.xlu0 %2649
      %v2651 = vsel %vm2584, %v2574, -inf
      %2652 = vmax.xlane.f32.xlu0 %v2651
      %v2653 = vpop.xlane.xlu0 %2652
      %v2654 = vsel %vm2584, %v2575, -inf
      %2655 = vmax.xlane.f32.xlu0 %v2654
      %v2656 = vpop.xlane.xlu0 %2655
      %v2657 = vsel %vm2584, %v2576, -inf
      %2658 = vmax.xlane.f32.xlu0 %v2657
      %v2659 = vpop.xlane.xlu0 %2658
      %v2660 = vsel %vm2584, %v2577, -inf
      %2661 = vmax.xlane.f32.xlu0 %v2660
      %v2662 = vpop.xlane.xlu0 %2661
      %v2663 = vsel %vm2584, %v2578, -inf
      %2664 = vmax.xlane.f32.xlu0 %v2663
      %v2665 = vpop.xlane.xlu0 %2664
      %v2666 = vsel %vm2584, %v2579, -inf
      %2667 = vmax.xlane.f32.xlu0 %v2666
      %v2668 = vpop.xlane.xlu0 %2667
      %v2669 = vsel %vm2584, %v2580, -inf
      %2670 = vmax.xlane.f32.xlu0 %v2669
      %v2671 = vpop.xlane.xlu0 %2670
      %v2672 = vsel %vm2584, %v2581, -inf
      %2673 = vmax.xlane.f32.xlu0 %v2672
      %v2674 = vpop.xlane.xlu0 %2673
      %v2675 = vsel %vm2584, %v2582, -inf
      %2676 = vmax.xlane.f32.xlu0 %v2675
      %v2677 = vpop.xlane.xlu0 %2676
      %v2678 = vsel %vm2584, %v2583, -inf
      %2679 = vmax.xlane.f32.xlu0 %v2678
      %v2680 = vpop.xlane.xlu0 %2679
      %v2681 = vsel %vm2584, %v1872, -inf
      %2682 = vmax.xlane.f32.xlu0 %v2681
      %v2683 = vpop.xlane.xlu0 %2682
      %v2684 = vsel %vm2584, %v1875, -inf
      %2685 = vmax.xlane.f32.xlu0 %v2684
      %v2686 = vpop.xlane.xlu0 %2685
      %v2687 = vsel %vm2584, %v1916, -inf
      %2688 = vmax.xlane.f32.xlu0 %v2687
      %v2689 = vpop.xlane.xlu0 %2688
      %v2690 = vsel %vm2584, %v1919, -inf
      %2691 = vmax.xlane.f32.xlu0 %v2690
      %v2692 = vpop.xlane.xlu0 %2691
      %v2693 = vsel %vm2584, %v1960, -inf
      %2694 = vmax.xlane.f32.xlu0 %v2693
      %v2695 = vpop.xlane.xlu0 %2694
      %v2696 = vsel %vm2584, %v1963, -inf
      %2697 = vmax.xlane.f32.xlu0 %v2696
      %v2698 = vpop.xlane.xlu0 %2697
      %v2699 = vsel %vm2584, %v2004, -inf
      %2700 = vmax.xlane.f32.xlu0 %v2699
      %v2701 = vpop.xlane.xlu0 %2700
      %v2702 = vsel %vm2584, %v2007, -inf
      %2703 = vmax.xlane.f32.xlu0 %v2702
      %v2704 = vpop.xlane.xlu0 %2703
      %v2705 = vsel %vm2584, %v2048, -inf
      %2706 = vmax.xlane.f32.xlu0 %v2705
      %v2707 = vpop.xlane.xlu0 %2706
      %v2708 = vsel %vm2584, %v2051, -inf
      %2709 = vmax.xlane.f32.xlu0 %v2708
      %v2710 = vpop.xlane.xlu0 %2709
      %v2711 = vsel %vm2584, %v2092, -inf
      %2712 = vmax.xlane.f32.xlu0 %v2711
      %v2713 = vpop.xlane.xlu0 %2712
      %v2714 = vsel %vm2584, %v2095, -inf
      %2715 = vmax.xlane.f32.xlu0 %v2714
      %v2716 = vpop.xlane.xlu0 %2715
      %v2717 = vsel %vm2584, %v2136, -inf
      %2718 = vmax.xlane.f32.xlu0 %v2717
      %v2719 = vpop.xlane.xlu0 %2718
      %v2720 = vsel %vm2584, %v2139, -inf
      %2721 = vmax.xlane.f32.xlu0 %v2720
      %v2722 = vpop.xlane.xlu0 %2721
      %v2723 = vsel %vm2584, %v2180, -inf
      %2724 = vmax.xlane.f32.xlu0 %v2723
      %v2725 = vpop.xlane.xlu0 %2724
      %v2726 = vsel %vm2584, %v2183, -inf
      %2727 = vmax.xlane.f32.xlu0 %v2726
      %v2728 = vpop.xlane.xlu0 %2727
      %v2729 = vsel %vm2584, %v2224, -inf
      %2730 = vmax.xlane.f32.xlu0 %v2729
      %v2731 = vpop.xlane.xlu0 %2730
      %v2732 = vsel %vm2584, %v2227, -inf
      %2733 = vmax.xlane.f32.xlu0 %v2732
      %v2734 = vpop.xlane.xlu0 %2733
      %v2735 = vsel %vm2584, %v2268, -inf
      %2736 = vmax.xlane.f32.xlu0 %v2735
      %v2737 = vpop.xlane.xlu0 %2736
      %v2738 = vsel %vm2584, %v2271, -inf
      %2739 = vmax.xlane.f32.xlu0 %v2738
      %v2740 = vpop.xlane.xlu0 %2739
      %v2741 = vsel %vm2584, %v2312, -inf
      %2742 = vmax.xlane.f32.xlu0 %v2741
      %v2743 = vpop.xlane.xlu0 %2742
      %v2744 = vsel %vm2584, %v2315, -inf
      %2745 = vmax.xlane.f32.xlu0 %v2744
      %v2746 = vpop.xlane.xlu0 %2745
      %v2747 = vsel %vm2584, %v2356, -inf
      %2748 = vmax.xlane.f32.xlu0 %v2747
      %v2749 = vpop.xlane.xlu0 %2748
      %v2750 = vsel %vm2584, %v2359, -inf
      %2751 = vmax.xlane.f32.xlu0 %v2750
      %v2752 = vpop.xlane.xlu0 %2751
      %v2753 = vsel %vm2584, %v2400, -inf
      %2754 = vmax.xlane.f32.xlu0 %v2753
      %v2755 = vpop.xlane.xlu0 %2754
      %v2756 = vsel %vm2584, %v2403, -inf
      %2757 = vmax.xlane.f32.xlu0 %v2756
      %v2758 = vpop.xlane.xlu0 %2757
      %v2759 = vsel %vm2584, %v2444, -inf
      %2760 = vmax.xlane.f32.xlu0 %v2759
      %v2761 = vpop.xlane.xlu0 %2760
      %v2762 = vsel %vm2584, %v2447, -inf
      %2763 = vmax.xlane.f32.xlu0 %v2762
      %v2764 = vpop.xlane.xlu0 %2763
      %v2765 = vsel %vm2584, %v2488, -inf
      %2766 = vmax.xlane.f32.xlu0 %v2765
      %v2767 = vpop.xlane.xlu0 %2766
      %v2768 = vsel %vm2584, %v2491, -inf
      %2769 = vmax.xlane.f32.xlu0 %v2768
      %v2770 = vpop.xlane.xlu0 %2769
      %v2771 = vsel %vm2584, %v2532, -inf
      %2772 = vmax.xlane.f32.xlu0 %v2771
      %v2773 = vpop.xlane.xlu0 %2772
      %v2774 = vsel %vm2584, %v2535, -inf
      %2775 = vmax.xlane.f32.xlu0 %v2774
      %v2776 = vpop.xlane.xlu0 %2775
      %v2809 = vlaneseq
      %v2810 = vshrl.u32 %v2809, 7
      %v2811 = vsub.s32 %v2542, %v2810
      %v2812 = vrot.slane %v2587, %v2811
      %v2813 = vadd.s32 %v2542, 4294967288
      %v2814 = vlaneseq
      %v2815 = vshrl.u32 %v2814, 7
      %v2816 = vsub.s32 %v2813, %v2815
      %v2817 = vrot.slane %v2590, %v2816
      %vm2818 = vcmask 130112
      %v2819 = vsel %vm2818, %v2817, %v2812
      %v2820 = vlaneseq
      %v2821 = vshrl.u32 %v2820, 7
      %v2822 = vsub.s32 %v2542, %v2821
      %v2823 = vrot.slane %v2593, %v2822
      %v2824 = vlaneseq
      %v2825 = vshrl.u32 %v2824, 7
      %v2826 = vsub.s32 %v2813, %v2825
      %v2827 = vrot.slane %v2596, %v2826
      %v2828 = vsel %vm2818, %v2827, %v2823
      %v2829 = vlaneseq
      %v2830 = vshrl.u32 %v2829, 7
      %v2831 = vsub.s32 %v2542, %v2830
      %v2832 = vrot.slane %v2599, %v2831
      %v2833 = vlaneseq
      %v2834 = vshrl.u32 %v2833, 7
      %v2835 = vsub.s32 %v2813, %v2834
      %v2836 = vrot.slane %v2602, %v2835
      %v2837 = vsel %vm2818, %v2836, %v2832
      %v2838 = vlaneseq
      %v2839 = vshrl.u32 %v2838, 7
      %v2840 = vsub.s32 %v2542, %v2839
      %v2841 = vrot.slane %v2605, %v2840
      %v2842 = vlaneseq
      %v2843 = vshrl.u32 %v2842, 7
      %v2844 = vsub.s32 %v2813, %v2843
      %v2845 = vrot.slane %v2608, %v2844
      %v2846 = vsel %vm2818, %v2845, %v2841
      %v2847 = vlaneseq
      %v2848 = vshrl.u32 %v2847, 7
      %v2849 = vsub.s32 %v2542, %v2848
      %v2850 = vrot.slane %v2611, %v2849
      %v2851 = vlaneseq
      %v2852 = vshrl.u32 %v2851, 7
      %v2853 = vsub.s32 %v2813, %v2852
      %v2854 = vrot.slane %v2614, %v2853
      %v2855 = vsel %vm2818, %v2854, %v2850
      %v2856 = vlaneseq
      %v2857 = vshrl.u32 %v2856, 7
      %v2858 = vsub.s32 %v2542, %v2857
      %v2859 = vrot.slane %v2617, %v2858
      %v2860 = vlaneseq
      %v2861 = vshrl.u32 %v2860, 7
      %v2862 = vsub.s32 %v2813, %v2861
      %v2863 = vrot.slane %v2620, %v2862
      %v2864 = vsel %vm2818, %v2863, %v2859
      %v2865 = vlaneseq
      %v2866 = vshrl.u32 %v2865, 7
      %v2867 = vsub.s32 %v2542, %v2866
      %v2868 = vrot.slane %v2623, %v2867
      %v2869 = vlaneseq
      %v2870 = vshrl.u32 %v2869, 7
      %v2871 = vsub.s32 %v2813, %v2870
      %v2872 = vrot.slane %v2626, %v2871
      %v2873 = vsel %vm2818, %v2872, %v2868
      %v2874 = vlaneseq
      %v2875 = vshrl.u32 %v2874, 7
      %v2876 = vsub.s32 %v2542, %v2875
      %v2877 = vrot.slane %v2629, %v2876
      %v2878 = vlaneseq
      %v2879 = vshrl.u32 %v2878, 7
      %v2880 = vsub.s32 %v2813, %v2879
      %v2881 = vrot.slane %v2632, %v2880
      %v2882 = vsel %vm2818, %v2881, %v2877
      %v2883 = vlaneseq
      %v2884 = vshrl.u32 %v2883, 7
      %v2885 = vsub.s32 %v2542, %v2884
      %v2886 = vrot.slane %v2635, %v2885
      %v2887 = vlaneseq
      %v2888 = vshrl.u32 %v2887, 7
      %v2889 = vsub.s32 %v2813, %v2888
      %v2890 = vrot.slane %v2638, %v2889
      %v2891 = vsel %vm2818, %v2890, %v2886
      %v2892 = vlaneseq
      %v2893 = vshrl.u32 %v2892, 7
      %v2894 = vsub.s32 %v2542, %v2893
      %v2895 = vrot.slane %v2641, %v2894
      %v2896 = vlaneseq
      %v2897 = vshrl.u32 %v2896, 7
      %v2898 = vsub.s32 %v2813, %v2897
      %v2899 = vrot.slane %v2644, %v2898
      %v2900 = vsel %vm2818, %v2899, %v2895
      %v2901 = vlaneseq
      %v2902 = vshrl.u32 %v2901, 7
      %v2903 = vsub.s32 %v2542, %v2902
      %v2904 = vrot.slane %v2647, %v2903
      %v2905 = vlaneseq
      %v2906 = vshrl.u32 %v2905, 7
      %v2907 = vsub.s32 %v2813, %v2906
      %v2908 = vrot.slane %v2650, %v2907
      %v2909 = vsel %vm2818, %v2908, %v2904
      %v2910 = vlaneseq
      %v2911 = vshrl.u32 %v2910, 7
      %v2912 = vsub.s32 %v2542, %v2911
      %v2913 = vrot.slane %v2653, %v2912
      %v2914 = vlaneseq
      %v2915 = vshrl.u32 %v2914, 7
      %v2916 = vsub.s32 %v2813, %v2915
      %v2917 = vrot.slane %v2656, %v2916
      %v2918 = vsel %vm2818, %v2917, %v2913
      %v2919 = vlaneseq
      %v2920 = vshrl.u32 %v2919, 7
      %v2921 = vsub.s32 %v2542, %v2920
      %v2922 = vrot.slane %v2659, %v2921
      %v2923 = vlaneseq
      %v2924 = vshrl.u32 %v2923, 7
      %v2925 = vsub.s32 %v2813, %v2924
      %v2926 = vrot.slane %v2662, %v2925
      %v2927 = vsel %vm2818, %v2926, %v2922
      %v2928 = vlaneseq
      %v2929 = vshrl.u32 %v2928, 7
      %v2930 = vsub.s32 %v2542, %v2929
      %v2931 = vrot.slane %v2665, %v2930
      %v2932 = vlaneseq
      %v2933 = vshrl.u32 %v2932, 7
      %v2934 = vsub.s32 %v2813, %v2933
      %v2935 = vrot.slane %v2668, %v2934
      %v2936 = vsel %vm2818, %v2935, %v2931
      %v2937 = vlaneseq
      %v2938 = vshrl.u32 %v2937, 7
      %v2939 = vsub.s32 %v2542, %v2938
      %v2940 = vrot.slane %v2671, %v2939
      %v2941 = vlaneseq
      %v2942 = vshrl.u32 %v2941, 7
      %v2943 = vsub.s32 %v2813, %v2942
      %v2944 = vrot.slane %v2674, %v2943
      %v2945 = vsel %vm2818, %v2944, %v2940
      %v2946 = vlaneseq
      %v2947 = vshrl.u32 %v2946, 7
      %v2948 = vsub.s32 %v2542, %v2947
      %v2949 = vrot.slane %v2677, %v2948
      %v2950 = vlaneseq
      %v2951 = vshrl.u32 %v2950, 7
      %v2952 = vsub.s32 %v2813, %v2951
      %v2953 = vrot.slane %v2680, %v2952
      %v2954 = vsel %vm2818, %v2953, %v2949
      %vm2955 = vcmask 1041409
      %v2956 = vsel %vm2955, %v2828, %v2819
      %vm2957 = vcmask 1042434
      %v2958 = vsel %vm2957, %v2837, %v2956
      %vm2959 = vcmask 1043459
      %v2960 = vsel %vm2959, %v2846, %v2958
      %vm2961 = vcmask 1044484
      %v2962 = vsel %vm2961, %v2855, %v2960
      %vm2963 = vcmask 1045509
      %v2964 = vsel %vm2963, %v2864, %v2962
      %vm2965 = vcmask 1046534
      %v2966 = vsel %vm2965, %v2873, %v2964
      %vm2967 = vcmask 1047559
      %v2968 = vsel %vm2967, %v2882, %v2966
      %v2969 = vsel %vm2955, %v2900, %v2891
      %v2970 = vsel %vm2957, %v2909, %v2969
      %v2971 = vsel %vm2959, %v2918, %v2970
      %v2972 = vsel %vm2961, %v2927, %v2971
      %v2973 = vsel %vm2963, %v2936, %v2972
      %v2974 = vsel %vm2965, %v2945, %v2973
      %v2975 = vsel %vm2967, %v2954, %v2974
      %2978 = vxpose.xlu0.b32.start [1/16] %v2968, 128
      %2979 = vxpose.xlu0.b32.cont [2/16] %v2975, 128
      %2980 = vxpose.xlu0.b32.cont [3/16] 0.0, 128
      %2981 = vxpose.xlu0.b32.cont [4/16] 0.0, 128
      %2982 = vxpose.xlu0.b32.cont [5/16] 0.0, 128
      %2983 = vxpose.xlu0.b32.cont [6/16] 0.0, 128
      %2984 = vxpose.xlu0.b32.cont [7/16] 0.0, 128
      %2985 = vxpose.xlu0.b32.cont [8/16] 0.0, 128
      %2986 = vxpose.xlu0.b32.cont [9/16] 0.0, 128
      %2987 = vxpose.xlu0.b32.cont [10/16] 0.0, 128
      %2988 = vxpose.xlu0.b32.cont [11/16] 0.0, 128
      %2989 = vxpose.xlu0.b32.cont [12/16] 0.0, 128
      %2990 = vxpose.xlu0.b32.cont [13/16] 0.0, 128
      %2991 = vxpose.xlu0.b32.cont [14/16] 0.0, 128
      %2992 = vxpose.xlu0.b32.cont [15/16] 0.0, 128
      %2993 = vxpose.xlu0.b32.end [16/16] 0.0, 128
      %v2994 = vpop.trf.xlu0
      %v2995 = vpop.trf.xlu0
      %v2996 = vpop.trf.xlu0
      %v2997 = vpop.trf.xlu0
      %v2998 = vpop.trf.xlu0
      %v2999 = vpop.trf.xlu0
      %v3000 = vpop.trf.xlu0
      %v3001 = vpop.trf.xlu0
      %v3002 = vpop.trf.xlu0
      %v3003 = vpop.trf.xlu0
      %v3004 = vpop.trf.xlu0
      %v3005 = vpop.trf.xlu0
      %v3006 = vpop.trf.xlu0
      %v3007 = vpop.trf.xlu0
      %v3008 = vpop.trf.xlu0
      %v3009 = vpop.trf.xlu0
      %v3012 = vlaneseq
      %v3013 = vshrl.u32 %v3012, 7
      %v3014 = vsub.s32 0, %v3013
      %v3015 = vrot.slane %v2994, %v3014
      %3017 = vbcast.lane.b32.xlu0 %v3015, 256
      %v3018 = vpop.permute.xlu0 %3017
      %s3020 = sor.u32 256, 8
      %3021 = vbcast.lane.b32.xlu0 %v3015, %s3020
      %v3022 = vpop.permute.xlu0 %3021
      %v3023 = vlaneseq
      %v3024 = vshrl.u32 %v3023, 7
      %v3025 = vsub.s32 1, %v3024
      %v3026 = vrot.slane %v2994, %v3025
      %3028 = vbcast.lane.b32.xlu0 %v3026, 256
      %v3029 = vpop.permute.xlu0 %3028
      %s3031 = sor.u32 256, 8
      %3032 = vbcast.lane.b32.xlu0 %v3026, %s3031
      %v3033 = vpop.permute.xlu0 %3032
      %v3034 = vlaneseq
      %v3035 = vshrl.u32 %v3034, 7
      %v3036 = vsub.s32 2, %v3035
      %v3037 = vrot.slane %v2994, %v3036
      %3039 = vbcast.lane.b32.xlu0 %v3037, 256
      %v3040 = vpop.permute.xlu0 %3039
      %s3042 = sor.u32 256, 8
      %3043 = vbcast.lane.b32.xlu0 %v3037, %s3042
      %v3044 = vpop.permute.xlu0 %3043
      %v3045 = vlaneseq
      %v3046 = vshrl.u32 %v3045, 7
      %v3047 = vsub.s32 3, %v3046
      %v3048 = vrot.slane %v2994, %v3047
      %3050 = vbcast.lane.b32.xlu0 %v3048, 256
      %v3051 = vpop.permute.xlu0 %3050
      %s3053 = sor.u32 256, 8
      %3054 = vbcast.lane.b32.xlu0 %v3048, %s3053
      %v3055 = vpop.permute.xlu0 %3054
      %v3056 = vlaneseq
      %v3057 = vshrl.u32 %v3056, 7
      %v3058 = vsub.s32 4, %v3057
      %v3059 = vrot.slane %v2994, %v3058
      %3061 = vbcast.lane.b32.xlu0 %v3059, 256
      %v3062 = vpop.permute.xlu0 %3061
      %s3064 = sor.u32 256, 8
      %3065 = vbcast.lane.b32.xlu0 %v3059, %s3064
      %v3066 = vpop.permute.xlu0 %3065
      %v3067 = vlaneseq
      %v3068 = vshrl.u32 %v3067, 7
      %v3069 = vsub.s32 5, %v3068
      %v3070 = vrot.slane %v2994, %v3069
      %3072 = vbcast.lane.b32.xlu0 %v3070, 256
      %v3073 = vpop.permute.xlu0 %3072
      %s3075 = sor.u32 256, 8
      %3076 = vbcast.lane.b32.xlu0 %v3070, %s3075
      %v3077 = vpop.permute.xlu0 %3076
      %v3078 = vlaneseq
      %v3079 = vshrl.u32 %v3078, 7
      %v3080 = vsub.s32 6, %v3079
      %v3081 = vrot.slane %v2994, %v3080
      %3083 = vbcast.lane.b32.xlu0 %v3081, 256
      %v3084 = vpop.permute.xlu0 %3083
      %s3086 = sor.u32 256, 8
      %3087 = vbcast.lane.b32.xlu0 %v3081, %s3086
      %v3088 = vpop.permute.xlu0 %3087
      %v3089 = vlaneseq
      %v3090 = vshrl.u32 %v3089, 7
      %v3091 = vsub.s32 7, %v3090
      %v3092 = vrot.slane %v2994, %v3091
      %3094 = vbcast.lane.b32.xlu0 %v3092, 256
      %v3095 = vpop.permute.xlu0 %3094
      %s3097 = sor.u32 256, 8
      %3098 = vbcast.lane.b32.xlu0 %v3092, %s3097
      %v3099 = vpop.permute.xlu0 %3098
      %v3100 = vlaneseq
      %v3101 = vshrl.u32 %v3100, 7
      %v3102 = vsub.s32 0, %v3101
      %v3103 = vrot.slane %v2995, %v3102
      %3105 = vbcast.lane.b32.xlu0 %v3103, 256
      %v3106 = vpop.permute.xlu0 %3105
      %s3108 = sor.u32 256, 8
      %3109 = vbcast.lane.b32.xlu0 %v3103, %s3108
      %v3110 = vpop.permute.xlu0 %3109
      %v3111 = vlaneseq
      %v3112 = vshrl.u32 %v3111, 7
      %v3113 = vsub.s32 1, %v3112
      %v3114 = vrot.slane %v2995, %v3113
      %3116 = vbcast.lane.b32.xlu0 %v3114, 256
      %v3117 = vpop.permute.xlu0 %3116
      %s3119 = sor.u32 256, 8
      %3120 = vbcast.lane.b32.xlu0 %v3114, %s3119
      %v3121 = vpop.permute.xlu0 %3120
      %v3122 = vlaneseq
      %v3123 = vshrl.u32 %v3122, 7
      %v3124 = vsub.s32 2, %v3123
      %v3125 = vrot.slane %v2995, %v3124
      %3127 = vbcast.lane.b32.xlu0 %v3125, 256
      %v3128 = vpop.permute.xlu0 %3127
      %s3130 = sor.u32 256, 8
      %3131 = vbcast.lane.b32.xlu0 %v3125, %s3130
      %v3132 = vpop.permute.xlu0 %3131
      %v3133 = vlaneseq
      %v3134 = vshrl.u32 %v3133, 7
      %v3135 = vsub.s32 3, %v3134
      %v3136 = vrot.slane %v2995, %v3135
      %3138 = vbcast.lane.b32.xlu0 %v3136, 256
      %v3139 = vpop.permute.xlu0 %3138
      %s3141 = sor.u32 256, 8
      %3142 = vbcast.lane.b32.xlu0 %v3136, %s3141
      %v3143 = vpop.permute.xlu0 %3142
      %v3144 = vlaneseq
      %v3145 = vshrl.u32 %v3144, 7
      %v3146 = vsub.s32 4, %v3145
      %v3147 = vrot.slane %v2995, %v3146
      %3149 = vbcast.lane.b32.xlu0 %v3147, 256
      %v3150 = vpop.permute.xlu0 %3149
      %s3152 = sor.u32 256, 8
      %3153 = vbcast.lane.b32.xlu0 %v3147, %s3152
      %v3154 = vpop.permute.xlu0 %3153
      %v3155 = vlaneseq
      %v3156 = vshrl.u32 %v3155, 7
      %v3157 = vsub.s32 5, %v3156
      %v3158 = vrot.slane %v2995, %v3157
      %3160 = vbcast.lane.b32.xlu0 %v3158, 256
      %v3161 = vpop.permute.xlu0 %3160
      %s3163 = sor.u32 256, 8
      %3164 = vbcast.lane.b32.xlu0 %v3158, %s3163
      %v3165 = vpop.permute.xlu0 %3164
      %v3166 = vlaneseq
      %v3167 = vshrl.u32 %v3166, 7
      %v3168 = vsub.s32 6, %v3167
      %v3169 = vrot.slane %v2995, %v3168
      %3171 = vbcast.lane.b32.xlu0 %v3169, 256
      %v3172 = vpop.permute.xlu0 %3171
      %s3174 = sor.u32 256, 8
      %3175 = vbcast.lane.b32.xlu0 %v3169, %s3174
      %v3176 = vpop.permute.xlu0 %3175
      %v3177 = vlaneseq
      %v3178 = vshrl.u32 %v3177, 7
      %v3179 = vsub.s32 7, %v3178
      %v3180 = vrot.slane %v2995, %v3179
      %3182 = vbcast.lane.b32.xlu0 %v3180, 256
      %v3183 = vpop.permute.xlu0 %3182
      %s3185 = sor.u32 256, 8
      %3186 = vbcast.lane.b32.xlu0 %v3180, %s3185
      %v3187 = vpop.permute.xlu0 %3186
      %v3220 = vmax.f32 %v2683, %v3018
      %v3221 = vmax.f32 %v2686, %v3022
      %v3222 = vmax.f32 %v2689, %v3029
      %v3223 = vmax.f32 %v2692, %v3033
      %v3224 = vmax.f32 %v2695, %v3040
      %v3225 = vmax.f32 %v2698, %v3044
      %v3226 = vmax.f32 %v2701, %v3051
      %v3227 = vmax.f32 %v2704, %v3055
      %v3228 = vmax.f32 %v2707, %v3062
      %v3229 = vmax.f32 %v2710, %v3066
      %v3230 = vmax.f32 %v2713, %v3073
      %v3231 = vmax.f32 %v2716, %v3077
      %v3232 = vmax.f32 %v2719, %v3084
      %v3233 = vmax.f32 %v2722, %v3088
      %v3234 = vmax.f32 %v2725, %v3095
      %v3235 = vmax.f32 %v2728, %v3099
      %v3236 = vmax.f32 %v2731, %v3106
      %v3237 = vmax.f32 %v2734, %v3110
      %v3238 = vmax.f32 %v2737, %v3117
      %v3239 = vmax.f32 %v2740, %v3121
      %v3240 = vmax.f32 %v2743, %v3128
      %v3241 = vmax.f32 %v2746, %v3132
      %v3242 = vmax.f32 %v2749, %v3139
      %v3243 = vmax.f32 %v2752, %v3143
      %v3244 = vmax.f32 %v2755, %v3150
      %v3245 = vmax.f32 %v2758, %v3154
      %v3246 = vmax.f32 %v2761, %v3161
      %v3247 = vmax.f32 %v2764, %v3165
      %v3248 = vmax.f32 %v2767, %v3172
      %v3249 = vmax.f32 %v2770, %v3176
      %v3250 = vmax.f32 %v2773, %v3183
      %v3251 = vmax.f32 %v2776, %v3187
      %3284 = vset.pattern.permute.xlu0 0
      %3285 = vperm.xlu0 %3284, %v3220
      %v3286 = vpop.permute.xlu0 %3285
      %3287 = vset.pattern.permute.xlu0 0
      %3288 = vperm.xlu0 %3287, %v3221
      %v3289 = vpop.permute.xlu0 %3288
      %3290 = vset.pattern.permute.xlu0 0
      %3291 = vperm.xlu0 %3290, %v3222
      %v3292 = vpop.permute.xlu0 %3291
      %3293 = vset.pattern.permute.xlu0 0
      %3294 = vperm.xlu0 %3293, %v3223
      %v3295 = vpop.permute.xlu0 %3294
      %3296 = vset.pattern.permute.xlu0 0
      %3297 = vperm.xlu0 %3296, %v3224
      %v3298 = vpop.permute.xlu0 %3297
      %3299 = vset.pattern.permute.xlu0 0
      %3300 = vperm.xlu0 %3299, %v3225
      %v3301 = vpop.permute.xlu0 %3300
      %3302 = vset.pattern.permute.xlu0 0
      %3303 = vperm.xlu0 %3302, %v3226
      %v3304 = vpop.permute.xlu0 %3303
      %3305 = vset.pattern.permute.xlu0 0
      %3306 = vperm.xlu0 %3305, %v3227
      %v3307 = vpop.permute.xlu0 %3306
      %3308 = vset.pattern.permute.xlu0 0
      %3309 = vperm.xlu0 %3308, %v3228
      %v3310 = vpop.permute.xlu0 %3309
      %3311 = vset.pattern.permute.xlu0 0
      %3312 = vperm.xlu0 %3311, %v3229
      %v3313 = vpop.permute.xlu0 %3312
      %3314 = vset.pattern.permute.xlu0 0
      %3315 = vperm.xlu0 %3314, %v3230
      %v3316 = vpop.permute.xlu0 %3315
      %3317 = vset.pattern.permute.xlu0 0
      %3318 = vperm.xlu0 %3317, %v3231
      %v3319 = vpop.permute.xlu0 %3318
      %3320 = vset.pattern.permute.xlu0 0
      %3321 = vperm.xlu0 %3320, %v3232
      %v3322 = vpop.permute.xlu0 %3321
      %3323 = vset.pattern.permute.xlu0 0
      %3324 = vperm.xlu0 %3323, %v3233
      %v3325 = vpop.permute.xlu0 %3324
      %3326 = vset.pattern.permute.xlu0 0
      %3327 = vperm.xlu0 %3326, %v3234
      %v3328 = vpop.permute.xlu0 %3327
      %3329 = vset.pattern.permute.xlu0 0
      %3330 = vperm.xlu0 %3329, %v3235
      %v3331 = vpop.permute.xlu0 %3330
      %3332 = vset.pattern.permute.xlu0 0
      %3333 = vperm.xlu0 %3332, %v3236
      %v3334 = vpop.permute.xlu0 %3333
      %3335 = vset.pattern.permute.xlu0 0
      %3336 = vperm.xlu0 %3335, %v3237
      %v3337 = vpop.permute.xlu0 %3336
      %3338 = vset.pattern.permute.xlu0 0
      %3339 = vperm.xlu0 %3338, %v3238
      %v3340 = vpop.permute.xlu0 %3339
      %3341 = vset.pattern.permute.xlu0 0
      %3342 = vperm.xlu0 %3341, %v3239
      %v3343 = vpop.permute.xlu0 %3342
      %3344 = vset.pattern.permute.xlu0 0
      %3345 = vperm.xlu0 %3344, %v3240
      %v3346 = vpop.permute.xlu0 %3345
      %3347 = vset.pattern.permute.xlu0 0
      %3348 = vperm.xlu0 %3347, %v3241
      %v3349 = vpop.permute.xlu0 %3348
      %3350 = vset.pattern.permute.xlu0 0
      %3351 = vperm.xlu0 %3350, %v3242
      %v3352 = vpop.permute.xlu0 %3351
      %3353 = vset.pattern.permute.xlu0 0
      %3354 = vperm.xlu0 %3353, %v3243
      %v3355 = vpop.permute.xlu0 %3354
      %3356 = vset.pattern.permute.xlu0 0
      %3357 = vperm.xlu0 %3356, %v3244
      %v3358 = vpop.permute.xlu0 %3357
      %3359 = vset.pattern.permute.xlu0 0
      %3360 = vperm.xlu0 %3359, %v3245
      %v3361 = vpop.permute.xlu0 %3360
      %3362 = vset.pattern.permute.xlu0 0
      %3363 = vperm.xlu0 %3362, %v3246
      %v3364 = vpop.permute.xlu0 %3363
      %3365 = vset.pattern.permute.xlu0 0
      %3366 = vperm.xlu0 %3365, %v3247
      %v3367 = vpop.permute.xlu0 %3366
      %3368 = vset.pattern.permute.xlu0 0
      %3369 = vperm.xlu0 %3368, %v3248
      %v3370 = vpop.permute.xlu0 %3369
      %3371 = vset.pattern.permute.xlu0 0
      %3372 = vperm.xlu0 %3371, %v3249
      %v3373 = vpop.permute.xlu0 %3372
      %3374 = vset.pattern.permute.xlu0 0
      %3375 = vperm.xlu0 %3374, %v3250
      %v3376 = vpop.permute.xlu0 %3375
      %3377 = vset.pattern.permute.xlu0 0
      %3378 = vperm.xlu0 %3377, %v3251
      %v3379 = vpop.permute.xlu0 %3378
      %v3380 = vlaneseq
      %v3381 = vshrl.u32 %v3380, 7
      %v3382 = vsub.s32 %v2542, %v3381
      %v3383 = vrot.slane %v3286, %v3382
      %v3384 = vlaneseq
      %v3385 = vshrl.u32 %v3384, 7
      %v3386 = vsub.s32 %v2813, %v3385
      %v3387 = vrot.slane %v3289, %v3386
      %v3388 = vsel %vm2818, %v3387, %v3383
      %v3389 = vlaneseq
      %v3390 = vshrl.u32 %v3389, 7
      %v3391 = vsub.s32 %v2542, %v3390
      %v3392 = vrot.slane %v3292, %v3391
      %v3393 = vlaneseq
      %v3394 = vshrl.u32 %v3393, 7
      %v3395 = vsub.s32 %v2813, %v3394
      %v3396 = vrot.slane %v3295, %v3395
      %v3397 = vsel %vm2818, %v3396, %v3392
      %v3398 = vlaneseq
      %v3399 = vshrl.u32 %v3398, 7
      %v3400 = vsub.s32 %v2542, %v3399
      %v3401 = vrot.slane %v3298, %v3400
      %v3402 = vlaneseq
      %v3403 = vshrl.u32 %v3402, 7
      %v3404 = vsub.s32 %v2813, %v3403
      %v3405 = vrot.slane %v3301, %v3404
      %v3406 = vsel %vm2818, %v3405, %v3401
      %v3407 = vlaneseq
      %v3408 = vshrl.u32 %v3407, 7
      %v3409 = vsub.s32 %v2542, %v3408
      %v3410 = vrot.slane %v3304, %v3409
      %v3411 = vlaneseq
      %v3412 = vshrl.u32 %v3411, 7
      %v3413 = vsub.s32 %v2813, %v3412
      %v3414 = vrot.slane %v3307, %v3413
      %v3415 = vsel %vm2818, %v3414, %v3410
      %v3416 = vlaneseq
      %v3417 = vshrl.u32 %v3416, 7
      %v3418 = vsub.s32 %v2542, %v3417
      %v3419 = vrot.slane %v3310, %v3418
      %v3420 = vlaneseq
      %v3421 = vshrl.u32 %v3420, 7
      %v3422 = vsub.s32 %v2813, %v3421
      %v3423 = vrot.slane %v3313, %v3422
      %v3424 = vsel %vm2818, %v3423, %v3419
      %v3425 = vlaneseq
      %v3426 = vshrl.u32 %v3425, 7
      %v3427 = vsub.s32 %v2542, %v3426
      %v3428 = vrot.slane %v3316, %v3427
      %v3429 = vlaneseq
      %v3430 = vshrl.u32 %v3429, 7
      %v3431 = vsub.s32 %v2813, %v3430
      %v3432 = vrot.slane %v3319, %v3431
      %v3433 = vsel %vm2818, %v3432, %v3428
      %v3434 = vlaneseq
      %v3435 = vshrl.u32 %v3434, 7
      %v3436 = vsub.s32 %v2542, %v3435
      %v3437 = vrot.slane %v3322, %v3436
      %v3438 = vlaneseq
      %v3439 = vshrl.u32 %v3438, 7
      %v3440 = vsub.s32 %v2813, %v3439
      %v3441 = vrot.slane %v3325, %v3440
      %v3442 = vsel %vm2818, %v3441, %v3437
      %v3443 = vlaneseq
      %v3444 = vshrl.u32 %v3443, 7
      %v3445 = vsub.s32 %v2542, %v3444
      %v3446 = vrot.slane %v3328, %v3445
      %v3447 = vlaneseq
      %v3448 = vshrl.u32 %v3447, 7
      %v3449 = vsub.s32 %v2813, %v3448
      %v3450 = vrot.slane %v3331, %v3449
      %v3451 = vsel %vm2818, %v3450, %v3446
      %v3452 = vlaneseq
      %v3453 = vshrl.u32 %v3452, 7
      %v3454 = vsub.s32 %v2542, %v3453
      %v3455 = vrot.slane %v3334, %v3454
      %v3456 = vlaneseq
      %v3457 = vshrl.u32 %v3456, 7
      %v3458 = vsub.s32 %v2813, %v3457
      %v3459 = vrot.slane %v3337, %v3458
      %v3460 = vsel %vm2818, %v3459, %v3455
      %v3461 = vlaneseq
      %v3462 = vshrl.u32 %v3461, 7
      %v3463 = vsub.s32 %v2542, %v3462
      %v3464 = vrot.slane %v3340, %v3463
      %v3465 = vlaneseq
      %v3466 = vshrl.u32 %v3465, 7
      %v3467 = vsub.s32 %v2813, %v3466
      %v3468 = vrot.slane %v3343, %v3467
      %v3469 = vsel %vm2818, %v3468, %v3464
      %v3470 = vlaneseq
      %v3471 = vshrl.u32 %v3470, 7
      %v3472 = vsub.s32 %v2542, %v3471
      %v3473 = vrot.slane %v3346, %v3472
      %v3474 = vlaneseq
      %v3475 = vshrl.u32 %v3474, 7
      %v3476 = vsub.s32 %v2813, %v3475
      %v3477 = vrot.slane %v3349, %v3476
      %v3478 = vsel %vm2818, %v3477, %v3473
      %v3479 = vlaneseq
      %v3480 = vshrl.u32 %v3479, 7
      %v3481 = vsub.s32 %v2542, %v3480
      %v3482 = vrot.slane %v3352, %v3481
      %v3483 = vlaneseq
      %v3484 = vshrl.u32 %v3483, 7
      %v3485 = vsub.s32 %v2813, %v3484
      %v3486 = vrot.slane %v3355, %v3485
      %v3487 = vsel %vm2818, %v3486, %v3482
      %v3488 = vlaneseq
      %v3489 = vshrl.u32 %v3488, 7
      %v3490 = vsub.s32 %v2542, %v3489
      %v3491 = vrot.slane %v3358, %v3490
      %v3492 = vlaneseq
      %v3493 = vshrl.u32 %v3492, 7
      %v3494 = vsub.s32 %v2813, %v3493
      %v3495 = vrot.slane %v3361, %v3494
      %v3496 = vsel %vm2818, %v3495, %v3491
      %v3497 = vlaneseq
      %v3498 = vshrl.u32 %v3497, 7
      %v3499 = vsub.s32 %v2542, %v3498
      %v3500 = vrot.slane %v3364, %v3499
      %v3501 = vlaneseq
      %v3502 = vshrl.u32 %v3501, 7
      %v3503 = vsub.s32 %v2813, %v3502
      %v3504 = vrot.slane %v3367, %v3503
      %v3505 = vsel %vm2818, %v3504, %v3500
      %v3506 = vlaneseq
      %v3507 = vshrl.u32 %v3506, 7
      %v3508 = vsub.s32 %v2542, %v3507
      %v3509 = vrot.slane %v3370, %v3508
      %v3510 = vlaneseq
      %v3511 = vshrl.u32 %v3510, 7
      %v3512 = vsub.s32 %v2813, %v3511
      %v3513 = vrot.slane %v3373, %v3512
      %v3514 = vsel %vm2818, %v3513, %v3509
      %v3515 = vlaneseq
      %v3516 = vshrl.u32 %v3515, 7
      %v3517 = vsub.s32 %v2542, %v3516
      %v3518 = vrot.slane %v3376, %v3517
      %v3519 = vlaneseq
      %v3520 = vshrl.u32 %v3519, 7
      %v3521 = vsub.s32 %v2813, %v3520
      %v3522 = vrot.slane %v3379, %v3521
      %v3523 = vsel %vm2818, %v3522, %v3518
      %v3524 = vsel %vm2955, %v3397, %v3388
      %v3525 = vsel %vm2957, %v3406, %v3524
      %v3526 = vsel %vm2959, %v3415, %v3525
      %v3527 = vsel %vm2961, %v3424, %v3526
      %v3528 = vsel %vm2963, %v3433, %v3527
      %v3529 = vsel %vm2965, %v3442, %v3528
      %v3530 = vsel %vm2967, %v3451, %v3529
      %v3531 = vsel %vm2955, %v3469, %v3460
      %v3532 = vsel %vm2957, %v3478, %v3531
      %v3533 = vsel %vm2959, %v3487, %v3532
      %v3534 = vsel %vm2961, %v3496, %v3533
      %v3535 = vsel %vm2963, %v3505, %v3534
      %v3536 = vsel %vm2965, %v3514, %v3535
      %v3537 = vsel %vm2967, %v3523, %v3536
      %3540 = vxpose.xlu0.b32.start [1/16] %v3530, 128
      %3541 = vxpose.xlu0.b32.cont [2/16] %v3537, 128
      %3542 = vxpose.xlu0.b32.cont [3/16] 0.0, 128
      %3543 = vxpose.xlu0.b32.cont [4/16] 0.0, 128
      %3544 = vxpose.xlu0.b32.cont [5/16] 0.0, 128
      %3545 = vxpose.xlu0.b32.cont [6/16] 0.0, 128
      %3546 = vxpose.xlu0.b32.cont [7/16] 0.0, 128
      %3547 = vxpose.xlu0.b32.cont [8/16] 0.0, 128
      %3548 = vxpose.xlu0.b32.cont [9/16] 0.0, 128
      %3549 = vxpose.xlu0.b32.cont [10/16] 0.0, 128
      %3550 = vxpose.xlu0.b32.cont [11/16] 0.0, 128
      %3551 = vxpose.xlu0.b32.cont [12/16] 0.0, 128
      %3552 = vxpose.xlu0.b32.cont [13/16] 0.0, 128
      %3553 = vxpose.xlu0.b32.cont [14/16] 0.0, 128
      %3554 = vxpose.xlu0.b32.cont [15/16] 0.0, 128
      %3555 = vxpose.xlu0.b32.end [16/16] 0.0, 128
      %v3556 = vpop.trf.xlu0
      %v3557 = vpop.trf.xlu0
      %v3558 = vpop.trf.xlu0
      %v3559 = vpop.trf.xlu0
      %v3560 = vpop.trf.xlu0
      %v3561 = vpop.trf.xlu0
      %v3562 = vpop.trf.xlu0
      %v3563 = vpop.trf.xlu0
      %v3564 = vpop.trf.xlu0
      %v3565 = vpop.trf.xlu0
      %v3566 = vpop.trf.xlu0
      %v3567 = vpop.trf.xlu0
      %v3568 = vpop.trf.xlu0
      %v3569 = vpop.trf.xlu0
      %v3570 = vpop.trf.xlu0
      %v3571 = vpop.trf.xlu0
      %v3572 = vlaneseq
      %v3573 = vshrl.u32 %v3572, 7
      %v3574 = vsub.s32 0, %v3573
      %v3575 = vrot.slane %v3556, %v3574
      %3577 = vbcast.lane.b32.xlu0 %v3575, 256
      %v3578 = vpop.permute.xlu0 %3577
      %s3580 = sor.u32 256, 8
      %3581 = vbcast.lane.b32.xlu0 %v3575, %s3580
      %v3582 = vpop.permute.xlu0 %3581
      %v3583 = vlaneseq
      %v3584 = vshrl.u32 %v3583, 7
      %v3585 = vsub.s32 1, %v3584
      %v3586 = vrot.slane %v3556, %v3585
      %3588 = vbcast.lane.b32.xlu0 %v3586, 256
      %v3589 = vpop.permute.xlu0 %3588
      %s3591 = sor.u32 256, 8
      %3592 = vbcast.lane.b32.xlu0 %v3586, %s3591
      %v3593 = vpop.permute.xlu0 %3592
      %v3594 = vlaneseq
      %v3595 = vshrl.u32 %v3594, 7
      %v3596 = vsub.s32 2, %v3595
      %v3597 = vrot.slane %v3556, %v3596
      %3599 = vbcast.lane.b32.xlu0 %v3597, 256
      %v3600 = vpop.permute.xlu0 %3599
      %s3602 = sor.u32 256, 8
      %3603 = vbcast.lane.b32.xlu0 %v3597, %s3602
      %v3604 = vpop.permute.xlu0 %3603
      %v3605 = vlaneseq
      %v3606 = vshrl.u32 %v3605, 7
      %v3607 = vsub.s32 3, %v3606
      %v3608 = vrot.slane %v3556, %v3607
      %3610 = vbcast.lane.b32.xlu0 %v3608, 256
      %v3611 = vpop.permute.xlu0 %3610
      %s3613 = sor.u32 256, 8
      %3614 = vbcast.lane.b32.xlu0 %v3608, %s3613
      %v3615 = vpop.permute.xlu0 %3614
      %v3616 = vlaneseq
      %v3617 = vshrl.u32 %v3616, 7
      %v3618 = vsub.s32 4, %v3617
      %v3619 = vrot.slane %v3556, %v3618
      %3621 = vbcast.lane.b32.xlu0 %v3619, 256
      %v3622 = vpop.permute.xlu0 %3621
      %s3624 = sor.u32 256, 8
      %3625 = vbcast.lane.b32.xlu0 %v3619, %s3624
      %v3626 = vpop.permute.xlu0 %3625
      %v3627 = vlaneseq
      %v3628 = vshrl.u32 %v3627, 7
      %v3629 = vsub.s32 5, %v3628
      %v3630 = vrot.slane %v3556, %v3629
      %3632 = vbcast.lane.b32.xlu0 %v3630, 256
      %v3633 = vpop.permute.xlu0 %3632
      %s3635 = sor.u32 256, 8
      %3636 = vbcast.lane.b32.xlu0 %v3630, %s3635
      %v3637 = vpop.permute.xlu0 %3636
      %v3638 = vlaneseq
      %v3639 = vshrl.u32 %v3638, 7
      %v3640 = vsub.s32 6, %v3639
      %v3641 = vrot.slane %v3556, %v3640
      %3643 = vbcast.lane.b32.xlu0 %v3641, 256
      %v3644 = vpop.permute.xlu0 %3643
      %s3646 = sor.u32 256, 8
      %3647 = vbcast.lane.b32.xlu0 %v3641, %s3646
      %v3648 = vpop.permute.xlu0 %3647
      %v3649 = vlaneseq
      %v3650 = vshrl.u32 %v3649, 7
      %v3651 = vsub.s32 7, %v3650
      %v3652 = vrot.slane %v3556, %v3651
      %3654 = vbcast.lane.b32.xlu0 %v3652, 256
      %v3655 = vpop.permute.xlu0 %3654
      %s3657 = sor.u32 256, 8
      %3658 = vbcast.lane.b32.xlu0 %v3652, %s3657
      %v3659 = vpop.permute.xlu0 %3658
      %v3660 = vlaneseq
      %v3661 = vshrl.u32 %v3660, 7
      %v3662 = vsub.s32 0, %v3661
      %v3663 = vrot.slane %v3557, %v3662
      %3665 = vbcast.lane.b32.xlu0 %v3663, 256
      %v3666 = vpop.permute.xlu0 %3665
      %s3668 = sor.u32 256, 8
      %3669 = vbcast.lane.b32.xlu0 %v3663, %s3668
      %v3670 = vpop.permute.xlu0 %3669
      %v3671 = vlaneseq
      %v3672 = vshrl.u32 %v3671, 7
      %v3673 = vsub.s32 1, %v3672
      %v3674 = vrot.slane %v3557, %v3673
      %3676 = vbcast.lane.b32.xlu0 %v3674, 256
      %v3677 = vpop.permute.xlu0 %3676
      %s3679 = sor.u32 256, 8
      %3680 = vbcast.lane.b32.xlu0 %v3674, %s3679
      %v3681 = vpop.permute.xlu0 %3680
      %v3682 = vlaneseq
      %v3683 = vshrl.u32 %v3682, 7
      %v3684 = vsub.s32 2, %v3683
      %v3685 = vrot.slane %v3557, %v3684
      %3687 = vbcast.lane.b32.xlu0 %v3685, 256
      %v3688 = vpop.permute.xlu0 %3687
      %s3690 = sor.u32 256, 8
      %3691 = vbcast.lane.b32.xlu0 %v3685, %s3690
      %v3692 = vpop.permute.xlu0 %3691
      %v3693 = vlaneseq
      %v3694 = vshrl.u32 %v3693, 7
      %v3695 = vsub.s32 3, %v3694
      %v3696 = vrot.slane %v3557, %v3695
      %3698 = vbcast.lane.b32.xlu0 %v3696, 256
      %v3699 = vpop.permute.xlu0 %3698
      %s3701 = sor.u32 256, 8
      %3702 = vbcast.lane.b32.xlu0 %v3696, %s3701
      %v3703 = vpop.permute.xlu0 %3702
      %v3704 = vlaneseq
      %v3705 = vshrl.u32 %v3704, 7
      %v3706 = vsub.s32 4, %v3705
      %v3707 = vrot.slane %v3557, %v3706
      %3709 = vbcast.lane.b32.xlu0 %v3707, 256
      %v3710 = vpop.permute.xlu0 %3709
      %s3712 = sor.u32 256, 8
      %3713 = vbcast.lane.b32.xlu0 %v3707, %s3712
      %v3714 = vpop.permute.xlu0 %3713
      %v3715 = vlaneseq
      %v3716 = vshrl.u32 %v3715, 7
      %v3717 = vsub.s32 5, %v3716
      %v3718 = vrot.slane %v3557, %v3717
      %3720 = vbcast.lane.b32.xlu0 %v3718, 256
      %v3721 = vpop.permute.xlu0 %3720
      %s3723 = sor.u32 256, 8
      %3724 = vbcast.lane.b32.xlu0 %v3718, %s3723
      %v3725 = vpop.permute.xlu0 %3724
      %v3726 = vlaneseq
      %v3727 = vshrl.u32 %v3726, 7
      %v3728 = vsub.s32 6, %v3727
      %v3729 = vrot.slane %v3557, %v3728
      %3731 = vbcast.lane.b32.xlu0 %v3729, 256
      %v3732 = vpop.permute.xlu0 %3731
      %s3734 = sor.u32 256, 8
      %3735 = vbcast.lane.b32.xlu0 %v3729, %s3734
      %v3736 = vpop.permute.xlu0 %3735
      %v3737 = vlaneseq
      %v3738 = vshrl.u32 %v3737, 7
      %v3739 = vsub.s32 7, %v3738
      %v3740 = vrot.slane %v3557, %v3739
      %3742 = vbcast.lane.b32.xlu0 %v3740, 256
      %v3743 = vpop.permute.xlu0 %3742
      %s3745 = sor.u32 256, 8
      %3746 = vbcast.lane.b32.xlu0 %v3740, %s3745
      %v3747 = vpop.permute.xlu0 %3746
      %v3748 = vsub.f32 %v2552, %v3578
      %v3749 = vsub.f32 %v2553, %v3582
      %v3750 = vsub.f32 %v2554, %v3589
      %v3751 = vsub.f32 %v2555, %v3593
      %v3752 = vsub.f32 %v2556, %v3600
      %v3753 = vsub.f32 %v2557, %v3604
      %v3754 = vsub.f32 %v2558, %v3611
      %v3755 = vsub.f32 %v2559, %v3615
      %v3756 = vsub.f32 %v2560, %v3622
      %v3757 = vsub.f32 %v2561, %v3626
      %v3758 = vsub.f32 %v2562, %v3633
      %v3759 = vsub.f32 %v2563, %v3637
      %v3760 = vsub.f32 %v2564, %v3644
      %v3761 = vsub.f32 %v2565, %v3648
      %v3762 = vsub.f32 %v2566, %v3655
      %v3763 = vsub.f32 %v2567, %v3659
      %v3764 = vsub.f32 %v2568, %v3666
      %v3765 = vsub.f32 %v2569, %v3670
      %v3766 = vsub.f32 %v2570, %v3677
      %v3767 = vsub.f32 %v2571, %v3681
      %v3768 = vsub.f32 %v2572, %v3688
      %v3769 = vsub.f32 %v2573, %v3692
      %v3770 = vsub.f32 %v2574, %v3699
      %v3771 = vsub.f32 %v2575, %v3703
      %v3772 = vsub.f32 %v2576, %v3710
      %v3773 = vsub.f32 %v2577, %v3714
      %v3774 = vsub.f32 %v2578, %v3721
      %v3775 = vsub.f32 %v2579, %v3725
      %v3776 = vsub.f32 %v2580, %v3732
      %v3777 = vsub.f32 %v2581, %v3736
      %v3778 = vsub.f32 %v2582, %v3743
      %v3779 = vsub.f32 %v2583, %v3747
      %v3780 = vmul.f32 %v3748, 1.442695
      %v3781 = vpow.pop %v3780
      %v3782 = vmul.f32 %v3749, 1.442695
      %v3783 = vpow.pop %v3782
      %v3784 = vmul.f32 %v3750, 1.442695
      %v3785 = vpow.pop %v3784
      %v3786 = vmul.f32 %v3751, 1.442695
      %v3787 = vpow.pop %v3786
      %v3788 = vmul.f32 %v3752, 1.442695
      %v3789 = vpow.pop %v3788
      %v3790 = vmul.f32 %v3753, 1.442695
      %v3791 = vpow.pop %v3790
      %v3792 = vmul.f32 %v3754, 1.442695
      %v3793 = vpow.pop %v3792
      %v3794 = vmul.f32 %v3755, 1.442695
      %v3795 = vpow.pop %v3794
      %v3796 = vmul.f32 %v3756, 1.442695
      %v3797 = vpow.pop %v3796
      %v3798 = vmul.f32 %v3757, 1.442695
      %v3799 = vpow.pop %v3798
      %v3800 = vmul.f32 %v3758, 1.442695
      %v3801 = vpow.pop %v3800
      %v3802 = vmul.f32 %v3759, 1.442695
      %v3803 = vpow.pop %v3802
      %v3804 = vmul.f32 %v3760, 1.442695
      %v3805 = vpow.pop %v3804
      %v3806 = vmul.f32 %v3761, 1.442695
      %v3807 = vpow.pop %v3806
      %v3808 = vmul.f32 %v3762, 1.442695
      %v3809 = vpow.pop %v3808
      %v3810 = vmul.f32 %v3763, 1.442695
      %v3811 = vpow.pop %v3810
      %v3812 = vmul.f32 %v3764, 1.442695
      %v3813 = vpow.pop %v3812
      %v3814 = vmul.f32 %v3765, 1.442695
      %v3815 = vpow.pop %v3814
      %v3816 = vmul.f32 %v3766, 1.442695
      %v3817 = vpow.pop %v3816
      %v3818 = vmul.f32 %v3767, 1.442695
      %v3819 = vpow.pop %v3818
      %v3820 = vmul.f32 %v3768, 1.442695
      %v3821 = vpow.pop %v3820
      %v3822 = vmul.f32 %v3769, 1.442695
      %v3823 = vpow.pop %v3822
      %v3824 = vmul.f32 %v3770, 1.442695
      %v3825 = vpow.pop %v3824
      %v3826 = vmul.f32 %v3771, 1.442695
      %v3827 = vpow.pop %v3826
      %v3828 = vmul.f32 %v3772, 1.442695
      %v3829 = vpow.pop %v3828
      %v3830 = vmul.f32 %v3773, 1.442695
      %v3831 = vpow.pop %v3830
      %v3832 = vmul.f32 %v3774, 1.442695
      %v3833 = vpow.pop %v3832
      %v3834 = vmul.f32 %v3775, 1.442695
      %v3835 = vpow.pop %v3834
      %v3836 = vmul.f32 %v3776, 1.442695
      %v3837 = vpow.pop %v3836
      %v3838 = vmul.f32 %v3777, 1.442695
      %v3839 = vpow.pop %v3838
      %v3840 = vmul.f32 %v3778, 1.442695
      %v3841 = vpow.pop %v3840
      %v3842 = vmul.f32 %v3779, 1.442695
      %v3843 = vpow.pop %v3842
      %v3876 = vsub.f32 %v1872, %v3286
      %v3877 = vsub.f32 %v1875, %v3289
      %v3878 = vsub.f32 %v1916, %v3292
      %v3879 = vsub.f32 %v1919, %v3295
      %v3880 = vsub.f32 %v1960, %v3298
      %v3881 = vsub.f32 %v1963, %v3301
      %v3882 = vsub.f32 %v2004, %v3304
      %v3883 = vsub.f32 %v2007, %v3307
      %v3884 = vsub.f32 %v2048, %v3310
      %v3885 = vsub.f32 %v2051, %v3313
      %v3886 = vsub.f32 %v2092, %v3316
      %v3887 = vsub.f32 %v2095, %v3319
      %v3888 = vsub.f32 %v2136, %v3322
      %v3889 = vsub.f32 %v2139, %v3325
      %v3890 = vsub.f32 %v2180, %v3328
      %v3891 = vsub.f32 %v2183, %v3331
      %v3892 = vsub.f32 %v2224, %v3334
      %v3893 = vsub.f32 %v2227, %v3337
      %v3894 = vsub.f32 %v2268, %v3340
      %v3895 = vsub.f32 %v2271, %v3343
      %v3896 = vsub.f32 %v2312, %v3346
      %v3897 = vsub.f32 %v2315, %v3349
      %v3898 = vsub.f32 %v2356, %v3352
      %v3899 = vsub.f32 %v2359, %v3355
      %v3900 = vsub.f32 %v2400, %v3358
      %v3901 = vsub.f32 %v2403, %v3361
      %v3902 = vsub.f32 %v2444, %v3364
      %v3903 = vsub.f32 %v2447, %v3367
      %v3904 = vsub.f32 %v2488, %v3370
      %v3905 = vsub.f32 %v2491, %v3373
      %v3906 = vsub.f32 %v2532, %v3376
      %v3907 = vsub.f32 %v2535, %v3379
      %v3908 = vmul.f32 %v3876, 1.442695
      %v3909 = vpow.pop %v3908
      %v3910 = vmul.f32 %v3877, 1.442695
      %v3911 = vpow.pop %v3910
      %v3912 = vmul.f32 %v3878, 1.442695
      %v3913 = vpow.pop %v3912
      %v3914 = vmul.f32 %v3879, 1.442695
      %v3915 = vpow.pop %v3914
      %v3916 = vmul.f32 %v3880, 1.442695
      %v3917 = vpow.pop %v3916
      %v3918 = vmul.f32 %v3881, 1.442695
      %v3919 = vpow.pop %v3918
      %v3920 = vmul.f32 %v3882, 1.442695
      %v3921 = vpow.pop %v3920
      %v3922 = vmul.f32 %v3883, 1.442695
      %v3923 = vpow.pop %v3922
      %v3924 = vmul.f32 %v3884, 1.442695
      %v3925 = vpow.pop %v3924
      %v3926 = vmul.f32 %v3885, 1.442695
      %v3927 = vpow.pop %v3926
      %v3928 = vmul.f32 %v3886, 1.442695
      %v3929 = vpow.pop %v3928
      %v3930 = vmul.f32 %v3887, 1.442695
      %v3931 = vpow.pop %v3930
      %v3932 = vmul.f32 %v3888, 1.442695
      %v3933 = vpow.pop %v3932
      %v3934 = vmul.f32 %v3889, 1.442695
      %v3935 = vpow.pop %v3934
      %v3936 = vmul.f32 %v3890, 1.442695
      %v3937 = vpow.pop %v3936
      %v3938 = vmul.f32 %v3891, 1.442695
      %v3939 = vpow.pop %v3938
      %v3940 = vmul.f32 %v3892, 1.442695
      %v3941 = vpow.pop %v3940
      %v3942 = vmul.f32 %v3893, 1.442695
      %v3943 = vpow.pop %v3942
      %v3944 = vmul.f32 %v3894, 1.442695
      %v3945 = vpow.pop %v3944
      %v3946 = vmul.f32 %v3895, 1.442695
      %v3947 = vpow.pop %v3946
      %v3948 = vmul.f32 %v3896, 1.442695
      %v3949 = vpow.pop %v3948
      %v3950 = vmul.f32 %v3897, 1.442695
      %v3951 = vpow.pop %v3950
      %v3952 = vmul.f32 %v3898, 1.442695
      %v3953 = vpow.pop %v3952
      %v3954 = vmul.f32 %v3899, 1.442695
      %v3955 = vpow.pop %v3954
      %v3956 = vmul.f32 %v3900, 1.442695
      %v3957 = vpow.pop %v3956
      %v3958 = vmul.f32 %v3901, 1.442695
      %v3959 = vpow.pop %v3958
      %v3960 = vmul.f32 %v3902, 1.442695
      %v3961 = vpow.pop %v3960
      %v3962 = vmul.f32 %v3903, 1.442695
      %v3963 = vpow.pop %v3962
      %v3964 = vmul.f32 %v3904, 1.442695
      %v3965 = vpow.pop %v3964
      %v3966 = vmul.f32 %v3905, 1.442695
      %v3967 = vpow.pop %v3966
      %v3968 = vmul.f32 %v3906, 1.442695
      %v3969 = vpow.pop %v3968
      %v3970 = vmul.f32 %v3907, 1.442695
      %v3971 = vpow.pop %v3970
      %v3972 = vsel %vm2584, %v3909, 0.0
      %3973 = vadd.xlane.f32.xlu0 %v3972
      %v3974 = vpop.xlane.xlu0 %3973
      %v3975 = vsel %vm2584, %v3911, 0.0
      %3976 = vadd.xlane.f32.xlu0 %v3975
      %v3977 = vpop.xlane.xlu0 %3976
      %v3978 = vsel %vm2584, %v3913, 0.0
      %3979 = vadd.xlane.f32.xlu0 %v3978
      %v3980 = vpop.xlane.xlu0 %3979
      %v3981 = vsel %vm2584, %v3915, 0.0
      %3982 = vadd.xlane.f32.xlu0 %v3981
      %v3983 = vpop.xlane.xlu0 %3982
      %v3984 = vsel %vm2584, %v3917, 0.0
      %3985 = vadd.xlane.f32.xlu0 %v3984
      %v3986 = vpop.xlane.xlu0 %3985
      %v3987 = vsel %vm2584, %v3919, 0.0
      %3988 = vadd.xlane.f32.xlu0 %v3987
      %v3989 = vpop.xlane.xlu0 %3988
      %v3990 = vsel %vm2584, %v3921, 0.0
      %3991 = vadd.xlane.f32.xlu0 %v3990
      %v3992 = vpop.xlane.xlu0 %3991
      %v3993 = vsel %vm2584, %v3923, 0.0
      %3994 = vadd.xlane.f32.xlu0 %v3993
      %v3995 = vpop.xlane.xlu0 %3994
      %v3996 = vsel %vm2584, %v3925, 0.0
      %3997 = vadd.xlane.f32.xlu0 %v3996
      %v3998 = vpop.xlane.xlu0 %3997
      %v3999 = vsel %vm2584, %v3927, 0.0
      %4000 = vadd.xlane.f32.xlu0 %v3999
      %v4001 = vpop.xlane.xlu0 %4000
      %v4002 = vsel %vm2584, %v3929, 0.0
      %4003 = vadd.xlane.f32.xlu0 %v4002
      %v4004 = vpop.xlane.xlu0 %4003
      %v4005 = vsel %vm2584, %v3931, 0.0
      %4006 = vadd.xlane.f32.xlu0 %v4005
      %v4007 = vpop.xlane.xlu0 %4006
      %v4008 = vsel %vm2584, %v3933, 0.0
      %4009 = vadd.xlane.f32.xlu0 %v4008
      %v4010 = vpop.xlane.xlu0 %4009
      %v4011 = vsel %vm2584, %v3935, 0.0
      %4012 = vadd.xlane.f32.xlu0 %v4011
      %v4013 = vpop.xlane.xlu0 %4012
      %v4014 = vsel %vm2584, %v3937, 0.0
      %4015 = vadd.xlane.f32.xlu0 %v4014
      %v4016 = vpop.xlane.xlu0 %4015
      %v4017 = vsel %vm2584, %v3939, 0.0
      %4018 = vadd.xlane.f32.xlu0 %v4017
      %v4019 = vpop.xlane.xlu0 %4018
      %v4020 = vsel %vm2584, %v3941, 0.0
      %4021 = vadd.xlane.f32.xlu0 %v4020
      %v4022 = vpop.xlane.xlu0 %4021
      %v4023 = vsel %vm2584, %v3943, 0.0
      %4024 = vadd.xlane.f32.xlu0 %v4023
      %v4025 = vpop.xlane.xlu0 %4024
      %v4026 = vsel %vm2584, %v3945, 0.0
      %4027 = vadd.xlane.f32.xlu0 %v4026
      %v4028 = vpop.xlane.xlu0 %4027
      %v4029 = vsel %vm2584, %v3947, 0.0
      %4030 = vadd.xlane.f32.xlu0 %v4029
      %v4031 = vpop.xlane.xlu0 %4030
      %v4032 = vsel %vm2584, %v3949, 0.0
      %4033 = vadd.xlane.f32.xlu0 %v4032
      %v4034 = vpop.xlane.xlu0 %4033
      %v4035 = vsel %vm2584, %v3951, 0.0
      %4036 = vadd.xlane.f32.xlu0 %v4035
      %v4037 = vpop.xlane.xlu0 %4036
      %v4038 = vsel %vm2584, %v3953, 0.0
      %4039 = vadd.xlane.f32.xlu0 %v4038
      %v4040 = vpop.xlane.xlu0 %4039
      %v4041 = vsel %vm2584, %v3955, 0.0
      %4042 = vadd.xlane.f32.xlu0 %v4041
      %v4043 = vpop.xlane.xlu0 %4042
      %v4044 = vsel %vm2584, %v3957, 0.0
      %4045 = vadd.xlane.f32.xlu0 %v4044
      %v4046 = vpop.xlane.xlu0 %4045
      %v4047 = vsel %vm2584, %v3959, 0.0
      %4048 = vadd.xlane.f32.xlu0 %v4047
      %v4049 = vpop.xlane.xlu0 %4048
      %v4050 = vsel %vm2584, %v3961, 0.0
      %4051 = vadd.xlane.f32.xlu0 %v4050
      %v4052 = vpop.xlane.xlu0 %4051
      %v4053 = vsel %vm2584, %v3963, 0.0
      %4054 = vadd.xlane.f32.xlu0 %v4053
      %v4055 = vpop.xlane.xlu0 %4054
      %v4056 = vsel %vm2584, %v3965, 0.0
      %4057 = vadd.xlane.f32.xlu0 %v4056
      %v4058 = vpop.xlane.xlu0 %4057
      %v4059 = vsel %vm2584, %v3967, 0.0
      %4060 = vadd.xlane.f32.xlu0 %v4059
      %v4061 = vpop.xlane.xlu0 %4060
      %v4062 = vsel %vm2584, %v3969, 0.0
      %4063 = vadd.xlane.f32.xlu0 %v4062
      %v4064 = vpop.xlane.xlu0 %4063
      %v4065 = vsel %vm2584, %v3971, 0.0
      %4066 = vadd.xlane.f32.xlu0 %v4065
      %v4067 = vpop.xlane.xlu0 %4066
      %v4068 = vsel %vm2584, %v3781, 0.0
      %4069 = vadd.xlane.f32.xlu0 %v4068
      %v4070 = vpop.xlane.xlu0 %4069
      %v4071 = vsel %vm2584, %v3783, 0.0
      %4072 = vadd.xlane.f32.xlu0 %v4071
      %v4073 = vpop.xlane.xlu0 %4072
      %v4074 = vsel %vm2584, %v3785, 0.0
      %4075 = vadd.xlane.f32.xlu0 %v4074
      %v4076 = vpop.xlane.xlu0 %4075
      %v4077 = vsel %vm2584, %v3787, 0.0
      %4078 = vadd.xlane.f32.xlu0 %v4077
      %v4079 = vpop.xlane.xlu0 %4078
      %v4080 = vsel %vm2584, %v3789, 0.0
      %4081 = vadd.xlane.f32.xlu0 %v4080
      %v4082 = vpop.xlane.xlu0 %4081
      %v4083 = vsel %vm2584, %v3791, 0.0
      %4084 = vadd.xlane.f32.xlu0 %v4083
      %v4085 = vpop.xlane.xlu0 %4084
      %v4086 = vsel %vm2584, %v3793, 0.0
      %4087 = vadd.xlane.f32.xlu0 %v4086
      %v4088 = vpop.xlane.xlu0 %4087
      %v4089 = vsel %vm2584, %v3795, 0.0
      %4090 = vadd.xlane.f32.xlu0 %v4089
      %v4091 = vpop.xlane.xlu0 %4090
      %v4092 = vsel %vm2584, %v3797, 0.0
      %4093 = vadd.xlane.f32.xlu0 %v4092
      %v4094 = vpop.xlane.xlu0 %4093
      %v4095 = vsel %vm2584, %v3799, 0.0
      %4096 = vadd.xlane.f32.xlu0 %v4095
      %v4097 = vpop.xlane.xlu0 %4096
      %v4098 = vsel %vm2584, %v3801, 0.0
      %4099 = vadd.xlane.f32.xlu0 %v4098
      %v4100 = vpop.xlane.xlu0 %4099
      %v4101 = vsel %vm2584, %v3803, 0.0
      %4102 = vadd.xlane.f32.xlu0 %v4101
      %v4103 = vpop.xlane.xlu0 %4102
      %v4104 = vsel %vm2584, %v3805, 0.0
      %4105 = vadd.xlane.f32.xlu0 %v4104
      %v4106 = vpop.xlane.xlu0 %4105
      %v4107 = vsel %vm2584, %v3807, 0.0
      %4108 = vadd.xlane.f32.xlu0 %v4107
      %v4109 = vpop.xlane.xlu0 %4108
      %v4110 = vsel %vm2584, %v3809, 0.0
      %4111 = vadd.xlane.f32.xlu0 %v4110
      %v4112 = vpop.xlane.xlu0 %4111
      %v4113 = vsel %vm2584, %v3811, 0.0
      %4114 = vadd.xlane.f32.xlu0 %v4113
      %v4115 = vpop.xlane.xlu0 %4114
      %v4116 = vsel %vm2584, %v3813, 0.0
      %4117 = vadd.xlane.f32.xlu0 %v4116
      %v4118 = vpop.xlane.xlu0 %4117
      %v4119 = vsel %vm2584, %v3815, 0.0
      %4120 = vadd.xlane.f32.xlu0 %v4119
      %v4121 = vpop.xlane.xlu0 %4120
      %v4122 = vsel %vm2584, %v3817, 0.0
      %4123 = vadd.xlane.f32.xlu0 %v4122
      %v4124 = vpop.xlane.xlu0 %4123
      %v4125 = vsel %vm2584, %v3819, 0.0
      %4126 = vadd.xlane.f32.xlu0 %v4125
      %v4127 = vpop.xlane.xlu0 %4126
      %v4128 = vsel %vm2584, %v3821, 0.0
      %4129 = vadd.xlane.f32.xlu0 %v4128
      %v4130 = vpop.xlane.xlu0 %4129
      %v4131 = vsel %vm2584, %v3823, 0.0
      %4132 = vadd.xlane.f32.xlu0 %v4131
      %v4133 = vpop.xlane.xlu0 %4132
      %v4134 = vsel %vm2584, %v3825, 0.0
      %4135 = vadd.xlane.f32.xlu0 %v4134
      %v4136 = vpop.xlane.xlu0 %4135
      %v4137 = vsel %vm2584, %v3827, 0.0
      %4138 = vadd.xlane.f32.xlu0 %v4137
      %v4139 = vpop.xlane.xlu0 %4138
      %v4140 = vsel %vm2584, %v3829, 0.0
      %4141 = vadd.xlane.f32.xlu0 %v4140
      %v4142 = vpop.xlane.xlu0 %4141
      %v4143 = vsel %vm2584, %v3831, 0.0
      %4144 = vadd.xlane.f32.xlu0 %v4143
      %v4145 = vpop.xlane.xlu0 %4144
      %v4146 = vsel %vm2584, %v3833, 0.0
      %4147 = vadd.xlane.f32.xlu0 %v4146
      %v4148 = vpop.xlane.xlu0 %4147
      %v4149 = vsel %vm2584, %v3835, 0.0
      %4150 = vadd.xlane.f32.xlu0 %v4149
      %v4151 = vpop.xlane.xlu0 %4150
      %v4152 = vsel %vm2584, %v3837, 0.0
      %4153 = vadd.xlane.f32.xlu0 %v4152
      %v4154 = vpop.xlane.xlu0 %4153
      %v4155 = vsel %vm2584, %v3839, 0.0
      %4156 = vadd.xlane.f32.xlu0 %v4155
      %v4157 = vpop.xlane.xlu0 %4156
      %v4158 = vsel %vm2584, %v3841, 0.0
      %4159 = vadd.xlane.f32.xlu0 %v4158
      %v4160 = vpop.xlane.xlu0 %4159
      %v4161 = vsel %vm2584, %v3843, 0.0
      %4162 = vadd.xlane.f32.xlu0 %v4161
      %v4163 = vpop.xlane.xlu0 %4162
      %v4196 = vlaneseq
      %v4197 = vshrl.u32 %v4196, 7
      %v4198 = vsub.s32 %v2542, %v4197
      %v4199 = vrot.slane %v4070, %v4198
      %v4200 = vlaneseq
      %v4201 = vshrl.u32 %v4200, 7
      %v4202 = vsub.s32 %v2813, %v4201
      %v4203 = vrot.slane %v4073, %v4202
      %v4204 = vsel %vm2818, %v4203, %v4199
      %v4205 = vlaneseq
      %v4206 = vshrl.u32 %v4205, 7
      %v4207 = vsub.s32 %v2542, %v4206
      %v4208 = vrot.slane %v4076, %v4207
      %v4209 = vlaneseq
      %v4210 = vshrl.u32 %v4209, 7
      %v4211 = vsub.s32 %v2813, %v4210
      %v4212 = vrot.slane %v4079, %v4211
      %v4213 = vsel %vm2818, %v4212, %v4208
      %v4214 = vlaneseq
      %v4215 = vshrl.u32 %v4214, 7
      %v4216 = vsub.s32 %v2542, %v4215
      %v4217 = vrot.slane %v4082, %v4216
      %v4218 = vlaneseq
      %v4219 = vshrl.u32 %v4218, 7
      %v4220 = vsub.s32 %v2813, %v4219
      %v4221 = vrot.slane %v4085, %v4220
      %v4222 = vsel %vm2818, %v4221, %v4217
      %v4223 = vlaneseq
      %v4224 = vshrl.u32 %v4223, 7
      %v4225 = vsub.s32 %v2542, %v4224
      %v4226 = vrot.slane %v4088, %v4225
      %v4227 = vlaneseq
      %v4228 = vshrl.u32 %v4227, 7
      %v4229 = vsub.s32 %v2813, %v4228
      %v4230 = vrot.slane %v4091, %v4229
      %v4231 = vsel %vm2818, %v4230, %v4226
      %v4232 = vlaneseq
      %v4233 = vshrl.u32 %v4232, 7
      %v4234 = vsub.s32 %v2542, %v4233
      %v4235 = vrot.slane %v4094, %v4234
      %v4236 = vlaneseq
      %v4237 = vshrl.u32 %v4236, 7
      %v4238 = vsub.s32 %v2813, %v4237
      %v4239 = vrot.slane %v4097, %v4238
      %v4240 = vsel %vm2818, %v4239, %v4235
      %v4241 = vlaneseq
      %v4242 = vshrl.u32 %v4241, 7
      %v4243 = vsub.s32 %v2542, %v4242
      %v4244 = vrot.slane %v4100, %v4243
      %v4245 = vlaneseq
      %v4246 = vshrl.u32 %v4245, 7
      %v4247 = vsub.s32 %v2813, %v4246
      %v4248 = vrot.slane %v4103, %v4247
      %v4249 = vsel %vm2818, %v4248, %v4244
      %v4250 = vlaneseq
      %v4251 = vshrl.u32 %v4250, 7
      %v4252 = vsub.s32 %v2542, %v4251
      %v4253 = vrot.slane %v4106, %v4252
      %v4254 = vlaneseq
      %v4255 = vshrl.u32 %v4254, 7
      %v4256 = vsub.s32 %v2813, %v4255
      %v4257 = vrot.slane %v4109, %v4256
      %v4258 = vsel %vm2818, %v4257, %v4253
      %v4259 = vlaneseq
      %v4260 = vshrl.u32 %v4259, 7
      %v4261 = vsub.s32 %v2542, %v4260
      %v4262 = vrot.slane %v4112, %v4261
      %v4263 = vlaneseq
      %v4264 = vshrl.u32 %v4263, 7
      %v4265 = vsub.s32 %v2813, %v4264
      %v4266 = vrot.slane %v4115, %v4265
      %v4267 = vsel %vm2818, %v4266, %v4262
      %v4268 = vlaneseq
      %v4269 = vshrl.u32 %v4268, 7
      %v4270 = vsub.s32 %v2542, %v4269
      %v4271 = vrot.slane %v4118, %v4270
      %v4272 = vlaneseq
      %v4273 = vshrl.u32 %v4272, 7
      %v4274 = vsub.s32 %v2813, %v4273
      %v4275 = vrot.slane %v4121, %v4274
      %v4276 = vsel %vm2818, %v4275, %v4271
      %v4277 = vlaneseq
      %v4278 = vshrl.u32 %v4277, 7
      %v4279 = vsub.s32 %v2542, %v4278
      %v4280 = vrot.slane %v4124, %v4279
      %v4281 = vlaneseq
      %v4282 = vshrl.u32 %v4281, 7
      %v4283 = vsub.s32 %v2813, %v4282
      %v4284 = vrot.slane %v4127, %v4283
      %v4285 = vsel %vm2818, %v4284, %v4280
      %v4286 = vlaneseq
      %v4287 = vshrl.u32 %v4286, 7
      %v4288 = vsub.s32 %v2542, %v4287
      %v4289 = vrot.slane %v4130, %v4288
      %v4290 = vlaneseq
      %v4291 = vshrl.u32 %v4290, 7
      %v4292 = vsub.s32 %v2813, %v4291
      %v4293 = vrot.slane %v4133, %v4292
      %v4294 = vsel %vm2818, %v4293, %v4289
      %v4295 = vlaneseq
      %v4296 = vshrl.u32 %v4295, 7
      %v4297 = vsub.s32 %v2542, %v4296
      %v4298 = vrot.slane %v4136, %v4297
      %v4299 = vlaneseq
      %v4300 = vshrl.u32 %v4299, 7
      %v4301 = vsub.s32 %v2813, %v4300
      %v4302 = vrot.slane %v4139, %v4301
      %v4303 = vsel %vm2818, %v4302, %v4298
      %v4304 = vlaneseq
      %v4305 = vshrl.u32 %v4304, 7
      %v4306 = vsub.s32 %v2542, %v4305
      %v4307 = vrot.slane %v4142, %v4306
      %v4308 = vlaneseq
      %v4309 = vshrl.u32 %v4308, 7
      %v4310 = vsub.s32 %v2813, %v4309
      %v4311 = vrot.slane %v4145, %v4310
      %v4312 = vsel %vm2818, %v4311, %v4307
      %v4313 = vlaneseq
      %v4314 = vshrl.u32 %v4313, 7
      %v4315 = vsub.s32 %v2542, %v4314
      %v4316 = vrot.slane %v4148, %v4315
      %v4317 = vlaneseq
      %v4318 = vshrl.u32 %v4317, 7
      %v4319 = vsub.s32 %v2813, %v4318
      %v4320 = vrot.slane %v4151, %v4319
      %v4321 = vsel %vm2818, %v4320, %v4316
      %v4322 = vlaneseq
      %v4323 = vshrl.u32 %v4322, 7
      %v4324 = vsub.s32 %v2542, %v4323
      %v4325 = vrot.slane %v4154, %v4324
      %v4326 = vlaneseq
      %v4327 = vshrl.u32 %v4326, 7
      %v4328 = vsub.s32 %v2813, %v4327
      %v4329 = vrot.slane %v4157, %v4328
      %v4330 = vsel %vm2818, %v4329, %v4325
      %v4331 = vlaneseq
      %v4332 = vshrl.u32 %v4331, 7
      %v4333 = vsub.s32 %v2542, %v4332
      %v4334 = vrot.slane %v4160, %v4333
      %v4335 = vlaneseq
      %v4336 = vshrl.u32 %v4335, 7
      %v4337 = vsub.s32 %v2813, %v4336
      %v4338 = vrot.slane %v4163, %v4337
      %v4339 = vsel %vm2818, %v4338, %v4334
      %v4340 = vsel %vm2955, %v4213, %v4204
      %v4341 = vsel %vm2957, %v4222, %v4340
      %v4342 = vsel %vm2959, %v4231, %v4341
      %v4343 = vsel %vm2961, %v4240, %v4342
      %v4344 = vsel %vm2963, %v4249, %v4343
      %v4345 = vsel %vm2965, %v4258, %v4344
      %v4346 = vsel %vm2967, %v4267, %v4345
      %v4347 = vsel %vm2955, %v4285, %v4276
      %v4348 = vsel %vm2957, %v4294, %v4347
      %v4349 = vsel %vm2959, %v4303, %v4348
      %v4350 = vsel %vm2961, %v4312, %v4349
      %v4351 = vsel %vm2963, %v4321, %v4350
      %v4352 = vsel %vm2965, %v4330, %v4351
      %v4353 = vsel %vm2967, %v4339, %v4352
      %4356 = vxpose.xlu0.b32.start [1/16] %v4346, 128
      %4357 = vxpose.xlu0.b32.cont [2/16] %v4353, 128
      %4358 = vxpose.xlu0.b32.cont [3/16] 0.0, 128
      %4359 = vxpose.xlu0.b32.cont [4/16] 0.0, 128
      %4360 = vxpose.xlu0.b32.cont [5/16] 0.0, 128
      %4361 = vxpose.xlu0.b32.cont [6/16] 0.0, 128
      %4362 = vxpose.xlu0.b32.cont [7/16] 0.0, 128
      %4363 = vxpose.xlu0.b32.cont [8/16] 0.0, 128
      %4364 = vxpose.xlu0.b32.cont [9/16] 0.0, 128
      %4365 = vxpose.xlu0.b32.cont [10/16] 0.0, 128
      %4366 = vxpose.xlu0.b32.cont [11/16] 0.0, 128
      %4367 = vxpose.xlu0.b32.cont [12/16] 0.0, 128
      %4368 = vxpose.xlu0.b32.cont [13/16] 0.0, 128
      %4369 = vxpose.xlu0.b32.cont [14/16] 0.0, 128
      %4370 = vxpose.xlu0.b32.cont [15/16] 0.0, 128
      %4371 = vxpose.xlu0.b32.end [16/16] 0.0, 128
      %v4372 = vpop.trf.xlu0
      %v4373 = vpop.trf.xlu0
      %v4374 = vpop.trf.xlu0
      %v4375 = vpop.trf.xlu0
      %v4376 = vpop.trf.xlu0
      %v4377 = vpop.trf.xlu0
      %v4378 = vpop.trf.xlu0
      %v4379 = vpop.trf.xlu0
      %v4380 = vpop.trf.xlu0
      %v4381 = vpop.trf.xlu0
      %v4382 = vpop.trf.xlu0
      %v4383 = vpop.trf.xlu0
      %v4384 = vpop.trf.xlu0
      %v4385 = vpop.trf.xlu0
      %v4386 = vpop.trf.xlu0
      %v4387 = vpop.trf.xlu0
      %v4390 = vlaneseq
      %v4391 = vshrl.u32 %v4390, 7
      %v4392 = vsub.s32 0, %v4391
      %v4393 = vrot.slane %v4372, %v4392
      %4395 = vbcast.lane.b32.xlu0 %v4393, 256
      %v4396 = vpop.permute.xlu0 %4395
      %s4398 = sor.u32 256, 8
      %4399 = vbcast.lane.b32.xlu0 %v4393, %s4398
      %v4400 = vpop.permute.xlu0 %4399
      %v4401 = vlaneseq
      %v4402 = vshrl.u32 %v4401, 7
      %v4403 = vsub.s32 1, %v4402
      %v4404 = vrot.slane %v4372, %v4403
      %4406 = vbcast.lane.b32.xlu0 %v4404, 256
      %v4407 = vpop.permute.xlu0 %4406
      %s4409 = sor.u32 256, 8
      %4410 = vbcast.lane.b32.xlu0 %v4404, %s4409
      %v4411 = vpop.permute.xlu0 %4410
      %v4412 = vlaneseq
      %v4413 = vshrl.u32 %v4412, 7
      %v4414 = vsub.s32 2, %v4413
      %v4415 = vrot.slane %v4372, %v4414
      %4417 = vbcast.lane.b32.xlu0 %v4415, 256
      %v4418 = vpop.permute.xlu0 %4417
      %s4420 = sor.u32 256, 8
      %4421 = vbcast.lane.b32.xlu0 %v4415, %s4420
      %v4422 = vpop.permute.xlu0 %4421
      %v4423 = vlaneseq
      %v4424 = vshrl.u32 %v4423, 7
      %v4425 = vsub.s32 3, %v4424
      %v4426 = vrot.slane %v4372, %v4425
      %4428 = vbcast.lane.b32.xlu0 %v4426, 256
      %v4429 = vpop.permute.xlu0 %4428
      %s4431 = sor.u32 256, 8
      %4432 = vbcast.lane.b32.xlu0 %v4426, %s4431
      %v4433 = vpop.permute.xlu0 %4432
      %v4434 = vlaneseq
      %v4435 = vshrl.u32 %v4434, 7
      %v4436 = vsub.s32 4, %v4435
      %v4437 = vrot.slane %v4372, %v4436
      %4439 = vbcast.lane.b32.xlu0 %v4437, 256
      %v4440 = vpop.permute.xlu0 %4439
      %s4442 = sor.u32 256, 8
      %4443 = vbcast.lane.b32.xlu0 %v4437, %s4442
      %v4444 = vpop.permute.xlu0 %4443
      %v4445 = vlaneseq
      %v4446 = vshrl.u32 %v4445, 7
      %v4447 = vsub.s32 5, %v4446
      %v4448 = vrot.slane %v4372, %v4447
      %4450 = vbcast.lane.b32.xlu0 %v4448, 256
      %v4451 = vpop.permute.xlu0 %4450
      %s4453 = sor.u32 256, 8
      %4454 = vbcast.lane.b32.xlu0 %v4448, %s4453
      %v4455 = vpop.permute.xlu0 %4454
      %v4456 = vlaneseq
      %v4457 = vshrl.u32 %v4456, 7
      %v4458 = vsub.s32 6, %v4457
      %v4459 = vrot.slane %v4372, %v4458
      %4461 = vbcast.lane.b32.xlu0 %v4459, 256
      %v4462 = vpop.permute.xlu0 %4461
      %s4464 = sor.u32 256, 8
      %4465 = vbcast.lane.b32.xlu0 %v4459, %s4464
      %v4466 = vpop.permute.xlu0 %4465
      %v4467 = vlaneseq
      %v4468 = vshrl.u32 %v4467, 7
      %v4469 = vsub.s32 7, %v4468
      %v4470 = vrot.slane %v4372, %v4469
      %4472 = vbcast.lane.b32.xlu0 %v4470, 256
      %v4473 = vpop.permute.xlu0 %4472
      %s4475 = sor.u32 256, 8
      %4476 = vbcast.lane.b32.xlu0 %v4470, %s4475
      %v4477 = vpop.permute.xlu0 %4476
      %v4478 = vlaneseq
      %v4479 = vshrl.u32 %v4478, 7
      %v4480 = vsub.s32 0, %v4479
      %v4481 = vrot.slane %v4373, %v4480
      %4483 = vbcast.lane.b32.xlu0 %v4481, 256
      %v4484 = vpop.permute.xlu0 %4483
      %s4486 = sor.u32 256, 8
      %4487 = vbcast.lane.b32.xlu0 %v4481, %s4486
      %v4488 = vpop.permute.xlu0 %4487
      %v4489 = vlaneseq
      %v4490 = vshrl.u32 %v4489, 7
      %v4491 = vsub.s32 1, %v4490
      %v4492 = vrot.slane %v4373, %v4491
      %4494 = vbcast.lane.b32.xlu0 %v4492, 256
      %v4495 = vpop.permute.xlu0 %4494
      %s4497 = sor.u32 256, 8
      %4498 = vbcast.lane.b32.xlu0 %v4492, %s4497
      %v4499 = vpop.permute.xlu0 %4498
      %v4500 = vlaneseq
      %v4501 = vshrl.u32 %v4500, 7
      %v4502 = vsub.s32 2, %v4501
      %v4503 = vrot.slane %v4373, %v4502
      %4505 = vbcast.lane.b32.xlu0 %v4503, 256
      %v4506 = vpop.permute.xlu0 %4505
      %s4508 = sor.u32 256, 8
      %4509 = vbcast.lane.b32.xlu0 %v4503, %s4508
      %v4510 = vpop.permute.xlu0 %4509
      %v4511 = vlaneseq
      %v4512 = vshrl.u32 %v4511, 7
      %v4513 = vsub.s32 3, %v4512
      %v4514 = vrot.slane %v4373, %v4513
      %4516 = vbcast.lane.b32.xlu0 %v4514, 256
      %v4517 = vpop.permute.xlu0 %4516
      %s4519 = sor.u32 256, 8
      %4520 = vbcast.lane.b32.xlu0 %v4514, %s4519
      %v4521 = vpop.permute.xlu0 %4520
      %v4522 = vlaneseq
      %v4523 = vshrl.u32 %v4522, 7
      %v4524 = vsub.s32 4, %v4523
      %v4525 = vrot.slane %v4373, %v4524
      %4527 = vbcast.lane.b32.xlu0 %v4525, 256
      %v4528 = vpop.permute.xlu0 %4527
      %s4530 = sor.u32 256, 8
      %4531 = vbcast.lane.b32.xlu0 %v4525, %s4530
      %v4532 = vpop.permute.xlu0 %4531
      %v4533 = vlaneseq
      %v4534 = vshrl.u32 %v4533, 7
      %v4535 = vsub.s32 5, %v4534
      %v4536 = vrot.slane %v4373, %v4535
      %4538 = vbcast.lane.b32.xlu0 %v4536, 256
      %v4539 = vpop.permute.xlu0 %4538
      %s4541 = sor.u32 256, 8
      %4542 = vbcast.lane.b32.xlu0 %v4536, %s4541
      %v4543 = vpop.permute.xlu0 %4542
      %v4544 = vlaneseq
      %v4545 = vshrl.u32 %v4544, 7
      %v4546 = vsub.s32 6, %v4545
      %v4547 = vrot.slane %v4373, %v4546
      %4549 = vbcast.lane.b32.xlu0 %v4547, 256
      %v4550 = vpop.permute.xlu0 %4549
      %s4552 = sor.u32 256, 8
      %4553 = vbcast.lane.b32.xlu0 %v4547, %s4552
      %v4554 = vpop.permute.xlu0 %4553
      %v4555 = vlaneseq
      %v4556 = vshrl.u32 %v4555, 7
      %v4557 = vsub.s32 7, %v4556
      %v4558 = vrot.slane %v4373, %v4557
      %4560 = vbcast.lane.b32.xlu0 %v4558, 256
      %v4561 = vpop.permute.xlu0 %4560
      %s4563 = sor.u32 256, 8
      %4564 = vbcast.lane.b32.xlu0 %v4558, %s4563
      %v4565 = vpop.permute.xlu0 %4564
      %v4598 = vadd.f32 %v3974, %v4396
      %v4599 = vadd.f32 %v3977, %v4400
      %v4600 = vadd.f32 %v3980, %v4407
      %v4601 = vadd.f32 %v3983, %v4411
      %v4602 = vadd.f32 %v3986, %v4418
      %v4603 = vadd.f32 %v3989, %v4422
      %v4604 = vadd.f32 %v3992, %v4429
      %v4605 = vadd.f32 %v3995, %v4433
      %v4606 = vadd.f32 %v3998, %v4440
      %v4607 = vadd.f32 %v4001, %v4444
      %v4608 = vadd.f32 %v4004, %v4451
      %v4609 = vadd.f32 %v4007, %v4455
      %v4610 = vadd.f32 %v4010, %v4462
      %v4611 = vadd.f32 %v4013, %v4466
      %v4612 = vadd.f32 %v4016, %v4473
      %v4613 = vadd.f32 %v4019, %v4477
      %v4614 = vadd.f32 %v4022, %v4484
      %v4615 = vadd.f32 %v4025, %v4488
      %v4616 = vadd.f32 %v4028, %v4495
      %v4617 = vadd.f32 %v4031, %v4499
      %v4618 = vadd.f32 %v4034, %v4506
      %v4619 = vadd.f32 %v4037, %v4510
      %v4620 = vadd.f32 %v4040, %v4517
      %v4621 = vadd.f32 %v4043, %v4521
      %v4622 = vadd.f32 %v4046, %v4528
      %v4623 = vadd.f32 %v4049, %v4532
      %v4624 = vadd.f32 %v4052, %v4539
      %v4625 = vadd.f32 %v4055, %v4543
      %v4626 = vadd.f32 %v4058, %v4550
      %v4627 = vadd.f32 %v4061, %v4554
      %v4628 = vadd.f32 %v4064, %v4561
      %v4629 = vadd.f32 %v4067, %v4565
      %v4630 = vrcp.pop %v4598
      %v4631 = vrcp.pop %v4599
      %v4632 = vrcp.pop %v4600
      %v4633 = vrcp.pop %v4601
      %v4634 = vrcp.pop %v4602
      %v4635 = vrcp.pop %v4603
      %v4636 = vrcp.pop %v4604
      %v4637 = vrcp.pop %v4605
      %v4638 = vrcp.pop %v4606
      %v4639 = vrcp.pop %v4607
      %v4640 = vrcp.pop %v4608
      %v4641 = vrcp.pop %v4609
      %v4642 = vrcp.pop %v4610
      %v4643 = vrcp.pop %v4611
      %v4644 = vrcp.pop %v4612
      %v4645 = vrcp.pop %v4613
      %v4646 = vrcp.pop %v4614
      %v4647 = vrcp.pop %v4615
      %v4648 = vrcp.pop %v4616
      %v4649 = vrcp.pop %v4617
      %v4650 = vrcp.pop %v4618
      %v4651 = vrcp.pop %v4619
      %v4652 = vrcp.pop %v4620
      %v4653 = vrcp.pop %v4621
      %v4654 = vrcp.pop %v4622
      %v4655 = vrcp.pop %v4623
      %v4656 = vrcp.pop %v4624
      %v4657 = vrcp.pop %v4625
      %v4658 = vrcp.pop %v4626
      %v4659 = vrcp.pop %v4627
      %v4660 = vrcp.pop %v4628
      %v4661 = vrcp.pop %v4629
      %4694 = vset.pattern.permute.xlu0 0
      %4695 = vperm.xlu0 %4694, %v4630
      %v4696 = vpop.permute.xlu0 %4695
      %4697 = vset.pattern.permute.xlu0 0
      %4698 = vperm.xlu0 %4697, %v4631
      %v4699 = vpop.permute.xlu0 %4698
      %4700 = vset.pattern.permute.xlu0 0
      %4701 = vperm.xlu0 %4700, %v4632
      %v4702 = vpop.permute.xlu0 %4701
      %4703 = vset.pattern.permute.xlu0 0
      %4704 = vperm.xlu0 %4703, %v4633
      %v4705 = vpop.permute.xlu0 %4704
      %4706 = vset.pattern.permute.xlu0 0
      %4707 = vperm.xlu0 %4706, %v4634
      %v4708 = vpop.permute.xlu0 %4707
      %4709 = vset.pattern.permute.xlu0 0
      %4710 = vperm.xlu0 %4709, %v4635
      %v4711 = vpop.permute.xlu0 %4710
      %4712 = vset.pattern.permute.xlu0 0
      %4713 = vperm.xlu0 %4712, %v4636
      %v4714 = vpop.permute.xlu0 %4713
      %4715 = vset.pattern.permute.xlu0 0
      %4716 = vperm.xlu0 %4715, %v4637
      %v4717 = vpop.permute.xlu0 %4716
      %4718 = vset.pattern.permute.xlu0 0
      %4719 = vperm.xlu0 %4718, %v4638
      %v4720 = vpop.permute.xlu0 %4719
      %4721 = vset.pattern.permute.xlu0 0
      %4722 = vperm.xlu0 %4721, %v4639
      %v4723 = vpop.permute.xlu0 %4722
      %4724 = vset.pattern.permute.xlu0 0
      %4725 = vperm.xlu0 %4724, %v4640
      %v4726 = vpop.permute.xlu0 %4725
      %4727 = vset.pattern.permute.xlu0 0
      %4728 = vperm.xlu0 %4727, %v4641
      %v4729 = vpop.permute.xlu0 %4728
      %4730 = vset.pattern.permute.xlu0 0
      %4731 = vperm.xlu0 %4730, %v4642
      %v4732 = vpop.permute.xlu0 %4731
      %4733 = vset.pattern.permute.xlu0 0
      %4734 = vperm.xlu0 %4733, %v4643
      %v4735 = vpop.permute.xlu0 %4734
      %4736 = vset.pattern.permute.xlu0 0
      %4737 = vperm.xlu0 %4736, %v4644
      %v4738 = vpop.permute.xlu0 %4737
      %4739 = vset.pattern.permute.xlu0 0
      %4740 = vperm.xlu0 %4739, %v4645
      %v4741 = vpop.permute.xlu0 %4740
      %4742 = vset.pattern.permute.xlu0 0
      %4743 = vperm.xlu0 %4742, %v4646
      %v4744 = vpop.permute.xlu0 %4743
      %4745 = vset.pattern.permute.xlu0 0
      %4746 = vperm.xlu0 %4745, %v4647
      %v4747 = vpop.permute.xlu0 %4746
      %4748 = vset.pattern.permute.xlu0 0
      %4749 = vperm.xlu0 %4748, %v4648
      %v4750 = vpop.permute.xlu0 %4749
      %4751 = vset.pattern.permute.xlu0 0
      %4752 = vperm.xlu0 %4751, %v4649
      %v4753 = vpop.permute.xlu0 %4752
      %4754 = vset.pattern.permute.xlu0 0
      %4755 = vperm.xlu0 %4754, %v4650
      %v4756 = vpop.permute.xlu0 %4755
      %4757 = vset.pattern.permute.xlu0 0
      %4758 = vperm.xlu0 %4757, %v4651
      %v4759 = vpop.permute.xlu0 %4758
      %4760 = vset.pattern.permute.xlu0 0
      %4761 = vperm.xlu0 %4760, %v4652
      %v4762 = vpop.permute.xlu0 %4761
      %4763 = vset.pattern.permute.xlu0 0
      %4764 = vperm.xlu0 %4763, %v4653
      %v4765 = vpop.permute.xlu0 %4764
      %4766 = vset.pattern.permute.xlu0 0
      %4767 = vperm.xlu0 %4766, %v4654
      %v4768 = vpop.permute.xlu0 %4767
      %4769 = vset.pattern.permute.xlu0 0
      %4770 = vperm.xlu0 %4769, %v4655
      %v4771 = vpop.permute.xlu0 %4770
      %4772 = vset.pattern.permute.xlu0 0
      %4773 = vperm.xlu0 %4772, %v4656
      %v4774 = vpop.permute.xlu0 %4773
      %4775 = vset.pattern.permute.xlu0 0
      %4776 = vperm.xlu0 %4775, %v4657
      %v4777 = vpop.permute.xlu0 %4776
      %4778 = vset.pattern.permute.xlu0 0
      %4779 = vperm.xlu0 %4778, %v4658
      %v4780 = vpop.permute.xlu0 %4779
      %4781 = vset.pattern.permute.xlu0 0
      %4782 = vperm.xlu0 %4781, %v4659
      %v4783 = vpop.permute.xlu0 %4782
      %4784 = vset.pattern.permute.xlu0 0
      %4785 = vperm.xlu0 %4784, %v4660
      %v4786 = vpop.permute.xlu0 %4785
      %4787 = vset.pattern.permute.xlu0 0
      %4788 = vperm.xlu0 %4787, %v4661
      %v4789 = vpop.permute.xlu0 %4788
      %v4790 = vlaneseq
      %v4791 = vshrl.u32 %v4790, 7
      %v4792 = vsub.s32 %v2542, %v4791
      %v4793 = vrot.slane %v4696, %v4792
      %v4794 = vlaneseq
      %v4795 = vshrl.u32 %v4794, 7
      %v4796 = vsub.s32 %v2813, %v4795
      %v4797 = vrot.slane %v4699, %v4796
      %v4798 = vsel %vm2818, %v4797, %v4793
      %v4799 = vlaneseq
      %v4800 = vshrl.u32 %v4799, 7
      %v4801 = vsub.s32 %v2542, %v4800
      %v4802 = vrot.slane %v4702, %v4801
      %v4803 = vlaneseq
      %v4804 = vshrl.u32 %v4803, 7
      %v4805 = vsub.s32 %v2813, %v4804
      %v4806 = vrot.slane %v4705, %v4805
      %v4807 = vsel %vm2818, %v4806, %v4802
      %v4808 = vlaneseq
      %v4809 = vshrl.u32 %v4808, 7
      %v4810 = vsub.s32 %v2542, %v4809
      %v4811 = vrot.slane %v4708, %v4810
      %v4812 = vlaneseq
      %v4813 = vshrl.u32 %v4812, 7
      %v4814 = vsub.s32 %v2813, %v4813
      %v4815 = vrot.slane %v4711, %v4814
      %v4816 = vsel %vm2818, %v4815, %v4811
      %v4817 = vlaneseq
      %v4818 = vshrl.u32 %v4817, 7
      %v4819 = vsub.s32 %v2542, %v4818
      %v4820 = vrot.slane %v4714, %v4819
      %v4821 = vlaneseq
      %v4822 = vshrl.u32 %v4821, 7
      %v4823 = vsub.s32 %v2813, %v4822
      %v4824 = vrot.slane %v4717, %v4823
      %v4825 = vsel %vm2818, %v4824, %v4820
      %v4826 = vlaneseq
      %v4827 = vshrl.u32 %v4826, 7
      %v4828 = vsub.s32 %v2542, %v4827
      %v4829 = vrot.slane %v4720, %v4828
      %v4830 = vlaneseq
      %v4831 = vshrl.u32 %v4830, 7
      %v4832 = vsub.s32 %v2813, %v4831
      %v4833 = vrot.slane %v4723, %v4832
      %v4834 = vsel %vm2818, %v4833, %v4829
      %v4835 = vlaneseq
      %v4836 = vshrl.u32 %v4835, 7
      %v4837 = vsub.s32 %v2542, %v4836
      %v4838 = vrot.slane %v4726, %v4837
      %v4839 = vlaneseq
      %v4840 = vshrl.u32 %v4839, 7
      %v4841 = vsub.s32 %v2813, %v4840
      %v4842 = vrot.slane %v4729, %v4841
      %v4843 = vsel %vm2818, %v4842, %v4838
      %v4844 = vlaneseq
      %v4845 = vshrl.u32 %v4844, 7
      %v4846 = vsub.s32 %v2542, %v4845
      %v4847 = vrot.slane %v4732, %v4846
      %v4848 = vlaneseq
      %v4849 = vshrl.u32 %v4848, 7
      %v4850 = vsub.s32 %v2813, %v4849
      %v4851 = vrot.slane %v4735, %v4850
      %v4852 = vsel %vm2818, %v4851, %v4847
      %v4853 = vlaneseq
      %v4854 = vshrl.u32 %v4853, 7
      %v4855 = vsub.s32 %v2542, %v4854
      %v4856 = vrot.slane %v4738, %v4855
      %v4857 = vlaneseq
      %v4858 = vshrl.u32 %v4857, 7
      %v4859 = vsub.s32 %v2813, %v4858
      %v4860 = vrot.slane %v4741, %v4859
      %v4861 = vsel %vm2818, %v4860, %v4856
      %v4862 = vlaneseq
      %v4863 = vshrl.u32 %v4862, 7
      %v4864 = vsub.s32 %v2542, %v4863
      %v4865 = vrot.slane %v4744, %v4864
      %v4866 = vlaneseq
      %v4867 = vshrl.u32 %v4866, 7
      %v4868 = vsub.s32 %v2813, %v4867
      %v4869 = vrot.slane %v4747, %v4868
      %v4870 = vsel %vm2818, %v4869, %v4865
      %v4871 = vlaneseq
      %v4872 = vshrl.u32 %v4871, 7
      %v4873 = vsub.s32 %v2542, %v4872
      %v4874 = vrot.slane %v4750, %v4873
      %v4875 = vlaneseq
      %v4876 = vshrl.u32 %v4875, 7
      %v4877 = vsub.s32 %v2813, %v4876
      %v4878 = vrot.slane %v4753, %v4877
      %v4879 = vsel %vm2818, %v4878, %v4874
      %v4880 = vlaneseq
      %v4881 = vshrl.u32 %v4880, 7
      %v4882 = vsub.s32 %v2542, %v4881
      %v4883 = vrot.slane %v4756, %v4882
      %v4884 = vlaneseq
      %v4885 = vshrl.u32 %v4884, 7
      %v4886 = vsub.s32 %v2813, %v4885
      %v4887 = vrot.slane %v4759, %v4886
      %v4888 = vsel %vm2818, %v4887, %v4883
      %v4889 = vlaneseq
      %v4890 = vshrl.u32 %v4889, 7
      %v4891 = vsub.s32 %v2542, %v4890
      %v4892 = vrot.slane %v4762, %v4891
      %v4893 = vlaneseq
      %v4894 = vshrl.u32 %v4893, 7
      %v4895 = vsub.s32 %v2813, %v4894
      %v4896 = vrot.slane %v4765, %v4895
      %v4897 = vsel %vm2818, %v4896, %v4892
      %v4898 = vlaneseq
      %v4899 = vshrl.u32 %v4898, 7
      %v4900 = vsub.s32 %v2542, %v4899
      %v4901 = vrot.slane %v4768, %v4900
      %v4902 = vlaneseq
      %v4903 = vshrl.u32 %v4902, 7
      %v4904 = vsub.s32 %v2813, %v4903
      %v4905 = vrot.slane %v4771, %v4904
      %v4906 = vsel %vm2818, %v4905, %v4901
      %v4907 = vlaneseq
      %v4908 = vshrl.u32 %v4907, 7
      %v4909 = vsub.s32 %v2542, %v4908
      %v4910 = vrot.slane %v4774, %v4909
      %v4911 = vlaneseq
      %v4912 = vshrl.u32 %v4911, 7
      %v4913 = vsub.s32 %v2813, %v4912
      %v4914 = vrot.slane %v4777, %v4913
      %v4915 = vsel %vm2818, %v4914, %v4910
      %v4916 = vlaneseq
      %v4917 = vshrl.u32 %v4916, 7
      %v4918 = vsub.s32 %v2542, %v4917
      %v4919 = vrot.slane %v4780, %v4918
      %v4920 = vlaneseq
      %v4921 = vshrl.u32 %v4920, 7
      %v4922 = vsub.s32 %v2813, %v4921
      %v4923 = vrot.slane %v4783, %v4922
      %v4924 = vsel %vm2818, %v4923, %v4919
      %v4925 = vlaneseq
      %v4926 = vshrl.u32 %v4925, 7
      %v4927 = vsub.s32 %v2542, %v4926
      %v4928 = vrot.slane %v4786, %v4927
      %v4929 = vlaneseq
      %v4930 = vshrl.u32 %v4929, 7
      %v4931 = vsub.s32 %v2813, %v4930
      %v4932 = vrot.slane %v4789, %v4931
      %v4933 = vsel %vm2818, %v4932, %v4928
      %v4934 = vsel %vm2955, %v4807, %v4798
      %v4935 = vsel %vm2957, %v4816, %v4934
      %v4936 = vsel %vm2959, %v4825, %v4935
      %v4937 = vsel %vm2961, %v4834, %v4936
      %v4938 = vsel %vm2963, %v4843, %v4937
      %v4939 = vsel %vm2965, %v4852, %v4938
      %v4940 = vsel %vm2967, %v4861, %v4939
      %v4941 = vsel %vm2955, %v4879, %v4870
      %v4942 = vsel %vm2957, %v4888, %v4941
      %v4943 = vsel %vm2959, %v4897, %v4942
      %v4944 = vsel %vm2961, %v4906, %v4943
      %v4945 = vsel %vm2963, %v4915, %v4944
      %v4946 = vsel %vm2965, %v4924, %v4945
      %v4947 = vsel %vm2967, %v4933, %v4946
      %4950 = vxpose.xlu0.b32.start [1/16] %v4940, 128
      %4951 = vxpose.xlu0.b32.cont [2/16] %v4947, 128
      %4952 = vxpose.xlu0.b32.cont [3/16] 0.0, 128
      %4953 = vxpose.xlu0.b32.cont [4/16] 0.0, 128
      %4954 = vxpose.xlu0.b32.cont [5/16] 0.0, 128
      %4955 = vxpose.xlu0.b32.cont [6/16] 0.0, 128
      %4956 = vxpose.xlu0.b32.cont [7/16] 0.0, 128
      %4957 = vxpose.xlu0.b32.cont [8/16] 0.0, 128
      %4958 = vxpose.xlu0.b32.cont [9/16] 0.0, 128
      %4959 = vxpose.xlu0.b32.cont [10/16] 0.0, 128
      %4960 = vxpose.xlu0.b32.cont [11/16] 0.0, 128
      %4961 = vxpose.xlu0.b32.cont [12/16] 0.0, 128
      %4962 = vxpose.xlu0.b32.cont [13/16] 0.0, 128
      %4963 = vxpose.xlu0.b32.cont [14/16] 0.0, 128
      %4964 = vxpose.xlu0.b32.cont [15/16] 0.0, 128
      %4965 = vxpose.xlu0.b32.end [16/16] 0.0, 128
      %v4966 = vpop.trf.xlu0
      %v4967 = vpop.trf.xlu0
      %v4968 = vpop.trf.xlu0
      %v4969 = vpop.trf.xlu0
      %v4970 = vpop.trf.xlu0
      %v4971 = vpop.trf.xlu0
      %v4972 = vpop.trf.xlu0
      %v4973 = vpop.trf.xlu0
      %v4974 = vpop.trf.xlu0
      %v4975 = vpop.trf.xlu0
      %v4976 = vpop.trf.xlu0
      %v4977 = vpop.trf.xlu0
      %v4978 = vpop.trf.xlu0
      %v4979 = vpop.trf.xlu0
      %v4980 = vpop.trf.xlu0
      %v4981 = vpop.trf.xlu0
      %v4982 = vlaneseq
      %v4983 = vshrl.u32 %v4982, 7
      %v4984 = vsub.s32 0, %v4983
      %v4985 = vrot.slane %v4966, %v4984
      %4987 = vbcast.lane.b32.xlu0 %v4985, 256
      %v4988 = vpop.permute.xlu0 %4987
      %s4990 = sor.u32 256, 8
      %4991 = vbcast.lane.b32.xlu0 %v4985, %s4990
      %v4992 = vpop.permute.xlu0 %4991
      %v4993 = vlaneseq
      %v4994 = vshrl.u32 %v4993, 7
      %v4995 = vsub.s32 1, %v4994
      %v4996 = vrot.slane %v4966, %v4995
      %4998 = vbcast.lane.b32.xlu0 %v4996, 256
      %v4999 = vpop.permute.xlu0 %4998
      %s5001 = sor.u32 256, 8
      %5002 = vbcast.lane.b32.xlu0 %v4996, %s5001
      %v5003 = vpop.permute.xlu0 %5002
      %v5004 = vlaneseq
      %v5005 = vshrl.u32 %v5004, 7
      %v5006 = vsub.s32 2, %v5005
      %v5007 = vrot.slane %v4966, %v5006
      %5009 = vbcast.lane.b32.xlu0 %v5007, 256
      %v5010 = vpop.permute.xlu0 %5009
      %s5012 = sor.u32 256, 8
      %5013 = vbcast.lane.b32.xlu0 %v5007, %s5012
      %v5014 = vpop.permute.xlu0 %5013
      %v5015 = vlaneseq
      %v5016 = vshrl.u32 %v5015, 7
      %v5017 = vsub.s32 3, %v5016
      %v5018 = vrot.slane %v4966, %v5017
      %5020 = vbcast.lane.b32.xlu0 %v5018, 256
      %v5021 = vpop.permute.xlu0 %5020
      %s5023 = sor.u32 256, 8
      %5024 = vbcast.lane.b32.xlu0 %v5018, %s5023
      %v5025 = vpop.permute.xlu0 %5024
      %v5026 = vlaneseq
      %v5027 = vshrl.u32 %v5026, 7
      %v5028 = vsub.s32 4, %v5027
      %v5029 = vrot.slane %v4966, %v5028
      %5031 = vbcast.lane.b32.xlu0 %v5029, 256
      %v5032 = vpop.permute.xlu0 %5031
      %s5034 = sor.u32 256, 8
      %5035 = vbcast.lane.b32.xlu0 %v5029, %s5034
      %v5036 = vpop.permute.xlu0 %5035
      %v5037 = vlaneseq
      %v5038 = vshrl.u32 %v5037, 7
      %v5039 = vsub.s32 5, %v5038
      %v5040 = vrot.slane %v4966, %v5039
      %5042 = vbcast.lane.b32.xlu0 %v5040, 256
      %v5043 = vpop.permute.xlu0 %5042
      %s5045 = sor.u32 256, 8
      %5046 = vbcast.lane.b32.xlu0 %v5040, %s5045
      %v5047 = vpop.permute.xlu0 %5046
      %v5048 = vlaneseq
      %v5049 = vshrl.u32 %v5048, 7
      %v5050 = vsub.s32 6, %v5049
      %v5051 = vrot.slane %v4966, %v5050
      %5053 = vbcast.lane.b32.xlu0 %v5051, 256
      %v5054 = vpop.permute.xlu0 %5053
      %s5056 = sor.u32 256, 8
      %5057 = vbcast.lane.b32.xlu0 %v5051, %s5056
      %v5058 = vpop.permute.xlu0 %5057
      %v5059 = vlaneseq
      %v5060 = vshrl.u32 %v5059, 7
      %v5061 = vsub.s32 7, %v5060
      %v5062 = vrot.slane %v4966, %v5061
      %5064 = vbcast.lane.b32.xlu0 %v5062, 256
      %v5065 = vpop.permute.xlu0 %5064
      %s5067 = sor.u32 256, 8
      %5068 = vbcast.lane.b32.xlu0 %v5062, %s5067
      %v5069 = vpop.permute.xlu0 %5068
      %v5070 = vlaneseq
      %v5071 = vshrl.u32 %v5070, 7
      %v5072 = vsub.s32 0, %v5071
      %v5073 = vrot.slane %v4967, %v5072
      %5075 = vbcast.lane.b32.xlu0 %v5073, 256
      %v5076 = vpop.permute.xlu0 %5075
      %s5078 = sor.u32 256, 8
      %5079 = vbcast.lane.b32.xlu0 %v5073, %s5078
      %v5080 = vpop.permute.xlu0 %5079
      %v5081 = vlaneseq
      %v5082 = vshrl.u32 %v5081, 7
      %v5083 = vsub.s32 1, %v5082
      %v5084 = vrot.slane %v4967, %v5083
      %5086 = vbcast.lane.b32.xlu0 %v5084, 256
      %v5087 = vpop.permute.xlu0 %5086
      %s5089 = sor.u32 256, 8
      %5090 = vbcast.lane.b32.xlu0 %v5084, %s5089
      %v5091 = vpop.permute.xlu0 %5090
      %v5092 = vlaneseq
      %v5093 = vshrl.u32 %v5092, 7
      %v5094 = vsub.s32 2, %v5093
      %v5095 = vrot.slane %v4967, %v5094
      %5097 = vbcast.lane.b32.xlu0 %v5095, 256
      %v5098 = vpop.permute.xlu0 %5097
      %s5100 = sor.u32 256, 8
      %5101 = vbcast.lane.b32.xlu0 %v5095, %s5100
      %v5102 = vpop.permute.xlu0 %5101
      %v5103 = vlaneseq
      %v5104 = vshrl.u32 %v5103, 7
      %v5105 = vsub.s32 3, %v5104
      %v5106 = vrot.slane %v4967, %v5105
      %5108 = vbcast.lane.b32.xlu0 %v5106, 256
      %v5109 = vpop.permute.xlu0 %5108
      %s5111 = sor.u32 256, 8
      %5112 = vbcast.lane.b32.xlu0 %v5106, %s5111
      %v5113 = vpop.permute.xlu0 %5112
      %v5114 = vlaneseq
      %v5115 = vshrl.u32 %v5114, 7
      %v5116 = vsub.s32 4, %v5115
      %v5117 = vrot.slane %v4967, %v5116
      %5119 = vbcast.lane.b32.xlu0 %v5117, 256
      %v5120 = vpop.permute.xlu0 %5119
      %s5122 = sor.u32 256, 8
      %5123 = vbcast.lane.b32.xlu0 %v5117, %s5122
      %v5124 = vpop.permute.xlu0 %5123
      %v5125 = vlaneseq
      %v5126 = vshrl.u32 %v5125, 7
      %v5127 = vsub.s32 5, %v5126
      %v5128 = vrot.slane %v4967, %v5127
      %5130 = vbcast.lane.b32.xlu0 %v5128, 256
      %v5131 = vpop.permute.xlu0 %5130
      %s5133 = sor.u32 256, 8
      %5134 = vbcast.lane.b32.xlu0 %v5128, %s5133
      %v5135 = vpop.permute.xlu0 %5134
      %v5136 = vlaneseq
      %v5137 = vshrl.u32 %v5136, 7
      %v5138 = vsub.s32 6, %v5137
      %v5139 = vrot.slane %v4967, %v5138
      %5141 = vbcast.lane.b32.xlu0 %v5139, 256
      %v5142 = vpop.permute.xlu0 %5141
      %s5144 = sor.u32 256, 8
      %5145 = vbcast.lane.b32.xlu0 %v5139, %s5144
      %v5146 = vpop.permute.xlu0 %5145
      %v5147 = vlaneseq
      %v5148 = vshrl.u32 %v5147, 7
      %v5149 = vsub.s32 7, %v5148
      %v5150 = vrot.slane %v4967, %v5149
      %5152 = vbcast.lane.b32.xlu0 %v5150, 256
      %v5153 = vpop.permute.xlu0 %5152
      %s5155 = sor.u32 256, 8
      %5156 = vbcast.lane.b32.xlu0 %v5150, %s5155
      %v5157 = vpop.permute.xlu0 %5156
      %v5158 = vmul.f32 %v3781, %v4988
      %v5159 = vmul.f32 %v3783, %v4992
      %v5160 = vmul.f32 %v3785, %v4999
      %v5161 = vmul.f32 %v3787, %v5003
      %v5162 = vmul.f32 %v3789, %v5010
      %v5163 = vmul.f32 %v3791, %v5014
      %v5164 = vmul.f32 %v3793, %v5021
      %v5165 = vmul.f32 %v3795, %v5025
      %v5166 = vmul.f32 %v3797, %v5032
      %v5167 = vmul.f32 %v3799, %v5036
      %v5168 = vmul.f32 %v3801, %v5043
      %v5169 = vmul.f32 %v3803, %v5047
      %v5170 = vmul.f32 %v3805, %v5054
      %v5171 = vmul.f32 %v3807, %v5058
      %v5172 = vmul.f32 %v3809, %v5065
      %v5173 = vmul.f32 %v3811, %v5069
      %v5174 = vmul.f32 %v3813, %v5076
      %v5175 = vmul.f32 %v3815, %v5080
      %v5176 = vmul.f32 %v3817, %v5087
      %v5177 = vmul.f32 %v3819, %v5091
      %v5178 = vmul.f32 %v3821, %v5098
      %v5179 = vmul.f32 %v3823, %v5102
      %v5180 = vmul.f32 %v3825, %v5109
      %v5181 = vmul.f32 %v3827, %v5113
      %v5182 = vmul.f32 %v3829, %v5120
      %v5183 = vmul.f32 %v3831, %v5124
      %v5184 = vmul.f32 %v3833, %v5131
      %v5185 = vmul.f32 %v3835, %v5135
      %v5186 = vmul.f32 %v3837, %v5142
      %v5187 = vmul.f32 %v3839, %v5146
      %v5188 = vmul.f32 %v3841, %v5153
      %v5189 = vmul.f32 %v3843, %v5157
      %v5190 = vpack.c.bf16 %v5159, %v5158
      %v5191 = vpack.c.bf16 %v5161, %v5160
      %v5192 = vpack.c.bf16 %v5163, %v5162
      %v5193 = vpack.c.bf16 %v5165, %v5164
      %v5194 = vpack.c.bf16 %v5167, %v5166
      %v5195 = vpack.c.bf16 %v5169, %v5168
      %v5196 = vpack.c.bf16 %v5171, %v5170
      %v5197 = vpack.c.bf16 %v5173, %v5172
      %v5198 = vpack.c.bf16 %v5175, %v5174
      %v5199 = vpack.c.bf16 %v5177, %v5176
      %v5200 = vpack.c.bf16 %v5179, %v5178
      %v5201 = vpack.c.bf16 %v5181, %v5180
      %v5202 = vpack.c.bf16 %v5183, %v5182
      %v5203 = vpack.c.bf16 %v5185, %v5184
      %v5204 = vpack.c.bf16 %v5187, %v5186
      %v5205 = vpack.c.bf16 %v5189, %v5188
      %v5238 = vmul.f32 %v3909, %v4696
      %v5239 = vmul.f32 %v3911, %v4699
      %v5240 = vmul.f32 %v3913, %v4702
      %v5241 = vmul.f32 %v3915, %v4705
      %v5242 = vmul.f32 %v3917, %v4708
      %v5243 = vmul.f32 %v3919, %v4711
      %v5244 = vmul.f32 %v3921, %v4714
      %v5245 = vmul.f32 %v3923, %v4717
      %v5246 = vmul.f32 %v3925, %v4720
      %v5247 = vmul.f32 %v3927, %v4723
      %v5248 = vmul.f32 %v3929, %v4726
      %v5249 = vmul.f32 %v3931, %v4729
      %v5250 = vmul.f32 %v3933, %v4732
      %v5251 = vmul.f32 %v3935, %v4735
      %v5252 = vmul.f32 %v3937, %v4738
      %v5253 = vmul.f32 %v3939, %v4741
      %v5254 = vmul.f32 %v3941, %v4744
      %v5255 = vmul.f32 %v3943, %v4747
      %v5256 = vmul.f32 %v3945, %v4750
      %v5257 = vmul.f32 %v3947, %v4753
      %v5258 = vmul.f32 %v3949, %v4756
      %v5259 = vmul.f32 %v3951, %v4759
      %v5260 = vmul.f32 %v3953, %v4762
      %v5261 = vmul.f32 %v3955, %v4765
      %v5262 = vmul.f32 %v3957, %v4768
      %v5263 = vmul.f32 %v3959, %v4771
      %v5264 = vmul.f32 %v3961, %v4774
      %v5265 = vmul.f32 %v3963, %v4777
      %v5266 = vmul.f32 %v3965, %v4780
      %v5267 = vmul.f32 %v3967, %v4783
      %v5268 = vmul.f32 %v3969, %v4786
      %v5269 = vmul.f32 %v3971, %v4789
      %v5270 = vpack.c.bf16 %v5239, %v5238
      %v5271 = vpack.c.bf16 %v5241, %v5240
      %v5272 = vpack.c.bf16 %v5243, %v5242
      %v5273 = vpack.c.bf16 %v5245, %v5244
      %v5274 = vpack.c.bf16 %v5247, %v5246
      %v5275 = vpack.c.bf16 %v5249, %v5248
      %v5276 = vpack.c.bf16 %v5251, %v5250
      %v5277 = vpack.c.bf16 %v5253, %v5252
      %v5278 = vpack.c.bf16 %v5255, %v5254
      %v5279 = vpack.c.bf16 %v5257, %v5256
      %v5280 = vpack.c.bf16 %v5259, %v5258
      %v5281 = vpack.c.bf16 %v5261, %v5260
      %v5282 = vpack.c.bf16 %v5263, %v5262
      %v5283 = vpack.c.bf16 %v5265, %v5264
      %v5284 = vpack.c.bf16 %v5267, %v5266
      %v5285 = vpack.c.bf16 %v5269, %v5268
      %v5288 = vsel %vm2584, %v5190, 0
      %5290 = vmatprep.subr.bf16.mxu0 0
      %5291 = vmatpush1.bf16.msra.mxu0 %v1006
      %5292 = vmatprep.subr.bf16.mxu0 0
      %5293 = vmatpush1.bf16.msra.mxu0 0
      %5294 = vmatprep.subr.bf16.mxu0 0
      %5295 = vmatpush1.bf16.msra.mxu0 0
      %5296 = vmatprep.subr.bf16.mxu0 0
      %5297 = vmatpush1.bf16.msra.mxu0 0
      %5298 = vmatprep.subr.bf16.mxu0 0
      %5299 = vmatpush1.bf16.msra.mxu0 0
      %5300 = vmatprep.subr.bf16.mxu0 0
      %5301 = vmatpush1.bf16.msra.mxu0 0
      %5302 = vmatprep.subr.bf16.mxu0 0
      %5303 = vmatpush1.bf16.msra.mxu0 0
      %5304 = vmatprep.subr.bf16.mxu0 0
      %5305 = vmatpush1.bf16.msra.mxu0 0
      %5306 = vmatprep.subr.bf16.mxu0 0
      %5307 = vmatpush1.bf16.msra.mxu0 0
      %5308 = vmatprep.subr.bf16.mxu0 0
      %5309 = vmatpush1.bf16.msra.mxu0 0
      %5310 = vmatprep.subr.bf16.mxu0 0
      %5311 = vmatpush1.bf16.msra.mxu0 0
      %5312 = vmatprep.subr.bf16.mxu0 0
      %5313 = vmatpush1.bf16.msra.mxu0 0
      %5314 = vmatprep.subr.bf16.mxu0 0
      %5315 = vmatpush1.bf16.msra.mxu0 0
      %5316 = vmatprep.subr.bf16.mxu0 0
      %5317 = vmatpush1.bf16.msra.mxu0 0
      %5318 = vmatprep.subr.bf16.mxu0 0
      %5319 = vmatpush1.bf16.msra.mxu0 0
      %5320 = vmatprep.subr.bf16.mxu0 0
      %5321 = vmatpush1.bf16.msra.mxu0 0
      %5322 = vmatprep.mubr.bf16.mxu0 0
      %5323 = vmatmul.mubr.bf16.gmra.mrb[0].mxu0 %v5288
      %v5324 = vpop.f32.mrb[0].mxu0
      %v5325 = vadd.f32 0.0, %v5324
      %v5326 = vpop.f32.mrb[0].mxu0
      %v5327 = vpop.f32.mrb[0].mxu0
      %v5328 = vadd.f32 0.0, %v5327
      %v5329 = vpop.f32.mrb[0].mxu0
      %5330 = vdwg.mxu0
      %v5333 = vsel %vm2584, %v5191, 0
      %5335 = vmatprep.subr.bf16.mxu0 0
      %5336 = vmatpush1.bf16.msra.mxu0 %v1058
      %5337 = vmatprep.subr.bf16.mxu0 0
      %5338 = vmatpush1.bf16.msra.mxu0 0
      %5339 = vmatprep.subr.bf16.mxu0 0
      %5340 = vmatpush1.bf16.msra.mxu0 0
      %5341 = vmatprep.subr.bf16.mxu0 0
      %5342 = vmatpush1.bf16.msra.mxu0 0
      %5343 = vmatprep.subr.bf16.mxu0 0
      %5344 = vmatpush1.bf16.msra.mxu0 0
      %5345 = vmatprep.subr.bf16.mxu0 0
      %5346 = vmatpush1.bf16.msra.mxu0 0
      %5347 = vmatprep.subr.bf16.mxu0 0
      %5348 = vmatpush1.bf16.msra.mxu0 0
      %5349 = vmatprep.subr.bf16.mxu0 0
      %5350 = vmatpush1.bf16.msra.mxu0 0
      %5351 = vmatprep.subr.bf16.mxu0 0
      %5352 = vmatpush1.bf16.msra.mxu0 0
      %5353 = vmatprep.subr.bf16.mxu0 0
      %5354 = vmatpush1.bf16.msra.mxu0 0
      %5355 = vmatprep.subr.bf16.mxu0 0
      %5356 = vmatpush1.bf16.msra.mxu0 0
      %5357 = vmatprep.subr.bf16.mxu0 0
      %5358 = vmatpush1.bf16.msra.mxu0 0
      %5359 = vmatprep.subr.bf16.mxu0 0
      %5360 = vmatpush1.bf16.msra.mxu0 0
      %5361 = vmatprep.subr.bf16.mxu0 0
      %5362 = vmatpush1.bf16.msra.mxu0 0
      %5363 = vmatprep.subr.bf16.mxu0 0
      %5364 = vmatpush1.bf16.msra.mxu0 0
      %5365 = vmatprep.subr.bf16.mxu0 0
      %5366 = vmatpush1.bf16.msra.mxu0 0
      %5367 = vmatprep.mubr.bf16.mxu0 0
      %5368 = vmatmul.mubr.bf16.gmra.mrb[0].mxu0 %v5333
      %v5369 = vpop.f32.mrb[0].mxu0
      %v5370 = vadd.f32 0.0, %v5369
      %v5371 = vpop.f32.mrb[0].mxu0
      %v5372 = vpop.f32.mrb[0].mxu0
      %v5373 = vadd.f32 0.0, %v5372
      %v5374 = vpop.f32.mrb[0].mxu0
      %5375 = vdwg.mxu0
      %v5378 = vsel %vm2584, %v5192, 0
      %5380 = vmatprep.subr.bf16.mxu0 0
      %5381 = vmatpush1.bf16.msra.mxu0 %v1110
      %5382 = vmatprep.subr.bf16.mxu0 0
      %5383 = vmatpush1.bf16.msra.mxu0 0
      %5384 = vmatprep.subr.bf16.mxu0 0
      %5385 = vmatpush1.bf16.msra.mxu0 0
      %5386 = vmatprep.subr.bf16.mxu0 0
      %5387 = vmatpush1.bf16.msra.mxu0 0
      %5388 = vmatprep.subr.bf16.mxu0 0
      %5389 = vmatpush1.bf16.msra.mxu0 0
      %5390 = vmatprep.subr.bf16.mxu0 0
      %5391 = vmatpush1.bf16.msra.mxu0 0
      %5392 = vmatprep.subr.bf16.mxu0 0
      %5393 = vmatpush1.bf16.msra.mxu0 0
      %5394 = vmatprep.subr.bf16.mxu0 0
      %5395 = vmatpush1.bf16.msra.mxu0 0
      %5396 = vmatprep.subr.bf16.mxu0 0
      %5397 = vmatpush1.bf16.msra.mxu0 0
      %5398 = vmatprep.subr.bf16.mxu0 0
      %5399 = vmatpush1.bf16.msra.mxu0 0
      %5400 = vmatprep.subr.bf16.mxu0 0
      %5401 = vmatpush1.bf16.msra.mxu0 0
      %5402 = vmatprep.subr.bf16.mxu0 0
      %5403 = vmatpush1.bf16.msra.mxu0 0
      %5404 = vmatprep.subr.bf16.mxu0 0
      %5405 = vmatpush1.bf16.msra.mxu0 0
      %5406 = vmatprep.subr.bf16.mxu0 0
      %5407 = vmatpush1.bf16.msra.mxu0 0
      %5408 = vmatprep.subr.bf16.mxu0 0
      %5409 = vmatpush1.bf16.msra.mxu0 0
      %5410 = vmatprep.subr.bf16.mxu0 0
      %5411 = vmatpush1.bf16.msra.mxu0 0
      %5412 = vmatprep.mubr.bf16.mxu0 0
      %5413 = vmatmul.mubr.bf16.gmra.mrb[0].mxu0 %v5378
      %v5414 = vpop.f32.mrb[0].mxu0
      %v5415 = vadd.f32 0.0, %v5414
      %v5416 = vpop.f32.mrb[0].mxu0
      %v5417 = vpop.f32.mrb[0].mxu0
      %v5418 = vadd.f32 0.0, %v5417
      %v5419 = vpop.f32.mrb[0].mxu0
      %5420 = vdwg.mxu0
      %v5423 = vsel %vm2584, %v5193, 0
      %5425 = vmatprep.subr.bf16.mxu0 0
      %5426 = vmatpush1.bf16.msra.mxu0 %v1162
      %5427 = vmatprep.subr.bf16.mxu0 0
      %5428 = vmatpush1.bf16.msra.mxu0 0
      %5429 = vmatprep.subr.bf16.mxu0 0
      %5430 = vmatpush1.bf16.msra.mxu0 0
      %5431 = vmatprep.subr.bf16.mxu0 0
      %5432 = vmatpush1.bf16.msra.mxu0 0
      %5433 = vmatprep.subr.bf16.mxu0 0
      %5434 = vmatpush1.bf16.msra.mxu0 0
      %5435 = vmatprep.subr.bf16.mxu0 0
      %5436 = vmatpush1.bf16.msra.mxu0 0
      %5437 = vmatprep.subr.bf16.mxu0 0
      %5438 = vmatpush1.bf16.msra.mxu0 0
      %5439 = vmatprep.subr.bf16.mxu0 0
      %5440 = vmatpush1.bf16.msra.mxu0 0
      %5441 = vmatprep.subr.bf16.mxu0 0
      %5442 = vmatpush1.bf16.msra.mxu0 0
      %5443 = vmatprep.subr.bf16.mxu0 0
      %5444 = vmatpush1.bf16.msra.mxu0 0
      %5445 = vmatprep.subr.bf16.mxu0 0
      %5446 = vmatpush1.bf16.msra.mxu0 0
      %5447 = vmatprep.subr.bf16.mxu0 0
      %5448 = vmatpush1.bf16.msra.mxu0 0
      %5449 = vmatprep.subr.bf16.mxu0 0
      %5450 = vmatpush1.bf16.msra.mxu0 0
      %5451 = vmatprep.subr.bf16.mxu0 0
      %5452 = vmatpush1.bf16.msra.mxu0 0
      %5453 = vmatprep.subr.bf16.mxu0 0
      %5454 = vmatpush1.bf16.msra.mxu0 0
      %5455 = vmatprep.subr.bf16.mxu0 0
      %5456 = vmatpush1.bf16.msra.mxu0 0
      %5457 = vmatprep.mubr.bf16.mxu0 0
      %5458 = vmatmul.mubr.bf16.gmra.mrb[0].mxu0 %v5423
      %v5459 = vpop.f32.mrb[0].mxu0
      %v5460 = vadd.f32 0.0, %v5459
      %v5461 = vpop.f32.mrb[0].mxu0
      %v5462 = vpop.f32.mrb[0].mxu0
      %v5463 = vadd.f32 0.0, %v5462
      %v5464 = vpop.f32.mrb[0].mxu0
      %5465 = vdwg.mxu0
      %v5468 = vsel %vm2584, %v5194, 0
      %5470 = vmatprep.subr.bf16.mxu0 0
      %5471 = vmatpush1.bf16.msra.mxu0 %v1214
      %5472 = vmatprep.subr.bf16.mxu0 0
      %5473 = vmatpush1.bf16.msra.mxu0 0
      %5474 = vmatprep.subr.bf16.mxu0 0
      %5475 = vmatpush1.bf16.msra.mxu0 0
      %5476 = vmatprep.subr.bf16.mxu0 0
      %5477 = vmatpush1.bf16.msra.mxu0 0
      %5478 = vmatprep.subr.bf16.mxu0 0
      %5479 = vmatpush1.bf16.msra.mxu0 0
      %5480 = vmatprep.subr.bf16.mxu0 0
      %5481 = vmatpush1.bf16.msra.mxu0 0
      %5482 = vmatprep.subr.bf16.mxu0 0
      %5483 = vmatpush1.bf16.msra.mxu0 0
      %5484 = vmatprep.subr.bf16.mxu0 0
      %5485 = vmatpush1.bf16.msra.mxu0 0
      %5486 = vmatprep.subr.bf16.mxu0 0
      %5487 = vmatpush1.bf16.msra.mxu0 0
      %5488 = vmatprep.subr.bf16.mxu0 0
      %5489 = vmatpush1.bf16.msra.mxu0 0
      %5490 = vmatprep.subr.bf16.mxu0 0
      %5491 = vmatpush1.bf16.msra.mxu0 0
      %5492 = vmatprep.subr.bf16.mxu0 0
      %5493 = vmatpush1.bf16.msra.mxu0 0
      %5494 = vmatprep.subr.bf16.mxu0 0
      %5495 = vmatpush1.bf16.msra.mxu0 0
      %5496 = vmatprep.subr.bf16.mxu0 0
      %5497 = vmatpush1.bf16.msra.mxu0 0
      %5498 = vmatprep.subr.bf16.mxu0 0
      %5499 = vmatpush1.bf16.msra.mxu0 0
      %5500 = vmatprep.subr.bf16.mxu0 0
      %5501 = vmatpush1.bf16.msra.mxu0 0
      %5502 = vmatprep.mubr.bf16.mxu0 0
      %5503 = vmatmul.mubr.bf16.gmra.mrb[0].mxu0 %v5468
      %v5504 = vpop.f32.mrb[0].mxu0
      %v5505 = vadd.f32 0.0, %v5504
      %v5506 = vpop.f32.mrb[0].mxu0
      %v5507 = vpop.f32.mrb[0].mxu0
      %v5508 = vadd.f32 0.0, %v5507
      %v5509 = vpop.f32.mrb[0].mxu0
      %5510 = vdwg.mxu0
      %v5513 = vsel %vm2584, %v5195, 0
      %5515 = vmatprep.subr.bf16.mxu0 0
      %5516 = vmatpush1.bf16.msra.mxu0 %v1266
      %5517 = vmatprep.subr.bf16.mxu0 0
      %5518 = vmatpush1.bf16.msra.mxu0 0
      %5519 = vmatprep.subr.bf16.mxu0 0
      %5520 = vmatpush1.bf16.msra.mxu0 0
      %5521 = vmatprep.subr.bf16.mxu0 0
      %5522 = vmatpush1.bf16.msra.mxu0 0
      %5523 = vmatprep.subr.bf16.mxu0 0
      %5524 = vmatpush1.bf16.msra.mxu0 0
      %5525 = vmatprep.subr.bf16.mxu0 0
      %5526 = vmatpush1.bf16.msra.mxu0 0
      %5527 = vmatprep.subr.bf16.mxu0 0
      %5528 = vmatpush1.bf16.msra.mxu0 0
      %5529 = vmatprep.subr.bf16.mxu0 0
      %5530 = vmatpush1.bf16.msra.mxu0 0
      %5531 = vmatprep.subr.bf16.mxu0 0
      %5532 = vmatpush1.bf16.msra.mxu0 0
      %5533 = vmatprep.subr.bf16.mxu0 0
      %5534 = vmatpush1.bf16.msra.mxu0 0
      %5535 = vmatprep.subr.bf16.mxu0 0
      %5536 = vmatpush1.bf16.msra.mxu0 0
      %5537 = vmatprep.subr.bf16.mxu0 0
      %5538 = vmatpush1.bf16.msra.mxu0 0
      %5539 = vmatprep.subr.bf16.mxu0 0
      %5540 = vmatpush1.bf16.msra.mxu0 0
      %5541 = vmatprep.subr.bf16.mxu0 0
      %5542 = vmatpush1.bf16.msra.mxu0 0
      %5543 = vmatprep.subr.bf16.mxu0 0
      %5544 = vmatpush1.bf16.msra.mxu0 0
      %5545 = vmatprep.subr.bf16.mxu0 0
      %5546 = vmatpush1.bf16.msra.mxu0 0
      %5547 = vmatprep.mubr.bf16.mxu0 0
      %5548 = vmatmul.mubr.bf16.gmra.mrb[0].mxu0 %v5513
      %v5549 = vpop.f32.mrb[0].mxu0
      %v5550 = vadd.f32 0.0, %v5549
      %v5551 = vpop.f32.mrb[0].mxu0
      %v5552 = vpop.f32.mrb[0].mxu0
      %v5553 = vadd.f32 0.0, %v5552
      %v5554 = vpop.f32.mrb[0].mxu0
      %5555 = vdwg.mxu0
      %v5558 = vsel %vm2584, %v5196, 0
      %5560 = vmatprep.subr.bf16.mxu0 0
      %5561 = vmatpush1.bf16.msra.mxu0 %v1318
      %5562 = vmatprep.subr.bf16.mxu0 0
      %5563 = vmatpush1.bf16.msra.mxu0 0
      %5564 = vmatprep.subr.bf16.mxu0 0
      %5565 = vmatpush1.bf16.msra.mxu0 0
      %5566 = vmatprep.subr.bf16.mxu0 0
      %5567 = vmatpush1.bf16.msra.mxu0 0
      %5568 = vmatprep.subr.bf16.mxu0 0
      %5569 = vmatpush1.bf16.msra.mxu0 0
      %5570 = vmatprep.subr.bf16.mxu0 0
      %5571 = vmatpush1.bf16.msra.mxu0 0
      %5572 = vmatprep.subr.bf16.mxu0 0
      %5573 = vmatpush1.bf16.msra.mxu0 0
      %5574 = vmatprep.subr.bf16.mxu0 0
      %5575 = vmatpush1.bf16.msra.mxu0 0
      %5576 = vmatprep.subr.bf16.mxu0 0
      %5577 = vmatpush1.bf16.msra.mxu0 0
      %5578 = vmatprep.subr.bf16.mxu0 0
      %5579 = vmatpush1.bf16.msra.mxu0 0
      %5580 = vmatprep.subr.bf16.mxu0 0
      %5581 = vmatpush1.bf16.msra.mxu0 0
      %5582 = vmatprep.subr.bf16.mxu0 0
      %5583 = vmatpush1.bf16.msra.mxu0 0
      %5584 = vmatprep.subr.bf16.mxu0 0
      %5585 = vmatpush1.bf16.msra.mxu0 0
      %5586 = vmatprep.subr.bf16.mxu0 0
      %5587 = vmatpush1.bf16.msra.mxu0 0
      %5588 = vmatprep.subr.bf16.mxu0 0
      %5589 = vmatpush1.bf16.msra.mxu0 0
      %5590 = vmatprep.subr.bf16.mxu0 0
      %5591 = vmatpush1.bf16.msra.mxu0 0
      %5592 = vmatprep.mubr.bf16.mxu0 0
      %5593 = vmatmul.mubr.bf16.gmra.mrb[0].mxu0 %v5558
      %v5594 = vpop.f32.mrb[0].mxu0
      %v5595 = vadd.f32 0.0, %v5594
      %v5596 = vpop.f32.mrb[0].mxu0
      %v5597 = vpop.f32.mrb[0].mxu0
      %v5598 = vadd.f32 0.0, %v5597
      %v5599 = vpop.f32.mrb[0].mxu0
      %5600 = vdwg.mxu0
      %v5603 = vsel %vm2584, %v5197, 0
      %5605 = vmatprep.subr.bf16.mxu0 0
      %5606 = vmatpush1.bf16.msra.mxu0 %v1370
      %5607 = vmatprep.subr.bf16.mxu0 0
      %5608 = vmatpush1.bf16.msra.mxu0 0
      %5609 = vmatprep.subr.bf16.mxu0 0
      %5610 = vmatpush1.bf16.msra.mxu0 0
      %5611 = vmatprep.subr.bf16.mxu0 0
      %5612 = vmatpush1.bf16.msra.mxu0 0
      %5613 = vmatprep.subr.bf16.mxu0 0
      %5614 = vmatpush1.bf16.msra.mxu0 0
      %5615 = vmatprep.subr.bf16.mxu0 0
      %5616 = vmatpush1.bf16.msra.mxu0 0
      %5617 = vmatprep.subr.bf16.mxu0 0
      %5618 = vmatpush1.bf16.msra.mxu0 0
      %5619 = vmatprep.subr.bf16.mxu0 0
      %5620 = vmatpush1.bf16.msra.mxu0 0
      %5621 = vmatprep.subr.bf16.mxu0 0
      %5622 = vmatpush1.bf16.msra.mxu0 0
      %5623 = vmatprep.subr.bf16.mxu0 0
      %5624 = vmatpush1.bf16.msra.mxu0 0
      %5625 = vmatprep.subr.bf16.mxu0 0
      %5626 = vmatpush1.bf16.msra.mxu0 0
      %5627 = vmatprep.subr.bf16.mxu0 0
      %5628 = vmatpush1.bf16.msra.mxu0 0
      %5629 = vmatprep.subr.bf16.mxu0 0
      %5630 = vmatpush1.bf16.msra.mxu0 0
      %5631 = vmatprep.subr.bf16.mxu0 0
      %5632 = vmatpush1.bf16.msra.mxu0 0
      %5633 = vmatprep.subr.bf16.mxu0 0
      %5634 = vmatpush1.bf16.msra.mxu0 0
      %5635 = vmatprep.subr.bf16.mxu0 0
      %5636 = vmatpush1.bf16.msra.mxu0 0
      %5637 = vmatprep.mubr.bf16.mxu0 0
      %5638 = vmatmul.mubr.bf16.gmra.mrb[0].mxu0 %v5603
      %v5639 = vpop.f32.mrb[0].mxu0
      %v5640 = vadd.f32 0.0, %v5639
      %v5641 = vpop.f32.mrb[0].mxu0
      %v5642 = vpop.f32.mrb[0].mxu0
      %v5643 = vadd.f32 0.0, %v5642
      %v5644 = vpop.f32.mrb[0].mxu0
      %5645 = vdwg.mxu0
      %v5648 = vsel %vm2584, %v5198, 0
      %5650 = vmatprep.subr.bf16.mxu0 0
      %5651 = vmatpush1.bf16.msra.mxu0 %v1422
      %5652 = vmatprep.subr.bf16.mxu0 0
      %5653 = vmatpush1.bf16.msra.mxu0 0
      %5654 = vmatprep.subr.bf16.mxu0 0
      %5655 = vmatpush1.bf16.msra.mxu0 0
      %5656 = vmatprep.subr.bf16.mxu0 0
      %5657 = vmatpush1.bf16.msra.mxu0 0
      %5658 = vmatprep.subr.bf16.mxu0 0
      %5659 = vmatpush1.bf16.msra.mxu0 0
      %5660 = vmatprep.subr.bf16.mxu0 0
      %5661 = vmatpush1.bf16.msra.mxu0 0
      %5662 = vmatprep.subr.bf16.mxu0 0
      %5663 = vmatpush1.bf16.msra.mxu0 0
      %5664 = vmatprep.subr.bf16.mxu0 0
      %5665 = vmatpush1.bf16.msra.mxu0 0
      %5666 = vmatprep.subr.bf16.mxu0 0
      %5667 = vmatpush1.bf16.msra.mxu0 0
      %5668 = vmatprep.subr.bf16.mxu0 0
      %5669 = vmatpush1.bf16.msra.mxu0 0
      %5670 = vmatprep.subr.bf16.mxu0 0
      %5671 = vmatpush1.bf16.msra.mxu0 0
      %5672 = vmatprep.subr.bf16.mxu0 0
      %5673 = vmatpush1.bf16.msra.mxu0 0
      %5674 = vmatprep.subr.bf16.mxu0 0
      %5675 = vmatpush1.bf16.msra.mxu0 0
      %5676 = vmatprep.subr.bf16.mxu0 0
      %5677 = vmatpush1.bf16.msra.mxu0 0
      %5678 = vmatprep.subr.bf16.mxu0 0
      %5679 = vmatpush1.bf16.msra.mxu0 0
      %5680 = vmatprep.subr.bf16.mxu0 0
      %5681 = vmatpush1.bf16.msra.mxu0 0
      %5682 = vmatprep.mubr.bf16.mxu0 0
      %5683 = vmatmul.mubr.bf16.gmra.mrb[0].mxu0 %v5648
      %v5684 = vpop.f32.mrb[0].mxu0
      %v5685 = vadd.f32 0.0, %v5684
      %v5686 = vpop.f32.mrb[0].mxu0
      %v5687 = vpop.f32.mrb[0].mxu0
      %v5688 = vadd.f32 0.0, %v5687
      %v5689 = vpop.f32.mrb[0].mxu0
      %5690 = vdwg.mxu0
      %v5693 = vsel %vm2584, %v5199, 0
      %5695 = vmatprep.subr.bf16.mxu0 0
      %5696 = vmatpush1.bf16.msra.mxu0 %v1474
      %5697 = vmatprep.subr.bf16.mxu0 0
      %5698 = vmatpush1.bf16.msra.mxu0 0
      %5699 = vmatprep.subr.bf16.mxu0 0
      %5700 = vmatpush1.bf16.msra.mxu0 0
      %5701 = vmatprep.subr.bf16.mxu0 0
      %5702 = vmatpush1.bf16.msra.mxu0 0
      %5703 = vmatprep.subr.bf16.mxu0 0
      %5704 = vmatpush1.bf16.msra.mxu0 0
      %5705 = vmatprep.subr.bf16.mxu0 0
      %5706 = vmatpush1.bf16.msra.mxu0 0
      %5707 = vmatprep.subr.bf16.mxu0 0
      %5708 = vmatpush1.bf16.msra.mxu0 0
      %5709 = vmatprep.subr.bf16.mxu0 0
      %5710 = vmatpush1.bf16.msra.mxu0 0
      %5711 = vmatprep.subr.bf16.mxu0 0
      %5712 = vmatpush1.bf16.msra.mxu0 0
      %5713 = vmatprep.subr.bf16.mxu0 0
      %5714 = vmatpush1.bf16.msra.mxu0 0
      %5715 = vmatprep.subr.bf16.mxu0 0
      %5716 = vmatpush1.bf16.msra.mxu0 0
      %5717 = vmatprep.subr.bf16.mxu0 0
      %5718 = vmatpush1.bf16.msra.mxu0 0
      %5719 = vmatprep.subr.bf16.mxu0 0
      %5720 = vmatpush1.bf16.msra.mxu0 0
      %5721 = vmatprep.subr.bf16.mxu0 0
      %5722 = vmatpush1.bf16.msra.mxu0 0
      %5723 = vmatprep.subr.bf16.mxu0 0
      %5724 = vmatpush1.bf16.msra.mxu0 0
      %5725 = vmatprep.subr.bf16.mxu0 0
      %5726 = vmatpush1.bf16.msra.mxu0 0
      %5727 = vmatprep.mubr.bf16.mxu0 0
      %5728 = vmatmul.mubr.bf16.gmra.mrb[0].mxu0 %v5693
      %v5729 = vpop.f32.mrb[0].mxu0
      %v5730 = vadd.f32 0.0, %v5729
      %v5731 = vpop.f32.mrb[0].mxu0
      %v5732 = vpop.f32.mrb[0].mxu0
      %v5733 = vadd.f32 0.0, %v5732
      %v5734 = vpop.f32.mrb[0].mxu0
      %5735 = vdwg.mxu0
      %v5738 = vsel %vm2584, %v5200, 0
      %5740 = vmatprep.subr.bf16.mxu0 0
      %5741 = vmatpush1.bf16.msra.mxu0 %v1526
      %5742 = vmatprep.subr.bf16.mxu0 0
      %5743 = vmatpush1.bf16.msra.mxu0 0
      %5744 = vmatprep.subr.bf16.mxu0 0
      %5745 = vmatpush1.bf16.msra.mxu0 0
      %5746 = vmatprep.subr.bf16.mxu0 0
      %5747 = vmatpush1.bf16.msra.mxu0 0
      %5748 = vmatprep.subr.bf16.mxu0 0
      %5749 = vmatpush1.bf16.msra.mxu0 0
      %5750 = vmatprep.subr.bf16.mxu0 0
      %5751 = vmatpush1.bf16.msra.mxu0 0
      %5752 = vmatprep.subr.bf16.mxu0 0
      %5753 = vmatpush1.bf16.msra.mxu0 0
      %5754 = vmatprep.subr.bf16.mxu0 0
      %5755 = vmatpush1.bf16.msra.mxu0 0
      %5756 = vmatprep.subr.bf16.mxu0 0
      %5757 = vmatpush1.bf16.msra.mxu0 0
      %5758 = vmatprep.subr.bf16.mxu0 0
      %5759 = vmatpush1.bf16.msra.mxu0 0
      %5760 = vmatprep.subr.bf16.mxu0 0
      %5761 = vmatpush1.bf16.msra.mxu0 0
      %5762 = vmatprep.subr.bf16.mxu0 0
      %5763 = vmatpush1.bf16.msra.mxu0 0
      %5764 = vmatprep.subr.bf16.mxu0 0
      %5765 = vmatpush1.bf16.msra.mxu0 0
      %5766 = vmatprep.subr.bf16.mxu0 0
      %5767 = vmatpush1.bf16.msra.mxu0 0
      %5768 = vmatprep.subr.bf16.mxu0 0
      %5769 = vmatpush1.bf16.msra.mxu0 0
      %5770 = vmatprep.subr.bf16.mxu0 0
      %5771 = vmatpush1.bf16.msra.mxu0 0
      %5772 = vmatprep.mubr.bf16.mxu0 0
      %5773 = vmatmul.mubr.bf16.gmra.mrb[0].mxu0 %v5738
      %v5774 = vpop.f32.mrb[0].mxu0
      %v5775 = vadd.f32 0.0, %v5774
      %v5776 = vpop.f32.mrb[0].mxu0
      %v5777 = vpop.f32.mrb[0].mxu0
      %v5778 = vadd.f32 0.0, %v5777
      %v5779 = vpop.f32.mrb[0].mxu0
      %5780 = vdwg.mxu0
      %v5783 = vsel %vm2584, %v5201, 0
      %5785 = vmatprep.subr.bf16.mxu0 0
      %5786 = vmatpush1.bf16.msra.mxu0 %v1578
      %5787 = vmatprep.subr.bf16.mxu0 0
      %5788 = vmatpush1.bf16.msra.mxu0 0
      %5789 = vmatprep.subr.bf16.mxu0 0
      %5790 = vmatpush1.bf16.msra.mxu0 0
      %5791 = vmatprep.subr.bf16.mxu0 0
      %5792 = vmatpush1.bf16.msra.mxu0 0
      %5793 = vmatprep.subr.bf16.mxu0 0
      %5794 = vmatpush1.bf16.msra.mxu0 0
      %5795 = vmatprep.subr.bf16.mxu0 0
      %5796 = vmatpush1.bf16.msra.mxu0 0
      %5797 = vmatprep.subr.bf16.mxu0 0
      %5798 = vmatpush1.bf16.msra.mxu0 0
      %5799 = vmatprep.subr.bf16.mxu0 0
      %5800 = vmatpush1.bf16.msra.mxu0 0
      %5801 = vmatprep.subr.bf16.mxu0 0
      %5802 = vmatpush1.bf16.msra.mxu0 0
      %5803 = vmatprep.subr.bf16.mxu0 0
      %5804 = vmatpush1.bf16.msra.mxu0 0
      %5805 = vmatprep.subr.bf16.mxu0 0
      %5806 = vmatpush1.bf16.msra.mxu0 0
      %5807 = vmatprep.subr.bf16.mxu0 0
      %5808 = vmatpush1.bf16.msra.mxu0 0
      %5809 = vmatprep.subr.bf16.mxu0 0
      %5810 = vmatpush1.bf16.msra.mxu0 0
      %5811 = vmatprep.subr.bf16.mxu0 0
      %5812 = vmatpush1.bf16.msra.mxu0 0
      %5813 = vmatprep.subr.bf16.mxu0 0
      %5814 = vmatpush1.bf16.msra.mxu0 0
      %5815 = vmatprep.subr.bf16.mxu0 0
      %5816 = vmatpush1.bf16.msra.mxu0 0
      %5817 = vmatprep.mubr.bf16.mxu0 0
      %5818 = vmatmul.mubr.bf16.gmra.mrb[0].mxu0 %v5783
      %v5819 = vpop.f32.mrb[0].mxu0
      %v5820 = vadd.f32 0.0, %v5819
      %v5821 = vpop.f32.mrb[0].mxu0
      %v5822 = vpop.f32.mrb[0].mxu0
      %v5823 = vadd.f32 0.0, %v5822
      %v5824 = vpop.f32.mrb[0].mxu0
      %5825 = vdwg.mxu0
      %v5828 = vsel %vm2584, %v5202, 0
      %5830 = vmatprep.subr.bf16.mxu0 0
      %5831 = vmatpush1.bf16.msra.mxu0 %v1630
      %5832 = vmatprep.subr.bf16.mxu0 0
      %5833 = vmatpush1.bf16.msra.mxu0 0
      %5834 = vmatprep.subr.bf16.mxu0 0
      %5835 = vmatpush1.bf16.msra.mxu0 0
      %5836 = vmatprep.subr.bf16.mxu0 0
      %5837 = vmatpush1.bf16.msra.mxu0 0
      %5838 = vmatprep.subr.bf16.mxu0 0
      %5839 = vmatpush1.bf16.msra.mxu0 0
      %5840 = vmatprep.subr.bf16.mxu0 0
      %5841 = vmatpush1.bf16.msra.mxu0 0
      %5842 = vmatprep.subr.bf16.mxu0 0
      %5843 = vmatpush1.bf16.msra.mxu0 0
      %5844 = vmatprep.subr.bf16.mxu0 0
      %5845 = vmatpush1.bf16.msra.mxu0 0
      %5846 = vmatprep.subr.bf16.mxu0 0
      %5847 = vmatpush1.bf16.msra.mxu0 0
      %5848 = vmatprep.subr.bf16.mxu0 0
      %5849 = vmatpush1.bf16.msra.mxu0 0
      %5850 = vmatprep.subr.bf16.mxu0 0
      %5851 = vmatpush1.bf16.msra.mxu0 0
      %5852 = vmatprep.subr.bf16.mxu0 0
      %5853 = vmatpush1.bf16.msra.mxu0 0
      %5854 = vmatprep.subr.bf16.mxu0 0
      %5855 = vmatpush1.bf16.msra.mxu0 0
      %5856 = vmatprep.subr.bf16.mxu0 0
      %5857 = vmatpush1.bf16.msra.mxu0 0
      %5858 = vmatprep.subr.bf16.mxu0 0
      %5859 = vmatpush1.bf16.msra.mxu0 0
      %5860 = vmatprep.subr.bf16.mxu0 0
      %5861 = vmatpush1.bf16.msra.mxu0 0
      %5862 = vmatprep.mubr.bf16.mxu0 0
      %5863 = vmatmul.mubr.bf16.gmra.mrb[0].mxu0 %v5828
      %v5864 = vpop.f32.mrb[0].mxu0
      %v5865 = vadd.f32 0.0, %v5864
      %v5866 = vpop.f32.mrb[0].mxu0
      %v5867 = vpop.f32.mrb[0].mxu0
      %v5868 = vadd.f32 0.0, %v5867
      %v5869 = vpop.f32.mrb[0].mxu0
      %5870 = vdwg.mxu0
      %v5873 = vsel %vm2584, %v5203, 0
      %5875 = vmatprep.subr.bf16.mxu0 0
      %5876 = vmatpush1.bf16.msra.mxu0 %v1682
      %5877 = vmatprep.subr.bf16.mxu0 0
      %5878 = vmatpush1.bf16.msra.mxu0 0
      %5879 = vmatprep.subr.bf16.mxu0 0
      %5880 = vmatpush1.bf16.msra.mxu0 0
      %5881 = vmatprep.subr.bf16.mxu0 0
      %5882 = vmatpush1.bf16.msra.mxu0 0
      %5883 = vmatprep.subr.bf16.mxu0 0
      %5884 = vmatpush1.bf16.msra.mxu0 0
      %5885 = vmatprep.subr.bf16.mxu0 0
      %5886 = vmatpush1.bf16.msra.mxu0 0
      %5887 = vmatprep.subr.bf16.mxu0 0
      %5888 = vmatpush1.bf16.msra.mxu0 0
      %5889 = vmatprep.subr.bf16.mxu0 0
      %5890 = vmatpush1.bf16.msra.mxu0 0
      %5891 = vmatprep.subr.bf16.mxu0 0
      %5892 = vmatpush1.bf16.msra.mxu0 0
      %5893 = vmatprep.subr.bf16.mxu0 0
      %5894 = vmatpush1.bf16.msra.mxu0 0
      %5895 = vmatprep.subr.bf16.mxu0 0
      %5896 = vmatpush1.bf16.msra.mxu0 0
      %5897 = vmatprep.subr.bf16.mxu0 0
      %5898 = vmatpush1.bf16.msra.mxu0 0
      %5899 = vmatprep.subr.bf16.mxu0 0
      %5900 = vmatpush1.bf16.msra.mxu0 0
      %5901 = vmatprep.subr.bf16.mxu0 0
      %5902 = vmatpush1.bf16.msra.mxu0 0
      %5903 = vmatprep.subr.bf16.mxu0 0
      %5904 = vmatpush1.bf16.msra.mxu0 0
      %5905 = vmatprep.subr.bf16.mxu0 0
      %5906 = vmatpush1.bf16.msra.mxu0 0
      %5907 = vmatprep.mubr.bf16.mxu0 0
      %5908 = vmatmul.mubr.bf16.gmra.mrb[0].mxu0 %v5873
      %v5909 = vpop.f32.mrb[0].mxu0
      %v5910 = vadd.f32 0.0, %v5909
      %v5911 = vpop.f32.mrb[0].mxu0
      %v5912 = vpop.f32.mrb[0].mxu0
      %v5913 = vadd.f32 0.0, %v5912
      %v5914 = vpop.f32.mrb[0].mxu0
      %5915 = vdwg.mxu0
      %v5918 = vsel %vm2584, %v5204, 0
      %5920 = vmatprep.subr.bf16.mxu0 0
      %5921 = vmatpush1.bf16.msra.mxu0 %v1734
      %5922 = vmatprep.subr.bf16.mxu0 0
      %5923 = vmatpush1.bf16.msra.mxu0 0
      %5924 = vmatprep.subr.bf16.mxu0 0
      %5925 = vmatpush1.bf16.msra.mxu0 0
      %5926 = vmatprep.subr.bf16.mxu0 0
      %5927 = vmatpush1.bf16.msra.mxu0 0
      %5928 = vmatprep.subr.bf16.mxu0 0
      %5929 = vmatpush1.bf16.msra.mxu0 0
      %5930 = vmatprep.subr.bf16.mxu0 0
      %5931 = vmatpush1.bf16.msra.mxu0 0
      %5932 = vmatprep.subr.bf16.mxu0 0
      %5933 = vmatpush1.bf16.msra.mxu0 0
      %5934 = vmatprep.subr.bf16.mxu0 0
      %5935 = vmatpush1.bf16.msra.mxu0 0
      %5936 = vmatprep.subr.bf16.mxu0 0
      %5937 = vmatpush1.bf16.msra.mxu0 0
      %5938 = vmatprep.subr.bf16.mxu0 0
      %5939 = vmatpush1.bf16.msra.mxu0 0
      %5940 = vmatprep.subr.bf16.mxu0 0
      %5941 = vmatpush1.bf16.msra.mxu0 0
      %5942 = vmatprep.subr.bf16.mxu0 0
      %5943 = vmatpush1.bf16.msra.mxu0 0
      %5944 = vmatprep.subr.bf16.mxu0 0
      %5945 = vmatpush1.bf16.msra.mxu0 0
      %5946 = vmatprep.subr.bf16.mxu0 0
      %5947 = vmatpush1.bf16.msra.mxu0 0
      %5948 = vmatprep.subr.bf16.mxu0 0
      %5949 = vmatpush1.bf16.msra.mxu0 0
      %5950 = vmatprep.subr.bf16.mxu0 0
      %5951 = vmatpush1.bf16.msra.mxu0 0
      %5952 = vmatprep.mubr.bf16.mxu0 0
      %5953 = vmatmul.mubr.bf16.gmra.mrb[0].mxu0 %v5918
      %v5954 = vpop.f32.mrb[0].mxu0
      %v5955 = vadd.f32 0.0, %v5954
      %v5956 = vpop.f32.mrb[0].mxu0
      %v5957 = vpop.f32.mrb[0].mxu0
      %v5958 = vadd.f32 0.0, %v5957
      %v5959 = vpop.f32.mrb[0].mxu0
      %5960 = vdwg.mxu0
      %v5963 = vsel %vm2584, %v5205, 0
      %5965 = vmatprep.subr.bf16.mxu0 0
      %5966 = vmatpush1.bf16.msra.mxu0 %v1786
      %5967 = vmatprep.subr.bf16.mxu0 0
      %5968 = vmatpush1.bf16.msra.mxu0 0
      %5969 = vmatprep.subr.bf16.mxu0 0
      %5970 = vmatpush1.bf16.msra.mxu0 0
      %5971 = vmatprep.subr.bf16.mxu0 0
      %5972 = vmatpush1.bf16.msra.mxu0 0
      %5973 = vmatprep.subr.bf16.mxu0 0
      %5974 = vmatpush1.bf16.msra.mxu0 0
      %5975 = vmatprep.subr.bf16.mxu0 0
      %5976 = vmatpush1.bf16.msra.mxu0 0
      %5977 = vmatprep.subr.bf16.mxu0 0
      %5978 = vmatpush1.bf16.msra.mxu0 0
      %5979 = vmatprep.subr.bf16.mxu0 0
      %5980 = vmatpush1.bf16.msra.mxu0 0
      %5981 = vmatprep.subr.bf16.mxu0 0
      %5982 = vmatpush1.bf16.msra.mxu0 0
      %5983 = vmatprep.subr.bf16.mxu0 0
      %5984 = vmatpush1.bf16.msra.mxu0 0
      %5985 = vmatprep.subr.bf16.mxu0 0
      %5986 = vmatpush1.bf16.msra.mxu0 0
      %5987 = vmatprep.subr.bf16.mxu0 0
      %5988 = vmatpush1.bf16.msra.mxu0 0
      %5989 = vmatprep.subr.bf16.mxu0 0
      %5990 = vmatpush1.bf16.msra.mxu0 0
      %5991 = vmatprep.subr.bf16.mxu0 0
      %5992 = vmatpush1.bf16.msra.mxu0 0
      %5993 = vmatprep.subr.bf16.mxu0 0
      %5994 = vmatpush1.bf16.msra.mxu0 0
      %5995 = vmatprep.subr.bf16.mxu0 0
      %5996 = vmatpush1.bf16.msra.mxu0 0
      %5997 = vmatprep.mubr.bf16.mxu0 0
      %5998 = vmatmul.mubr.bf16.gmra.mrb[0].mxu0 %v5963
      %v5999 = vpop.f32.mrb[0].mxu0
      %v6000 = vadd.f32 0.0, %v5999
      %v6001 = vpop.f32.mrb[0].mxu0
      %v6002 = vpop.f32.mrb[0].mxu0
      %v6003 = vadd.f32 0.0, %v6002
      %v6004 = vpop.f32.mrb[0].mxu0
      %6005 = vdwg.mxu0
      %v6006 = vcombine.low %v5325, %v5415
      %v6007 = vcombine.high %v5325, %v5415
      %v6009 = vunpack.c.l.s4 1983009808
      %v6010 = vunpack.c.0.s8 %v6009
      %v6011 = vlaneseq
      %v6012 = vshrl.u32 %v6011, 7
      %v6013 = vsub.s32 %v6010, %v6012
      %v6014 = vrot.slane %v6006, %v6013
      %v6016 = vunpack.c.l.s4 1983009808
      %v6017 = vunpack.c.0.s8 %v6016
      %v6018 = vlaneseq
      %v6019 = vshrl.u32 %v6018, 7
      %v6020 = vsub.s32 %v6017, %v6019
      %v6021 = vrot.slane %v6007, %v6020
      %v6022 = vcombine.low %v5370, %v5460
      %v6023 = vcombine.high %v5370, %v5460
      %v6025 = vunpack.c.l.s4 1983009808
      %v6026 = vunpack.c.0.s8 %v6025
      %v6027 = vlaneseq
      %v6028 = vshrl.u32 %v6027, 7
      %v6029 = vsub.s32 %v6026, %v6028
      %v6030 = vrot.slane %v6022, %v6029
      %v6032 = vunpack.c.l.s4 1983009808
      %v6033 = vunpack.c.0.s8 %v6032
      %v6034 = vlaneseq
      %v6035 = vshrl.u32 %v6034, 7
      %v6036 = vsub.s32 %v6033, %v6035
      %v6037 = vrot.slane %v6023, %v6036
      %v6038 = vcombine.low %v5505, %v5595
      %v6039 = vcombine.high %v5505, %v5595
      %v6041 = vunpack.c.l.s4 1983009808
      %v6042 = vunpack.c.0.s8 %v6041
      %v6043 = vlaneseq
      %v6044 = vshrl.u32 %v6043, 7
      %v6045 = vsub.s32 %v6042, %v6044
      %v6046 = vrot.slane %v6038, %v6045
      %v6048 = vunpack.c.l.s4 1983009808
      %v6049 = vunpack.c.0.s8 %v6048
      %v6050 = vlaneseq
      %v6051 = vshrl.u32 %v6050, 7
      %v6052 = vsub.s32 %v6049, %v6051
      %v6053 = vrot.slane %v6039, %v6052
      %v6054 = vcombine.low %v5550, %v5640
      %v6055 = vcombine.high %v5550, %v5640
      %v6057 = vunpack.c.l.s4 1983009808
      %v6058 = vunpack.c.0.s8 %v6057
      %v6059 = vlaneseq
      %v6060 = vshrl.u32 %v6059, 7
      %v6061 = vsub.s32 %v6058, %v6060
      %v6062 = vrot.slane %v6054, %v6061
      %v6064 = vunpack.c.l.s4 1983009808
      %v6065 = vunpack.c.0.s8 %v6064
      %v6066 = vlaneseq
      %v6067 = vshrl.u32 %v6066, 7
      %v6068 = vsub.s32 %v6065, %v6067
      %v6069 = vrot.slane %v6055, %v6068
      %v6070 = vcombine.low %v6014, %v6030
      %v6071 = vcombine.high %v6014, %v6030
      %v6073 = vunpack.c.l.s4 1934713408
      %v6074 = vunpack.c.0.s8 %v6073
      %v6075 = vlaneseq
      %v6076 = vshrl.u32 %v6075, 7
      %v6077 = vsub.s32 %v6074, %v6076
      %v6078 = vrot.slane %v6070, %v6077
      %v6080 = vunpack.c.l.s4 1934713408
      %v6081 = vunpack.c.0.s8 %v6080
      %v6082 = vlaneseq
      %v6083 = vshrl.u32 %v6082, 7
      %v6084 = vsub.s32 %v6081, %v6083
      %v6085 = vrot.slane %v6071, %v6084
      %v6086 = vcombine.low %v6021, %v6037
      %v6087 = vcombine.high %v6021, %v6037
      %v6089 = vunpack.c.l.s4 1934713408
      %v6090 = vunpack.c.0.s8 %v6089
      %v6091 = vlaneseq
      %v6092 = vshrl.u32 %v6091, 7
      %v6093 = vsub.s32 %v6090, %v6092
      %v6094 = vrot.slane %v6086, %v6093
      %v6096 = vunpack.c.l.s4 1934713408
      %v6097 = vunpack.c.0.s8 %v6096
      %v6098 = vlaneseq
      %v6099 = vshrl.u32 %v6098, 7
      %v6100 = vsub.s32 %v6097, %v6099
      %v6101 = vrot.slane %v6087, %v6100
      %v6102 = vcombine.low %v6046, %v6062
      %v6103 = vcombine.high %v6046, %v6062
      %v6105 = vunpack.c.l.s4 1934713408
      %v6106 = vunpack.c.0.s8 %v6105
      %v6107 = vlaneseq
      %v6108 = vshrl.u32 %v6107, 7
      %v6109 = vsub.s32 %v6106, %v6108
      %v6110 = vrot.slane %v6102, %v6109
      %v6112 = vunpack.c.l.s4 1934713408
      %v6113 = vunpack.c.0.s8 %v6112
      %v6114 = vlaneseq
      %v6115 = vshrl.u32 %v6114, 7
      %v6116 = vsub.s32 %v6113, %v6115
      %v6117 = vrot.slane %v6103, %v6116
      %v6118 = vcombine.low %v6053, %v6069
      %v6119 = vcombine.high %v6053, %v6069
      %v6121 = vunpack.c.l.s4 1934713408
      %v6122 = vunpack.c.0.s8 %v6121
      %v6123 = vlaneseq
      %v6124 = vshrl.u32 %v6123, 7
      %v6125 = vsub.s32 %v6122, %v6124
      %v6126 = vrot.slane %v6118, %v6125
      %v6128 = vunpack.c.l.s4 1934713408
      %v6129 = vunpack.c.0.s8 %v6128
      %v6130 = vlaneseq
      %v6131 = vshrl.u32 %v6130, 7
      %v6132 = vsub.s32 %v6129, %v6131
      %v6133 = vrot.slane %v6119, %v6132
      %v6134 = vcombine.low %v6078, %v6110
      %v6135 = vcombine.high %v6078, %v6110
      %v6136 = vcombine.low %v6085, %v6117
      %v6137 = vcombine.high %v6085, %v6117
      %v6138 = vcombine.low %v6094, %v6126
      %v6139 = vcombine.high %v6094, %v6126
      %v6140 = vcombine.low %v6101, %v6133
      %v6141 = vcombine.high %v6101, %v6133
      %v6142 = vcombine.low %v5685, %v5775
      %v6143 = vcombine.high %v5685, %v5775
      %v6145 = vunpack.c.l.s4 1983009808
      %v6146 = vunpack.c.0.s8 %v6145
      %v6147 = vlaneseq
      %v6148 = vshrl.u32 %v6147, 7
      %v6149 = vsub.s32 %v6146, %v6148
      %v6150 = vrot.slane %v6142, %v6149
      %v6152 = vunpack.c.l.s4 1983009808
      %v6153 = vunpack.c.0.s8 %v6152
      %v6154 = vlaneseq
      %v6155 = vshrl.u32 %v6154, 7
      %v6156 = vsub.s32 %v6153, %v6155
      %v6157 = vrot.slane %v6143, %v6156
      %v6158 = vcombine.low %v5730, %v5820
      %v6159 = vcombine.high %v5730, %v5820
      %v6161 = vunpack.c.l.s4 1983009808
      %v6162 = vunpack.c.0.s8 %v6161
      %v6163 = vlaneseq
      %v6164 = vshrl.u32 %v6163, 7
      %v6165 = vsub.s32 %v6162, %v6164
      %v6166 = vrot.slane %v6158, %v6165
      %v6168 = vunpack.c.l.s4 1983009808
      %v6169 = vunpack.c.0.s8 %v6168
      %v6170 = vlaneseq
      %v6171 = vshrl.u32 %v6170, 7
      %v6172 = vsub.s32 %v6169, %v6171
      %v6173 = vrot.slane %v6159, %v6172
      %v6174 = vcombine.low %v5865, %v5955
      %v6175 = vcombine.high %v5865, %v5955
      %v6177 = vunpack.c.l.s4 1983009808
      %v6178 = vunpack.c.0.s8 %v6177
      %v6179 = vlaneseq
      %v6180 = vshrl.u32 %v6179, 7
      %v6181 = vsub.s32 %v6178, %v6180
      %v6182 = vrot.slane %v6174, %v6181
      %v6184 = vunpack.c.l.s4 1983009808
      %v6185 = vunpack.c.0.s8 %v6184
      %v6186 = vlaneseq
      %v6187 = vshrl.u32 %v6186, 7
      %v6188 = vsub.s32 %v6185, %v6187
      %v6189 = vrot.slane %v6175, %v6188
      %v6190 = vcombine.low %v5910, %v6000
      %v6191 = vcombine.high %v5910, %v6000
      %v6193 = vunpack.c.l.s4 1983009808
      %v6194 = vunpack.c.0.s8 %v6193
      %v6195 = vlaneseq
      %v6196 = vshrl.u32 %v6195, 7
      %v6197 = vsub.s32 %v6194, %v6196
      %v6198 = vrot.slane %v6190, %v6197
      %v6200 = vunpack.c.l.s4 1983009808
      %v6201 = vunpack.c.0.s8 %v6200
      %v6202 = vlaneseq
      %v6203 = vshrl.u32 %v6202, 7
      %v6204 = vsub.s32 %v6201, %v6203
      %v6205 = vrot.slane %v6191, %v6204
      %v6206 = vcombine.low %v6150, %v6166
      %v6207 = vcombine.high %v6150, %v6166
      %v6209 = vunpack.c.l.s4 1934713408
      %v6210 = vunpack.c.0.s8 %v6209
      %v6211 = vlaneseq
      %v6212 = vshrl.u32 %v6211, 7
      %v6213 = vsub.s32 %v6210, %v6212
      %v6214 = vrot.slane %v6206, %v6213
      %v6216 = vunpack.c.l.s4 1934713408
      %v6217 = vunpack.c.0.s8 %v6216
      %v6218 = vlaneseq
      %v6219 = vshrl.u32 %v6218, 7
      %v6220 = vsub.s32 %v6217, %v6219
      %v6221 = vrot.slane %v6207, %v6220
      %v6222 = vcombine.low %v6157, %v6173
      %v6223 = vcombine.high %v6157, %v6173
      %v6225 = vunpack.c.l.s4 1934713408
      %v6226 = vunpack.c.0.s8 %v6225
      %v6227 = vlaneseq
      %v6228 = vshrl.u32 %v6227, 7
      %v6229 = vsub.s32 %v6226, %v6228
      %v6230 = vrot.slane %v6222, %v6229
      %v6232 = vunpack.c.l.s4 1934713408
      %v6233 = vunpack.c.0.s8 %v6232
      %v6234 = vlaneseq
      %v6235 = vshrl.u32 %v6234, 7
      %v6236 = vsub.s32 %v6233, %v6235
      %v6237 = vrot.slane %v6223, %v6236
      %v6238 = vcombine.low %v6182, %v6198
      %v6239 = vcombine.high %v6182, %v6198
      %v6241 = vunpack.c.l.s4 1934713408
      %v6242 = vunpack.c.0.s8 %v6241
      %v6243 = vlaneseq
      %v6244 = vshrl.u32 %v6243, 7
      %v6245 = vsub.s32 %v6242, %v6244
      %v6246 = vrot.slane %v6238, %v6245
      %v6248 = vunpack.c.l.s4 1934713408
      %v6249 = vunpack.c.0.s8 %v6248
      %v6250 = vlaneseq
      %v6251 = vshrl.u32 %v6250, 7
      %v6252 = vsub.s32 %v6249, %v6251
      %v6253 = vrot.slane %v6239, %v6252
      %v6254 = vcombine.low %v6189, %v6205
      %v6255 = vcombine.high %v6189, %v6205
      %v6257 = vunpack.c.l.s4 1934713408
      %v6258 = vunpack.c.0.s8 %v6257
      %v6259 = vlaneseq
      %v6260 = vshrl.u32 %v6259, 7
      %v6261 = vsub.s32 %v6258, %v6260
      %v6262 = vrot.slane %v6254, %v6261
      %v6264 = vunpack.c.l.s4 1934713408
      %v6265 = vunpack.c.0.s8 %v6264
      %v6266 = vlaneseq
      %v6267 = vshrl.u32 %v6266, 7
      %v6268 = vsub.s32 %v6265, %v6267
      %v6269 = vrot.slane %v6255, %v6268
      %v6270 = vcombine.low %v6214, %v6246
      %v6271 = vcombine.high %v6214, %v6246
      %v6272 = vcombine.low %v6221, %v6253
      %v6273 = vcombine.high %v6221, %v6253
      %v6274 = vcombine.low %v6230, %v6262
      %v6275 = vcombine.high %v6230, %v6262
      %v6276 = vcombine.low %v6237, %v6269
      %v6277 = vcombine.high %v6237, %v6269
      %v6278 = vcombine.low %v5328, %v5418
      %v6279 = vcombine.high %v5328, %v5418
      %v6281 = vunpack.c.l.s4 1983009808
      %v6282 = vunpack.c.0.s8 %v6281
      %v6283 = vlaneseq
      %v6284 = vshrl.u32 %v6283, 7
      %v6285 = vsub.s32 %v6282, %v6284
      %v6286 = vrot.slane %v6278, %v6285
      %v6288 = vunpack.c.l.s4 1983009808
      %v6289 = vunpack.c.0.s8 %v6288
      %v6290 = vlaneseq
      %v6291 = vshrl.u32 %v6290, 7
      %v6292 = vsub.s32 %v6289, %v6291
      %v6293 = vrot.slane %v6279, %v6292
      %v6294 = vcombine.low %v5373, %v5463
      %v6295 = vcombine.high %v5373, %v5463
      %v6297 = vunpack.c.l.s4 1983009808
      %v6298 = vunpack.c.0.s8 %v6297
      %v6299 = vlaneseq
      %v6300 = vshrl.u32 %v6299, 7
      %v6301 = vsub.s32 %v6298, %v6300
      %v6302 = vrot.slane %v6294, %v6301
      %v6304 = vunpack.c.l.s4 1983009808
      %v6305 = vunpack.c.0.s8 %v6304
      %v6306 = vlaneseq
      %v6307 = vshrl.u32 %v6306, 7
      %v6308 = vsub.s32 %v6305, %v6307
      %v6309 = vrot.slane %v6295, %v6308
      %v6310 = vcombine.low %v5508, %v5598
      %v6311 = vcombine.high %v5508, %v5598
      %v6313 = vunpack.c.l.s4 1983009808
      %v6314 = vunpack.c.0.s8 %v6313
      %v6315 = vlaneseq
      %v6316 = vshrl.u32 %v6315, 7
      %v6317 = vsub.s32 %v6314, %v6316
      %v6318 = vrot.slane %v6310, %v6317
      %v6320 = vunpack.c.l.s4 1983009808
      %v6321 = vunpack.c.0.s8 %v6320
      %v6322 = vlaneseq
      %v6323 = vshrl.u32 %v6322, 7
      %v6324 = vsub.s32 %v6321, %v6323
      %v6325 = vrot.slane %v6311, %v6324
      %v6326 = vcombine.low %v5553, %v5643
      %v6327 = vcombine.high %v5553, %v5643
      %v6329 = vunpack.c.l.s4 1983009808
      %v6330 = vunpack.c.0.s8 %v6329
      %v6331 = vlaneseq
      %v6332 = vshrl.u32 %v6331, 7
      %v6333 = vsub.s32 %v6330, %v6332
      %v6334 = vrot.slane %v6326, %v6333
      %v6336 = vunpack.c.l.s4 1983009808
      %v6337 = vunpack.c.0.s8 %v6336
      %v6338 = vlaneseq
      %v6339 = vshrl.u32 %v6338, 7
      %v6340 = vsub.s32 %v6337, %v6339
      %v6341 = vrot.slane %v6327, %v6340
      %v6342 = vcombine.low %v6286, %v6302
      %v6343 = vcombine.high %v6286, %v6302
      %v6345 = vunpack.c.l.s4 1934713408
      %v6346 = vunpack.c.0.s8 %v6345
      %v6347 = vlaneseq
      %v6348 = vshrl.u32 %v6347, 7
      %v6349 = vsub.s32 %v6346, %v6348
      %v6350 = vrot.slane %v6342, %v6349
      %v6352 = vunpack.c.l.s4 1934713408
      %v6353 = vunpack.c.0.s8 %v6352
      %v6354 = vlaneseq
      %v6355 = vshrl.u32 %v6354, 7
      %v6356 = vsub.s32 %v6353, %v6355
      %v6357 = vrot.slane %v6343, %v6356
      %v6358 = vcombine.low %v6293, %v6309
      %v6359 = vcombine.high %v6293, %v6309
      %v6361 = vunpack.c.l.s4 1934713408
      %v6362 = vunpack.c.0.s8 %v6361
      %v6363 = vlaneseq
      %v6364 = vshrl.u32 %v6363, 7
      %v6365 = vsub.s32 %v6362, %v6364
      %v6366 = vrot.slane %v6358, %v6365
      %v6368 = vunpack.c.l.s4 1934713408
      %v6369 = vunpack.c.0.s8 %v6368
      %v6370 = vlaneseq
      %v6371 = vshrl.u32 %v6370, 7
      %v6372 = vsub.s32 %v6369, %v6371
      %v6373 = vrot.slane %v6359, %v6372
      %v6374 = vcombine.low %v6318, %v6334
      %v6375 = vcombine.high %v6318, %v6334
      %v6377 = vunpack.c.l.s4 1934713408
      %v6378 = vunpack.c.0.s8 %v6377
      %v6379 = vlaneseq
      %v6380 = vshrl.u32 %v6379, 7
      %v6381 = vsub.s32 %v6378, %v6380
      %v6382 = vrot.slane %v6374, %v6381
      %v6384 = vunpack.c.l.s4 1934713408
      %v6385 = vunpack.c.0.s8 %v6384
      %v6386 = vlaneseq
      %v6387 = vshrl.u32 %v6386, 7
      %v6388 = vsub.s32 %v6385, %v6387
      %v6389 = vrot.slane %v6375, %v6388
      %v6390 = vcombine.low %v6325, %v6341
      %v6391 = vcombine.high %v6325, %v6341
      %v6393 = vunpack.c.l.s4 1934713408
      %v6394 = vunpack.c.0.s8 %v6393
      %v6395 = vlaneseq
      %v6396 = vshrl.u32 %v6395, 7
      %v6397 = vsub.s32 %v6394, %v6396
      %v6398 = vrot.slane %v6390, %v6397
      %v6400 = vunpack.c.l.s4 1934713408
      %v6401 = vunpack.c.0.s8 %v6400
      %v6402 = vlaneseq
      %v6403 = vshrl.u32 %v6402, 7
      %v6404 = vsub.s32 %v6401, %v6403
      %v6405 = vrot.slane %v6391, %v6404
      %v6406 = vcombine.low %v6350, %v6382
      %v6407 = vcombine.high %v6350, %v6382
      %v6408 = vcombine.low %v6357, %v6389
      %v6409 = vcombine.high %v6357, %v6389
      %v6410 = vcombine.low %v6366, %v6398
      %v6411 = vcombine.high %v6366, %v6398
      %v6412 = vcombine.low %v6373, %v6405
      %v6413 = vcombine.high %v6373, %v6405
      %v6414 = vcombine.low %v5688, %v5778
      %v6415 = vcombine.high %v5688, %v5778
      %v6417 = vunpack.c.l.s4 1983009808
      %v6418 = vunpack.c.0.s8 %v6417
      %v6419 = vlaneseq
      %v6420 = vshrl.u32 %v6419, 7
      %v6421 = vsub.s32 %v6418, %v6420
      %v6422 = vrot.slane %v6414, %v6421
      %v6424 = vunpack.c.l.s4 1983009808
      %v6425 = vunpack.c.0.s8 %v6424
      %v6426 = vlaneseq
      %v6427 = vshrl.u32 %v6426, 7
      %v6428 = vsub.s32 %v6425, %v6427
      %v6429 = vrot.slane %v6415, %v6428
      %v6430 = vcombine.low %v5733, %v5823
      %v6431 = vcombine.high %v5733, %v5823
      %v6433 = vunpack.c.l.s4 1983009808
      %v6434 = vunpack.c.0.s8 %v6433
      %v6435 = vlaneseq
      %v6436 = vshrl.u32 %v6435, 7
      %v6437 = vsub.s32 %v6434, %v6436
      %v6438 = vrot.slane %v6430, %v6437
      %v6440 = vunpack.c.l.s4 1983009808
      %v6441 = vunpack.c.0.s8 %v6440
      %v6442 = vlaneseq
      %v6443 = vshrl.u32 %v6442, 7
      %v6444 = vsub.s32 %v6441, %v6443
      %v6445 = vrot.slane %v6431, %v6444
      %v6446 = vcombine.low %v5868, %v5958
      %v6447 = vcombine.high %v5868, %v5958
      %v6449 = vunpack.c.l.s4 1983009808
      %v6450 = vunpack.c.0.s8 %v6449
      %v6451 = vlaneseq
      %v6452 = vshrl.u32 %v6451, 7
      %v6453 = vsub.s32 %v6450, %v6452
      %v6454 = vrot.slane %v6446, %v6453
      %v6456 = vunpack.c.l.s4 1983009808
      %v6457 = vunpack.c.0.s8 %v6456
      %v6458 = vlaneseq
      %v6459 = vshrl.u32 %v6458, 7
      %v6460 = vsub.s32 %v6457, %v6459
      %v6461 = vrot.slane %v6447, %v6460
      %v6462 = vcombine.low %v5913, %v6003
      %v6463 = vcombine.high %v5913, %v6003
      %v6465 = vunpack.c.l.s4 1983009808
      %v6466 = vunpack.c.0.s8 %v6465
      %v6467 = vlaneseq
      %v6468 = vshrl.u32 %v6467, 7
      %v6469 = vsub.s32 %v6466, %v6468
      %v6470 = vrot.slane %v6462, %v6469
      %v6472 = vunpack.c.l.s4 1983009808
      %v6473 = vunpack.c.0.s8 %v6472
      %v6474 = vlaneseq
      %v6475 = vshrl.u32 %v6474, 7
      %v6476 = vsub.s32 %v6473, %v6475
      %v6477 = vrot.slane %v6463, %v6476
      %v6478 = vcombine.low %v6422, %v6438
      %v6479 = vcombine.high %v6422, %v6438
      %v6481 = vunpack.c.l.s4 1934713408
      %v6482 = vunpack.c.0.s8 %v6481
      %v6483 = vlaneseq
      %v6484 = vshrl.u32 %v6483, 7
      %v6485 = vsub.s32 %v6482, %v6484
      %v6486 = vrot.slane %v6478, %v6485
      %v6488 = vunpack.c.l.s4 1934713408
      %v6489 = vunpack.c.0.s8 %v6488
      %v6490 = vlaneseq
      %v6491 = vshrl.u32 %v6490, 7
      %v6492 = vsub.s32 %v6489, %v6491
      %v6493 = vrot.slane %v6479, %v6492
      %v6494 = vcombine.low %v6429, %v6445
      %v6495 = vcombine.high %v6429, %v6445
      %v6497 = vunpack.c.l.s4 1934713408
      %v6498 = vunpack.c.0.s8 %v6497
      %v6499 = vlaneseq
      %v6500 = vshrl.u32 %v6499, 7
      %v6501 = vsub.s32 %v6498, %v6500
      %v6502 = vrot.slane %v6494, %v6501
      %v6504 = vunpack.c.l.s4 1934713408
      %v6505 = vunpack.c.0.s8 %v6504
      %v6506 = vlaneseq
      %v6507 = vshrl.u32 %v6506, 7
      %v6508 = vsub.s32 %v6505, %v6507
      %v6509 = vrot.slane %v6495, %v6508
      %v6510 = vcombine.low %v6454, %v6470
      %v6511 = vcombine.high %v6454, %v6470
      %v6513 = vunpack.c.l.s4 1934713408
      %v6514 = vunpack.c.0.s8 %v6513
      %v6515 = vlaneseq
      %v6516 = vshrl.u32 %v6515, 7
      %v6517 = vsub.s32 %v6514, %v6516
      %v6518 = vrot.slane %v6510, %v6517
      %v6520 = vunpack.c.l.s4 1934713408
      %v6521 = vunpack.c.0.s8 %v6520
      %v6522 = vlaneseq
      %v6523 = vshrl.u32 %v6522, 7
      %v6524 = vsub.s32 %v6521, %v6523
      %v6525 = vrot.slane %v6511, %v6524
      %v6526 = vcombine.low %v6461, %v6477
      %v6527 = vcombine.high %v6461, %v6477
      %v6529 = vunpack.c.l.s4 1934713408
      %v6530 = vunpack.c.0.s8 %v6529
      %v6531 = vlaneseq
      %v6532 = vshrl.u32 %v6531, 7
      %v6533 = vsub.s32 %v6530, %v6532
      %v6534 = vrot.slane %v6526, %v6533
      %v6536 = vunpack.c.l.s4 1934713408
      %v6537 = vunpack.c.0.s8 %v6536
      %v6538 = vlaneseq
      %v6539 = vshrl.u32 %v6538, 7
      %v6540 = vsub.s32 %v6537, %v6539
      %v6541 = vrot.slane %v6527, %v6540
      %v6542 = vcombine.low %v6486, %v6518
      %v6543 = vcombine.high %v6486, %v6518
      %v6544 = vcombine.low %v6493, %v6525
      %v6545 = vcombine.high %v6493, %v6525
      %v6546 = vcombine.low %v6502, %v6534
      %v6547 = vcombine.high %v6502, %v6534
      %v6548 = vcombine.low %v6509, %v6541
      %v6549 = vcombine.high %v6509, %v6541
      %v6551 = vsel %vm2584, %v5270, 0
      %6553 = vmatprep.subr.bf16.mxu0 0
      %6554 = vmatpush1.bf16.msra.mxu0 %v385
      %6555 = vmatprep.subr.bf16.mxu0 0
      %6556 = vmatpush1.bf16.msra.mxu0 0
      %6557 = vmatprep.subr.bf16.mxu0 0
      %6558 = vmatpush1.bf16.msra.mxu0 0
      %6559 = vmatprep.subr.bf16.mxu0 0
      %6560 = vmatpush1.bf16.msra.mxu0 0
      %6561 = vmatprep.subr.bf16.mxu0 0
      %6562 = vmatpush1.bf16.msra.mxu0 0
      %6563 = vmatprep.subr.bf16.mxu0 0
      %6564 = vmatpush1.bf16.msra.mxu0 0
      %6565 = vmatprep.subr.bf16.mxu0 0
      %6566 = vmatpush1.bf16.msra.mxu0 0
      %6567 = vmatprep.subr.bf16.mxu0 0
      %6568 = vmatpush1.bf16.msra.mxu0 0
      %6569 = vmatprep.subr.bf16.mxu0 0
      %6570 = vmatpush1.bf16.msra.mxu0 0
      %6571 = vmatprep.subr.bf16.mxu0 0
      %6572 = vmatpush1.bf16.msra.mxu0 0
      %6573 = vmatprep.subr.bf16.mxu0 0
      %6574 = vmatpush1.bf16.msra.mxu0 0
      %6575 = vmatprep.subr.bf16.mxu0 0
      %6576 = vmatpush1.bf16.msra.mxu0 0
      %6577 = vmatprep.subr.bf16.mxu0 0
      %6578 = vmatpush1.bf16.msra.mxu0 0
      %6579 = vmatprep.subr.bf16.mxu0 0
      %6580 = vmatpush1.bf16.msra.mxu0 0
      %6581 = vmatprep.subr.bf16.mxu0 0
      %6582 = vmatpush1.bf16.msra.mxu0 0
      %6583 = vmatprep.subr.bf16.mxu0 0
      %6584 = vmatpush1.bf16.msra.mxu0 0
      %6585 = vmatprep.mubr.bf16.mxu0 0
      %6586 = vmatmul.mubr.bf16.gmra.mrb[0].mxu0 %v6551
      %v6587 = vpop.f32.mrb[0].mxu0
      %v6588 = vadd.f32 %v6134, %v6587
      %v6589 = vpop.f32.mrb[0].mxu0
      %v6590 = vpop.f32.mrb[0].mxu0
      %v6591 = vadd.f32 %v6270, %v6590
      %v6592 = vpop.f32.mrb[0].mxu0
      %6593 = vdwg.mxu0
      %v6595 = vsel %vm2584, %v5271, 0
      %6597 = vmatprep.subr.bf16.mxu0 0
      %6598 = vmatpush1.bf16.msra.mxu0 %v386
      %6599 = vmatprep.subr.bf16.mxu0 0
      %6600 = vmatpush1.bf16.msra.mxu0 0
      %6601 = vmatprep.subr.bf16.mxu0 0
      %6602 = vmatpush1.bf16.msra.mxu0 0
      %6603 = vmatprep.subr.bf16.mxu0 0
      %6604 = vmatpush1.bf16.msra.mxu0 0
      %6605 = vmatprep.subr.bf16.mxu0 0
      %6606 = vmatpush1.bf16.msra.mxu0 0
      %6607 = vmatprep.subr.bf16.mxu0 0
      %6608 = vmatpush1.bf16.msra.mxu0 0
      %6609 = vmatprep.subr.bf16.mxu0 0
      %6610 = vmatpush1.bf16.msra.mxu0 0
      %6611 = vmatprep.subr.bf16.mxu0 0
      %6612 = vmatpush1.bf16.msra.mxu0 0
      %6613 = vmatprep.subr.bf16.mxu0 0
      %6614 = vmatpush1.bf16.msra.mxu0 0
      %6615 = vmatprep.subr.bf16.mxu0 0
      %6616 = vmatpush1.bf16.msra.mxu0 0
      %6617 = vmatprep.subr.bf16.mxu0 0
      %6618 = vmatpush1.bf16.msra.mxu0 0
      %6619 = vmatprep.subr.bf16.mxu0 0
      %6620 = vmatpush1.bf16.msra.mxu0 0
      %6621 = vmatprep.subr.bf16.mxu0 0
      %6622 = vmatpush1.bf16.msra.mxu0 0
      %6623 = vmatprep.subr.bf16.mxu0 0
      %6624 = vmatpush1.bf16.msra.mxu0 0
      %6625 = vmatprep.subr.bf16.mxu0 0
      %6626 = vmatpush1.bf16.msra.mxu0 0
      %6627 = vmatprep.subr.bf16.mxu0 0
      %6628 = vmatpush1.bf16.msra.mxu0 0
      %6629 = vmatprep.mubr.bf16.mxu0 0
      %6630 = vmatmul.mubr.bf16.gmra.mrb[0].mxu0 %v6595
      %v6631 = vpop.f32.mrb[0].mxu0
      %v6632 = vadd.f32 %v6135, %v6631
      %v6633 = vpop.f32.mrb[0].mxu0
      %v6634 = vpop.f32.mrb[0].mxu0
      %v6635 = vadd.f32 %v6271, %v6634
      %v6636 = vpop.f32.mrb[0].mxu0
      %6637 = vdwg.mxu0
      %v6639 = vsel %vm2584, %v5272, 0
      %6641 = vmatprep.subr.bf16.mxu0 0
      %6642 = vmatpush1.bf16.msra.mxu0 %v387
      %6643 = vmatprep.subr.bf16.mxu0 0
      %6644 = vmatpush1.bf16.msra.mxu0 0
      %6645 = vmatprep.subr.bf16.mxu0 0
      %6646 = vmatpush1.bf16.msra.mxu0 0
      %6647 = vmatprep.subr.bf16.mxu0 0
      %6648 = vmatpush1.bf16.msra.mxu0 0
      %6649 = vmatprep.subr.bf16.mxu0 0
      %6650 = vmatpush1.bf16.msra.mxu0 0
      %6651 = vmatprep.subr.bf16.mxu0 0
      %6652 = vmatpush1.bf16.msra.mxu0 0
      %6653 = vmatprep.subr.bf16.mxu0 0
      %6654 = vmatpush1.bf16.msra.mxu0 0
      %6655 = vmatprep.subr.bf16.mxu0 0
      %6656 = vmatpush1.bf16.msra.mxu0 0
      %6657 = vmatprep.subr.bf16.mxu0 0
      %6658 = vmatpush1.bf16.msra.mxu0 0
      %6659 = vmatprep.subr.bf16.mxu0 0
      %6660 = vmatpush1.bf16.msra.mxu0 0
      %6661 = vmatprep.subr.bf16.mxu0 0
      %6662 = vmatpush1.bf16.msra.mxu0 0
      %6663 = vmatprep.subr.bf16.mxu0 0
      %6664 = vmatpush1.bf16.msra.mxu0 0
      %6665 = vmatprep.subr.bf16.mxu0 0
      %6666 = vmatpush1.bf16.msra.mxu0 0
      %6667 = vmatprep.subr.bf16.mxu0 0
      %6668 = vmatpush1.bf16.msra.mxu0 0
      %6669 = vmatprep.subr.bf16.mxu0 0
      %6670 = vmatpush1.bf16.msra.mxu0 0
      %6671 = vmatprep.subr.bf16.mxu0 0
      %6672 = vmatpush1.bf16.msra.mxu0 0
      %6673 = vmatprep.mubr.bf16.mxu0 0
      %6674 = vmatmul.mubr.bf16.gmra.mrb[0].mxu0 %v6639
      %v6675 = vpop.f32.mrb[0].mxu0
      %v6676 = vadd.f32 %v6136, %v6675
      %v6677 = vpop.f32.mrb[0].mxu0
      %v6678 = vpop.f32.mrb[0].mxu0
      %v6679 = vadd.f32 %v6272, %v6678
      %v6680 = vpop.f32.mrb[0].mxu0
      %6681 = vdwg.mxu0
      %v6683 = vsel %vm2584, %v5273, 0
      %6685 = vmatprep.subr.bf16.mxu0 0
      %6686 = vmatpush1.bf16.msra.mxu0 %v388
      %6687 = vmatprep.subr.bf16.mxu0 0
      %6688 = vmatpush1.bf16.msra.mxu0 0
      %6689 = vmatprep.subr.bf16.mxu0 0
      %6690 = vmatpush1.bf16.msra.mxu0 0
      %6691 = vmatprep.subr.bf16.mxu0 0
      %6692 = vmatpush1.bf16.msra.mxu0 0
      %6693 = vmatprep.subr.bf16.mxu0 0
      %6694 = vmatpush1.bf16.msra.mxu0 0
      %6695 = vmatprep.subr.bf16.mxu0 0
      %6696 = vmatpush1.bf16.msra.mxu0 0
      %6697 = vmatprep.subr.bf16.mxu0 0
      %6698 = vmatpush1.bf16.msra.mxu0 0
      %6699 = vmatprep.subr.bf16.mxu0 0
      %6700 = vmatpush1.bf16.msra.mxu0 0
      %6701 = vmatprep.subr.bf16.mxu0 0
      %6702 = vmatpush1.bf16.msra.mxu0 0
      %6703 = vmatprep.subr.bf16.mxu0 0
      %6704 = vmatpush1.bf16.msra.mxu0 0
      %6705 = vmatprep.subr.bf16.mxu0 0
      %6706 = vmatpush1.bf16.msra.mxu0 0
      %6707 = vmatprep.subr.bf16.mxu0 0
      %6708 = vmatpush1.bf16.msra.mxu0 0
      %6709 = vmatprep.subr.bf16.mxu0 0
      %6710 = vmatpush1.bf16.msra.mxu0 0
      %6711 = vmatprep.subr.bf16.mxu0 0
      %6712 = vmatpush1.bf16.msra.mxu0 0
      %6713 = vmatprep.subr.bf16.mxu0 0
      %6714 = vmatpush1.bf16.msra.mxu0 0
      %6715 = vmatprep.subr.bf16.mxu0 0
      %6716 = vmatpush1.bf16.msra.mxu0 0
      %6717 = vmatprep.mubr.bf16.mxu0 0
      %6718 = vmatmul.mubr.bf16.gmra.mrb[0].mxu0 %v6683
      %v6719 = vpop.f32.mrb[0].mxu0
      %v6720 = vadd.f32 %v6137, %v6719
      %v6721 = vpop.f32.mrb[0].mxu0
      %v6722 = vpop.f32.mrb[0].mxu0
      %v6723 = vadd.f32 %v6273, %v6722
      %v6724 = vpop.f32.mrb[0].mxu0
      %6725 = vdwg.mxu0
      %v6727 = vsel %vm2584, %v5274, 0
      %6729 = vmatprep.subr.bf16.mxu0 0
      %6730 = vmatpush1.bf16.msra.mxu0 %v389
      %6731 = vmatprep.subr.bf16.mxu0 0
      %6732 = vmatpush1.bf16.msra.mxu0 0
      %6733 = vmatprep.subr.bf16.mxu0 0
      %6734 = vmatpush1.bf16.msra.mxu0 0
      %6735 = vmatprep.subr.bf16.mxu0 0
      %6736 = vmatpush1.bf16.msra.mxu0 0
      %6737 = vmatprep.subr.bf16.mxu0 0
      %6738 = vmatpush1.bf16.msra.mxu0 0
      %6739 = vmatprep.subr.bf16.mxu0 0
      %6740 = vmatpush1.bf16.msra.mxu0 0
      %6741 = vmatprep.subr.bf16.mxu0 0
      %6742 = vmatpush1.bf16.msra.mxu0 0
      %6743 = vmatprep.subr.bf16.mxu0 0
      %6744 = vmatpush1.bf16.msra.mxu0 0
      %6745 = vmatprep.subr.bf16.mxu0 0
      %6746 = vmatpush1.bf16.msra.mxu0 0
      %6747 = vmatprep.subr.bf16.mxu0 0
      %6748 = vmatpush1.bf16.msra.mxu0 0
      %6749 = vmatprep.subr.bf16.mxu0 0
      %6750 = vmatpush1.bf16.msra.mxu0 0
      %6751 = vmatprep.subr.bf16.mxu0 0
      %6752 = vmatpush1.bf16.msra.mxu0 0
      %6753 = vmatprep.subr.bf16.mxu0 0
      %6754 = vmatpush1.bf16.msra.mxu0 0
      %6755 = vmatprep.subr.bf16.mxu0 0
      %6756 = vmatpush1.bf16.msra.mxu0 0
      %6757 = vmatprep.subr.bf16.mxu0 0
      %6758 = vmatpush1.bf16.msra.mxu0 0
      %6759 = vmatprep.subr.bf16.mxu0 0
      %6760 = vmatpush1.bf16.msra.mxu0 0
      %6761 = vmatprep.mubr.bf16.mxu0 0
      %6762 = vmatmul.mubr.bf16.gmra.mrb[0].mxu0 %v6727
      %v6763 = vpop.f32.mrb[0].mxu0
      %v6764 = vadd.f32 %v6138, %v6763
      %v6765 = vpop.f32.mrb[0].mxu0
      %v6766 = vpop.f32.mrb[0].mxu0
      %v6767 = vadd.f32 %v6274, %v6766
      %v6768 = vpop.f32.mrb[0].mxu0
      %6769 = vdwg.mxu0
      %v6771 = vsel %vm2584, %v5275, 0
      %6773 = vmatprep.subr.bf16.mxu0 0
      %6774 = vmatpush1.bf16.msra.mxu0 %v390
      %6775 = vmatprep.subr.bf16.mxu0 0
      %6776 = vmatpush1.bf16.msra.mxu0 0
      %6777 = vmatprep.subr.bf16.mxu0 0
      %6778 = vmatpush1.bf16.msra.mxu0 0
      %6779 = vmatprep.subr.bf16.mxu0 0
      %6780 = vmatpush1.bf16.msra.mxu0 0
      %6781 = vmatprep.subr.bf16.mxu0 0
      %6782 = vmatpush1.bf16.msra.mxu0 0
      %6783 = vmatprep.subr.bf16.mxu0 0
      %6784 = vmatpush1.bf16.msra.mxu0 0
      %6785 = vmatprep.subr.bf16.mxu0 0
      %6786 = vmatpush1.bf16.msra.mxu0 0
      %6787 = vmatprep.subr.bf16.mxu0 0
      %6788 = vmatpush1.bf16.msra.mxu0 0
      %6789 = vmatprep.subr.bf16.mxu0 0
      %6790 = vmatpush1.bf16.msra.mxu0 0
      %6791 = vmatprep.subr.bf16.mxu0 0
      %6792 = vmatpush1.bf16.msra.mxu0 0
      %6793 = vmatprep.subr.bf16.mxu0 0
      %6794 = vmatpush1.bf16.msra.mxu0 0
      %6795 = vmatprep.subr.bf16.mxu0 0
      %6796 = vmatpush1.bf16.msra.mxu0 0
      %6797 = vmatprep.subr.bf16.mxu0 0
      %6798 = vmatpush1.bf16.msra.mxu0 0
      %6799 = vmatprep.subr.bf16.mxu0 0
      %6800 = vmatpush1.bf16.msra.mxu0 0
      %6801 = vmatprep.subr.bf16.mxu0 0
      %6802 = vmatpush1.bf16.msra.mxu0 0
      %6803 = vmatprep.subr.bf16.mxu0 0
      %6804 = vmatpush1.bf16.msra.mxu0 0
      %6805 = vmatprep.mubr.bf16.mxu0 0
      %6806 = vmatmul.mubr.bf16.gmra.mrb[0].mxu0 %v6771
      %v6807 = vpop.f32.mrb[0].mxu0
      %v6808 = vadd.f32 %v6139, %v6807
      %v6809 = vpop.f32.mrb[0].mxu0
      %v6810 = vpop.f32.mrb[0].mxu0
      %v6811 = vadd.f32 %v6275, %v6810
      %v6812 = vpop.f32.mrb[0].mxu0
      %6813 = vdwg.mxu0
      %v6815 = vsel %vm2584, %v5276, 0
      %6817 = vmatprep.subr.bf16.mxu0 0
      %6818 = vmatpush1.bf16.msra.mxu0 %v391
      %6819 = vmatprep.subr.bf16.mxu0 0
      %6820 = vmatpush1.bf16.msra.mxu0 0
      %6821 = vmatprep.subr.bf16.mxu0 0
      %6822 = vmatpush1.bf16.msra.mxu0 0
      %6823 = vmatprep.subr.bf16.mxu0 0
      %6824 = vmatpush1.bf16.msra.mxu0 0
      %6825 = vmatprep.subr.bf16.mxu0 0
      %6826 = vmatpush1.bf16.msra.mxu0 0
      %6827 = vmatprep.subr.bf16.mxu0 0
      %6828 = vmatpush1.bf16.msra.mxu0 0
      %6829 = vmatprep.subr.bf16.mxu0 0
      %6830 = vmatpush1.bf16.msra.mxu0 0
      %6831 = vmatprep.subr.bf16.mxu0 0
      %6832 = vmatpush1.bf16.msra.mxu0 0
      %6833 = vmatprep.subr.bf16.mxu0 0
      %6834 = vmatpush1.bf16.msra.mxu0 0
      %6835 = vmatprep.subr.bf16.mxu0 0
      %6836 = vmatpush1.bf16.msra.mxu0 0
      %6837 = vmatprep.subr.bf16.mxu0 0
      %6838 = vmatpush1.bf16.msra.mxu0 0
      %6839 = vmatprep.subr.bf16.mxu0 0
      %6840 = vmatpush1.bf16.msra.mxu0 0
      %6841 = vmatprep.subr.bf16.mxu0 0
      %6842 = vmatpush1.bf16.msra.mxu0 0
      %6843 = vmatprep.subr.bf16.mxu0 0
      %6844 = vmatpush1.bf16.msra.mxu0 0
      %6845 = vmatprep.subr.bf16.mxu0 0
      %6846 = vmatpush1.bf16.msra.mxu0 0
      %6847 = vmatprep.subr.bf16.mxu0 0
      %6848 = vmatpush1.bf16.msra.mxu0 0
      %6849 = vmatprep.mubr.bf16.mxu0 0
      %6850 = vmatmul.mubr.bf16.gmra.mrb[0].mxu0 %v6815
      %v6851 = vpop.f32.mrb[0].mxu0
      %v6852 = vadd.f32 %v6140, %v6851
      %v6853 = vpop.f32.mrb[0].mxu0
      %v6854 = vpop.f32.mrb[0].mxu0
      %v6855 = vadd.f32 %v6276, %v6854
      %v6856 = vpop.f32.mrb[0].mxu0
      %6857 = vdwg.mxu0
      %v6859 = vsel %vm2584, %v5277, 0
      %6861 = vmatprep.subr.bf16.mxu0 0
      %6862 = vmatpush1.bf16.msra.mxu0 %v392
      %6863 = vmatprep.subr.bf16.mxu0 0
      %6864 = vmatpush1.bf16.msra.mxu0 0
      %6865 = vmatprep.subr.bf16.mxu0 0
      %6866 = vmatpush1.bf16.msra.mxu0 0
      %6867 = vmatprep.subr.bf16.mxu0 0
      %6868 = vmatpush1.bf16.msra.mxu0 0
      %6869 = vmatprep.subr.bf16.mxu0 0
      %6870 = vmatpush1.bf16.msra.mxu0 0
      %6871 = vmatprep.subr.bf16.mxu0 0
      %6872 = vmatpush1.bf16.msra.mxu0 0
      %6873 = vmatprep.subr.bf16.mxu0 0
      %6874 = vmatpush1.bf16.msra.mxu0 0
      %6875 = vmatprep.subr.bf16.mxu0 0
      %6876 = vmatpush1.bf16.msra.mxu0 0
      %6877 = vmatprep.subr.bf16.mxu0 0
      %6878 = vmatpush1.bf16.msra.mxu0 0
      %6879 = vmatprep.subr.bf16.mxu0 0
      %6880 = vmatpush1.bf16.msra.mxu0 0
      %6881 = vmatprep.subr.bf16.mxu0 0
      %6882 = vmatpush1.bf16.msra.mxu0 0
      %6883 = vmatprep.subr.bf16.mxu0 0
      %6884 = vmatpush1.bf16.msra.mxu0 0
      %6885 = vmatprep.subr.bf16.mxu0 0
      %6886 = vmatpush1.bf16.msra.mxu0 0
      %6887 = vmatprep.subr.bf16.mxu0 0
      %6888 = vmatpush1.bf16.msra.mxu0 0
      %6889 = vmatprep.subr.bf16.mxu0 0
      %6890 = vmatpush1.bf16.msra.mxu0 0
      %6891 = vmatprep.subr.bf16.mxu0 0
      %6892 = vmatpush1.bf16.msra.mxu0 0
      %6893 = vmatprep.mubr.bf16.mxu0 0
      %6894 = vmatmul.mubr.bf16.gmra.mrb[0].mxu0 %v6859
      %v6895 = vpop.f32.mrb[0].mxu0
      %v6896 = vadd.f32 %v6141, %v6895
      %v6897 = vpop.f32.mrb[0].mxu0
      %v6898 = vpop.f32.mrb[0].mxu0
      %v6899 = vadd.f32 %v6277, %v6898
      %v6900 = vpop.f32.mrb[0].mxu0
      %6901 = vdwg.mxu0
      %v6903 = vsel %vm2584, %v5278, 0
      %6905 = vmatprep.subr.bf16.mxu0 0
      %6906 = vmatpush1.bf16.msra.mxu0 %v393
      %6907 = vmatprep.subr.bf16.mxu0 0
      %6908 = vmatpush1.bf16.msra.mxu0 0
      %6909 = vmatprep.subr.bf16.mxu0 0
      %6910 = vmatpush1.bf16.msra.mxu0 0
      %6911 = vmatprep.subr.bf16.mxu0 0
      %6912 = vmatpush1.bf16.msra.mxu0 0
      %6913 = vmatprep.subr.bf16.mxu0 0
      %6914 = vmatpush1.bf16.msra.mxu0 0
      %6915 = vmatprep.subr.bf16.mxu0 0
      %6916 = vmatpush1.bf16.msra.mxu0 0
      %6917 = vmatprep.subr.bf16.mxu0 0
      %6918 = vmatpush1.bf16.msra.mxu0 0
      %6919 = vmatprep.subr.bf16.mxu0 0
      %6920 = vmatpush1.bf16.msra.mxu0 0
      %6921 = vmatprep.subr.bf16.mxu0 0
      %6922 = vmatpush1.bf16.msra.mxu0 0
      %6923 = vmatprep.subr.bf16.mxu0 0
      %6924 = vmatpush1.bf16.msra.mxu0 0
      %6925 = vmatprep.subr.bf16.mxu0 0
      %6926 = vmatpush1.bf16.msra.mxu0 0
      %6927 = vmatprep.subr.bf16.mxu0 0
      %6928 = vmatpush1.bf16.msra.mxu0 0
      %6929 = vmatprep.subr.bf16.mxu0 0
      %6930 = vmatpush1.bf16.msra.mxu0 0
      %6931 = vmatprep.subr.bf16.mxu0 0
      %6932 = vmatpush1.bf16.msra.mxu0 0
      %6933 = vmatprep.subr.bf16.mxu0 0
      %6934 = vmatpush1.bf16.msra.mxu0 0
      %6935 = vmatprep.subr.bf16.mxu0 0
      %6936 = vmatpush1.bf16.msra.mxu0 0
      %6937 = vmatprep.mubr.bf16.mxu0 0
      %6938 = vmatmul.mubr.bf16.gmra.mrb[0].mxu0 %v6903
      %v6939 = vpop.f32.mrb[0].mxu0
      %v6940 = vadd.f32 %v6406, %v6939
      %v6941 = vpop.f32.mrb[0].mxu0
      %v6942 = vpop.f32.mrb[0].mxu0
      %v6943 = vadd.f32 %v6542, %v6942
      %v6944 = vpop.f32.mrb[0].mxu0
      %6945 = vdwg.mxu0
      %v6947 = vsel %vm2584, %v5279, 0
      %6949 = vmatprep.subr.bf16.mxu0 0
      %6950 = vmatpush1.bf16.msra.mxu0 %v394
      %6951 = vmatprep.subr.bf16.mxu0 0
      %6952 = vmatpush1.bf16.msra.mxu0 0
      %6953 = vmatprep.subr.bf16.mxu0 0
      %6954 = vmatpush1.bf16.msra.mxu0 0
      %6955 = vmatprep.subr.bf16.mxu0 0
      %6956 = vmatpush1.bf16.msra.mxu0 0
      %6957 = vmatprep.subr.bf16.mxu0 0
      %6958 = vmatpush1.bf16.msra.mxu0 0
      %6959 = vmatprep.subr.bf16.mxu0 0
      %6960 = vmatpush1.bf16.msra.mxu0 0
      %6961 = vmatprep.subr.bf16.mxu0 0
      %6962 = vmatpush1.bf16.msra.mxu0 0
      %6963 = vmatprep.subr.bf16.mxu0 0
      %6964 = vmatpush1.bf16.msra.mxu0 0
      %6965 = vmatprep.subr.bf16.mxu0 0
      %6966 = vmatpush1.bf16.msra.mxu0 0
      %6967 = vmatprep.subr.bf16.mxu0 0
      %6968 = vmatpush1.bf16.msra.mxu0 0
      %6969 = vmatprep.subr.bf16.mxu0 0
      %6970 = vmatpush1.bf16.msra.mxu0 0
      %6971 = vmatprep.subr.bf16.mxu0 0
      %6972 = vmatpush1.bf16.msra.mxu0 0
      %6973 = vmatprep.subr.bf16.mxu0 0
      %6974 = vmatpush1.bf16.msra.mxu0 0
      %6975 = vmatprep.subr.bf16.mxu0 0
      %6976 = vmatpush1.bf16.msra.mxu0 0
      %6977 = vmatprep.subr.bf16.mxu0 0
      %6978 = vmatpush1.bf16.msra.mxu0 0
      %6979 = vmatprep.subr.bf16.mxu0 0
      %6980 = vmatpush1.bf16.msra.mxu0 0
      %6981 = vmatprep.mubr.bf16.mxu0 0
      %6982 = vmatmul.mubr.bf16.gmra.mrb[0].mxu0 %v6947
      %v6983 = vpop.f32.mrb[0].mxu0
      %v6984 = vadd.f32 %v6407, %v6983
      %v6985 = vpop.f32.mrb[0].mxu0
      %v6986 = vpop.f32.mrb[0].mxu0
      %v6987 = vadd.f32 %v6543, %v6986
      %v6988 = vpop.f32.mrb[0].mxu0
      %6989 = vdwg.mxu0
      %v6991 = vsel %vm2584, %v5280, 0
      %6993 = vmatprep.subr.bf16.mxu0 0
      %6994 = vmatpush1.bf16.msra.mxu0 %v395
      %6995 = vmatprep.subr.bf16.mxu0 0
      %6996 = vmatpush1.bf16.msra.mxu0 0
      %6997 = vmatprep.subr.bf16.mxu0 0
      %6998 = vmatpush1.bf16.msra.mxu0 0
      %6999 = vmatprep.subr.bf16.mxu0 0
      %7000 = vmatpush1.bf16.msra.mxu0 0
      %7001 = vmatprep.subr.bf16.mxu0 0
      %7002 = vmatpush1.bf16.msra.mxu0 0
      %7003 = vmatprep.subr.bf16.mxu0 0
      %7004 = vmatpush1.bf16.msra.mxu0 0
      %7005 = vmatprep.subr.bf16.mxu0 0
      %7006 = vmatpush1.bf16.msra.mxu0 0
      %7007 = vmatprep.subr.bf16.mxu0 0
      %7008 = vmatpush1.bf16.msra.mxu0 0
      %7009 = vmatprep.subr.bf16.mxu0 0
      %7010 = vmatpush1.bf16.msra.mxu0 0
      %7011 = vmatprep.subr.bf16.mxu0 0
      %7012 = vmatpush1.bf16.msra.mxu0 0
      %7013 = vmatprep.subr.bf16.mxu0 0
      %7014 = vmatpush1.bf16.msra.mxu0 0
      %7015 = vmatprep.subr.bf16.mxu0 0
      %7016 = vmatpush1.bf16.msra.mxu0 0
      %7017 = vmatprep.subr.bf16.mxu0 0
      %7018 = vmatpush1.bf16.msra.mxu0 0
      %7019 = vmatprep.subr.bf16.mxu0 0
      %7020 = vmatpush1.bf16.msra.mxu0 0
      %7021 = vmatprep.subr.bf16.mxu0 0
      %7022 = vmatpush1.bf16.msra.mxu0 0
      %7023 = vmatprep.subr.bf16.mxu0 0
      %7024 = vmatpush1.bf16.msra.mxu0 0
      %7025 = vmatprep.mubr.bf16.mxu0 0
      %7026 = vmatmul.mubr.bf16.gmra.mrb[0].mxu0 %v6991
      %v7027 = vpop.f32.mrb[0].mxu0
      %v7028 = vadd.f32 %v6408, %v7027
      %v7029 = vpop.f32.mrb[0].mxu0
      %v7030 = vpop.f32.mrb[0].mxu0
      %v7031 = vadd.f32 %v6544, %v7030
      %v7032 = vpop.f32.mrb[0].mxu0
      %7033 = vdwg.mxu0
      %v7035 = vsel %vm2584, %v5281, 0
      %7037 = vmatprep.subr.bf16.mxu0 0
      %7038 = vmatpush1.bf16.msra.mxu0 %v396
      %7039 = vmatprep.subr.bf16.mxu0 0
      %7040 = vmatpush1.bf16.msra.mxu0 0
      %7041 = vmatprep.subr.bf16.mxu0 0
      %7042 = vmatpush1.bf16.msra.mxu0 0
      %7043 = vmatprep.subr.bf16.mxu0 0
      %7044 = vmatpush1.bf16.msra.mxu0 0
      %7045 = vmatprep.subr.bf16.mxu0 0
      %7046 = vmatpush1.bf16.msra.mxu0 0
      %7047 = vmatprep.subr.bf16.mxu0 0
      %7048 = vmatpush1.bf16.msra.mxu0 0
      %7049 = vmatprep.subr.bf16.mxu0 0
      %7050 = vmatpush1.bf16.msra.mxu0 0
      %7051 = vmatprep.subr.bf16.mxu0 0
      %7052 = vmatpush1.bf16.msra.mxu0 0
      %7053 = vmatprep.subr.bf16.mxu0 0
      %7054 = vmatpush1.bf16.msra.mxu0 0
      %7055 = vmatprep.subr.bf16.mxu0 0
      %7056 = vmatpush1.bf16.msra.mxu0 0
      %7057 = vmatprep.subr.bf16.mxu0 0
      %7058 = vmatpush1.bf16.msra.mxu0 0
      %7059 = vmatprep.subr.bf16.mxu0 0
      %7060 = vmatpush1.bf16.msra.mxu0 0
      %7061 = vmatprep.subr.bf16.mxu0 0
      %7062 = vmatpush1.bf16.msra.mxu0 0
      %7063 = vmatprep.subr.bf16.mxu0 0
      %7064 = vmatpush1.bf16.msra.mxu0 0
      %7065 = vmatprep.subr.bf16.mxu0 0
      %7066 = vmatpush1.bf16.msra.mxu0 0
      %7067 = vmatprep.subr.bf16.mxu0 0
      %7068 = vmatpush1.bf16.msra.mxu0 0
      %7069 = vmatprep.mubr.bf16.mxu0 0
      %7070 = vmatmul.mubr.bf16.gmra.mrb[0].mxu0 %v7035
      %v7071 = vpop.f32.mrb[0].mxu0
      %v7072 = vadd.f32 %v6409, %v7071
      %v7073 = vpop.f32.mrb[0].mxu0
      %v7074 = vpop.f32.mrb[0].mxu0
      %v7075 = vadd.f32 %v6545, %v7074
      %v7076 = vpop.f32.mrb[0].mxu0
      %7077 = vdwg.mxu0
      %v7079 = vsel %vm2584, %v5282, 0
      %7081 = vmatprep.subr.bf16.mxu0 0
      %7082 = vmatpush1.bf16.msra.mxu0 %v397
      %7083 = vmatprep.subr.bf16.mxu0 0
      %7084 = vmatpush1.bf16.msra.mxu0 0
      %7085 = vmatprep.subr.bf16.mxu0 0
      %7086 = vmatpush1.bf16.msra.mxu0 0
      %7087 = vmatprep.subr.bf16.mxu0 0
      %7088 = vmatpush1.bf16.msra.mxu0 0
      %7089 = vmatprep.subr.bf16.mxu0 0
      %7090 = vmatpush1.bf16.msra.mxu0 0
      %7091 = vmatprep.subr.bf16.mxu0 0
      %7092 = vmatpush1.bf16.msra.mxu0 0
      %7093 = vmatprep.subr.bf16.mxu0 0
      %7094 = vmatpush1.bf16.msra.mxu0 0
      %7095 = vmatprep.subr.bf16.mxu0 0
      %7096 = vmatpush1.bf16.msra.mxu0 0
      %7097 = vmatprep.subr.bf16.mxu0 0
      %7098 = vmatpush1.bf16.msra.mxu0 0
      %7099 = vmatprep.subr.bf16.mxu0 0
      %7100 = vmatpush1.bf16.msra.mxu0 0
      %7101 = vmatprep.subr.bf16.mxu0 0
      %7102 = vmatpush1.bf16.msra.mxu0 0
      %7103 = vmatprep.subr.bf16.mxu0 0
      %7104 = vmatpush1.bf16.msra.mxu0 0
      %7105 = vmatprep.subr.bf16.mxu0 0
      %7106 = vmatpush1.bf16.msra.mxu0 0
      %7107 = vmatprep.subr.bf16.mxu0 0
      %7108 = vmatpush1.bf16.msra.mxu0 0
      %7109 = vmatprep.subr.bf16.mxu0 0
      %7110 = vmatpush1.bf16.msra.mxu0 0
      %7111 = vmatprep.subr.bf16.mxu0 0
      %7112 = vmatpush1.bf16.msra.mxu0 0
      %7113 = vmatprep.mubr.bf16.mxu0 0
      %7114 = vmatmul.mubr.bf16.gmra.mrb[0].mxu0 %v7079
      %v7115 = vpop.f32.mrb[0].mxu0
      %v7116 = vadd.f32 %v6410, %v7115
      %v7117 = vpop.f32.mrb[0].mxu0
      %v7118 = vpop.f32.mrb[0].mxu0
      %v7119 = vadd.f32 %v6546, %v7118
      %v7120 = vpop.f32.mrb[0].mxu0
      %7121 = vdwg.mxu0
      %v7123 = vsel %vm2584, %v5283, 0
      %7125 = vmatprep.subr.bf16.mxu0 0
      %7126 = vmatpush1.bf16.msra.mxu0 %v398
      %7127 = vmatprep.subr.bf16.mxu0 0
      %7128 = vmatpush1.bf16.msra.mxu0 0
      %7129 = vmatprep.subr.bf16.mxu0 0
      %7130 = vmatpush1.bf16.msra.mxu0 0
      %7131 = vmatprep.subr.bf16.mxu0 0
      %7132 = vmatpush1.bf16.msra.mxu0 0
      %7133 = vmatprep.subr.bf16.mxu0 0
      %7134 = vmatpush1.bf16.msra.mxu0 0
      %7135 = vmatprep.subr.bf16.mxu0 0
      %7136 = vmatpush1.bf16.msra.mxu0 0
      %7137 = vmatprep.subr.bf16.mxu0 0
      %7138 = vmatpush1.bf16.msra.mxu0 0
      %7139 = vmatprep.subr.bf16.mxu0 0
      %7140 = vmatpush1.bf16.msra.mxu0 0
      %7141 = vmatprep.subr.bf16.mxu0 0
      %7142 = vmatpush1.bf16.msra.mxu0 0
      %7143 = vmatprep.subr.bf16.mxu0 0
      %7144 = vmatpush1.bf16.msra.mxu0 0
      %7145 = vmatprep.subr.bf16.mxu0 0
      %7146 = vmatpush1.bf16.msra.mxu0 0
      %7147 = vmatprep.subr.bf16.mxu0 0
      %7148 = vmatpush1.bf16.msra.mxu0 0
      %7149 = vmatprep.subr.bf16.mxu0 0
      %7150 = vmatpush1.bf16.msra.mxu0 0
      %7151 = vmatprep.subr.bf16.mxu0 0
      %7152 = vmatpush1.bf16.msra.mxu0 0
      %7153 = vmatprep.subr.bf16.mxu0 0
      %7154 = vmatpush1.bf16.msra.mxu0 0
      %7155 = vmatprep.subr.bf16.mxu0 0
      %7156 = vmatpush1.bf16.msra.mxu0 0
      %7157 = vmatprep.mubr.bf16.mxu0 0
      %7158 = vmatmul.mubr.bf16.gmra.mrb[0].mxu0 %v7123
      %v7159 = vpop.f32.mrb[0].mxu0
      %v7160 = vadd.f32 %v6411, %v7159
      %v7161 = vpop.f32.mrb[0].mxu0
      %v7162 = vpop.f32.mrb[0].mxu0
      %v7163 = vadd.f32 %v6547, %v7162
      %v7164 = vpop.f32.mrb[0].mxu0
      %7165 = vdwg.mxu0
      %v7167 = vsel %vm2584, %v5284, 0
      %7169 = vmatprep.subr.bf16.mxu0 0
      %7170 = vmatpush1.bf16.msra.mxu0 %v399
      %7171 = vmatprep.subr.bf16.mxu0 0
      %7172 = vmatpush1.bf16.msra.mxu0 0
      %7173 = vmatprep.subr.bf16.mxu0 0
      %7174 = vmatpush1.bf16.msra.mxu0 0
      %7175 = vmatprep.subr.bf16.mxu0 0
      %7176 = vmatpush1.bf16.msra.mxu0 0
      %7177 = vmatprep.subr.bf16.mxu0 0
      %7178 = vmatpush1.bf16.msra.mxu0 0
      %7179 = vmatprep.subr.bf16.mxu0 0
      %7180 = vmatpush1.bf16.msra.mxu0 0
      %7181 = vmatprep.subr.bf16.mxu0 0
      %7182 = vmatpush1.bf16.msra.mxu0 0
      %7183 = vmatprep.subr.bf16.mxu0 0
      %7184 = vmatpush1.bf16.msra.mxu0 0
      %7185 = vmatprep.subr.bf16.mxu0 0
      %7186 = vmatpush1.bf16.msra.mxu0 0
      %7187 = vmatprep.subr.bf16.mxu0 0
      %7188 = vmatpush1.bf16.msra.mxu0 0
      %7189 = vmatprep.subr.bf16.mxu0 0
      %7190 = vmatpush1.bf16.msra.mxu0 0
      %7191 = vmatprep.subr.bf16.mxu0 0
      %7192 = vmatpush1.bf16.msra.mxu0 0
      %7193 = vmatprep.subr.bf16.mxu0 0
      %7194 = vmatpush1.bf16.msra.mxu0 0
      %7195 = vmatprep.subr.bf16.mxu0 0
      %7196 = vmatpush1.bf16.msra.mxu0 0
      %7197 = vmatprep.subr.bf16.mxu0 0
      %7198 = vmatpush1.bf16.msra.mxu0 0
      %7199 = vmatprep.subr.bf16.mxu0 0
      %7200 = vmatpush1.bf16.msra.mxu0 0
      %7201 = vmatprep.mubr.bf16.mxu0 0
      %7202 = vmatmul.mubr.bf16.gmra.mrb[0].mxu0 %v7167
      %v7203 = vpop.f32.mrb[0].mxu0
      %v7204 = vadd.f32 %v6412, %v7203
      %v7205 = vpop.f32.mrb[0].mxu0
      %v7206 = vpop.f32.mrb[0].mxu0
      %v7207 = vadd.f32 %v6548, %v7206
      %v7208 = vpop.f32.mrb[0].mxu0
      %7209 = vdwg.mxu0
      %v7211 = vsel %vm2584, %v5285, 0
      %7213 = vmatprep.subr.bf16.mxu0 0
      %7214 = vmatpush1.bf16.msra.mxu0 %v400
      %7215 = vmatprep.subr.bf16.mxu0 0
      %7216 = vmatpush1.bf16.msra.mxu0 0
      %7217 = vmatprep.subr.bf16.mxu0 0
      %7218 = vmatpush1.bf16.msra.mxu0 0
      %7219 = vmatprep.subr.bf16.mxu0 0
      %7220 = vmatpush1.bf16.msra.mxu0 0
      %7221 = vmatprep.subr.bf16.mxu0 0
      %7222 = vmatpush1.bf16.msra.mxu0 0
      %7223 = vmatprep.subr.bf16.mxu0 0
      %7224 = vmatpush1.bf16.msra.mxu0 0
      %7225 = vmatprep.subr.bf16.mxu0 0
      %7226 = vmatpush1.bf16.msra.mxu0 0
      %7227 = vmatprep.subr.bf16.mxu0 0
      %7228 = vmatpush1.bf16.msra.mxu0 0
      %7229 = vmatprep.subr.bf16.mxu0 0
      %7230 = vmatpush1.bf16.msra.mxu0 0
      %7231 = vmatprep.subr.bf16.mxu0 0
      %7232 = vmatpush1.bf16.msra.mxu0 0
      %7233 = vmatprep.subr.bf16.mxu0 0
      %7234 = vmatpush1.bf16.msra.mxu0 0
      %7235 = vmatprep.subr.bf16.mxu0 0
      %7236 = vmatpush1.bf16.msra.mxu0 0
      %7237 = vmatprep.subr.bf16.mxu0 0
      %7238 = vmatpush1.bf16.msra.mxu0 0
      %7239 = vmatprep.subr.bf16.mxu0 0
      %7240 = vmatpush1.bf16.msra.mxu0 0
      %7241 = vmatprep.subr.bf16.mxu0 0
      %7242 = vmatpush1.bf16.msra.mxu0 0
      %7243 = vmatprep.subr.bf16.mxu0 0
      %7244 = vmatpush1.bf16.msra.mxu0 0
      %7245 = vmatprep.mubr.bf16.mxu0 0
      %7246 = vmatmul.mubr.bf16.gmra.mrb[0].mxu0 %v7211
      %v7247 = vpop.f32.mrb[0].mxu0
      %v7248 = vadd.f32 %v6413, %v7247
      %v7249 = vpop.f32.mrb[0].mxu0
      %v7250 = vpop.f32.mrb[0].mxu0
      %v7251 = vadd.f32 %v6549, %v7250
      %v7252 = vpop.f32.mrb[0].mxu0
      %7253 = vdwg.mxu0
      %7254 = vxpose.xlu0.b32.start [1/16] %v6588, 128
      %7255 = vxpose.xlu0.b32.cont [2/16] %v6591, 128
      %7256 = vxpose.xlu0.b32.cont [3/16] %v6632, 128
      %7257 = vxpose.xlu0.b32.cont [4/16] %v6635, 128
      %7258 = vxpose.xlu0.b32.cont [5/16] %v6676, 128
      %7259 = vxpose.xlu0.b32.cont [6/16] %v6679, 128
      %7260 = vxpose.xlu0.b32.cont [7/16] %v6720, 128
      %7261 = vxpose.xlu0.b32.cont [8/16] %v6723, 128
      %7262 = vxpose.xlu0.b32.cont [9/16] %v6764, 128
      %7263 = vxpose.xlu0.b32.cont [10/16] %v6767, 128
      %7264 = vxpose.xlu0.b32.cont [11/16] %v6808, 128
      %7265 = vxpose.xlu0.b32.cont [12/16] %v6811, 128
      %7266 = vxpose.xlu0.b32.cont [13/16] %v6852, 128
      %7267 = vxpose.xlu0.b32.cont [14/16] %v6855, 128
      %7268 = vxpose.xlu0.b32.cont [15/16] %v6896, 128
      %7269 = vxpose.xlu0.b32.end [16/16] %v6899, 128
      %v7270 = vpop.trf.xlu0
      %v7271 = vpop.trf.xlu0
      %v7272 = vpop.trf.xlu0
      %v7273 = vpop.trf.xlu0
      %v7274 = vpop.trf.xlu0
      %v7275 = vpop.trf.xlu0
      %v7276 = vpop.trf.xlu0
      %v7277 = vpop.trf.xlu0
      %v7278 = vpop.trf.xlu0
      %v7279 = vpop.trf.xlu0
      %v7280 = vpop.trf.xlu0
      %v7281 = vpop.trf.xlu0
      %v7282 = vpop.trf.xlu0
      %v7283 = vpop.trf.xlu0
      %v7284 = vpop.trf.xlu0
      %v7285 = vpop.trf.xlu0
      %7286 = vxpose.xlu0.b32.start [1/16] %v6940, 128
      %7287 = vxpose.xlu0.b32.cont [2/16] %v6943, 128
      %7288 = vxpose.xlu0.b32.cont [3/16] %v6984, 128
      %7289 = vxpose.xlu0.b32.cont [4/16] %v6987, 128
      %7290 = vxpose.xlu0.b32.cont [5/16] %v7028, 128
      %7291 = vxpose.xlu0.b32.cont [6/16] %v7031, 128
      %7292 = vxpose.xlu0.b32.cont [7/16] %v7072, 128
      %7293 = vxpose.xlu0.b32.cont [8/16] %v7075, 128
      %7294 = vxpose.xlu0.b32.cont [9/16] %v7116, 128
      %7295 = vxpose.xlu0.b32.cont [10/16] %v7119, 128
      %7296 = vxpose.xlu0.b32.cont [11/16] %v7160, 128
      %7297 = vxpose.xlu0.b32.cont [12/16] %v7163, 128
      %7298 = vxpose.xlu0.b32.cont [13/16] %v7204, 128
      %7299 = vxpose.xlu0.b32.cont [14/16] %v7207, 128
      %7300 = vxpose.xlu0.b32.cont [15/16] %v7248, 128
      %7301 = vxpose.xlu0.b32.end [16/16] %v7251, 128
      %v7302 = vpop.trf.xlu0
      %v7303 = vpop.trf.xlu0
      %v7304 = vpop.trf.xlu0
      %v7305 = vpop.trf.xlu0
      %v7306 = vpop.trf.xlu0
      %v7307 = vpop.trf.xlu0
      %v7308 = vpop.trf.xlu0
      %v7309 = vpop.trf.xlu0
      %v7310 = vpop.trf.xlu0
      %v7311 = vpop.trf.xlu0
      %v7312 = vpop.trf.xlu0
      %v7313 = vpop.trf.xlu0
      %v7314 = vpop.trf.xlu0
      %v7315 = vpop.trf.xlu0
      %v7316 = vpop.trf.xlu0
      %v7317 = vpop.trf.xlu0
      %v7318 = vpack.c.bf16 %v7271, %v7270
      %v7319 = vpack.c.bf16 %v7303, %v7302
      %v7320 = vpack.c.bf16 %v7273, %v7272
      %v7321 = vpack.c.bf16 %v7305, %v7304
      %v7322 = vld [vmem:[%s4] sm:$0xf]
      %v7323 = vld [vmem:[%s4 + $0x4] sm:$0xf]
      %v7324 = vld [vmem:[%s4 + $0x8] sm:$0xf]
      %v7325 = vld [vmem:[%s4 + $0xc] sm:$0xf]
      %v7326 = vld [vmem:[%s5] sm:$0xff]
      %v7327 = vld [vmem:[%s5 + $0x8] sm:$0xff]
      %v7328 = vld [vmem:[%s5 + $0x10] sm:$0xff]
      %v7329 = vld [vmem:[%s5 + $0x18] sm:$0xff]
      %7331 = vset.pattern.permute.xlu0 0
      %7332 = vperm.xlu0 %7331, %v7326
      %v7333 = vpop.permute.xlu0 %7332
      %7336 = vset.pattern.permute.xlu0 0
      %7337 = vperm.xlu0 %7336, %v7327
      %v7338 = vpop.permute.xlu0 %7337
      %7341 = vset.pattern.permute.xlu0 0
      %7342 = vperm.xlu0 %7341, %v7328
      %v7343 = vpop.permute.xlu0 %7342
      %7346 = vset.pattern.permute.xlu0 0
      %7347 = vperm.xlu0 %7346, %v7329
      %v7348 = vpop.permute.xlu0 %7347
      %v7354 = vunpack.c.l.b16 %v7322
      %v7355 = vunpack.c.l.b16 %v7323
      %v7356 = vunpack.c.l.b16 %v7324
      %v7357 = vunpack.c.l.b16 %v7325
      %v7358 = vpack.c.b16 %v7355, %v7354
      %v7359 = vpack.c.b16 %v7357, %v7356
      %v7361 = vsel %vm456, %v7358, 0
      %v7364 = vsel %vm456, %v7359, 0
      %7366 = vmatprep.subr.bf16.mxu0 %v7319
      %7367 = vmatpush1.bf16.msra.mxu0 %v7318
      %7368 = vmatprep.subr.bf16.mxu0 %v7321
      %7369 = vmatpush1.bf16.msra.mxu0 %v7320
      %7370 = vmatprep.subr.bf16.mxu0 0
      %7371 = vmatpush1.bf16.msra.mxu0 0
      %7372 = vmatprep.subr.bf16.mxu0 0
      %7373 = vmatpush1.bf16.msra.mxu0 0
      %7374 = vmatprep.subr.bf16.mxu0 0
      %7375 = vmatpush1.bf16.msra.mxu0 0
      %7376 = vmatprep.subr.bf16.mxu0 0
      %7377 = vmatpush1.bf16.msra.mxu0 0
      %7378 = vmatprep.subr.bf16.mxu0 0
      %7379 = vmatpush1.bf16.msra.mxu0 0
      %7380 = vmatprep.subr.bf16.mxu0 0
      %7381 = vmatpush1.bf16.msra.mxu0 0
      %7382 = vmatprep.subr.bf16.mxu0 0
      %7383 = vmatpush1.bf16.msra.mxu0 0
      %7384 = vmatprep.subr.bf16.mxu0 0
      %7385 = vmatpush1.bf16.msra.mxu0 0
      %7386 = vmatprep.subr.bf16.mxu0 0
      %7387 = vmatpush1.bf16.msra.mxu0 0
      %7388 = vmatprep.subr.bf16.mxu0 0
      %7389 = vmatpush1.bf16.msra.mxu0 0
      %7390 = vmatprep.subr.bf16.mxu0 0
      %7391 = vmatpush1.bf16.msra.mxu0 0
      %7392 = vmatprep.subr.bf16.mxu0 0
      %7393 = vmatpush1.bf16.msra.mxu0 0
      %7394 = vmatprep.subr.bf16.mxu0 0
      %7395 = vmatpush1.bf16.msra.mxu0 0
      %7396 = vmatprep.subr.bf16.mxu0 0
      %7397 = vmatpush1.bf16.msra.mxu0 0
      %7398 = vmatprep.mubr.bf16.mxu0 0
      %7399 = vmatmul.mubr.bf16.gmra.mrb[0].mxu0 %v7361
      %v7400 = vpop.f32.mrb[0].mxu0
      %v7401 = vadd.f32 %v7333, %v7400
      %v7402 = vpop.f32.mrb[0].mxu0
      %v7403 = vadd.f32 %v7333, %v7402
      %v7404 = vpop.f32.mrb[0].mxu0
      %v7405 = vadd.f32 %v7338, %v7404
      %v7406 = vpop.f32.mrb[0].mxu0
      %v7407 = vadd.f32 %v7338, %v7406
      %7408 = vmatprep.mubr.bf16.mxu0 0
      %7409 = vmatmul.mubr.bf16.gmra.mrb[0].mxu0 %v7364
      %v7410 = vpop.f32.mrb[0].mxu0
      %v7411 = vadd.f32 %v7343, %v7410
      %v7412 = vpop.f32.mrb[0].mxu0
      %v7413 = vadd.f32 %v7343, %v7412
      %v7414 = vpop.f32.mrb[0].mxu0
      %v7415 = vadd.f32 %v7348, %v7414
      %v7416 = vpop.f32.mrb[0].mxu0
      %v7417 = vadd.f32 %v7348, %v7416
      %7418 = vdwg.mxu0
      %v7419 = vadd.f32 %v7401, %v313
      %v7420 = vadd.f32 %v7403, %v314
      %v7421 = vadd.f32 %v7405, %v315
      %v7422 = vadd.f32 %v7407, %v316
      %v7423 = vadd.f32 %v7411, %v317
      %v7424 = vadd.f32 %v7413, %v318
      %v7425 = vadd.f32 %v7415, %v319
      %v7426 = vadd.f32 %v7417, %v320
      %7427 = vst [vmem:[%s309] sm:$0xff] %v7419
      %7428 = vst [vmem:[%s309 + $0x8] sm:$0xff] %v7420
      %7429 = vst [vmem:[%s309 + $0x10] sm:$0xff] %v7421
      %7430 = vst [vmem:[%s309 + $0x18] sm:$0xff] %v7422
      %7431 = vst [vmem:[%s309 + $0x20] sm:$0xff] %v7423
      %7432 = vst [vmem:[%s309 + $0x28] sm:$0xff] %v7424
      %7433 = vst [vmem:[%s309 + $0x30] sm:$0xff] %v7425
      %7434 = vst [vmem:[%s309 + $0x38] sm:$0xff] %v7426
      %s7435 = smul.u32 2, %s22
      %p7436 = scmp.lt.s32.totalorder %s21, 1
      %s7437 = scalar_select %p7436, %s21, 1
      %p7438 = scmp.lt.s32.totalorder %s7435, 1
      %s7439 = scalar_select %p7438, %s7435, 1
      %s7440 = smul.addr %s7437, 8
      %s7441 = sadd.s32 %s7439, %s7440
      %s7442 = smul.addr %s7441, 8
      %s7443 = scalar_lea.vmem %s6, %s7442
      // Predicated region
      $region45: #{criss_cross_attention.1} parent=43 // pred_check
        %p7444 = pneg %p187
      $region46: #{criss_cross_attention.1} parent=43 // pred_check_branch
        %7446 = sbr.rel (%p7444) target = $region48
      $region47: #{criss_cross_attention.1} parent=43 // pred_region
        %s7447 = smul.u32 2, %s22
      $region48: #{criss_cross_attention.1} parent=43 // pred_fallthru
        _
    $region44: #{criss_cross_attention.1} parent=5 // pred_fallthru
      _
    %p7448 = scmp.le.s32.totalorder 2, %s12
    // Predicated region
    $region49: #{criss_cross_attention.1} parent=5 // pred_check
      %p7449 = pneg %p7448
    $region50: #{criss_cross_attention.1} parent=5 // pred_check_branch
      %7451 = sbr.rel (%p7449) target = $region52
    $region51: #{criss_cross_attention.1} parent=5 // pred_region
      %s7452 = ssub.s32 %s12, 2
      // Predicated region
      $region53: #{criss_cross_attention.1} parent=51 // pred_check
        %p7453 = pneg %p193
      $region54: #{criss_cross_attention.1} parent=51 // pred_check_branch
        %7455 = sbr.rel (%p7453) target = $region56
      $region55: #{criss_cross_attention.1} parent=51 // pred_region
        %s7456 = smul.u32 2, %s24
        %p7457 = scmp.lt.s32.totalorder %s23, 1
        %s7458 = scalar_select %p7457, %s23, 1
        %p7459 = scmp.lt.s32.totalorder %s7456, 1
        %s7460 = scalar_select %p7459, %s7456, 1
        %s7461 = smul.addr %s7458, 8
        %s7462 = sadd.s32 %s7460, %s7461
        %s7463 = smul.addr %s7462, 8
        %s7464 = scalar_lea.vmem %s6, %s7463
      $region56: #{criss_cross_attention.1} parent=51 // pred_fallthru
        _
    $region52: #{criss_cross_attention.1} parent=5 // pred_fallthru
      _
  $region6: #{criss_cross_attention.1} parent=0 // loop_footer
    %s16 = sadd.s32 1, %s12
  $region7: #{criss_cross_attention.1} parent=0 // loop_footer_branch
    %11 = sbr.rel target = $region3
  $region8: #{criss_cross_attention.1} parent=0 // loop_exit
    _

</llo_original>
